<compile_context>
chip_gen: v7x
topology: tpu7x:2x2x1
jax: 0.10.0
libtpu: 0.0.40
codegen_flags: <defaults>
</compile_context>

<pallas_src>
import jax
import jax.numpy as jnp
from jax.experimental import pallas as pl
from jax.experimental.pallas import tpu as pltpu

# --- dims implied by Multi_model.__init__ ---
D_MODEL = 512                 # transformer encoder output dim
EMB_DIM = 300                 # nn.Embedding(133829, 300)
FEAT = D_MODEL + EMB_DIM      # 812 = LSTM input_size
FEAT_PAD = 896                # 7 * 128, zero-padded K for the input projection
HIDDEN = 256                  # LSTM hidden_size
GATES = 4 * HIDDEN            # 1024
NUM_CLASSES = 105             # nn.Linear(256, 105)
OUT_PAD = 128                 # lane-dense fc output (sliced back to 105)
VOCAB = 1024                  # original vocab is 133829; shrunk for the demo
                              # (vocab size does not change kernel semantics)

CHUNK_VMEM_BUDGET = 12 * 1024 * 1024   # X-chunk (x2 buffers) + Zx scratch budget
VMEM_LIMIT_BYTES = 48 * 1024 * 1024    # explicit scoped-VMEM limit (fits v5e/v6e/v7x)


def _round_up(n, m):
    return ((n + m - 1) // m) * m


def _reorder_gates(w):
    """PyTorch LSTM gate order (i, f, g, o) -> (i, f, o, g) so sigmoid gates are contiguous."""
    i, f, g, o = jnp.split(w, 4, axis=0)
    return jnp.concatenate([i, f, o, g], axis=0)


def _bf16_gates_supported():
    """bf16 EUP/VPU exists on v6e / v7x; keep f32 gate math on v5e and older."""
    try:
        kind = jax.devices()[0].device_kind.lower()
    except Exception:
        return False
    return not any(t in kind for t in ("v2", "v3", "v4", "v5"))


# ------------- fused kernel: chunk GEMM + LSTM recurrence + fc head -----------

def lstm_fused_pallas(x, w_ih_t, bias, w_hh_t, w_fc_t, b_fc, *,
                      S, tch, n_chunks, n_bsplit, Bph, use_bf16_gates):
    """x: (n_bsplit, n_chunks*tch*Bph, FEAT_PAD) bf16 time-major activations.

    Per grid step (batch-half p, time-chunk c):
      1. Zx = X_chunk @ W_ih^T + (b_ih+b_hh)  on the MXU (into VMEM scratch),
      2. tch serial LSTM steps (only the small (Bph,256)@(256,1024) h-projection
         hits the MXU per step),
      3. at the last chunk: fc(h_S) into a lane-dense (Bph, 128) output block.
    """
    Bp = n_bsplit * Bph
    ragged = (n_chunks * tch) != S
    unroll = min(tch, 8)
    H3 = 3 * HIDDEN

    def kernel(x_ref, wih_ref, b_ref, whh_ref, wfc_ref, bfc_ref,
               out_ref, zx_sc, h_sc, c_sc):
        ci = pl.program_id(1)

        @pl.when(ci == 0)
        def _():
            # self.init_hidden(): zero hidden / cell state (per batch half)
            h_sc[...] = jnp.zeros_like(h_sc)
            c_sc[...] = jnp.zeros_like(c_sc)

        # --- fused, chunk-wide input projection (MXU, absorbed behind recurrence) ---
        zx_sc[...] = (jnp.dot(x_ref[...], wih_ref[...],
                              preferred_element_type=jnp.float32)
                      + b_ref[...])

        base = ci * tch

        def step(t, carry):
            h, c = carry
            row = pl.multiple_of(t * Bph, 8)
            # Zx already holds x@W_ih^T + b_ih + b_hh; only the h-projection remains.
            # TODO(synk): on v6e/v7x W_hh^T could be pinned in MXU staging across the
            # unrolled steps (pltpu.matmul_push_rhs / matmul_acc_lhs); kept as jnp.dot
            # for portability (not practical on v5e's 128-wide MXU staging).
            z = (zx_sc[pl.ds(row, Bph), :]
                 + jnp.dot(h.astype(jnp.bfloat16), whh_ref[...],
                           preferred_element_type=jnp.float32))        # (Bph, 4H) f32
            zg = z.astype(jnp.bfloat16) if use_bf16_gates else z
            sig = jax.nn.sigmoid(zg[:, :H3]).astype(jnp.float32)       # i | f | o, one wide sigmoid
            g = jnp.tanh(zg[:, H3:]).astype(jnp.float32)
            i = sig[:, :HIDDEN]
            f = sig[:, HIDDEN:2 * HIDDEN]
            o = sig[:, 2 * HIDDEN:]
            c_new = f * c + i * g                                      # f32 state math
            ct = c_new.astype(jnp.bfloat16) if use_bf16_gates else c_new
            h_new = o * jnp.tanh(ct).astype(jnp.float32)
            if ragged:                                                 # zero-padded + masked tail
                valid = (base + t) < S
                h_new = jnp.where(valid, h_new, h)
                c_new = jnp.where(valid, c_new, c)
            return h_new, c_new

        h, c = jax.lax.fori_loop(0, tch, step, (h_sc[...], c_sc[...]),
                                 unroll=unroll)
        h_sc[...] = h
        c_sc[...] = c

        @pl.when(ci == n_chunks - 1)
        def _():
            # lstm_out[-1] -> fc; dropout(p=0.2) is identity at inference time
            # TODO(synk): training-mode dropout (torch RNG) intentionally omitted.
            out_ref[...] = (jnp.dot(h.astype(jnp.bfloat16), wfc_ref[...],
                                    preferred_element_type=jnp.float32)
                            + bfc_ref[...])

    return pl.pallas_call(
        kernel,
        out_shape=jax.ShapeDtypeStruct((Bp, OUT_PAD), jnp.float32),
        grid=(n_bsplit, n_chunks),
        in_specs=[
            # bf16 X time-chunk for this batch half (auto double-buffered)
            pl.BlockSpec((None, tch * Bph, FEAT_PAD), lambda p, c: (p, c, 0)),
            # Constant weight blocks (index_map never changes -> no re-DMA across chunks).
            # pipeline_mode=pl.Buffered(1) would reclaim ~2.3 MiB; skipped, budget already fits.
            pl.BlockSpec((FEAT_PAD, GATES), lambda p, c: (0, 0)),      # W_ih^T (bf16)
            pl.BlockSpec((1, GATES), lambda p, c: (0, 0)),             # fused b_ih + b_hh (f32)
            pl.BlockSpec((HIDDEN, GATES), lambda p, c: (0, 0)),        # W_hh^T (bf16)
            pl.BlockSpec((HIDDEN, OUT_PAD), lambda p, c: (0, 0)),      # W_fc^T (bf16, padded)
            pl.BlockSpec((1, OUT_PAD), lambda p, c: (0, 0)),           # b_fc (f32, padded)
        ],
        out_specs=pl.BlockSpec((Bph, OUT_PAD), lambda p, c: (p, 0)),
        scratch_shapes=[
            pltpu.VMEM((tch * Bph, GATES), jnp.float32),   # Zx for the current chunk
            pltpu.VMEM((Bph, HIDDEN), jnp.float32),        # h (persists across chunks)
            pltpu.VMEM((Bph, HIDDEN), jnp.float32),        # c
        ],
        compiler_params=pltpu.CompilerParams(
            dimension_semantics=("parallel", "arbitrary"),  # batch-half || , time-chunk serial
            vmem_limit_bytes=VMEM_LIMIT_BYTES),
    )(x, w_ih_t, bias, w_hh_t, w_fc_t, b_fc)


# ----------------------------- glue (plain JAX) -----------------------------

def _sinusoid_table(n_pos, d):
    pos = jnp.arange(n_pos, dtype=jnp.float32)[:, None]
    dim = jnp.arange(d, dtype=jnp.float32)[None, :]
    angle = pos / jnp.power(10000.0, 2.0 * jnp.floor(dim / 2.0) / d)
    tbl = jnp.where((jnp.arange(d) % 2) == 0, jnp.sin(angle), jnp.cos(angle))
    return tbl.at[0].set(0.0)   # position 0 == PAD


def synthetic_encoder(src_seq, src_pos, enc_emb, pos_table):
    # TODO(synk): the real Extract_encoder loads a pretrained multi-layer Transformer
    # encoder from a .chkpt file; replaced by a deterministic word-embedding +
    # sinusoidal positional-encoding stand-in with the same (B, S, 512) output shape.
    return jnp.take(enc_emb, src_seq, axis=0) + jnp.take(pos_table, src_pos, axis=0)


def multi_model_forward(src_seq, src_pos, params):
    enc_out = synthetic_encoder(src_seq, src_pos,
                                params["enc_emb"], params["pos_table"])   # (B,S,512)
    emb_out = jnp.take(params["embedding"], src_seq, axis=0)              # (B,S,300)
    feats = jnp.concatenate([enc_out, emb_out], axis=2)                   # (B,S,812)
    feats = jnp.transpose(feats, (1, 0, 2))                               # (S,B,812) time-major
    S, B, _ = feats.shape

    # --- batch padding / optional megacore split (2 halves when B >= 16) ---
    if B >= 16:
        n_bsplit = 2
        Bp = _round_up(B, 16)
    else:
        n_bsplit = 1
        Bp = _round_up(B, 8)
    Bph = Bp // n_bsplit

    # --- VMEM-aware, balanced time-chunk size ---
    # per timestep: Zx scratch (f32) + double-buffered bf16 X rows
    per_step_bytes = Bph * (GATES * 4 + 2 * FEAT_PAD * 2)
    tch = max(8, min(128, CHUNK_VMEM_BUDGET // per_step_bytes))
    n_chunks = -(-S // tch)
    tch = -(-S // n_chunks)            # balance chunks; ragged waste <= n_chunks-1 steps
    S_pad = n_chunks * tch

    # --- weight prep: gate reorder (i,f,o,g), transpose, pad, cast to bf16 ---
    w_ih_t = jnp.pad(jnp.transpose(_reorder_gates(params["w_ih"])),
                     ((0, FEAT_PAD - FEAT), (0, 0))).astype(jnp.bfloat16)        # (896, 1024)
    bias = _reorder_gates(params["b_ih"] + params["b_hh"])[None, :]              # (1, 1024) f32
    w_hh_t = jnp.transpose(_reorder_gates(params["w_hh"])).astype(jnp.bfloat16)  # (256, 1024)
    w_fc_t = jnp.pad(jnp.transpose(params["w_fc"]),
                     ((0, 0), (0, OUT_PAD - NUM_CLASSES))).astype(jnp.bfloat16)  # (256, 128)
    b_fc = jnp.pad(params["b_fc"], (0, OUT_PAD - NUM_CLASSES))[None, :]          # (1, 128) f32

    # --- activations: zero-pad (time, batch, K), cast bf16, lay out per batch half ---
    x = jnp.pad(feats, ((0, S_pad - S), (0, Bp - B),
                        (0, FEAT_PAD - FEAT))).astype(jnp.bfloat16)              # (S_pad, Bp, 896)
    x = x.reshape(S_pad, n_bsplit, Bph, FEAT_PAD)
    x = jnp.transpose(x, (1, 0, 2, 3)).reshape(n_bsplit, S_pad * Bph, FEAT_PAD)

    out = lstm_fused_pallas(x, w_ih_t, bias, w_hh_t, w_fc_t, b_fc,
                            S=S, tch=tch, n_chunks=n_chunks,
                            n_bsplit=n_bsplit, Bph=Bph,
                            use_bf16_gates=_bf16_gates_supported())              # (Bp, 128)
    return out[:B, :NUM_CLASSES]


# ------------------------- pure-JAX reference -------------------------------

def _lstm_fc_ref(features, w_ih, w_hh, b_ih, b_hh, w_fc, b_fc, use_bf16_gates):
    """Reference of the kernel's hot path: bf16 matmul operands, f32 accumulation,
    and (on v6e/v7x) bf16 transcendental inputs, exactly mirroring the kernel."""
    S, B, F = features.shape
    bf = jnp.bfloat16

    def gc(v):   # gate-input cast
        return v.astype(bf) if use_bf16_gates else v

    zx = (jnp.dot(features.reshape(S * B, F).astype(bf), w_ih.T.astype(bf),
                  preferred_element_type=jnp.float32).reshape(S, B, -1)
          + (b_ih + b_hh))

    def step(carry, zx_t):
        h, c = carry
        z = zx_t + jnp.dot(h.astype(bf), w_hh.T.astype(bf),
                           preferred_element_type=jnp.float32)
        i, f, g, o = jnp.split(z, 4, axis=1)           # PyTorch gate order (i, f, g, o)
        i = jax.nn.sigmoid(gc(i)).astype(jnp.float32)
        f = jax.nn.sigmoid(gc(f)).astype(jnp.float32)
        o = jax.nn.sigmoid(gc(o)).astype(jnp.float32)
        g = jnp.tanh(gc(g)).astype(jnp.float32)
        c = f * c + i * g
        h = o * jnp.tanh(gc(c)).astype(jnp.float32)
        return (h, c), None

    (h, _), _ = jax.lax.scan(step,
                             (jnp.zeros((B, HIDDEN), jnp.float32),
                              jnp.zeros((B, HIDDEN), jnp.float32)),
                             zx)
    return jnp.dot(h.astype(bf), w_fc.T.astype(bf),
                   preferred_element_type=jnp.float32) + b_fc


if __name__ == "__main__":
    B, S = 4, 8
    key = jax.random.PRNGKey(0)
    ks = jax.random.split(key, 10)

    src_seq = jax.random.randint(ks[0], (B, S), 1, VOCAB)                  # token ids
    src_pos = jnp.tile(jnp.arange(1, S + 1, dtype=jnp.int32)[None, :], (B, 1))

    k_lstm = 1.0 / jnp.sqrt(jnp.float32(HIDDEN))
    xavier_std = jnp.sqrt(2.0 / (HIDDEN + NUM_CLASSES))
    params = {
        # nn.Embedding(133829, 300, padding_idx=PAD) -> row 0 zeroed
        "embedding": jax.random.normal(ks[1], (VOCAB, EMB_DIM), jnp.float32).at[0].set(0.0),
        # synthetic encoder stand-in parameters
        "enc_emb": jax.random.normal(ks[2], (VOCAB, D_MODEL), jnp.float32) * 0.1,
        "pos_table": _sinusoid_table(S + 1, D_MODEL),
        # nn.LSTM(812, 256) default uniform(-1/sqrt(H), 1/sqrt(H)) init
        "w_ih": jax.random.uniform(ks[3], (GATES, FEAT), jnp.float32, -k_lstm, k_lstm),
        "w_hh": jax.random.uniform(ks[4], (GATES, HIDDEN), jnp.float32, -k_lstm, k_lstm),
        "b_ih": jax.random.uniform(ks[5], (GATES,), jnp.float32, -k_lstm, k_lstm),
        "b_hh": jax.random.uniform(ks[6], (GATES,), jnp.float32, -k_lstm, k_lstm),
        # nn.Linear(256, 105), xavier_normal_ weight
        "w_fc": jax.random.normal(ks[7], (NUM_CLASSES, HIDDEN), jnp.float32) * xavier_std,
        "b_fc": jax.random.uniform(ks[8], (NUM_CLASSES,), jnp.float32, -k_lstm, k_lstm),
    }

    fwd = jax.jit(multi_model_forward)
    out = fwd(src_seq, src_pos, params)
    out = jax.block_until_ready(out)
    assert out.shape == (B, NUM_CLASSES) and out.dtype == jnp.float32

    # correctness check against a pure-JAX reference of the kernel's hot path
    enc_out = synthetic_encoder(src_seq, src_pos, params["enc_emb"], params["pos_table"])
    emb_out = jnp.take(params["embedding"], src_seq, axis=0)
    feats = jnp.transpose(jnp.concatenate([enc_out, emb_out], axis=2), (1, 0, 2))
    ref = _lstm_fc_ref(feats, params["w_ih"], params["w_hh"],
                       params["b_ih"], params["b_hh"],
                       params["w_fc"], params["b_fc"],
                       use_bf16_gates=_bf16_gates_supported())
    assert jnp.allclose(out, ref, atol=1e-2, rtol=1e-2)

    print("KERNEL_OK")
</pallas_src>

<mosaic_0001>
module attributes {stable_mosaic.version = 11 : i64} {
  func.func @kernel(%arg0: i32, %arg1: i32, %arg2: memref<1x64x896xbf16, #tpu.memory_space<vmem>>, %arg3: memref<896x1024xbf16, #tpu.memory_space<vmem>>, %arg4: memref<1x1024xf32, #tpu.memory_space<vmem>>, %arg5: memref<256x1024xbf16, #tpu.memory_space<vmem>>, %arg6: memref<256x128xbf16, #tpu.memory_space<vmem>>, %arg7: memref<1x128xf32, #tpu.memory_space<vmem>>, %arg8: memref<8x128xf32, #tpu.memory_space<vmem>>, %arg9: memref<64x1024xf32, #tpu.memory_space<vmem>>, %arg10: memref<8x256xf32, #tpu.memory_space<vmem>>, %arg11: memref<8x256xf32, #tpu.memory_space<vmem>>) attributes {dimension_semantics = [#tpu.dimension_semantics<parallel>, #tpu.dimension_semantics<arbitrary>], iteration_bounds = array<i64: 1, 1>, scalar_prefetch = 0 : i64, scratch_operands = 3 : i64, tpu.core_type = #tpu.core_type<tc>, window_params = [{transform_indices = @transform_0, window_bounds = array<i64: 1, 64, 896>}, {pipeline_mode = #tpu.pipeline_mode<synchronous>, transform_indices = @transform_1, window_bounds = array<i64: 896, 1024>}, {pipeline_mode = #tpu.pipeline_mode<synchronous>, transform_indices = @transform_2, window_bounds = array<i64: 1, 1024>}, {pipeline_mode = #tpu.pipeline_mode<synchronous>, transform_indices = @transform_3, window_bounds = array<i64: 256, 1024>}, {pipeline_mode = #tpu.pipeline_mode<synchronous>, transform_indices = @transform_4, window_bounds = array<i64: 256, 128>}, {pipeline_mode = #tpu.pipeline_mode<synchronous>, transform_indices = @transform_5, window_bounds = array<i64: 1, 128>}, {transform_indices = @transform_6, window_bounds = array<i64: 8, 128>}]} {
    %c0_i32 = arith.constant 0 : i32
    %0 = arith.cmpi eq, %arg1, %c0_i32 : i32
    %1 = arith.extui %0 : i1 to i32
    %c0_i32_0 = arith.constant 0 : i32
    %2 = arith.cmpi ne, %1, %c0_i32_0 : i32
    scf.if %2 {
      %cst_68 = arith.constant 0.000000e+00 : f32
      %250 = vector.broadcast %cst_68 : f32 to vector<8x256xf32>
      %c0_69 = arith.constant 0 : index
      %c0_70 = arith.constant 0 : index
      %251 = vector.load %arg10[%c0_69, %c0_70] : memref<8x256xf32, #tpu.memory_space<vmem>>, vector<8x256xf32>
      tpu.vector_store %arg10[%c0_69, %c0_70], %250 {strides = array<i32>} : memref<8x256xf32, #tpu.memory_space<vmem>>, vector<8x256xf32>,
      %cst_71 = arith.constant 0.000000e+00 : f32
      %252 = vector.broadcast %cst_71 : f32 to vector<8x256xf32>
      %c0_72 = arith.constant 0 : index
      %c0_73 = arith.constant 0 : index
      %253 = vector.load %arg11[%c0_72, %c0_73] : memref<8x256xf32, #tpu.memory_space<vmem>>, vector<8x256xf32>
      tpu.vector_store %arg11[%c0_72, %c0_73], %252 {strides = array<i32>} : memref<8x256xf32, #tpu.memory_space<vmem>>, vector<8x256xf32>,
    } else {
    }
    %c0 = arith.constant 0 : index
    %c0_1 = arith.constant 0 : index
    %c0_2 = arith.constant 0 : index
    %3 = vector.load %arg2[%c0, %c0_1, %c0_2] : memref<1x64x896xbf16, #tpu.memory_space<vmem>>, vector<1x64x896xbf16>
    %4 = vector.shape_cast %3 : vector<1x64x896xbf16> to vector<64x896xbf16>
    %c0_3 = arith.constant 0 : index
    %c0_4 = arith.constant 0 : index
    %5 = vector.load %arg3[%c0_3, %c0_4] : memref<896x1024xbf16, #tpu.memory_space<vmem>>, vector<896x1024xbf16>
    %cst = arith.constant dense<0.000000e+00> : vector<64x1024xf32>
    %6 = tpu.matmul %4, %5, %cst {dimension_numbers = #tpu.dot_dimension_numbers<[1], [0], [0], [1], [0, 0, 1, 1], [], []>} : vector<64x896xbf16>, vector<896x1024xbf16>, vector<64x1024xf32> -> vector<64x1024xf32>
    %c0_5 = arith.constant 0 : index
    %c0_6 = arith.constant 0 : index
    %7 = vector.load %arg4[%c0_5, %c0_6] : memref<1x1024xf32, #tpu.memory_space<vmem>>, vector<1x1024xf32>
    %8 = vector.broadcast %7 : vector<1x1024xf32> to vector<64x1024xf32>
    %9 = arith.addf %6, %8 : vector<64x1024xf32>
    %c0_7 = arith.constant 0 : index
    %c0_8 = arith.constant 0 : index
    %10 = vector.load %arg9[%c0_7, %c0_8] : memref<64x1024xf32, #tpu.memory_space<vmem>>, vector<64x1024xf32>
    tpu.vector_store %arg9[%c0_7, %c0_8], %9 {strides = array<i32>} : memref<64x1024xf32, #tpu.memory_space<vmem>>, vector<64x1024xf32>,
    %c0_9 = arith.constant 0 : index
    %c0_10 = arith.constant 0 : index
    %11 = vector.load %arg10[%c0_9, %c0_10] : memref<8x256xf32, #tpu.memory_space<vmem>>, vector<8x256xf32>
    %c0_11 = arith.constant 0 : index
    %c0_12 = arith.constant 0 : index
    %12 = vector.load %arg11[%c0_11, %c0_12] : memref<8x256xf32, #tpu.memory_space<vmem>>, vector<8x256xf32>
    %c0_i32_13 = arith.constant 0 : i32
    %c8_i32 = arith.constant 8 : i32
    %13 = arith.muli %c0_i32_13, %c8_i32 : i32
    %14 = tpu.assume_multiple %13, 8 : i32
    %15 = arith.index_cast %14 : i32 to index
    %c0_14 = arith.constant 0 : index
    %16 = vector.load %arg9[%15, %c0_14] : memref<64x1024xf32, #tpu.memory_space<vmem>>, vector<8x1024xf32>
    %17 = arith.truncf %11 : vector<8x256xf32> to vector<8x256xbf16>
    %c0_15 = arith.constant 0 : index
    %c0_16 = arith.constant 0 : index
    %18 = vector.load %arg5[%c0_15, %c0_16] : memref<256x1024xbf16, #tpu.memory_space<vmem>>, vector<256x1024xbf16>
    %cst_17 = arith.constant dense<0.000000e+00> : vector<8x1024xf32>
    %19 = tpu.matmul %17, %18, %cst_17 {dimension_numbers = #tpu.dot_dimension_numbers<[1], [0], [0], [1], [0, 0, 1, 1], [], []>} : vector<8x256xbf16>, vector<256x1024xbf16>, vector<8x1024xf32> -> vector<8x1024xf32>
    %20 = arith.addf %16, %19 : vector<8x1024xf32>
    %21 = arith.truncf %20 : vector<8x1024xf32> to vector<8x1024xbf16>
    %22 = vector.extract_strided_slice %21 {offsets = [0, 0], sizes = [8, 768], strides = [1, 1]} : vector<8x1024xbf16> to vector<8x768xbf16>
    %23 = arith.negf %22 : vector<8x768xbf16>
    %24 = math.exp %23 : vector<8x768xbf16>
    %cst_18 = arith.constant 1.000000e+00 : bf16
    %25 = vector.broadcast %cst_18 : bf16 to vector<8x768xbf16>
    %26 = arith.addf %25, %24 : vector<8x768xbf16>
    %27 = arith.divf %25, %26 : vector<8x768xbf16>
    %28 = arith.extf %27 : vector<8x768xbf16> to vector<8x768xf32>
    %29 = vector.extract_strided_slice %21 {offsets = [0, 768], sizes = [8, 256], strides = [1, 1]} : vector<8x1024xbf16> to vector<8x256xbf16>
    %30 = math.tanh %29 : vector<8x256xbf16>
    %31 = arith.extf %30 : vector<8x256xbf16> to vector<8x256xf32>
    %32 = vector.extract_strided_slice %28 {offsets = [0, 0], sizes = [8, 256], strides = [1, 1]} : vector<8x768xf32> to vector<8x256xf32>
    %33 = vector.extract_strided_slice %28 {offsets = [0, 256], sizes = [8, 256], strides = [1, 1]} : vector<8x768xf32> to vector<8x256xf32>
    %34 = vector.extract_strided_slice %28 {offsets = [0, 512], sizes = [8, 256], strides = [1, 1]} : vector<8x768xf32> to vector<8x256xf32>
    %35 = arith.mulf %33, %12 : vector<8x256xf32>
    %36 = arith.mulf %32, %31 : vector<8x256xf32>
    %37 = arith.addf %35, %36 : vector<8x256xf32>
    %38 = arith.truncf %37 : vector<8x256xf32> to vector<8x256xbf16>
    %39 = math.tanh %38 : vector<8x256xbf16>
    %40 = arith.extf %39 : vector<8x256xbf16> to vector<8x256xf32>
    %41 = arith.mulf %34, %40 : vector<8x256xf32>
    %c1_i32 = arith.constant 1 : i32
    %c8_i32_19 = arith.constant 8 : i32
    %42 = arith.muli %c1_i32, %c8_i32_19 : i32
    %43 = tpu.assume_multiple %42, 8 : i32
    %44 = arith.index_cast %43 : i32 to index
    %c0_20 = arith.constant 0 : index
    %45 = vector.load %arg9[%44, %c0_20] : memref<64x1024xf32, #tpu.memory_space<vmem>>, vector<8x1024xf32>
    %46 = arith.truncf %41 : vector<8x256xf32> to vector<8x256xbf16>
    %c0_21 = arith.constant 0 : index
    %c0_22 = arith.constant 0 : index
    %47 = vector.load %arg5[%c0_21, %c0_22] : memref<256x1024xbf16, #tpu.memory_space<vmem>>, vector<256x1024xbf16>
    %cst_23 = arith.constant dense<0.000000e+00> : vector<8x1024xf32>
    %48 = tpu.matmul %46, %47, %cst_23 {dimension_numbers = #tpu.dot_dimension_numbers<[1], [0], [0], [1], [0, 0, 1, 1], [], []>} : vector<8x256xbf16>, vector<256x1024xbf16>, vector<8x1024xf32> -> vector<8x1024xf32>
    %49 = arith.addf %45, %48 : vector<8x1024xf32>
    %50 = arith.truncf %49 : vector<8x1024xf32> to vector<8x1024xbf16>
    %51 = vector.extract_strided_slice %50 {offsets = [0, 0], sizes = [8, 768], strides = [1, 1]} : vector<8x1024xbf16> to vector<8x768xbf16>
    %52 = arith.negf %51 : vector<8x768xbf16>
    %53 = math.exp %52 : vector<8x768xbf16>
    %cst_24 = arith.constant 1.000000e+00 : bf16
    %54 = vector.broadcast %cst_24 : bf16 to vector<8x768xbf16>
    %55 = arith.addf %54, %53 : vector<8x768xbf16>
    %56 = arith.divf %54, %55 : vector<8x768xbf16>
    %57 = arith.extf %56 : vector<8x768xbf16> to vector<8x768xf32>
    %58 = vector.extract_strided_slice %50 {offsets = [0, 768], sizes = [8, 256], strides = [1, 1]} : vector<8x1024xbf16> to vector<8x256xbf16>
    %59 = math.tanh %58 : vector<8x256xbf16>
    %60 = arith.extf %59 : vector<8x256xbf16> to vector<8x256xf32>
    %61 = vector.extract_strided_slice %57 {offsets = [0, 0], sizes = [8, 256], strides = [1, 1]} : vector<8x768xf32> to vector<8x256xf32>
    %62 = vector.extract_strided_slice %57 {offsets = [0, 256], sizes = [8, 256], strides = [1, 1]} : vector<8x768xf32> to vector<8x256xf32>
    %63 = vector.extract_strided_slice %57 {offsets = [0, 512], sizes = [8, 256], strides = [1, 1]} : vector<8x768xf32> to vector<8x256xf32>
    %64 = arith.mulf %62, %37 : vector<8x256xf32>
    %65 = arith.mulf %61, %60 : vector<8x256xf32>
    %66 = arith.addf %64, %65 : vector<8x256xf32>
    %67 = arith.truncf %66 : vector<8x256xf32> to vector<8x256xbf16>
    %68 = math.tanh %67 : vector<8x256xbf16>
    %69 = arith.extf %68 : vector<8x256xbf16> to vector<8x256xf32>
    %70 = arith.mulf %63, %69 : vector<8x256xf32>
    %c2_i32 = arith.constant 2 : i32
    %c8_i32_25 = arith.constant 8 : i32
    %71 = arith.muli %c2_i32, %c8_i32_25 : i32
    %72 = tpu.assume_multiple %71, 8 : i32
    %73 = arith.index_cast %72 : i32 to index
    %c0_26 = arith.constant 0 : index
    %74 = vector.load %arg9[%73, %c0_26] : memref<64x1024xf32, #tpu.memory_space<vmem>>, vector<8x1024xf32>
    %75 = arith.truncf %70 : vector<8x256xf32> to vector<8x256xbf16>
    %c0_27 = arith.constant 0 : index
    %c0_28 = arith.constant 0 : index
    %76 = vector.load %arg5[%c0_27, %c0_28] : memref<256x1024xbf16, #tpu.memory_space<vmem>>, vector<256x1024xbf16>
    %cst_29 = arith.constant dense<0.000000e+00> : vector<8x1024xf32>
    %77 = tpu.matmul %75, %76, %cst_29 {dimension_numbers = #tpu.dot_dimension_numbers<[1], [0], [0], [1], [0, 0, 1, 1], [], []>} : vector<8x256xbf16>, vector<256x1024xbf16>, vector<8x1024xf32> -> vector<8x1024xf32>
    %78 = arith.addf %74, %77 : vector<8x1024xf32>
    %79 = arith.truncf %78 : vector<8x1024xf32> to vector<8x1024xbf16>
    %80 = vector.extract_strided_slice %79 {offsets = [0, 0], sizes = [8, 768], strides = [1, 1]} : vector<8x1024xbf16> to vector<8x768xbf16>
    %81 = arith.negf %80 : vector<8x768xbf16>
    %82 = math.exp %81 : vector<8x768xbf16>
    %cst_30 = arith.constant 1.000000e+00 : bf16
    %83 = vector.broadcast %cst_30 : bf16 to vector<8x768xbf16>
    %84 = arith.addf %83, %82 : vector<8x768xbf16>
    %85 = arith.divf %83, %84 : vector<8x768xbf16>
    %86 = arith.extf %85 : vector<8x768xbf16> to vector<8x768xf32>
    %87 = vector.extract_strided_slice %79 {offsets = [0, 768], sizes = [8, 256], strides = [1, 1]} : vector<8x1024xbf16> to vector<8x256xbf16>
    %88 = math.tanh %87 : vector<8x256xbf16>
    %89 = arith.extf %88 : vector<8x256xbf16> to vector<8x256xf32>
    %90 = vector.extract_strided_slice %86 {offsets = [0, 0], sizes = [8, 256], strides = [1, 1]} : vector<8x768xf32> to vector<8x256xf32>
    %91 = vector.extract_strided_slice %86 {offsets = [0, 256], sizes = [8, 256], strides = [1, 1]} : vector<8x768xf32> to vector<8x256xf32>
    %92 = vector.extract_strided_slice %86 {offsets = [0, 512], sizes = [8, 256], strides = [1, 1]} : vector<8x768xf32> to vector<8x256xf32>
    %93 = arith.mulf %91, %66 : vector<8x256xf32>
    %94 = arith.mulf %90, %89 : vector<8x256xf32>
    %95 = arith.addf %93, %94 : vector<8x256xf32>
    %96 = arith.truncf %95 : vector<8x256xf32> to vector<8x256xbf16>
    %97 = math.tanh %96 : vector<8x256xbf16>
    %98 = arith.extf %97 : vector<8x256xbf16> to vector<8x256xf32>
    %99 = arith.mulf %92, %98 : vector<8x256xf32>
    %c3_i32 = arith.constant 3 : i32
    %c8_i32_31 = arith.constant 8 : i32
    %100 = arith.muli %c3_i32, %c8_i32_31 : i32
    %101 = tpu.assume_multiple %100, 8 : i32
    %102 = arith.index_cast %101 : i32 to index
    %c0_32 = arith.constant 0 : index
    %103 = vector.load %arg9[%102, %c0_32] : memref<64x1024xf32, #tpu.memory_space<vmem>>, vector<8x1024xf32>
    %104 = arith.truncf %99 : vector<8x256xf32> to vector<8x256xbf16>
    %c0_33 = arith.constant 0 : index
    %c0_34 = arith.constant 0 : index
    %105 = vector.load %arg5[%c0_33, %c0_34] : memref<256x1024xbf16, #tpu.memory_space<vmem>>, vector<256x1024xbf16>
    %cst_35 = arith.constant dense<0.000000e+00> : vector<8x1024xf32>
    %106 = tpu.matmul %104, %105, %cst_35 {dimension_numbers = #tpu.dot_dimension_numbers<[1], [0], [0], [1], [0, 0, 1, 1], [], []>} : vector<8x256xbf16>, vector<256x1024xbf16>, vector<8x1024xf32> -> vector<8x1024xf32>
    %107 = arith.addf %103, %106 : vector<8x1024xf32>
    %108 = arith.truncf %107 : vector<8x1024xf32> to vector<8x1024xbf16>
    %109 = vector.extract_strided_slice %108 {offsets = [0, 0], sizes = [8, 768], strides = [1, 1]} : vector<8x1024xbf16> to vector<8x768xbf16>
    %110 = arith.negf %109 : vector<8x768xbf16>
    %111 = math.exp %110 : vector<8x768xbf16>
    %cst_36 = arith.constant 1.000000e+00 : bf16
    %112 = vector.broadcast %cst_36 : bf16 to vector<8x768xbf16>
    %113 = arith.addf %112, %111 : vector<8x768xbf16>
    %114 = arith.divf %112, %113 : vector<8x768xbf16>
    %115 = arith.extf %114 : vector<8x768xbf16> to vector<8x768xf32>
    %116 = vector.extract_strided_slice %108 {offsets = [0, 768], sizes = [8, 256], strides = [1, 1]} : vector<8x1024xbf16> to vector<8x256xbf16>
    %117 = math.tanh %116 : vector<8x256xbf16>
    %118 = arith.extf %117 : vector<8x256xbf16> to vector<8x256xf32>
    %119 = vector.extract_strided_slice %115 {offsets = [0, 0], sizes = [8, 256], strides = [1, 1]} : vector<8x768xf32> to vector<8x256xf32>
    %120 = vector.extract_strided_slice %115 {offsets = [0, 256], sizes = [8, 256], strides = [1, 1]} : vector<8x768xf32> to vector<8x256xf32>
    %121 = vector.extract_strided_slice %115 {offsets = [0, 512], sizes = [8, 256], strides = [1, 1]} : vector<8x768xf32> to vector<8x256xf32>
    %122 = arith.mulf %120, %95 : vector<8x256xf32>
    %123 = arith.mulf %119, %118 : vector<8x256xf32>
    %124 = arith.addf %122, %123 : vector<8x256xf32>
    %125 = arith.truncf %124 : vector<8x256xf32> to vector<8x256xbf16>
    %126 = math.tanh %125 : vector<8x256xbf16>
    %127 = arith.extf %126 : vector<8x256xbf16> to vector<8x256xf32>
    %128 = arith.mulf %121, %127 : vector<8x256xf32>
    %c4_i32 = arith.constant 4 : i32
    %c8_i32_37 = arith.constant 8 : i32
    %129 = arith.muli %c4_i32, %c8_i32_37 : i32
    %130 = tpu.assume_multiple %129, 8 : i32
    %131 = arith.index_cast %130 : i32 to index
    %c0_38 = arith.constant 0 : index
    %132 = vector.load %arg9[%131, %c0_38] : memref<64x1024xf32, #tpu.memory_space<vmem>>, vector<8x1024xf32>
    %133 = arith.truncf %128 : vector<8x256xf32> to vector<8x256xbf16>
    %c0_39 = arith.constant 0 : index
    %c0_40 = arith.constant 0 : index
    %134 = vector.load %arg5[%c0_39, %c0_40] : memref<256x1024xbf16, #tpu.memory_space<vmem>>, vector<256x1024xbf16>
    %cst_41 = arith.constant dense<0.000000e+00> : vector<8x1024xf32>
    %135 = tpu.matmul %133, %134, %cst_41 {dimension_numbers = #tpu.dot_dimension_numbers<[1], [0], [0], [1], [0, 0, 1, 1], [], []>} : vector<8x256xbf16>, vector<256x1024xbf16>, vector<8x1024xf32> -> vector<8x1024xf32>
    %136 = arith.addf %132, %135 : vector<8x1024xf32>
    %137 = arith.truncf %136 : vector<8x1024xf32> to vector<8x1024xbf16>
    %138 = vector.extract_strided_slice %137 {offsets = [0, 0], sizes = [8, 768], strides = [1, 1]} : vector<8x1024xbf16> to vector<8x768xbf16>
    %139 = arith.negf %138 : vector<8x768xbf16>
    %140 = math.exp %139 : vector<8x768xbf16>
    %cst_42 = arith.constant 1.000000e+00 : bf16
    %141 = vector.broadcast %cst_42 : bf16 to vector<8x768xbf16>
    %142 = arith.addf %141, %140 : vector<8x768xbf16>
    %143 = arith.divf %141, %142 : vector<8x768xbf16>
    %144 = arith.extf %143 : vector<8x768xbf16> to vector<8x768xf32>
    %145 = vector.extract_strided_slice %137 {offsets = [0, 768], sizes = [8, 256], strides = [1, 1]} : vector<8x1024xbf16> to vector<8x256xbf16>
    %146 = math.tanh %145 : vector<8x256xbf16>
    %147 = arith.extf %146 : vector<8x256xbf16> to vector<8x256xf32>
    %148 = vector.extract_strided_slice %144 {offsets = [0, 0], sizes = [8, 256], strides = [1, 1]} : vector<8x768xf32> to vector<8x256xf32>
    %149 = vector.extract_strided_slice %144 {offsets = [0, 256], sizes = [8, 256], strides = [1, 1]} : vector<8x768xf32> to vector<8x256xf32>
    %150 = vector.extract_strided_slice %144 {offsets = [0, 512], sizes = [8, 256], strides = [1, 1]} : vector<8x768xf32> to vector<8x256xf32>
    %151 = arith.mulf %149, %124 : vector<8x256xf32>
    %152 = arith.mulf %148, %147 : vector<8x256xf32>
    %153 = arith.addf %151, %152 : vector<8x256xf32>
    %154 = arith.truncf %153 : vector<8x256xf32> to vector<8x256xbf16>
    %155 = math.tanh %154 : vector<8x256xbf16>
    %156 = arith.extf %155 : vector<8x256xbf16> to vector<8x256xf32>
    %157 = arith.mulf %150, %156 : vector<8x256xf32>
    %c5_i32 = arith.constant 5 : i32
    %c8_i32_43 = arith.constant 8 : i32
    %158 = arith.muli %c5_i32, %c8_i32_43 : i32
    %159 = tpu.assume_multiple %158, 8 : i32
    %160 = arith.index_cast %159 : i32 to index
    %c0_44 = arith.constant 0 : index
    %161 = vector.load %arg9[%160, %c0_44] : memref<64x1024xf32, #tpu.memory_space<vmem>>, vector<8x1024xf32>
    %162 = arith.truncf %157 : vector<8x256xf32> to vector<8x256xbf16>
    %c0_45 = arith.constant 0 : index
    %c0_46 = arith.constant 0 : index
    %163 = vector.load %arg5[%c0_45, %c0_46] : memref<256x1024xbf16, #tpu.memory_space<vmem>>, vector<256x1024xbf16>
    %cst_47 = arith.constant dense<0.000000e+00> : vector<8x1024xf32>
    %164 = tpu.matmul %162, %163, %cst_47 {dimension_numbers = #tpu.dot_dimension_numbers<[1], [0], [0], [1], [0, 0, 1, 1], [], []>} : vector<8x256xbf16>, vector<256x1024xbf16>, vector<8x1024xf32> -> vector<8x1024xf32>
    %165 = arith.addf %161, %164 : vector<8x1024xf32>
    %166 = arith.truncf %165 : vector<8x1024xf32> to vector<8x1024xbf16>
    %167 = vector.extract_strided_slice %166 {offsets = [0, 0], sizes = [8, 768], strides = [1, 1]} : vector<8x1024xbf16> to vector<8x768xbf16>
    %168 = arith.negf %167 : vector<8x768xbf16>
    %169 = math.exp %168 : vector<8x768xbf16>
    %cst_48 = arith.constant 1.000000e+00 : bf16
    %170 = vector.broadcast %cst_48 : bf16 to vector<8x768xbf16>
    %171 = arith.addf %170, %169 : vector<8x768xbf16>
    %172 = arith.divf %170, %171 : vector<8x768xbf16>
    %173 = arith.extf %172 : vector<8x768xbf16> to vector<8x768xf32>
    %174 = vector.extract_strided_slice %166 {offsets = [0, 768], sizes = [8, 256], strides = [1, 1]} : vector<8x1024xbf16> to vector<8x256xbf16>
    %175 = math.tanh %174 : vector<8x256xbf16>
    %176 = arith.extf %175 : vector<8x256xbf16> to vector<8x256xf32>
    %177 = vector.extract_strided_slice %173 {offsets = [0, 0], sizes = [8, 256], strides = [1, 1]} : vector<8x768xf32> to vector<8x256xf32>
    %178 = vector.extract_strided_slice %173 {offsets = [0, 256], sizes = [8, 256], strides = [1, 1]} : vector<8x768xf32> to vector<8x256xf32>
    %179 = vector.extract_strided_slice %173 {offsets = [0, 512], sizes = [8, 256], strides = [1, 1]} : vector<8x768xf32> to vector<8x256xf32>
    %180 = arith.mulf %178, %153 : vector<8x256xf32>
    %181 = arith.mulf %177, %176 : vector<8x256xf32>
    %182 = arith.addf %180, %181 : vector<8x256xf32>
    %183 = arith.truncf %182 : vector<8x256xf32> to vector<8x256xbf16>
    %184 = math.tanh %183 : vector<8x256xbf16>
    %185 = arith.extf %184 : vector<8x256xbf16> to vector<8x256xf32>
    %186 = arith.mulf %179, %185 : vector<8x256xf32>
    %c6_i32 = arith.constant 6 : i32
    %c8_i32_49 = arith.constant 8 : i32
    %187 = arith.muli %c6_i32, %c8_i32_49 : i32
    %188 = tpu.assume_multiple %187, 8 : i32
    %189 = arith.index_cast %188 : i32 to index
    %c0_50 = arith.constant 0 : index
    %190 = vector.load %arg9[%189, %c0_50] : memref<64x1024xf32, #tpu.memory_space<vmem>>, vector<8x1024xf32>
    %191 = arith.truncf %186 : vector<8x256xf32> to vector<8x256xbf16>
    %c0_51 = arith.constant 0 : index
    %c0_52 = arith.constant 0 : index
    %192 = vector.load %arg5[%c0_51, %c0_52] : memref<256x1024xbf16, #tpu.memory_space<vmem>>, vector<256x1024xbf16>
    %cst_53 = arith.constant dense<0.000000e+00> : vector<8x1024xf32>
    %193 = tpu.matmul %191, %192, %cst_53 {dimension_numbers = #tpu.dot_dimension_numbers<[1], [0], [0], [1], [0, 0, 1, 1], [], []>} : vector<8x256xbf16>, vector<256x1024xbf16>, vector<8x1024xf32> -> vector<8x1024xf32>
    %194 = arith.addf %190, %193 : vector<8x1024xf32>
    %195 = arith.truncf %194 : vector<8x1024xf32> to vector<8x1024xbf16>
    %196 = vector.extract_strided_slice %195 {offsets = [0, 0], sizes = [8, 768], strides = [1, 1]} : vector<8x1024xbf16> to vector<8x768xbf16>
    %197 = arith.negf %196 : vector<8x768xbf16>
    %198 = math.exp %197 : vector<8x768xbf16>
    %cst_54 = arith.constant 1.000000e+00 : bf16
    %199 = vector.broadcast %cst_54 : bf16 to vector<8x768xbf16>
    %200 = arith.addf %199, %198 : vector<8x768xbf16>
    %201 = arith.divf %199, %200 : vector<8x768xbf16>
    %202 = arith.extf %201 : vector<8x768xbf16> to vector<8x768xf32>
    %203 = vector.extract_strided_slice %195 {offsets = [0, 768], sizes = [8, 256], strides = [1, 1]} : vector<8x1024xbf16> to vector<8x256xbf16>
    %204 = math.tanh %203 : vector<8x256xbf16>
    %205 = arith.extf %204 : vector<8x256xbf16> to vector<8x256xf32>
    %206 = vector.extract_strided_slice %202 {offsets = [0, 0], sizes = [8, 256], strides = [1, 1]} : vector<8x768xf32> to vector<8x256xf32>
    %207 = vector.extract_strided_slice %202 {offsets = [0, 256], sizes = [8, 256], strides = [1, 1]} : vector<8x768xf32> to vector<8x256xf32>
    %208 = vector.extract_strided_slice %202 {offsets = [0, 512], sizes = [8, 256], strides = [1, 1]} : vector<8x768xf32> to vector<8x256xf32>
    %209 = arith.mulf %207, %182 : vector<8x256xf32>
    %210 = arith.mulf %206, %205 : vector<8x256xf32>
    %211 = arith.addf %209, %210 : vector<8x256xf32>
    %212 = arith.truncf %211 : vector<8x256xf32> to vector<8x256xbf16>
    %213 = math.tanh %212 : vector<8x256xbf16>
    %214 = arith.extf %213 : vector<8x256xbf16> to vector<8x256xf32>
    %215 = arith.mulf %208, %214 : vector<8x256xf32>
    %c7_i32 = arith.constant 7 : i32
    %c8_i32_55 = arith.constant 8 : i32
    %216 = arith.muli %c7_i32, %c8_i32_55 : i32
    %217 = tpu.assume_multiple %216, 8 : i32
    %218 = arith.index_cast %217 : i32 to index
    %c0_56 = arith.constant 0 : index
    %219 = vector.load %arg9[%218, %c0_56] : memref<64x1024xf32, #tpu.memory_space<vmem>>, vector<8x1024xf32>
    %220 = arith.truncf %215 : vector<8x256xf32> to vector<8x256xbf16>
    %c0_57 = arith.constant 0 : index
    %c0_58 = arith.constant 0 : index
    %221 = vector.load %arg5[%c0_57, %c0_58] : memref<256x1024xbf16, #tpu.memory_space<vmem>>, vector<256x1024xbf16>
    %cst_59 = arith.constant dense<0.000000e+00> : vector<8x1024xf32>
    %222 = tpu.matmul %220, %221, %cst_59 {dimension_numbers = #tpu.dot_dimension_numbers<[1], [0], [0], [1], [0, 0, 1, 1], [], []>} : vector<8x256xbf16>, vector<256x1024xbf16>, vector<8x1024xf32> -> vector<8x1024xf32>
    %223 = arith.addf %219, %222 : vector<8x1024xf32>
    %224 = arith.truncf %223 : vector<8x1024xf32> to vector<8x1024xbf16>
    %225 = vector.extract_strided_slice %224 {offsets = [0, 0], sizes = [8, 768], strides = [1, 1]} : vector<8x1024xbf16> to vector<8x768xbf16>
    %226 = arith.negf %225 : vector<8x768xbf16>
    %227 = math.exp %226 : vector<8x768xbf16>
    %cst_60 = arith.constant 1.000000e+00 : bf16
    %228 = vector.broadcast %cst_60 : bf16 to vector<8x768xbf16>
    %229 = arith.addf %228, %227 : vector<8x768xbf16>
    %230 = arith.divf %228, %229 : vector<8x768xbf16>
    %231 = arith.extf %230 : vector<8x768xbf16> to vector<8x768xf32>
    %232 = vector.extract_strided_slice %224 {offsets = [0, 768], sizes = [8, 256], strides = [1, 1]} : vector<8x1024xbf16> to vector<8x256xbf16>
    %233 = math.tanh %232 : vector<8x256xbf16>
    %234 = arith.extf %233 : vector<8x256xbf16> to vector<8x256xf32>
    %235 = vector.extract_strided_slice %231 {offsets = [0, 0], sizes = [8, 256], strides = [1, 1]} : vector<8x768xf32> to vector<8x256xf32>
    %236 = vector.extract_strided_slice %231 {offsets = [0, 256], sizes = [8, 256], strides = [1, 1]} : vector<8x768xf32> to vector<8x256xf32>
    %237 = vector.extract_strided_slice %231 {offsets = [0, 512], sizes = [8, 256], strides = [1, 1]} : vector<8x768xf32> to vector<8x256xf32>
    %238 = arith.mulf %236, %211 : vector<8x256xf32>
    %239 = arith.mulf %235, %234 : vector<8x256xf32>
    %240 = arith.addf %238, %239 : vector<8x256xf32>
    %241 = arith.truncf %240 : vector<8x256xf32> to vector<8x256xbf16>
    %242 = math.tanh %241 : vector<8x256xbf16>
    %243 = arith.extf %242 : vector<8x256xbf16> to vector<8x256xf32>
    %244 = arith.mulf %237, %243 : vector<8x256xf32>
    %c8_i32_61 = arith.constant 8 : i32
    %c0_62 = arith.constant 0 : index
    %c0_63 = arith.constant 0 : index
    %245 = vector.load %arg10[%c0_62, %c0_63] : memref<8x256xf32, #tpu.memory_space<vmem>>, vector<8x256xf32>
    tpu.vector_store %arg10[%c0_62, %c0_63], %244 {strides = array<i32>} : memref<8x256xf32, #tpu.memory_space<vmem>>, vector<8x256xf32>,
    %c0_64 = arith.constant 0 : index
    %c0_65 = arith.constant 0 : index
    %246 = vector.load %arg11[%c0_64, %c0_65] : memref<8x256xf32, #tpu.memory_space<vmem>>, vector<8x256xf32>
    tpu.vector_store %arg11[%c0_64, %c0_65], %240 {strides = array<i32>} : memref<8x256xf32, #tpu.memory_space<vmem>>, vector<8x256xf32>,
    %c0_i32_66 = arith.constant 0 : i32
    %247 = arith.cmpi eq, %arg1, %c0_i32_66 : i32
    %248 = arith.extui %247 : i1 to i32
    %c0_i32_67 = arith.constant 0 : i32
    %249 = arith.cmpi ne, %248, %c0_i32_67 : i32
    scf.if %249 {
      %250 = arith.truncf %244 : vector<8x256xf32> to vector<8x256xbf16>
      %c0_68 = arith.constant 0 : index
      %c0_69 = arith.constant 0 : index
      %251 = vector.load %arg6[%c0_68, %c0_69] : memref<256x128xbf16, #tpu.memory_space<vmem>>, vector<256x128xbf16>
      %cst_70 = arith.constant dense<0.000000e+00> : vector<8x128xf32>
      %252 = tpu.matmul %250, %251, %cst_70 {dimension_numbers = #tpu.dot_dimension_numbers<[1], [0], [0], [1], [0, 0, 1, 1], [], []>} : vector<8x256xbf16>, vector<256x128xbf16>, vector<8x128xf32> -> vector<8x128xf32>
      %c0_71 = arith.constant 0 : index
      %c0_72 = arith.constant 0 : index
      %253 = vector.load %arg7[%c0_71, %c0_72] : memref<1x128xf32, #tpu.memory_space<vmem>>, vector<1x128xf32>
      %254 = vector.broadcast %253 : vector<1x128xf32> to vector<8x128xf32>
      %255 = arith.addf %252, %254 : vector<8x128xf32>
      %c0_73 = arith.constant 0 : index
      %c0_74 = arith.constant 0 : index
      %256 = vector.load %arg8[%c0_73, %c0_74] : memref<8x128xf32, #tpu.memory_space<vmem>>, vector<8x128xf32>
      tpu.vector_store %arg8[%c0_73, %c0_74], %255 {strides = array<i32>} : memref<8x128xf32, #tpu.memory_space<vmem>>, vector<8x128xf32>,
    } else {
    }
    return
  }
  func.func @transform_0(%arg0: i32, %arg1: i32) -> (i32, i32, i32) {
    %c0_i32 = arith.constant 0 : i32
    %c0_i32_0 = arith.constant 0 : i32
    return %arg0, %arg1, %c0_i32 : i32, i32, i32
  }
  func.func @transform_1(%arg0: i32, %arg1: i32) -> (i32, i32) {
    %c0_i32 = arith.constant 0 : i32
    %c0_i32_0 = arith.constant 0 : i32
    %c0_i32_1 = arith.constant 0 : i32
    return %c0_i32, %c0_i32_0 : i32, i32
  }
  func.func @transform_2(%arg0: i32, %arg1: i32) -> (i32, i32) {
    %c0_i32 = arith.constant 0 : i32
    %c0_i32_0 = arith.constant 0 : i32
    %c0_i32_1 = arith.constant 0 : i32
    return %c0_i32, %c0_i32_0 : i32, i32
  }
  func.func @transform_3(%arg0: i32, %arg1: i32) -> (i32, i32) {
    %c0_i32 = arith.constant 0 : i32
    %c0_i32_0 = arith.constant 0 : i32
    %c0_i32_1 = arith.constant 0 : i32
    return %c0_i32, %c0_i32_0 : i32, i32
  }
  func.func @transform_4(%arg0: i32, %arg1: i32) -> (i32, i32) {
    %c0_i32 = arith.constant 0 : i32
    %c0_i32_0 = arith.constant 0 : i32
    %c0_i32_1 = arith.constant 0 : i32
    return %c0_i32, %c0_i32_0 : i32, i32
  }
  func.func @transform_5(%arg0: i32, %arg1: i32) -> (i32, i32) {
    %c0_i32 = arith.constant 0 : i32
    %c0_i32_0 = arith.constant 0 : i32
    %c0_i32_1 = arith.constant 0 : i32
    return %c0_i32, %c0_i32_0 : i32, i32
  }
  func.func @transform_6(%arg0: i32, %arg1: i32) -> (i32, i32) {
    %c0_i32 = arith.constant 0 : i32
    %c0_i32_0 = arith.constant 0 : i32
    return %arg0, %c0_i32 : i32, i32
  }
}

</mosaic_0001>

<llo_original>
// kernel: multi_model_forward.1
$region0: #{multi_model_forward.1}
  #allocation0 [shape = 'u32[]', space=smem, size = 0x4, offset = 0x4, fixed_abs, tag = 'smem constant byte address 0x4 - core index']
  #allocation1 [shape = 'u32[144,128]{1,0:T(1,128)}', space=vmem, size = 0x12000, scoped, tag = 'internal scratch']
  #allocation2 [shape = 'f32[64,1024]{1,0:T(8,128)}', space=vmem, size = 0x40000, scoped, tag = 'scratch operand']
  #allocation3 [shape = 'f32[8,256]{1,0:T(8,128)}', space=vmem, size = 0x2000, scoped, tag = 'scratch operand']
  #allocation4 [shape = 'f32[8,256]{1,0:T(8,128)}', space=vmem, size = 0x2000, scoped, tag = 'scratch operand']
  %s0 = inlined_call_operand.vmem [shape: bf16[1,64,896], index: 0, kind: input, shape index: {}]
  %s1 = inlined_call_operand.vmem [shape: bf16[896,1024], index: 1, kind: input, shape index: {}]
  %s2 = inlined_call_operand.vmem [shape: f32[1,1024], index: 2, kind: input, shape index: {}]
  %s3 = inlined_call_operand.vmem [shape: bf16[256,1024], index: 3, kind: input, shape index: {}]
  %s4 = inlined_call_operand.vmem [shape: bf16[256,128], index: 4, kind: input, shape index: {}]
  %s5 = inlined_call_operand.vmem [shape: f32[1,128], index: 5, kind: input, shape index: {}]
  %s6 = inlined_call_operand.vmem [shape: f32[8,128], index: 6, kind: output, shape index: {}]
  %s7 = sld [smem:[#allocation0]]
  $region42: #{multi_model_forward.1} parent=0
    _
  %s9 = ssub.s32 1, %s7
  %s10 = scalar_select 0, %s9, %s7
  // Predicated region
  $region2: #{multi_model_forward.1} parent=0 // pred_check
    _
  $region3: #{multi_model_forward.1} parent=0 // pred_check_branch
    %12 = sbr.rel (0) target = $region5
  $region4: #{multi_model_forward.1} parent=0 // pred_region
    _
  $region5: #{multi_model_forward.1} parent=0 // pred_fallthru
    _
  // Predicated region
  $region6: #{multi_model_forward.1} parent=0 // pred_check
    _
  $region7: #{multi_model_forward.1} parent=0 // pred_check_branch
    %14 = sbr.rel (0) target = $region9
  $region8: #{multi_model_forward.1} parent=0 // pred_region
    _
  $region9: #{multi_model_forward.1} parent=0 // pred_fallthru
    _
  // Predicated region
  $region10: #{multi_model_forward.1} parent=0 // pred_check
    _
  $region11: #{multi_model_forward.1} parent=0 // pred_check_branch
    %16 = sbr.rel (0) target = $region13
  $region12: #{multi_model_forward.1} parent=0 // pred_region
    _
  $region13: #{multi_model_forward.1} parent=0 // pred_fallthru
    _
  // Predicated region
  $region14: #{multi_model_forward.1} parent=0 // pred_check
    _
  $region15: #{multi_model_forward.1} parent=0 // pred_check_branch
    %18 = sbr.rel (0) target = $region17
  $region16: #{multi_model_forward.1} parent=0 // pred_region
    _
  $region17: #{multi_model_forward.1} parent=0 // pred_fallthru
    _
  // Predicated region
  $region18: #{multi_model_forward.1} parent=0 // pred_check
    _
  $region19: #{multi_model_forward.1} parent=0 // pred_check_branch
    %20 = sbr.rel (0) target = $region21
  $region20: #{multi_model_forward.1} parent=0 // pred_region
    _
  $region21: #{multi_model_forward.1} parent=0 // pred_fallthru
    _
  // Predicated region
  $region22: #{multi_model_forward.1} parent=0 // pred_check
    _
  $region23: #{multi_model_forward.1} parent=0 // pred_check_branch
    %22 = sbr.rel (0) target = $region25
  $region24: #{multi_model_forward.1} parent=0 // pred_region
    _
  $region25: #{multi_model_forward.1} parent=0 // pred_fallthru
    _
  %p25 = scmp.eq.s32.totalorder 0, 0
  // Predicated region
  $region26: #{multi_model_forward.1} parent=0 // pred_check
    %p26 = pneg %p25
  $region27: #{multi_model_forward.1} parent=0 // pred_check_branch
    %28 = sbr.rel (%p26) target = $region29
  $region28: #{multi_model_forward.1} parent=0 // pred_region
    %29 = vst [vmem:[#allocation3] sm:$0xff] 0.0
    %30 = vst [vmem:[#allocation3 + $0x8] sm:$0xff] 0.0
    %31 = vst [vmem:[#allocation4] sm:$0xff] 0.0
    %32 = vst [vmem:[#allocation4 + $0x8] sm:$0xff] 0.0
  $region29: #{multi_model_forward.1} parent=0 // pred_fallthru
    _
  %v33 = vld [vmem:[%s0] sm:$0xff]
  %v34 = vld [vmem:[%s0 + $0x8] sm:$0xff]
  %v35 = vld [vmem:[%s0 + $0x10] sm:$0xff]
  %v36 = vld [vmem:[%s0 + $0x18] sm:$0xf]
  %v37 = vld [vmem:[%s0 + $0x1c] sm:$0xff]
  %v38 = vld [vmem:[%s0 + $0x24] sm:$0xff]
  %v39 = vld [vmem:[%s0 + $0x2c] sm:$0xff]
  %v40 = vld [vmem:[%s0 + $0x34] sm:$0xf]
  %v41 = vld [vmem:[%s0 + $0x38] sm:$0xff]
  %v42 = vld [vmem:[%s0 + $0x40] sm:$0xff]
  %v43 = vld [vmem:[%s0 + $0x48] sm:$0xff]
  %v44 = vld [vmem:[%s0 + $0x50] sm:$0xf]
  %v45 = vld [vmem:[%s0 + $0x54] sm:$0xff]
  %v46 = vld [vmem:[%s0 + $0x5c] sm:$0xff]
  %v47 = vld [vmem:[%s0 + $0x64] sm:$0xff]
  %v48 = vld [vmem:[%s0 + $0x6c] sm:$0xf]
  %v49 = vld [vmem:[%s0 + $0x70] sm:$0xff]
  %v50 = vld [vmem:[%s0 + $0x78] sm:$0xff]
  %v51 = vld [vmem:[%s0 + $0x80] sm:$0xff]
  %v52 = vld [vmem:[%s0 + $0x88] sm:$0xf]
  %v53 = vld [vmem:[%s0 + $0x8c] sm:$0xff]
  %v54 = vld [vmem:[%s0 + $0x94] sm:$0xff]
  %v55 = vld [vmem:[%s0 + $0x9c] sm:$0xff]
  %v56 = vld [vmem:[%s0 + $0xa4] sm:$0xf]
  %v57 = vld [vmem:[%s0 + $0xa8] sm:$0xff]
  %v58 = vld [vmem:[%s0 + $0xb0] sm:$0xff]
  %v59 = vld [vmem:[%s0 + $0xb8] sm:$0xff]
  %v60 = vld [vmem:[%s0 + $0xc0] sm:$0xf]
  %v61 = vld [vmem:[%s0 + $0xc4] sm:$0xff]
  %v62 = vld [vmem:[%s0 + $0xcc] sm:$0xff]
  %v63 = vld [vmem:[%s0 + $0xd4] sm:$0xff]
  %v64 = vld [vmem:[%s0 + $0xdc] sm:$0xf]
  %v65 = vld [vmem:[%s1] sm:$0xff]
  %v66 = vld [vmem:[%s1 + $0x8] sm:$0xff]
  %v67 = vld [vmem:[%s1 + $0x10] sm:$0xff]
  %v68 = vld [vmem:[%s1 + $0x18] sm:$0xff]
  %v69 = vld [vmem:[%s1 + $0x20] sm:$0xff]
  %v70 = vld [vmem:[%s1 + $0x28] sm:$0xff]
  %v71 = vld [vmem:[%s1 + $0x30] sm:$0xff]
  %v72 = vld [vmem:[%s1 + $0x38] sm:$0xff]
  %v73 = vld [vmem:[%s1 + $0x40] sm:$0xff]
  %v74 = vld [vmem:[%s1 + $0x48] sm:$0xff]
  %v75 = vld [vmem:[%s1 + $0x50] sm:$0xff]
  %v76 = vld [vmem:[%s1 + $0x58] sm:$0xff]
  %v77 = vld [vmem:[%s1 + $0x60] sm:$0xff]
  %v78 = vld [vmem:[%s1 + $0x68] sm:$0xff]
  %v79 = vld [vmem:[%s1 + $0x70] sm:$0xff]
  %v80 = vld [vmem:[%s1 + $0x78] sm:$0xff]
  %v81 = vld [vmem:[%s1 + $0x80] sm:$0xff]
  %v82 = vld [vmem:[%s1 + $0x88] sm:$0xff]
  %v83 = vld [vmem:[%s1 + $0x90] sm:$0xff]
  %v84 = vld [vmem:[%s1 + $0x98] sm:$0xff]
  %v85 = vld [vmem:[%s1 + $0xa0] sm:$0xff]
  %v86 = vld [vmem:[%s1 + $0xa8] sm:$0xff]
  %v87 = vld [vmem:[%s1 + $0xb0] sm:$0xff]
  %v88 = vld [vmem:[%s1 + $0xb8] sm:$0xff]
  %v89 = vld [vmem:[%s1 + $0xc0] sm:$0xff]
  %v90 = vld [vmem:[%s1 + $0xc8] sm:$0xff]
  %v91 = vld [vmem:[%s1 + $0xd0] sm:$0xff]
  %v92 = vld [vmem:[%s1 + $0xd8] sm:$0xff]
  %v93 = vld [vmem:[%s1 + $0xe0] sm:$0xff]
  %v94 = vld [vmem:[%s1 + $0xe8] sm:$0xff]
  %v95 = vld [vmem:[%s1 + $0xf0] sm:$0xff]
  %v96 = vld [vmem:[%s1 + $0xf8] sm:$0xff]
  %v97 = vld [vmem:[%s1 + $0x100] sm:$0xff]
  %v98 = vld [vmem:[%s1 + $0x108] sm:$0xff]
  %v99 = vld [vmem:[%s1 + $0x110] sm:$0xff]
  %v100 = vld [vmem:[%s1 + $0x118] sm:$0xff]
  %v101 = vld [vmem:[%s1 + $0x120] sm:$0xff]
  %v102 = vld [vmem:[%s1 + $0x128] sm:$0xff]
  %v103 = vld [vmem:[%s1 + $0x130] sm:$0xff]
  %v104 = vld [vmem:[%s1 + $0x138] sm:$0xff]
  %v105 = vld [vmem:[%s1 + $0x140] sm:$0xff]
  %v106 = vld [vmem:[%s1 + $0x148] sm:$0xff]
  %v107 = vld [vmem:[%s1 + $0x150] sm:$0xff]
  %v108 = vld [vmem:[%s1 + $0x158] sm:$0xff]
  %v109 = vld [vmem:[%s1 + $0x160] sm:$0xff]
  %v110 = vld [vmem:[%s1 + $0x168] sm:$0xff]
  %v111 = vld [vmem:[%s1 + $0x170] sm:$0xff]
  %v112 = vld [vmem:[%s1 + $0x178] sm:$0xff]
  %v113 = vld [vmem:[%s1 + $0x180] sm:$0xff]
  %v114 = vld [vmem:[%s1 + $0x188] sm:$0xff]
  %v115 = vld [vmem:[%s1 + $0x190] sm:$0xff]
  %v116 = vld [vmem:[%s1 + $0x198] sm:$0xff]
  %v117 = vld [vmem:[%s1 + $0x1a0] sm:$0xff]
  %v118 = vld [vmem:[%s1 + $0x1a8] sm:$0xff]
  %v119 = vld [vmem:[%s1 + $0x1b0] sm:$0xff]
  %v120 = vld [vmem:[%s1 + $0x1b8] sm:$0xff]
  %v121 = vld [vmem:[%s1 + $0x1c0] sm:$0xff]
  %v122 = vld [vmem:[%s1 + $0x1c8] sm:$0xff]
  %v123 = vld [vmem:[%s1 + $0x1d0] sm:$0xff]
  %v124 = vld [vmem:[%s1 + $0x1d8] sm:$0xff]
  %v125 = vld [vmem:[%s1 + $0x1e0] sm:$0xff]
  %v126 = vld [vmem:[%s1 + $0x1e8] sm:$0xff]
  %v127 = vld [vmem:[%s1 + $0x1f0] sm:$0xff]
  %v128 = vld [vmem:[%s1 + $0x1f8] sm:$0xff]
  %v129 = vld [vmem:[%s1 + $0x200] sm:$0xff]
  %v130 = vld [vmem:[%s1 + $0x208] sm:$0xff]
  %v131 = vld [vmem:[%s1 + $0x210] sm:$0xff]
  %v132 = vld [vmem:[%s1 + $0x218] sm:$0xff]
  %v133 = vld [vmem:[%s1 + $0x220] sm:$0xff]
  %v134 = vld [vmem:[%s1 + $0x228] sm:$0xff]
  %v135 = vld [vmem:[%s1 + $0x230] sm:$0xff]
  %v136 = vld [vmem:[%s1 + $0x238] sm:$0xff]
  %v137 = vld [vmem:[%s1 + $0x240] sm:$0xff]
  %v138 = vld [vmem:[%s1 + $0x248] sm:$0xff]
  %v139 = vld [vmem:[%s1 + $0x250] sm:$0xff]
  %v140 = vld [vmem:[%s1 + $0x258] sm:$0xff]
  %v141 = vld [vmem:[%s1 + $0x260] sm:$0xff]
  %v142 = vld [vmem:[%s1 + $0x268] sm:$0xff]
  %v143 = vld [vmem:[%s1 + $0x270] sm:$0xff]
  %v144 = vld [vmem:[%s1 + $0x278] sm:$0xff]
  %v145 = vld [vmem:[%s1 + $0x280] sm:$0xff]
  %v146 = vld [vmem:[%s1 + $0x288] sm:$0xff]
  %v147 = vld [vmem:[%s1 + $0x290] sm:$0xff]
  %v148 = vld [vmem:[%s1 + $0x298] sm:$0xff]
  %v149 = vld [vmem:[%s1 + $0x2a0] sm:$0xff]
  %v150 = vld [vmem:[%s1 + $0x2a8] sm:$0xff]
  %v151 = vld [vmem:[%s1 + $0x2b0] sm:$0xff]
  %v152 = vld [vmem:[%s1 + $0x2b8] sm:$0xff]
  %v153 = vld [vmem:[%s1 + $0x2c0] sm:$0xff]
  %v154 = vld [vmem:[%s1 + $0x2c8] sm:$0xff]
  %v155 = vld [vmem:[%s1 + $0x2d0] sm:$0xff]
  %v156 = vld [vmem:[%s1 + $0x2d8] sm:$0xff]
  %v157 = vld [vmem:[%s1 + $0x2e0] sm:$0xff]
  %v158 = vld [vmem:[%s1 + $0x2e8] sm:$0xff]
  %v159 = vld [vmem:[%s1 + $0x2f0] sm:$0xff]
  %v160 = vld [vmem:[%s1 + $0x2f8] sm:$0xff]
  %v161 = vld [vmem:[%s1 + $0x300] sm:$0xff]
  %v162 = vld [vmem:[%s1 + $0x308] sm:$0xff]
  %v163 = vld [vmem:[%s1 + $0x310] sm:$0xff]
  %v164 = vld [vmem:[%s1 + $0x318] sm:$0xff]
  %v165 = vld [vmem:[%s1 + $0x320] sm:$0xff]
  %v166 = vld [vmem:[%s1 + $0x328] sm:$0xff]
  %v167 = vld [vmem:[%s1 + $0x330] sm:$0xff]
  %v168 = vld [vmem:[%s1 + $0x338] sm:$0xff]
  %v169 = vld [vmem:[%s1 + $0x340] sm:$0xff]
  %v170 = vld [vmem:[%s1 + $0x348] sm:$0xff]
  %v171 = vld [vmem:[%s1 + $0x350] sm:$0xff]
  %v172 = vld [vmem:[%s1 + $0x358] sm:$0xff]
  %v173 = vld [vmem:[%s1 + $0x360] sm:$0xff]
  %v174 = vld [vmem:[%s1 + $0x368] sm:$0xff]
  %v175 = vld [vmem:[%s1 + $0x370] sm:$0xff]
  %v176 = vld [vmem:[%s1 + $0x378] sm:$0xff]
  %v177 = vld [vmem:[%s1 + $0x380] sm:$0xff]
  %v178 = vld [vmem:[%s1 + $0x388] sm:$0xff]
  %v179 = vld [vmem:[%s1 + $0x390] sm:$0xff]
  %v180 = vld [vmem:[%s1 + $0x398] sm:$0xff]
  %v181 = vld [vmem:[%s1 + $0x3a0] sm:$0xff]
  %v182 = vld [vmem:[%s1 + $0x3a8] sm:$0xff]
  %v183 = vld [vmem:[%s1 + $0x3b0] sm:$0xff]
  %v184 = vld [vmem:[%s1 + $0x3b8] sm:$0xff]
  %v185 = vld [vmem:[%s1 + $0x3c0] sm:$0xff]
  %v186 = vld [vmem:[%s1 + $0x3c8] sm:$0xff]
  %v187 = vld [vmem:[%s1 + $0x3d0] sm:$0xff]
  %v188 = vld [vmem:[%s1 + $0x3d8] sm:$0xff]
  %v189 = vld [vmem:[%s1 + $0x3e0] sm:$0xff]
  %v190 = vld [vmem:[%s1 + $0x3e8] sm:$0xff]
  %v191 = vld [vmem:[%s1 + $0x3f0] sm:$0xff]
  %v192 = vld [vmem:[%s1 + $0x3f8] sm:$0xff]
  %v193 = vld [vmem:[%s1 + $0x400] sm:$0xff]
  %v194 = vld [vmem:[%s1 + $0x408] sm:$0xff]
  %v195 = vld [vmem:[%s1 + $0x410] sm:$0xff]
  %v196 = vld [vmem:[%s1 + $0x418] sm:$0xff]
  %v197 = vld [vmem:[%s1 + $0x420] sm:$0xff]
  %v198 = vld [vmem:[%s1 + $0x428] sm:$0xff]
  %v199 = vld [vmem:[%s1 + $0x430] sm:$0xff]
  %v200 = vld [vmem:[%s1 + $0x438] sm:$0xff]
  %v201 = vld [vmem:[%s1 + $0x440] sm:$0xff]
  %v202 = vld [vmem:[%s1 + $0x448] sm:$0xff]
  %v203 = vld [vmem:[%s1 + $0x450] sm:$0xff]
  %v204 = vld [vmem:[%s1 + $0x458] sm:$0xff]
  %v205 = vld [vmem:[%s1 + $0x460] sm:$0xff]
  %v206 = vld [vmem:[%s1 + $0x468] sm:$0xff]
  %v207 = vld [vmem:[%s1 + $0x470] sm:$0xff]
  %v208 = vld [vmem:[%s1 + $0x478] sm:$0xff]
  %v209 = vld [vmem:[%s1 + $0x480] sm:$0xff]
  %v210 = vld [vmem:[%s1 + $0x488] sm:$0xff]
  %v211 = vld [vmem:[%s1 + $0x490] sm:$0xff]
  %v212 = vld [vmem:[%s1 + $0x498] sm:$0xff]
  %v213 = vld [vmem:[%s1 + $0x4a0] sm:$0xff]
  %v214 = vld [vmem:[%s1 + $0x4a8] sm:$0xff]
  %v215 = vld [vmem:[%s1 + $0x4b0] sm:$0xff]
  %v216 = vld [vmem:[%s1 + $0x4b8] sm:$0xff]
  %v217 = vld [vmem:[%s1 + $0x4c0] sm:$0xff]
  %v218 = vld [vmem:[%s1 + $0x4c8] sm:$0xff]
  %v219 = vld [vmem:[%s1 + $0x4d0] sm:$0xff]
  %v220 = vld [vmem:[%s1 + $0x4d8] sm:$0xff]
  %v221 = vld [vmem:[%s1 + $0x4e0] sm:$0xff]
  %v222 = vld [vmem:[%s1 + $0x4e8] sm:$0xff]
  %v223 = vld [vmem:[%s1 + $0x4f0] sm:$0xff]
  %v224 = vld [vmem:[%s1 + $0x4f8] sm:$0xff]
  %v225 = vld [vmem:[%s1 + $0x500] sm:$0xff]
  %v226 = vld [vmem:[%s1 + $0x508] sm:$0xff]
  %v227 = vld [vmem:[%s1 + $0x510] sm:$0xff]
  %v228 = vld [vmem:[%s1 + $0x518] sm:$0xff]
  %v229 = vld [vmem:[%s1 + $0x520] sm:$0xff]
  %v230 = vld [vmem:[%s1 + $0x528] sm:$0xff]
  %v231 = vld [vmem:[%s1 + $0x530] sm:$0xff]
  %v232 = vld [vmem:[%s1 + $0x538] sm:$0xff]
  %v233 = vld [vmem:[%s1 + $0x540] sm:$0xff]
  %v234 = vld [vmem:[%s1 + $0x548] sm:$0xff]
  %v235 = vld [vmem:[%s1 + $0x550] sm:$0xff]
  %v236 = vld [vmem:[%s1 + $0x558] sm:$0xff]
  %v237 = vld [vmem:[%s1 + $0x560] sm:$0xff]
  %v238 = vld [vmem:[%s1 + $0x568] sm:$0xff]
  %v239 = vld [vmem:[%s1 + $0x570] sm:$0xff]
  %v240 = vld [vmem:[%s1 + $0x578] sm:$0xff]
  %v241 = vld [vmem:[%s1 + $0x580] sm:$0xff]
  %v242 = vld [vmem:[%s1 + $0x588] sm:$0xff]
  %v243 = vld [vmem:[%s1 + $0x590] sm:$0xff]
  %v244 = vld [vmem:[%s1 + $0x598] sm:$0xff]
  %v245 = vld [vmem:[%s1 + $0x5a0] sm:$0xff]
  %v246 = vld [vmem:[%s1 + $0x5a8] sm:$0xff]
  %v247 = vld [vmem:[%s1 + $0x5b0] sm:$0xff]
  %v248 = vld [vmem:[%s1 + $0x5b8] sm:$0xff]
  %v249 = vld [vmem:[%s1 + $0x5c0] sm:$0xff]
  %v250 = vld [vmem:[%s1 + $0x5c8] sm:$0xff]
  %v251 = vld [vmem:[%s1 + $0x5d0] sm:$0xff]
  %v252 = vld [vmem:[%s1 + $0x5d8] sm:$0xff]
  %v253 = vld [vmem:[%s1 + $0x5e0] sm:$0xff]
  %v254 = vld [vmem:[%s1 + $0x5e8] sm:$0xff]
  %v255 = vld [vmem:[%s1 + $0x5f0] sm:$0xff]
  %v256 = vld [vmem:[%s1 + $0x5f8] sm:$0xff]
  %v257 = vld [vmem:[%s1 + $0x600] sm:$0xff]
  %v258 = vld [vmem:[%s1 + $0x608] sm:$0xff]
  %v259 = vld [vmem:[%s1 + $0x610] sm:$0xff]
  %v260 = vld [vmem:[%s1 + $0x618] sm:$0xff]
  %v261 = vld [vmem:[%s1 + $0x620] sm:$0xff]
  %v262 = vld [vmem:[%s1 + $0x628] sm:$0xff]
  %v263 = vld [vmem:[%s1 + $0x630] sm:$0xff]
  %v264 = vld [vmem:[%s1 + $0x638] sm:$0xff]
  %v265 = vld [vmem:[%s1 + $0x640] sm:$0xff]
  %v266 = vld [vmem:[%s1 + $0x648] sm:$0xff]
  %v267 = vld [vmem:[%s1 + $0x650] sm:$0xff]
  %v268 = vld [vmem:[%s1 + $0x658] sm:$0xff]
  %v269 = vld [vmem:[%s1 + $0x660] sm:$0xff]
  %v270 = vld [vmem:[%s1 + $0x668] sm:$0xff]
  %v271 = vld [vmem:[%s1 + $0x670] sm:$0xff]
  %v272 = vld [vmem:[%s1 + $0x678] sm:$0xff]
  %v273 = vld [vmem:[%s1 + $0x680] sm:$0xff]
  %v274 = vld [vmem:[%s1 + $0x688] sm:$0xff]
  %v275 = vld [vmem:[%s1 + $0x690] sm:$0xff]
  %v276 = vld [vmem:[%s1 + $0x698] sm:$0xff]
  %v277 = vld [vmem:[%s1 + $0x6a0] sm:$0xff]
  %v278 = vld [vmem:[%s1 + $0x6a8] sm:$0xff]
  %v279 = vld [vmem:[%s1 + $0x6b0] sm:$0xff]
  %v280 = vld [vmem:[%s1 + $0x6b8] sm:$0xff]
  %v281 = vld [vmem:[%s1 + $0x6c0] sm:$0xff]
  %v282 = vld [vmem:[%s1 + $0x6c8] sm:$0xff]
  %v283 = vld [vmem:[%s1 + $0x6d0] sm:$0xff]
  %v284 = vld [vmem:[%s1 + $0x6d8] sm:$0xff]
  %v285 = vld [vmem:[%s1 + $0x6e0] sm:$0xff]
  %v286 = vld [vmem:[%s1 + $0x6e8] sm:$0xff]
  %v287 = vld [vmem:[%s1 + $0x6f0] sm:$0xff]
  %v288 = vld [vmem:[%s1 + $0x6f8] sm:$0xff]
  %v289 = vld [vmem:[%s1 + $0x700] sm:$0xff]
  %v290 = vld [vmem:[%s1 + $0x708] sm:$0xff]
  %v291 = vld [vmem:[%s1 + $0x710] sm:$0xff]
  %v292 = vld [vmem:[%s1 + $0x718] sm:$0xff]
  %v293 = vld [vmem:[%s1 + $0x720] sm:$0xff]
  %v294 = vld [vmem:[%s1 + $0x728] sm:$0xff]
  %v295 = vld [vmem:[%s1 + $0x730] sm:$0xff]
  %v296 = vld [vmem:[%s1 + $0x738] sm:$0xff]
  %v297 = vld [vmem:[%s1 + $0x740] sm:$0xff]
  %v298 = vld [vmem:[%s1 + $0x748] sm:$0xff]
  %v299 = vld [vmem:[%s1 + $0x750] sm:$0xff]
  %v300 = vld [vmem:[%s1 + $0x758] sm:$0xff]
  %v301 = vld [vmem:[%s1 + $0x760] sm:$0xff]
  %v302 = vld [vmem:[%s1 + $0x768] sm:$0xff]
  %v303 = vld [vmem:[%s1 + $0x770] sm:$0xff]
  %v304 = vld [vmem:[%s1 + $0x778] sm:$0xff]
  %v305 = vld [vmem:[%s1 + $0x780] sm:$0xff]
  %v306 = vld [vmem:[%s1 + $0x788] sm:$0xff]
  %v307 = vld [vmem:[%s1 + $0x790] sm:$0xff]
  %v308 = vld [vmem:[%s1 + $0x798] sm:$0xff]
  %v309 = vld [vmem:[%s1 + $0x7a0] sm:$0xff]
  %v310 = vld [vmem:[%s1 + $0x7a8] sm:$0xff]
  %v311 = vld [vmem:[%s1 + $0x7b0] sm:$0xff]
  %v312 = vld [vmem:[%s1 + $0x7b8] sm:$0xff]
  %v313 = vld [vmem:[%s1 + $0x7c0] sm:$0xff]
  %v314 = vld [vmem:[%s1 + $0x7c8] sm:$0xff]
  %v315 = vld [vmem:[%s1 + $0x7d0] sm:$0xff]
  %v316 = vld [vmem:[%s1 + $0x7d8] sm:$0xff]
  %v317 = vld [vmem:[%s1 + $0x7e0] sm:$0xff]
  %v318 = vld [vmem:[%s1 + $0x7e8] sm:$0xff]
  %v319 = vld [vmem:[%s1 + $0x7f0] sm:$0xff]
  %v320 = vld [vmem:[%s1 + $0x7f8] sm:$0xff]
  %v321 = vld [vmem:[%s1 + $0x800] sm:$0xff]
  %v322 = vld [vmem:[%s1 + $0x808] sm:$0xff]
  %v323 = vld [vmem:[%s1 + $0x810] sm:$0xff]
  %v324 = vld [vmem:[%s1 + $0x818] sm:$0xff]
  %v325 = vld [vmem:[%s1 + $0x820] sm:$0xff]
  %v326 = vld [vmem:[%s1 + $0x828] sm:$0xff]
  %v327 = vld [vmem:[%s1 + $0x830] sm:$0xff]
  %v328 = vld [vmem:[%s1 + $0x838] sm:$0xff]
  %v329 = vld [vmem:[%s1 + $0x840] sm:$0xff]
  %v330 = vld [vmem:[%s1 + $0x848] sm:$0xff]
  %v331 = vld [vmem:[%s1 + $0x850] sm:$0xff]
  %v332 = vld [vmem:[%s1 + $0x858] sm:$0xff]
  %v333 = vld [vmem:[%s1 + $0x860] sm:$0xff]
  %v334 = vld [vmem:[%s1 + $0x868] sm:$0xff]
  %v335 = vld [vmem:[%s1 + $0x870] sm:$0xff]
  %v336 = vld [vmem:[%s1 + $0x878] sm:$0xff]
  %v337 = vld [vmem:[%s1 + $0x880] sm:$0xff]
  %v338 = vld [vmem:[%s1 + $0x888] sm:$0xff]
  %v339 = vld [vmem:[%s1 + $0x890] sm:$0xff]
  %v340 = vld [vmem:[%s1 + $0x898] sm:$0xff]
  %v341 = vld [vmem:[%s1 + $0x8a0] sm:$0xff]
  %v342 = vld [vmem:[%s1 + $0x8a8] sm:$0xff]
  %v343 = vld [vmem:[%s1 + $0x8b0] sm:$0xff]
  %v344 = vld [vmem:[%s1 + $0x8b8] sm:$0xff]
  %v345 = vld [vmem:[%s1 + $0x8c0] sm:$0xff]
  %v346 = vld [vmem:[%s1 + $0x8c8] sm:$0xff]
  %v347 = vld [vmem:[%s1 + $0x8d0] sm:$0xff]
  %v348 = vld [vmem:[%s1 + $0x8d8] sm:$0xff]
  %v349 = vld [vmem:[%s1 + $0x8e0] sm:$0xff]
  %v350 = vld [vmem:[%s1 + $0x8e8] sm:$0xff]
  %v351 = vld [vmem:[%s1 + $0x8f0] sm:$0xff]
  %v352 = vld [vmem:[%s1 + $0x8f8] sm:$0xff]
  %v353 = vld [vmem:[%s1 + $0x900] sm:$0xff]
  %v354 = vld [vmem:[%s1 + $0x908] sm:$0xff]
  %v355 = vld [vmem:[%s1 + $0x910] sm:$0xff]
  %v356 = vld [vmem:[%s1 + $0x918] sm:$0xff]
  %v357 = vld [vmem:[%s1 + $0x920] sm:$0xff]
  %v358 = vld [vmem:[%s1 + $0x928] sm:$0xff]
  %v359 = vld [vmem:[%s1 + $0x930] sm:$0xff]
  %v360 = vld [vmem:[%s1 + $0x938] sm:$0xff]
  %v361 = vld [vmem:[%s1 + $0x940] sm:$0xff]
  %v362 = vld [vmem:[%s1 + $0x948] sm:$0xff]
  %v363 = vld [vmem:[%s1 + $0x950] sm:$0xff]
  %v364 = vld [vmem:[%s1 + $0x958] sm:$0xff]
  %v365 = vld [vmem:[%s1 + $0x960] sm:$0xff]
  %v366 = vld [vmem:[%s1 + $0x968] sm:$0xff]
  %v367 = vld [vmem:[%s1 + $0x970] sm:$0xff]
  %v368 = vld [vmem:[%s1 + $0x978] sm:$0xff]
  %v369 = vld [vmem:[%s1 + $0x980] sm:$0xff]
  %v370 = vld [vmem:[%s1 + $0x988] sm:$0xff]
  %v371 = vld [vmem:[%s1 + $0x990] sm:$0xff]
  %v372 = vld [vmem:[%s1 + $0x998] sm:$0xff]
  %v373 = vld [vmem:[%s1 + $0x9a0] sm:$0xff]
  %v374 = vld [vmem:[%s1 + $0x9a8] sm:$0xff]
  %v375 = vld [vmem:[%s1 + $0x9b0] sm:$0xff]
  %v376 = vld [vmem:[%s1 + $0x9b8] sm:$0xff]
  %v377 = vld [vmem:[%s1 + $0x9c0] sm:$0xff]
  %v378 = vld [vmem:[%s1 + $0x9c8] sm:$0xff]
  %v379 = vld [vmem:[%s1 + $0x9d0] sm:$0xff]
  %v380 = vld [vmem:[%s1 + $0x9d8] sm:$0xff]
  %v381 = vld [vmem:[%s1 + $0x9e0] sm:$0xff]
  %v382 = vld [vmem:[%s1 + $0x9e8] sm:$0xff]
  %v383 = vld [vmem:[%s1 + $0x9f0] sm:$0xff]
  %v384 = vld [vmem:[%s1 + $0x9f8] sm:$0xff]
  %v385 = vld [vmem:[%s1 + $0xa00] sm:$0xff]
  %v386 = vld [vmem:[%s1 + $0xa08] sm:$0xff]
  %v387 = vld [vmem:[%s1 + $0xa10] sm:$0xff]
  %v388 = vld [vmem:[%s1 + $0xa18] sm:$0xff]
  %v389 = vld [vmem:[%s1 + $0xa20] sm:$0xff]
  %v390 = vld [vmem:[%s1 + $0xa28] sm:$0xff]
  %v391 = vld [vmem:[%s1 + $0xa30] sm:$0xff]
  %v392 = vld [vmem:[%s1 + $0xa38] sm:$0xff]
  %v393 = vld [vmem:[%s1 + $0xa40] sm:$0xff]
  %v394 = vld [vmem:[%s1 + $0xa48] sm:$0xff]
  %v395 = vld [vmem:[%s1 + $0xa50] sm:$0xff]
  %v396 = vld [vmem:[%s1 + $0xa58] sm:$0xff]
  %v397 = vld [vmem:[%s1 + $0xa60] sm:$0xff]
  %v398 = vld [vmem:[%s1 + $0xa68] sm:$0xff]
  %v399 = vld [vmem:[%s1 + $0xa70] sm:$0xff]
  %v400 = vld [vmem:[%s1 + $0xa78] sm:$0xff]
  %v401 = vld [vmem:[%s1 + $0xa80] sm:$0xff]
  %v402 = vld [vmem:[%s1 + $0xa88] sm:$0xff]
  %v403 = vld [vmem:[%s1 + $0xa90] sm:$0xff]
  %v404 = vld [vmem:[%s1 + $0xa98] sm:$0xff]
  %v405 = vld [vmem:[%s1 + $0xaa0] sm:$0xff]
  %v406 = vld [vmem:[%s1 + $0xaa8] sm:$0xff]
  %v407 = vld [vmem:[%s1 + $0xab0] sm:$0xff]
  %v408 = vld [vmem:[%s1 + $0xab8] sm:$0xff]
  %v409 = vld [vmem:[%s1 + $0xac0] sm:$0xff]
  %v410 = vld [vmem:[%s1 + $0xac8] sm:$0xff]
  %v411 = vld [vmem:[%s1 + $0xad0] sm:$0xff]
  %v412 = vld [vmem:[%s1 + $0xad8] sm:$0xff]
  %v413 = vld [vmem:[%s1 + $0xae0] sm:$0xff]
  %v414 = vld [vmem:[%s1 + $0xae8] sm:$0xff]
  %v415 = vld [vmem:[%s1 + $0xaf0] sm:$0xff]
  %v416 = vld [vmem:[%s1 + $0xaf8] sm:$0xff]
  %v417 = vld [vmem:[%s1 + $0xb00] sm:$0xff]
  %v418 = vld [vmem:[%s1 + $0xb08] sm:$0xff]
  %v419 = vld [vmem:[%s1 + $0xb10] sm:$0xff]
  %v420 = vld [vmem:[%s1 + $0xb18] sm:$0xff]
  %v421 = vld [vmem:[%s1 + $0xb20] sm:$0xff]
  %v422 = vld [vmem:[%s1 + $0xb28] sm:$0xff]
  %v423 = vld [vmem:[%s1 + $0xb30] sm:$0xff]
  %v424 = vld [vmem:[%s1 + $0xb38] sm:$0xff]
  %v425 = vld [vmem:[%s1 + $0xb40] sm:$0xff]
  %v426 = vld [vmem:[%s1 + $0xb48] sm:$0xff]
  %v427 = vld [vmem:[%s1 + $0xb50] sm:$0xff]
  %v428 = vld [vmem:[%s1 + $0xb58] sm:$0xff]
  %v429 = vld [vmem:[%s1 + $0xb60] sm:$0xff]
  %v430 = vld [vmem:[%s1 + $0xb68] sm:$0xff]
  %v431 = vld [vmem:[%s1 + $0xb70] sm:$0xff]
  %v432 = vld [vmem:[%s1 + $0xb78] sm:$0xff]
  %v433 = vld [vmem:[%s1 + $0xb80] sm:$0xff]
  %v434 = vld [vmem:[%s1 + $0xb88] sm:$0xff]
  %v435 = vld [vmem:[%s1 + $0xb90] sm:$0xff]
  %v436 = vld [vmem:[%s1 + $0xb98] sm:$0xff]
  %v437 = vld [vmem:[%s1 + $0xba0] sm:$0xff]
  %v438 = vld [vmem:[%s1 + $0xba8] sm:$0xff]
  %v439 = vld [vmem:[%s1 + $0xbb0] sm:$0xff]
  %v440 = vld [vmem:[%s1 + $0xbb8] sm:$0xff]
  %v441 = vld [vmem:[%s1 + $0xbc0] sm:$0xff]
  %v442 = vld [vmem:[%s1 + $0xbc8] sm:$0xff]
  %v443 = vld [vmem:[%s1 + $0xbd0] sm:$0xff]
  %v444 = vld [vmem:[%s1 + $0xbd8] sm:$0xff]
  %v445 = vld [vmem:[%s1 + $0xbe0] sm:$0xff]
  %v446 = vld [vmem:[%s1 + $0xbe8] sm:$0xff]
  %v447 = vld [vmem:[%s1 + $0xbf0] sm:$0xff]
  %v448 = vld [vmem:[%s1 + $0xbf8] sm:$0xff]
  %v449 = vld [vmem:[%s1 + $0xc00] sm:$0xff]
  %v450 = vld [vmem:[%s1 + $0xc08] sm:$0xff]
  %v451 = vld [vmem:[%s1 + $0xc10] sm:$0xff]
  %v452 = vld [vmem:[%s1 + $0xc18] sm:$0xff]
  %v453 = vld [vmem:[%s1 + $0xc20] sm:$0xff]
  %v454 = vld [vmem:[%s1 + $0xc28] sm:$0xff]
  %v455 = vld [vmem:[%s1 + $0xc30] sm:$0xff]
  %v456 = vld [vmem:[%s1 + $0xc38] sm:$0xff]
  %v457 = vld [vmem:[%s1 + $0xc40] sm:$0xff]
  %v458 = vld [vmem:[%s1 + $0xc48] sm:$0xff]
  %v459 = vld [vmem:[%s1 + $0xc50] sm:$0xff]
  %v460 = vld [vmem:[%s1 + $0xc58] sm:$0xff]
  %v461 = vld [vmem:[%s1 + $0xc60] sm:$0xff]
  %v462 = vld [vmem:[%s1 + $0xc68] sm:$0xff]
  %v463 = vld [vmem:[%s1 + $0xc70] sm:$0xff]
  %v464 = vld [vmem:[%s1 + $0xc78] sm:$0xff]
  %v465 = vld [vmem:[%s1 + $0xc80] sm:$0xff]
  %v466 = vld [vmem:[%s1 + $0xc88] sm:$0xff]
  %v467 = vld [vmem:[%s1 + $0xc90] sm:$0xff]
  %v468 = vld [vmem:[%s1 + $0xc98] sm:$0xff]
  %v469 = vld [vmem:[%s1 + $0xca0] sm:$0xff]
  %v470 = vld [vmem:[%s1 + $0xca8] sm:$0xff]
  %v471 = vld [vmem:[%s1 + $0xcb0] sm:$0xff]
  %v472 = vld [vmem:[%s1 + $0xcb8] sm:$0xff]
  %v473 = vld [vmem:[%s1 + $0xcc0] sm:$0xff]
  %v474 = vld [vmem:[%s1 + $0xcc8] sm:$0xff]
  %v475 = vld [vmem:[%s1 + $0xcd0] sm:$0xff]
  %v476 = vld [vmem:[%s1 + $0xcd8] sm:$0xff]
  %v477 = vld [vmem:[%s1 + $0xce0] sm:$0xff]
  %v478 = vld [vmem:[%s1 + $0xce8] sm:$0xff]
  %v479 = vld [vmem:[%s1 + $0xcf0] sm:$0xff]
  %v480 = vld [vmem:[%s1 + $0xcf8] sm:$0xff]
  %v481 = vld [vmem:[%s1 + $0xd00] sm:$0xff]
  %v482 = vld [vmem:[%s1 + $0xd08] sm:$0xff]
  %v483 = vld [vmem:[%s1 + $0xd10] sm:$0xff]
  %v484 = vld [vmem:[%s1 + $0xd18] sm:$0xff]
  %v485 = vld [vmem:[%s1 + $0xd20] sm:$0xff]
  %v486 = vld [vmem:[%s1 + $0xd28] sm:$0xff]
  %v487 = vld [vmem:[%s1 + $0xd30] sm:$0xff]
  %v488 = vld [vmem:[%s1 + $0xd38] sm:$0xff]
  %v489 = vld [vmem:[%s1 + $0xd40] sm:$0xff]
  %v490 = vld [vmem:[%s1 + $0xd48] sm:$0xff]
  %v491 = vld [vmem:[%s1 + $0xd50] sm:$0xff]
  %v492 = vld [vmem:[%s1 + $0xd58] sm:$0xff]
  %v493 = vld [vmem:[%s1 + $0xd60] sm:$0xff]
  %v494 = vld [vmem:[%s1 + $0xd68] sm:$0xff]
  %v495 = vld [vmem:[%s1 + $0xd70] sm:$0xff]
  %v496 = vld [vmem:[%s1 + $0xd78] sm:$0xff]
  %v497 = vld [vmem:[%s1 + $0xd80] sm:$0xff]
  %v498 = vld [vmem:[%s1 + $0xd88] sm:$0xff]
  %v499 = vld [vmem:[%s1 + $0xd90] sm:$0xff]
  %v500 = vld [vmem:[%s1 + $0xd98] sm:$0xff]
  %v501 = vld [vmem:[%s1 + $0xda0] sm:$0xff]
  %v502 = vld [vmem:[%s1 + $0xda8] sm:$0xff]
  %v503 = vld [vmem:[%s1 + $0xdb0] sm:$0xff]
  %v504 = vld [vmem:[%s1 + $0xdb8] sm:$0xff]
  %v505 = vld [vmem:[%s1 + $0xdc0] sm:$0xff]
  %v506 = vld [vmem:[%s1 + $0xdc8] sm:$0xff]
  %v507 = vld [vmem:[%s1 + $0xdd0] sm:$0xff]
  %v508 = vld [vmem:[%s1 + $0xdd8] sm:$0xff]
  %v509 = vld [vmem:[%s1 + $0xde0] sm:$0xff]
  %v510 = vld [vmem:[%s1 + $0xde8] sm:$0xff]
  %v511 = vld [vmem:[%s1 + $0xdf0] sm:$0xff]
  %v512 = vld [vmem:[%s1 + $0xdf8] sm:$0xff]
  %v513 = vld [vmem:[%s2] sm:$0xff]
  %v515 = vlaneseq
  %v516 = vshrl.u32 %v515, 7
  %v517 = vsub.s32 0, %v516
  %v518 = vrot.slane %v513, %v517
  %v519 = vlaneseq
  %v520 = vshrl.u32 %v519, 7
  %v521 = vsub.s32 1, %v520
  %v522 = vrot.slane %v513, %v521
  %v523 = vlaneseq
  %v524 = vshrl.u32 %v523, 7
  %v525 = vsub.s32 2, %v524
  %v526 = vrot.slane %v513, %v525
  %v527 = vlaneseq
  %v528 = vshrl.u32 %v527, 7
  %v529 = vsub.s32 3, %v528
  %v530 = vrot.slane %v513, %v529
  %v531 = vlaneseq
  %v532 = vshrl.u32 %v531, 7
  %v533 = vsub.s32 4, %v532
  %v534 = vrot.slane %v513, %v533
  %v535 = vlaneseq
  %v536 = vshrl.u32 %v535, 7
  %v537 = vsub.s32 5, %v536
  %v538 = vrot.slane %v513, %v537
  %v539 = vlaneseq
  %v540 = vshrl.u32 %v539, 7
  %v541 = vsub.s32 6, %v540
  %v542 = vrot.slane %v513, %v541
  %v543 = vlaneseq
  %v544 = vshrl.u32 %v543, 7
  %v545 = vsub.s32 7, %v544
  %v546 = vrot.slane %v513, %v545
  %v587 = vunpack.c.l.b16 %v33
  %v588 = vunpack.c.h.b16 %v33
  %v589 = vunpack.c.l.b16 %v34
  %v590 = vunpack.c.h.b16 %v34
  %v591 = vunpack.c.l.b16 %v35
  %v592 = vunpack.c.h.b16 %v35
  %v593 = vunpack.c.l.b16 %v36
  %v594 = vunpack.c.l.b16 %v37
  %v595 = vunpack.c.h.b16 %v37
  %v596 = vunpack.c.l.b16 %v38
  %v597 = vunpack.c.h.b16 %v38
  %v598 = vunpack.c.l.b16 %v39
  %v599 = vunpack.c.h.b16 %v39
  %v600 = vunpack.c.l.b16 %v40
  %v601 = vunpack.c.l.b16 %v41
  %v602 = vunpack.c.h.b16 %v41
  %v603 = vunpack.c.l.b16 %v42
  %v604 = vunpack.c.h.b16 %v42
  %v605 = vunpack.c.l.b16 %v43
  %v606 = vunpack.c.h.b16 %v43
  %v607 = vunpack.c.l.b16 %v44
  %v608 = vunpack.c.l.b16 %v45
  %v609 = vunpack.c.h.b16 %v45
  %v610 = vunpack.c.l.b16 %v46
  %v611 = vunpack.c.h.b16 %v46
  %v612 = vunpack.c.l.b16 %v47
  %v613 = vunpack.c.h.b16 %v47
  %v614 = vunpack.c.l.b16 %v48
  %v615 = vunpack.c.l.b16 %v49
  %v616 = vunpack.c.h.b16 %v49
  %v617 = vunpack.c.l.b16 %v50
  %v618 = vunpack.c.h.b16 %v50
  %v619 = vunpack.c.l.b16 %v51
  %v620 = vunpack.c.h.b16 %v51
  %v621 = vunpack.c.l.b16 %v52
  %v622 = vunpack.c.l.b16 %v53
  %v623 = vunpack.c.h.b16 %v53
  %v624 = vunpack.c.l.b16 %v54
  %v625 = vunpack.c.h.b16 %v54
  %v626 = vunpack.c.l.b16 %v55
  %v627 = vunpack.c.h.b16 %v55
  %v628 = vunpack.c.l.b16 %v56
  %v629 = vunpack.c.l.b16 %v57
  %v630 = vunpack.c.h.b16 %v57
  %v631 = vunpack.c.l.b16 %v58
  %v632 = vunpack.c.h.b16 %v58
  %v633 = vunpack.c.l.b16 %v59
  %v634 = vunpack.c.h.b16 %v59
  %v635 = vunpack.c.l.b16 %v60
  %v636 = vunpack.c.l.b16 %v61
  %v637 = vunpack.c.h.b16 %v61
  %v638 = vunpack.c.l.b16 %v62
  %v639 = vunpack.c.h.b16 %v62
  %v640 = vunpack.c.l.b16 %v63
  %v641 = vunpack.c.h.b16 %v63
  %v642 = vunpack.c.l.b16 %v64
  %v643 = vpack.c.b16 %v594, %v587
  %v644 = vpack.c.b16 %v595, %v588
  %v645 = vpack.c.b16 %v596, %v589
  %v646 = vpack.c.b16 %v597, %v590
  %v647 = vpack.c.b16 %v598, %v591
  %v648 = vpack.c.b16 %v599, %v592
  %v649 = vpack.c.b16 %v600, %v593
  %v650 = vpack.c.b16 %v608, %v601
  %v651 = vpack.c.b16 %v609, %v602
  %v652 = vpack.c.b16 %v610, %v603
  %v653 = vpack.c.b16 %v611, %v604
  %v654 = vpack.c.b16 %v612, %v605
  %v655 = vpack.c.b16 %v613, %v606
  %v656 = vpack.c.b16 %v614, %v607
  %v657 = vpack.c.b16 %v622, %v615
  %v658 = vpack.c.b16 %v623, %v616
  %v659 = vpack.c.b16 %v624, %v617
  %v660 = vpack.c.b16 %v625, %v618
  %v661 = vpack.c.b16 %v626, %v619
  %v662 = vpack.c.b16 %v627, %v620
  %v663 = vpack.c.b16 %v628, %v621
  %v664 = vpack.c.b16 %v636, %v629
  %v665 = vpack.c.b16 %v637, %v630
  %v666 = vpack.c.b16 %v638, %v631
  %v667 = vpack.c.b16 %v639, %v632
  %v668 = vpack.c.b16 %v640, %v633
  %v669 = vpack.c.b16 %v641, %v634
  %v670 = vpack.c.b16 %v642, %v635
  %v1147 = vunpack.c.l.b16 %v65
  %v1148 = vunpack.c.h.b16 %v65
  %v1149 = vunpack.c.l.b16 %v66
  %v1150 = vunpack.c.h.b16 %v66
  %v1151 = vunpack.c.l.b16 %v67
  %v1152 = vunpack.c.h.b16 %v67
  %v1153 = vunpack.c.l.b16 %v68
  %v1154 = vunpack.c.h.b16 %v68
  %v1155 = vunpack.c.l.b16 %v69
  %v1156 = vunpack.c.h.b16 %v69
  %v1157 = vunpack.c.l.b16 %v70
  %v1158 = vunpack.c.h.b16 %v70
  %v1159 = vunpack.c.l.b16 %v71
  %v1160 = vunpack.c.h.b16 %v71
  %v1161 = vunpack.c.l.b16 %v72
  %v1162 = vunpack.c.h.b16 %v72
  %v1163 = vunpack.c.l.b16 %v73
  %v1164 = vunpack.c.h.b16 %v73
  %v1165 = vunpack.c.l.b16 %v74
  %v1166 = vunpack.c.h.b16 %v74
  %v1167 = vunpack.c.l.b16 %v75
  %v1168 = vunpack.c.h.b16 %v75
  %v1169 = vunpack.c.l.b16 %v76
  %v1170 = vunpack.c.h.b16 %v76
  %v1171 = vunpack.c.l.b16 %v77
  %v1172 = vunpack.c.h.b16 %v77
  %v1173 = vunpack.c.l.b16 %v78
  %v1174 = vunpack.c.h.b16 %v78
  %v1175 = vunpack.c.l.b16 %v79
  %v1176 = vunpack.c.h.b16 %v79
  %v1177 = vunpack.c.l.b16 %v80
  %v1178 = vunpack.c.h.b16 %v80
  %v1179 = vunpack.c.l.b16 %v81
  %v1180 = vunpack.c.h.b16 %v81
  %v1181 = vunpack.c.l.b16 %v82
  %v1182 = vunpack.c.h.b16 %v82
  %v1183 = vunpack.c.l.b16 %v83
  %v1184 = vunpack.c.h.b16 %v83
  %v1185 = vunpack.c.l.b16 %v84
  %v1186 = vunpack.c.h.b16 %v84
  %v1187 = vunpack.c.l.b16 %v85
  %v1188 = vunpack.c.h.b16 %v85
  %v1189 = vunpack.c.l.b16 %v86
  %v1190 = vunpack.c.h.b16 %v86
  %v1191 = vunpack.c.l.b16 %v87
  %v1192 = vunpack.c.h.b16 %v87
  %v1193 = vunpack.c.l.b16 %v88
  %v1194 = vunpack.c.h.b16 %v88
  %v1195 = vunpack.c.l.b16 %v89
  %v1196 = vunpack.c.h.b16 %v89
  %v1197 = vunpack.c.l.b16 %v90
  %v1198 = vunpack.c.h.b16 %v90
  %v1199 = vunpack.c.l.b16 %v91
  %v1200 = vunpack.c.h.b16 %v91
  %v1201 = vunpack.c.l.b16 %v92
  %v1202 = vunpack.c.h.b16 %v92
  %v1203 = vunpack.c.l.b16 %v93
  %v1204 = vunpack.c.h.b16 %v93
  %v1205 = vunpack.c.l.b16 %v94
  %v1206 = vunpack.c.h.b16 %v94
  %v1207 = vunpack.c.l.b16 %v95
  %v1208 = vunpack.c.h.b16 %v95
  %v1209 = vunpack.c.l.b16 %v96
  %v1210 = vunpack.c.h.b16 %v96
  %v1211 = vunpack.c.l.b16 %v97
  %v1212 = vunpack.c.h.b16 %v97
  %v1213 = vunpack.c.l.b16 %v98
  %v1214 = vunpack.c.h.b16 %v98
  %v1215 = vunpack.c.l.b16 %v99
  %v1216 = vunpack.c.h.b16 %v99
  %v1217 = vunpack.c.l.b16 %v100
  %v1218 = vunpack.c.h.b16 %v100
  %v1219 = vunpack.c.l.b16 %v101
  %v1220 = vunpack.c.h.b16 %v101
  %v1221 = vunpack.c.l.b16 %v102
  %v1222 = vunpack.c.h.b16 %v102
  %v1223 = vunpack.c.l.b16 %v103
  %v1224 = vunpack.c.h.b16 %v103
  %v1225 = vunpack.c.l.b16 %v104
  %v1226 = vunpack.c.h.b16 %v104
  %v1227 = vunpack.c.l.b16 %v105
  %v1228 = vunpack.c.h.b16 %v105
  %v1229 = vunpack.c.l.b16 %v106
  %v1230 = vunpack.c.h.b16 %v106
  %v1231 = vunpack.c.l.b16 %v107
  %v1232 = vunpack.c.h.b16 %v107
  %v1233 = vunpack.c.l.b16 %v108
  %v1234 = vunpack.c.h.b16 %v108
  %v1235 = vunpack.c.l.b16 %v109
  %v1236 = vunpack.c.h.b16 %v109
  %v1237 = vunpack.c.l.b16 %v110
  %v1238 = vunpack.c.h.b16 %v110
  %v1239 = vunpack.c.l.b16 %v111
  %v1240 = vunpack.c.h.b16 %v111
  %v1241 = vunpack.c.l.b16 %v112
  %v1242 = vunpack.c.h.b16 %v112
  %v1243 = vunpack.c.l.b16 %v113
  %v1244 = vunpack.c.h.b16 %v113
  %v1245 = vunpack.c.l.b16 %v114
  %v1246 = vunpack.c.h.b16 %v114
  %v1247 = vunpack.c.l.b16 %v115
  %v1248 = vunpack.c.h.b16 %v115
  %v1249 = vunpack.c.l.b16 %v116
  %v1250 = vunpack.c.h.b16 %v116
  %v1251 = vunpack.c.l.b16 %v117
  %v1252 = vunpack.c.h.b16 %v117
  %v1253 = vunpack.c.l.b16 %v118
  %v1254 = vunpack.c.h.b16 %v118
  %v1255 = vunpack.c.l.b16 %v119
  %v1256 = vunpack.c.h.b16 %v119
  %v1257 = vunpack.c.l.b16 %v120
  %v1258 = vunpack.c.h.b16 %v120
  %v1259 = vunpack.c.l.b16 %v121
  %v1260 = vunpack.c.h.b16 %v121
  %v1261 = vunpack.c.l.b16 %v122
  %v1262 = vunpack.c.h.b16 %v122
  %v1263 = vunpack.c.l.b16 %v123
  %v1264 = vunpack.c.h.b16 %v123
  %v1265 = vunpack.c.l.b16 %v124
  %v1266 = vunpack.c.h.b16 %v124
  %v1267 = vunpack.c.l.b16 %v125
  %v1268 = vunpack.c.h.b16 %v125
  %v1269 = vunpack.c.l.b16 %v126
  %v1270 = vunpack.c.h.b16 %v126
  %v1271 = vunpack.c.l.b16 %v127
  %v1272 = vunpack.c.h.b16 %v127
  %v1273 = vunpack.c.l.b16 %v128
  %v1274 = vunpack.c.h.b16 %v128
  %v1275 = vunpack.c.l.b16 %v129
  %v1276 = vunpack.c.h.b16 %v129
  %v1277 = vunpack.c.l.b16 %v130
  %v1278 = vunpack.c.h.b16 %v130
  %v1279 = vunpack.c.l.b16 %v131
  %v1280 = vunpack.c.h.b16 %v131
  %v1281 = vunpack.c.l.b16 %v132
  %v1282 = vunpack.c.h.b16 %v132
  %v1283 = vunpack.c.l.b16 %v133
  %v1284 = vunpack.c.h.b16 %v133
  %v1285 = vunpack.c.l.b16 %v134
  %v1286 = vunpack.c.h.b16 %v134
  %v1287 = vunpack.c.l.b16 %v135
  %v1288 = vunpack.c.h.b16 %v135
  %v1289 = vunpack.c.l.b16 %v136
  %v1290 = vunpack.c.h.b16 %v136
  %v1291 = vunpack.c.l.b16 %v137
  %v1292 = vunpack.c.h.b16 %v137
  %v1293 = vunpack.c.l.b16 %v138
  %v1294 = vunpack.c.h.b16 %v138
  %v1295 = vunpack.c.l.b16 %v139
  %v1296 = vunpack.c.h.b16 %v139
  %v1297 = vunpack.c.l.b16 %v140
  %v1298 = vunpack.c.h.b16 %v140
  %v1299 = vunpack.c.l.b16 %v141
  %v1300 = vunpack.c.h.b16 %v141
  %v1301 = vunpack.c.l.b16 %v142
  %v1302 = vunpack.c.h.b16 %v142
  %v1303 = vunpack.c.l.b16 %v143
  %v1304 = vunpack.c.h.b16 %v143
  %v1305 = vunpack.c.l.b16 %v144
  %v1306 = vunpack.c.h.b16 %v144
  %v1307 = vunpack.c.l.b16 %v145
  %v1308 = vunpack.c.h.b16 %v145
  %v1309 = vunpack.c.l.b16 %v146
  %v1310 = vunpack.c.h.b16 %v146
  %v1311 = vunpack.c.l.b16 %v147
  %v1312 = vunpack.c.h.b16 %v147
  %v1313 = vunpack.c.l.b16 %v148
  %v1314 = vunpack.c.h.b16 %v148
  %v1315 = vunpack.c.l.b16 %v149
  %v1316 = vunpack.c.h.b16 %v149
  %v1317 = vunpack.c.l.b16 %v150
  %v1318 = vunpack.c.h.b16 %v150
  %v1319 = vunpack.c.l.b16 %v151
  %v1320 = vunpack.c.h.b16 %v151
  %v1321 = vunpack.c.l.b16 %v152
  %v1322 = vunpack.c.h.b16 %v152
  %v1323 = vunpack.c.l.b16 %v153
  %v1324 = vunpack.c.h.b16 %v153
  %v1325 = vunpack.c.l.b16 %v154
  %v1326 = vunpack.c.h.b16 %v154
  %v1327 = vunpack.c.l.b16 %v155
  %v1328 = vunpack.c.h.b16 %v155
  %v1329 = vunpack.c.l.b16 %v156
  %v1330 = vunpack.c.h.b16 %v156
  %v1331 = vunpack.c.l.b16 %v157
  %v1332 = vunpack.c.h.b16 %v157
  %v1333 = vunpack.c.l.b16 %v158
  %v1334 = vunpack.c.h.b16 %v158
  %v1335 = vunpack.c.l.b16 %v159
  %v1336 = vunpack.c.h.b16 %v159
  %v1337 = vunpack.c.l.b16 %v160
  %v1338 = vunpack.c.h.b16 %v160
  %v1339 = vunpack.c.l.b16 %v161
  %v1340 = vunpack.c.h.b16 %v161
  %v1341 = vunpack.c.l.b16 %v162
  %v1342 = vunpack.c.h.b16 %v162
  %v1343 = vunpack.c.l.b16 %v163
  %v1344 = vunpack.c.h.b16 %v163
  %v1345 = vunpack.c.l.b16 %v164
  %v1346 = vunpack.c.h.b16 %v164
  %v1347 = vunpack.c.l.b16 %v165
  %v1348 = vunpack.c.h.b16 %v165
  %v1349 = vunpack.c.l.b16 %v166
  %v1350 = vunpack.c.h.b16 %v166
  %v1351 = vunpack.c.l.b16 %v167
  %v1352 = vunpack.c.h.b16 %v167
  %v1353 = vunpack.c.l.b16 %v168
  %v1354 = vunpack.c.h.b16 %v168
  %v1355 = vunpack.c.l.b16 %v169
  %v1356 = vunpack.c.h.b16 %v169
  %v1357 = vunpack.c.l.b16 %v170
  %v1358 = vunpack.c.h.b16 %v170
  %v1359 = vunpack.c.l.b16 %v171
  %v1360 = vunpack.c.h.b16 %v171
  %v1361 = vunpack.c.l.b16 %v172
  %v1362 = vunpack.c.h.b16 %v172
  %v1363 = vunpack.c.l.b16 %v173
  %v1364 = vunpack.c.h.b16 %v173
  %v1365 = vunpack.c.l.b16 %v174
  %v1366 = vunpack.c.h.b16 %v174
  %v1367 = vunpack.c.l.b16 %v175
  %v1368 = vunpack.c.h.b16 %v175
  %v1369 = vunpack.c.l.b16 %v176
  %v1370 = vunpack.c.h.b16 %v176
  %v1371 = vunpack.c.l.b16 %v177
  %v1372 = vunpack.c.h.b16 %v177
  %v1373 = vunpack.c.l.b16 %v178
  %v1374 = vunpack.c.h.b16 %v178
  %v1375 = vunpack.c.l.b16 %v179
  %v1376 = vunpack.c.h.b16 %v179
  %v1377 = vunpack.c.l.b16 %v180
  %v1378 = vunpack.c.h.b16 %v180
  %v1379 = vunpack.c.l.b16 %v181
  %v1380 = vunpack.c.h.b16 %v181
  %v1381 = vunpack.c.l.b16 %v182
  %v1382 = vunpack.c.h.b16 %v182
  %v1383 = vunpack.c.l.b16 %v183
  %v1384 = vunpack.c.h.b16 %v183
  %v1385 = vunpack.c.l.b16 %v184
  %v1386 = vunpack.c.h.b16 %v184
  %v1387 = vunpack.c.l.b16 %v185
  %v1388 = vunpack.c.h.b16 %v185
  %v1389 = vunpack.c.l.b16 %v186
  %v1390 = vunpack.c.h.b16 %v186
  %v1391 = vunpack.c.l.b16 %v187
  %v1392 = vunpack.c.h.b16 %v187
  %v1393 = vunpack.c.l.b16 %v188
  %v1394 = vunpack.c.h.b16 %v188
  %v1395 = vunpack.c.l.b16 %v189
  %v1396 = vunpack.c.h.b16 %v189
  %v1397 = vunpack.c.l.b16 %v190
  %v1398 = vunpack.c.h.b16 %v190
  %v1399 = vunpack.c.l.b16 %v191
  %v1400 = vunpack.c.h.b16 %v191
  %v1401 = vunpack.c.l.b16 %v192
  %v1402 = vunpack.c.h.b16 %v192
  %v1403 = vunpack.c.l.b16 %v193
  %v1404 = vunpack.c.h.b16 %v193
  %v1405 = vunpack.c.l.b16 %v194
  %v1406 = vunpack.c.h.b16 %v194
  %v1407 = vunpack.c.l.b16 %v195
  %v1408 = vunpack.c.h.b16 %v195
  %v1409 = vunpack.c.l.b16 %v196
  %v1410 = vunpack.c.h.b16 %v196
  %v1411 = vunpack.c.l.b16 %v197
  %v1412 = vunpack.c.h.b16 %v197
  %v1413 = vunpack.c.l.b16 %v198
  %v1414 = vunpack.c.h.b16 %v198
  %v1415 = vunpack.c.l.b16 %v199
  %v1416 = vunpack.c.h.b16 %v199
  %v1417 = vunpack.c.l.b16 %v200
  %v1418 = vunpack.c.h.b16 %v200
  %v1419 = vunpack.c.l.b16 %v201
  %v1420 = vunpack.c.h.b16 %v201
  %v1421 = vunpack.c.l.b16 %v202
  %v1422 = vunpack.c.h.b16 %v202
  %v1423 = vunpack.c.l.b16 %v203
  %v1424 = vunpack.c.h.b16 %v203
  %v1425 = vunpack.c.l.b16 %v204
  %v1426 = vunpack.c.h.b16 %v204
  %v1427 = vunpack.c.l.b16 %v205
  %v1428 = vunpack.c.h.b16 %v205
  %v1429 = vunpack.c.l.b16 %v206
  %v1430 = vunpack.c.h.b16 %v206
  %v1431 = vunpack.c.l.b16 %v207
  %v1432 = vunpack.c.h.b16 %v207
  %v1433 = vunpack.c.l.b16 %v208
  %v1434 = vunpack.c.h.b16 %v208
  %v1435 = vunpack.c.l.b16 %v209
  %v1436 = vunpack.c.h.b16 %v209
  %v1437 = vunpack.c.l.b16 %v210
  %v1438 = vunpack.c.h.b16 %v210
  %v1439 = vunpack.c.l.b16 %v211
  %v1440 = vunpack.c.h.b16 %v211
  %v1441 = vunpack.c.l.b16 %v212
  %v1442 = vunpack.c.h.b16 %v212
  %v1443 = vunpack.c.l.b16 %v213
  %v1444 = vunpack.c.h.b16 %v213
  %v1445 = vunpack.c.l.b16 %v214
  %v1446 = vunpack.c.h.b16 %v214
  %v1447 = vunpack.c.l.b16 %v215
  %v1448 = vunpack.c.h.b16 %v215
  %v1449 = vunpack.c.l.b16 %v216
  %v1450 = vunpack.c.h.b16 %v216
  %v1451 = vunpack.c.l.b16 %v217
  %v1452 = vunpack.c.h.b16 %v217
  %v1453 = vunpack.c.l.b16 %v218
  %v1454 = vunpack.c.h.b16 %v218
  %v1455 = vunpack.c.l.b16 %v219
  %v1456 = vunpack.c.h.b16 %v219
  %v1457 = vunpack.c.l.b16 %v220
  %v1458 = vunpack.c.h.b16 %v220
  %v1459 = vunpack.c.l.b16 %v221
  %v1460 = vunpack.c.h.b16 %v221
  %v1461 = vunpack.c.l.b16 %v222
  %v1462 = vunpack.c.h.b16 %v222
  %v1463 = vunpack.c.l.b16 %v223
  %v1464 = vunpack.c.h.b16 %v223
  %v1465 = vunpack.c.l.b16 %v224
  %v1466 = vunpack.c.h.b16 %v224
  %v1467 = vunpack.c.l.b16 %v225
  %v1468 = vunpack.c.h.b16 %v225
  %v1469 = vunpack.c.l.b16 %v226
  %v1470 = vunpack.c.h.b16 %v226
  %v1471 = vunpack.c.l.b16 %v227
  %v1472 = vunpack.c.h.b16 %v227
  %v1473 = vunpack.c.l.b16 %v228
  %v1474 = vunpack.c.h.b16 %v228
  %v1475 = vunpack.c.l.b16 %v229
  %v1476 = vunpack.c.h.b16 %v229
  %v1477 = vunpack.c.l.b16 %v230
  %v1478 = vunpack.c.h.b16 %v230
  %v1479 = vunpack.c.l.b16 %v231
  %v1480 = vunpack.c.h.b16 %v231
  %v1481 = vunpack.c.l.b16 %v232
  %v1482 = vunpack.c.h.b16 %v232
  %v1483 = vunpack.c.l.b16 %v233
  %v1484 = vunpack.c.h.b16 %v233
  %v1485 = vunpack.c.l.b16 %v234
  %v1486 = vunpack.c.h.b16 %v234
  %v1487 = vunpack.c.l.b16 %v235
  %v1488 = vunpack.c.h.b16 %v235
  %v1489 = vunpack.c.l.b16 %v236
  %v1490 = vunpack.c.h.b16 %v236
  %v1491 = vunpack.c.l.b16 %v237
  %v1492 = vunpack.c.h.b16 %v237
  %v1493 = vunpack.c.l.b16 %v238
  %v1494 = vunpack.c.h.b16 %v238
  %v1495 = vunpack.c.l.b16 %v239
  %v1496 = vunpack.c.h.b16 %v239
  %v1497 = vunpack.c.l.b16 %v240
  %v1498 = vunpack.c.h.b16 %v240
  %v1499 = vunpack.c.l.b16 %v241
  %v1500 = vunpack.c.h.b16 %v241
  %v1501 = vunpack.c.l.b16 %v242
  %v1502 = vunpack.c.h.b16 %v242
  %v1503 = vunpack.c.l.b16 %v243
  %v1504 = vunpack.c.h.b16 %v243
  %v1505 = vunpack.c.l.b16 %v244
  %v1506 = vunpack.c.h.b16 %v244
  %v1507 = vunpack.c.l.b16 %v245
  %v1508 = vunpack.c.h.b16 %v245
  %v1509 = vunpack.c.l.b16 %v246
  %v1510 = vunpack.c.h.b16 %v246
  %v1511 = vunpack.c.l.b16 %v247
  %v1512 = vunpack.c.h.b16 %v247
  %v1513 = vunpack.c.l.b16 %v248
  %v1514 = vunpack.c.h.b16 %v248
  %v1515 = vunpack.c.l.b16 %v249
  %v1516 = vunpack.c.h.b16 %v249
  %v1517 = vunpack.c.l.b16 %v250
  %v1518 = vunpack.c.h.b16 %v250
  %v1519 = vunpack.c.l.b16 %v251
  %v1520 = vunpack.c.h.b16 %v251
  %v1521 = vunpack.c.l.b16 %v252
  %v1522 = vunpack.c.h.b16 %v252
  %v1523 = vunpack.c.l.b16 %v253
  %v1524 = vunpack.c.h.b16 %v253
  %v1525 = vunpack.c.l.b16 %v254
  %v1526 = vunpack.c.h.b16 %v254
  %v1527 = vunpack.c.l.b16 %v255
  %v1528 = vunpack.c.h.b16 %v255
  %v1529 = vunpack.c.l.b16 %v256
  %v1530 = vunpack.c.h.b16 %v256
  %v1531 = vunpack.c.l.b16 %v257
  %v1532 = vunpack.c.h.b16 %v257
  %v1533 = vunpack.c.l.b16 %v258
  %v1534 = vunpack.c.h.b16 %v258
  %v1535 = vunpack.c.l.b16 %v259
  %v1536 = vunpack.c.h.b16 %v259
  %v1537 = vunpack.c.l.b16 %v260
  %v1538 = vunpack.c.h.b16 %v260
  %v1539 = vunpack.c.l.b16 %v261
  %v1540 = vunpack.c.h.b16 %v261
  %v1541 = vunpack.c.l.b16 %v262
  %v1542 = vunpack.c.h.b16 %v262
  %v1543 = vunpack.c.l.b16 %v263
  %v1544 = vunpack.c.h.b16 %v263
  %v1545 = vunpack.c.l.b16 %v264
  %v1546 = vunpack.c.h.b16 %v264
  %v1547 = vunpack.c.l.b16 %v265
  %v1548 = vunpack.c.h.b16 %v265
  %v1549 = vunpack.c.l.b16 %v266
  %v1550 = vunpack.c.h.b16 %v266
  %v1551 = vunpack.c.l.b16 %v267
  %v1552 = vunpack.c.h.b16 %v267
  %v1553 = vunpack.c.l.b16 %v268
  %v1554 = vunpack.c.h.b16 %v268
  %v1555 = vunpack.c.l.b16 %v269
  %v1556 = vunpack.c.h.b16 %v269
  %v1557 = vunpack.c.l.b16 %v270
  %v1558 = vunpack.c.h.b16 %v270
  %v1559 = vunpack.c.l.b16 %v271
  %v1560 = vunpack.c.h.b16 %v271
  %v1561 = vunpack.c.l.b16 %v272
  %v1562 = vunpack.c.h.b16 %v272
  %v1563 = vunpack.c.l.b16 %v273
  %v1564 = vunpack.c.h.b16 %v273
  %v1565 = vunpack.c.l.b16 %v274
  %v1566 = vunpack.c.h.b16 %v274
  %v1567 = vunpack.c.l.b16 %v275
  %v1568 = vunpack.c.h.b16 %v275
  %v1569 = vunpack.c.l.b16 %v276
  %v1570 = vunpack.c.h.b16 %v276
  %v1571 = vunpack.c.l.b16 %v277
  %v1572 = vunpack.c.h.b16 %v277
  %v1573 = vunpack.c.l.b16 %v278
  %v1574 = vunpack.c.h.b16 %v278
  %v1575 = vunpack.c.l.b16 %v279
  %v1576 = vunpack.c.h.b16 %v279
  %v1577 = vunpack.c.l.b16 %v280
  %v1578 = vunpack.c.h.b16 %v280
  %v1579 = vunpack.c.l.b16 %v281
  %v1580 = vunpack.c.h.b16 %v281
  %v1581 = vunpack.c.l.b16 %v282
  %v1582 = vunpack.c.h.b16 %v282
  %v1583 = vunpack.c.l.b16 %v283
  %v1584 = vunpack.c.h.b16 %v283
  %v1585 = vunpack.c.l.b16 %v284
  %v1586 = vunpack.c.h.b16 %v284
  %v1587 = vunpack.c.l.b16 %v285
  %v1588 = vunpack.c.h.b16 %v285
  %v1589 = vunpack.c.l.b16 %v286
  %v1590 = vunpack.c.h.b16 %v286
  %v1591 = vunpack.c.l.b16 %v287
  %v1592 = vunpack.c.h.b16 %v287
  %v1593 = vunpack.c.l.b16 %v288
  %v1594 = vunpack.c.h.b16 %v288
  %v1595 = vunpack.c.l.b16 %v289
  %v1596 = vunpack.c.h.b16 %v289
  %v1597 = vunpack.c.l.b16 %v290
  %v1598 = vunpack.c.h.b16 %v290
  %v1599 = vunpack.c.l.b16 %v291
  %v1600 = vunpack.c.h.b16 %v291
  %v1601 = vunpack.c.l.b16 %v292
  %v1602 = vunpack.c.h.b16 %v292
  %v1603 = vunpack.c.l.b16 %v293
  %v1604 = vunpack.c.h.b16 %v293
  %v1605 = vunpack.c.l.b16 %v294
  %v1606 = vunpack.c.h.b16 %v294
  %v1607 = vunpack.c.l.b16 %v295
  %v1608 = vunpack.c.h.b16 %v295
  %v1609 = vunpack.c.l.b16 %v296
  %v1610 = vunpack.c.h.b16 %v296
  %v1611 = vunpack.c.l.b16 %v297
  %v1612 = vunpack.c.h.b16 %v297
  %v1613 = vunpack.c.l.b16 %v298
  %v1614 = vunpack.c.h.b16 %v298
  %v1615 = vunpack.c.l.b16 %v299
  %v1616 = vunpack.c.h.b16 %v299
  %v1617 = vunpack.c.l.b16 %v300
  %v1618 = vunpack.c.h.b16 %v300
  %v1619 = vunpack.c.l.b16 %v301
  %v1620 = vunpack.c.h.b16 %v301
  %v1621 = vunpack.c.l.b16 %v302
  %v1622 = vunpack.c.h.b16 %v302
  %v1623 = vunpack.c.l.b16 %v303
  %v1624 = vunpack.c.h.b16 %v303
  %v1625 = vunpack.c.l.b16 %v304
  %v1626 = vunpack.c.h.b16 %v304
  %v1627 = vunpack.c.l.b16 %v305
  %v1628 = vunpack.c.h.b16 %v305
  %v1629 = vunpack.c.l.b16 %v306
  %v1630 = vunpack.c.h.b16 %v306
  %v1631 = vunpack.c.l.b16 %v307
  %v1632 = vunpack.c.h.b16 %v307
  %v1633 = vunpack.c.l.b16 %v308
  %v1634 = vunpack.c.h.b16 %v308
  %v1635 = vunpack.c.l.b16 %v309
  %v1636 = vunpack.c.h.b16 %v309
  %v1637 = vunpack.c.l.b16 %v310
  %v1638 = vunpack.c.h.b16 %v310
  %v1639 = vunpack.c.l.b16 %v311
  %v1640 = vunpack.c.h.b16 %v311
  %v1641 = vunpack.c.l.b16 %v312
  %v1642 = vunpack.c.h.b16 %v312
  %v1643 = vunpack.c.l.b16 %v313
  %v1644 = vunpack.c.h.b16 %v313
  %v1645 = vunpack.c.l.b16 %v314
  %v1646 = vunpack.c.h.b16 %v314
  %v1647 = vunpack.c.l.b16 %v315
  %v1648 = vunpack.c.h.b16 %v315
  %v1649 = vunpack.c.l.b16 %v316
  %v1650 = vunpack.c.h.b16 %v316
  %v1651 = vunpack.c.l.b16 %v317
  %v1652 = vunpack.c.h.b16 %v317
  %v1653 = vunpack.c.l.b16 %v318
  %v1654 = vunpack.c.h.b16 %v318
  %v1655 = vunpack.c.l.b16 %v319
  %v1656 = vunpack.c.h.b16 %v319
  %v1657 = vunpack.c.l.b16 %v320
  %v1658 = vunpack.c.h.b16 %v320
  %v1659 = vunpack.c.l.b16 %v321
  %v1660 = vunpack.c.h.b16 %v321
  %v1661 = vunpack.c.l.b16 %v322
  %v1662 = vunpack.c.h.b16 %v322
  %v1663 = vunpack.c.l.b16 %v323
  %v1664 = vunpack.c.h.b16 %v323
  %v1665 = vunpack.c.l.b16 %v324
  %v1666 = vunpack.c.h.b16 %v324
  %v1667 = vunpack.c.l.b16 %v325
  %v1668 = vunpack.c.h.b16 %v325
  %v1669 = vunpack.c.l.b16 %v326
  %v1670 = vunpack.c.h.b16 %v326
  %v1671 = vunpack.c.l.b16 %v327
  %v1672 = vunpack.c.h.b16 %v327
  %v1673 = vunpack.c.l.b16 %v328
  %v1674 = vunpack.c.h.b16 %v328
  %v1675 = vunpack.c.l.b16 %v329
  %v1676 = vunpack.c.h.b16 %v329
  %v1677 = vunpack.c.l.b16 %v330
  %v1678 = vunpack.c.h.b16 %v330
  %v1679 = vunpack.c.l.b16 %v331
  %v1680 = vunpack.c.h.b16 %v331
  %v1681 = vunpack.c.l.b16 %v332
  %v1682 = vunpack.c.h.b16 %v332
  %v1683 = vunpack.c.l.b16 %v333
  %v1684 = vunpack.c.h.b16 %v333
  %v1685 = vunpack.c.l.b16 %v334
  %v1686 = vunpack.c.h.b16 %v334
  %v1687 = vunpack.c.l.b16 %v335
  %v1688 = vunpack.c.h.b16 %v335
  %v1689 = vunpack.c.l.b16 %v336
  %v1690 = vunpack.c.h.b16 %v336
  %v1691 = vunpack.c.l.b16 %v337
  %v1692 = vunpack.c.h.b16 %v337
  %v1693 = vunpack.c.l.b16 %v338
  %v1694 = vunpack.c.h.b16 %v338
  %v1695 = vunpack.c.l.b16 %v339
  %v1696 = vunpack.c.h.b16 %v339
  %v1697 = vunpack.c.l.b16 %v340
  %v1698 = vunpack.c.h.b16 %v340
  %v1699 = vunpack.c.l.b16 %v341
  %v1700 = vunpack.c.h.b16 %v341
  %v1701 = vunpack.c.l.b16 %v342
  %v1702 = vunpack.c.h.b16 %v342
  %v1703 = vunpack.c.l.b16 %v343
  %v1704 = vunpack.c.h.b16 %v343
  %v1705 = vunpack.c.l.b16 %v344
  %v1706 = vunpack.c.h.b16 %v344
  %v1707 = vunpack.c.l.b16 %v345
  %v1708 = vunpack.c.h.b16 %v345
  %v1709 = vunpack.c.l.b16 %v346
  %v1710 = vunpack.c.h.b16 %v346
  %v1711 = vunpack.c.l.b16 %v347
  %v1712 = vunpack.c.h.b16 %v347
  %v1713 = vunpack.c.l.b16 %v348
  %v1714 = vunpack.c.h.b16 %v348
  %v1715 = vunpack.c.l.b16 %v349
  %v1716 = vunpack.c.h.b16 %v349
  %v1717 = vunpack.c.l.b16 %v350
  %v1718 = vunpack.c.h.b16 %v350
  %v1719 = vunpack.c.l.b16 %v351
  %v1720 = vunpack.c.h.b16 %v351
  %v1721 = vunpack.c.l.b16 %v352
  %v1722 = vunpack.c.h.b16 %v352
  %v1723 = vunpack.c.l.b16 %v353
  %v1724 = vunpack.c.h.b16 %v353
  %v1725 = vunpack.c.l.b16 %v354
  %v1726 = vunpack.c.h.b16 %v354
  %v1727 = vunpack.c.l.b16 %v355
  %v1728 = vunpack.c.h.b16 %v355
  %v1729 = vunpack.c.l.b16 %v356
  %v1730 = vunpack.c.h.b16 %v356
  %v1731 = vunpack.c.l.b16 %v357
  %v1732 = vunpack.c.h.b16 %v357
  %v1733 = vunpack.c.l.b16 %v358
  %v1734 = vunpack.c.h.b16 %v358
  %v1735 = vunpack.c.l.b16 %v359
  %v1736 = vunpack.c.h.b16 %v359
  %v1737 = vunpack.c.l.b16 %v360
  %v1738 = vunpack.c.h.b16 %v360
  %v1739 = vunpack.c.l.b16 %v361
  %v1740 = vunpack.c.h.b16 %v361
  %v1741 = vunpack.c.l.b16 %v362
  %v1742 = vunpack.c.h.b16 %v362
  %v1743 = vunpack.c.l.b16 %v363
  %v1744 = vunpack.c.h.b16 %v363
  %v1745 = vunpack.c.l.b16 %v364
  %v1746 = vunpack.c.h.b16 %v364
  %v1747 = vunpack.c.l.b16 %v365
  %v1748 = vunpack.c.h.b16 %v365
  %v1749 = vunpack.c.l.b16 %v366
  %v1750 = vunpack.c.h.b16 %v366
  %v1751 = vunpack.c.l.b16 %v367
  %v1752 = vunpack.c.h.b16 %v367
  %v1753 = vunpack.c.l.b16 %v368
  %v1754 = vunpack.c.h.b16 %v368
  %v1755 = vunpack.c.l.b16 %v369
  %v1756 = vunpack.c.h.b16 %v369
  %v1757 = vunpack.c.l.b16 %v370
  %v1758 = vunpack.c.h.b16 %v370
  %v1759 = vunpack.c.l.b16 %v371
  %v1760 = vunpack.c.h.b16 %v371
  %v1761 = vunpack.c.l.b16 %v372
  %v1762 = vunpack.c.h.b16 %v372
  %v1763 = vunpack.c.l.b16 %v373
  %v1764 = vunpack.c.h.b16 %v373
  %v1765 = vunpack.c.l.b16 %v374
  %v1766 = vunpack.c.h.b16 %v374
  %v1767 = vunpack.c.l.b16 %v375
  %v1768 = vunpack.c.h.b16 %v375
  %v1769 = vunpack.c.l.b16 %v376
  %v1770 = vunpack.c.h.b16 %v376
  %v1771 = vunpack.c.l.b16 %v377
  %v1772 = vunpack.c.h.b16 %v377
  %v1773 = vunpack.c.l.b16 %v378
  %v1774 = vunpack.c.h.b16 %v378
  %v1775 = vunpack.c.l.b16 %v379
  %v1776 = vunpack.c.h.b16 %v379
  %v1777 = vunpack.c.l.b16 %v380
  %v1778 = vunpack.c.h.b16 %v380
  %v1779 = vunpack.c.l.b16 %v381
  %v1780 = vunpack.c.h.b16 %v381
  %v1781 = vunpack.c.l.b16 %v382
  %v1782 = vunpack.c.h.b16 %v382
  %v1783 = vunpack.c.l.b16 %v383
  %v1784 = vunpack.c.h.b16 %v383
  %v1785 = vunpack.c.l.b16 %v384
  %v1786 = vunpack.c.h.b16 %v384
  %v1787 = vunpack.c.l.b16 %v385
  %v1788 = vunpack.c.h.b16 %v385
  %v1789 = vunpack.c.l.b16 %v386
  %v1790 = vunpack.c.h.b16 %v386
  %v1791 = vunpack.c.l.b16 %v387
  %v1792 = vunpack.c.h.b16 %v387
  %v1793 = vunpack.c.l.b16 %v388
  %v1794 = vunpack.c.h.b16 %v388
  %v1795 = vunpack.c.l.b16 %v389
  %v1796 = vunpack.c.h.b16 %v389
  %v1797 = vunpack.c.l.b16 %v390
  %v1798 = vunpack.c.h.b16 %v390
  %v1799 = vunpack.c.l.b16 %v391
  %v1800 = vunpack.c.h.b16 %v391
  %v1801 = vunpack.c.l.b16 %v392
  %v1802 = vunpack.c.h.b16 %v392
  %v1803 = vunpack.c.l.b16 %v393
  %v1804 = vunpack.c.h.b16 %v393
  %v1805 = vunpack.c.l.b16 %v394
  %v1806 = vunpack.c.h.b16 %v394
  %v1807 = vunpack.c.l.b16 %v395
  %v1808 = vunpack.c.h.b16 %v395
  %v1809 = vunpack.c.l.b16 %v396
  %v1810 = vunpack.c.h.b16 %v396
  %v1811 = vunpack.c.l.b16 %v397
  %v1812 = vunpack.c.h.b16 %v397
  %v1813 = vunpack.c.l.b16 %v398
  %v1814 = vunpack.c.h.b16 %v398
  %v1815 = vunpack.c.l.b16 %v399
  %v1816 = vunpack.c.h.b16 %v399
  %v1817 = vunpack.c.l.b16 %v400
  %v1818 = vunpack.c.h.b16 %v400
  %v1819 = vunpack.c.l.b16 %v401
  %v1820 = vunpack.c.h.b16 %v401
  %v1821 = vunpack.c.l.b16 %v402
  %v1822 = vunpack.c.h.b16 %v402
  %v1823 = vunpack.c.l.b16 %v403
  %v1824 = vunpack.c.h.b16 %v403
  %v1825 = vunpack.c.l.b16 %v404
  %v1826 = vunpack.c.h.b16 %v404
  %v1827 = vunpack.c.l.b16 %v405
  %v1828 = vunpack.c.h.b16 %v405
  %v1829 = vunpack.c.l.b16 %v406
  %v1830 = vunpack.c.h.b16 %v406
  %v1831 = vunpack.c.l.b16 %v407
  %v1832 = vunpack.c.h.b16 %v407
  %v1833 = vunpack.c.l.b16 %v408
  %v1834 = vunpack.c.h.b16 %v408
  %v1835 = vunpack.c.l.b16 %v409
  %v1836 = vunpack.c.h.b16 %v409
  %v1837 = vunpack.c.l.b16 %v410
  %v1838 = vunpack.c.h.b16 %v410
  %v1839 = vunpack.c.l.b16 %v411
  %v1840 = vunpack.c.h.b16 %v411
  %v1841 = vunpack.c.l.b16 %v412
  %v1842 = vunpack.c.h.b16 %v412
  %v1843 = vunpack.c.l.b16 %v413
  %v1844 = vunpack.c.h.b16 %v413
  %v1845 = vunpack.c.l.b16 %v414
  %v1846 = vunpack.c.h.b16 %v414
  %v1847 = vunpack.c.l.b16 %v415
  %v1848 = vunpack.c.h.b16 %v415
  %v1849 = vunpack.c.l.b16 %v416
  %v1850 = vunpack.c.h.b16 %v416
  %v1851 = vunpack.c.l.b16 %v417
  %v1852 = vunpack.c.h.b16 %v417
  %v1853 = vunpack.c.l.b16 %v418
  %v1854 = vunpack.c.h.b16 %v418
  %v1855 = vunpack.c.l.b16 %v419
  %v1856 = vunpack.c.h.b16 %v419
  %v1857 = vunpack.c.l.b16 %v420
  %v1858 = vunpack.c.h.b16 %v420
  %v1859 = vunpack.c.l.b16 %v421
  %v1860 = vunpack.c.h.b16 %v421
  %v1861 = vunpack.c.l.b16 %v422
  %v1862 = vunpack.c.h.b16 %v422
  %v1863 = vunpack.c.l.b16 %v423
  %v1864 = vunpack.c.h.b16 %v423
  %v1865 = vunpack.c.l.b16 %v424
  %v1866 = vunpack.c.h.b16 %v424
  %v1867 = vunpack.c.l.b16 %v425
  %v1868 = vunpack.c.h.b16 %v425
  %v1869 = vunpack.c.l.b16 %v426
  %v1870 = vunpack.c.h.b16 %v426
  %v1871 = vunpack.c.l.b16 %v427
  %v1872 = vunpack.c.h.b16 %v427
  %v1873 = vunpack.c.l.b16 %v428
  %v1874 = vunpack.c.h.b16 %v428
  %v1875 = vunpack.c.l.b16 %v429
  %v1876 = vunpack.c.h.b16 %v429
  %v1877 = vunpack.c.l.b16 %v430
  %v1878 = vunpack.c.h.b16 %v430
  %v1879 = vunpack.c.l.b16 %v431
  %v1880 = vunpack.c.h.b16 %v431
  %v1881 = vunpack.c.l.b16 %v432
  %v1882 = vunpack.c.h.b16 %v432
  %v1883 = vunpack.c.l.b16 %v433
  %v1884 = vunpack.c.h.b16 %v433
  %v1885 = vunpack.c.l.b16 %v434
  %v1886 = vunpack.c.h.b16 %v434
  %v1887 = vunpack.c.l.b16 %v435
  %v1888 = vunpack.c.h.b16 %v435
  %v1889 = vunpack.c.l.b16 %v436
  %v1890 = vunpack.c.h.b16 %v436
  %v1891 = vunpack.c.l.b16 %v437
  %v1892 = vunpack.c.h.b16 %v437
  %v1893 = vunpack.c.l.b16 %v438
  %v1894 = vunpack.c.h.b16 %v438
  %v1895 = vunpack.c.l.b16 %v439
  %v1896 = vunpack.c.h.b16 %v439
  %v1897 = vunpack.c.l.b16 %v440
  %v1898 = vunpack.c.h.b16 %v440
  %v1899 = vunpack.c.l.b16 %v441
  %v1900 = vunpack.c.h.b16 %v441
  %v1901 = vunpack.c.l.b16 %v442
  %v1902 = vunpack.c.h.b16 %v442
  %v1903 = vunpack.c.l.b16 %v443
  %v1904 = vunpack.c.h.b16 %v443
  %v1905 = vunpack.c.l.b16 %v444
  %v1906 = vunpack.c.h.b16 %v444
  %v1907 = vunpack.c.l.b16 %v445
  %v1908 = vunpack.c.h.b16 %v445
  %v1909 = vunpack.c.l.b16 %v446
  %v1910 = vunpack.c.h.b16 %v446
  %v1911 = vunpack.c.l.b16 %v447
  %v1912 = vunpack.c.h.b16 %v447
  %v1913 = vunpack.c.l.b16 %v448
  %v1914 = vunpack.c.h.b16 %v448
  %v1915 = vunpack.c.l.b16 %v449
  %v1916 = vunpack.c.h.b16 %v449
  %v1917 = vunpack.c.l.b16 %v450
  %v1918 = vunpack.c.h.b16 %v450
  %v1919 = vunpack.c.l.b16 %v451
  %v1920 = vunpack.c.h.b16 %v451
  %v1921 = vunpack.c.l.b16 %v452
  %v1922 = vunpack.c.h.b16 %v452
  %v1923 = vunpack.c.l.b16 %v453
  %v1924 = vunpack.c.h.b16 %v453
  %v1925 = vunpack.c.l.b16 %v454
  %v1926 = vunpack.c.h.b16 %v454
  %v1927 = vunpack.c.l.b16 %v455
  %v1928 = vunpack.c.h.b16 %v455
  %v1929 = vunpack.c.l.b16 %v456
  %v1930 = vunpack.c.h.b16 %v456
  %v1931 = vunpack.c.l.b16 %v457
  %v1932 = vunpack.c.h.b16 %v457
  %v1933 = vunpack.c.l.b16 %v458
  %v1934 = vunpack.c.h.b16 %v458
  %v1935 = vunpack.c.l.b16 %v459
  %v1936 = vunpack.c.h.b16 %v459
  %v1937 = vunpack.c.l.b16 %v460
  %v1938 = vunpack.c.h.b16 %v460
  %v1939 = vunpack.c.l.b16 %v461
  %v1940 = vunpack.c.h.b16 %v461
  %v1941 = vunpack.c.l.b16 %v462
  %v1942 = vunpack.c.h.b16 %v462
  %v1943 = vunpack.c.l.b16 %v463
  %v1944 = vunpack.c.h.b16 %v463
  %v1945 = vunpack.c.l.b16 %v464
  %v1946 = vunpack.c.h.b16 %v464
  %v1947 = vunpack.c.l.b16 %v465
  %v1948 = vunpack.c.h.b16 %v465
  %v1949 = vunpack.c.l.b16 %v466
  %v1950 = vunpack.c.h.b16 %v466
  %v1951 = vunpack.c.l.b16 %v467
  %v1952 = vunpack.c.h.b16 %v467
  %v1953 = vunpack.c.l.b16 %v468
  %v1954 = vunpack.c.h.b16 %v468
  %v1955 = vunpack.c.l.b16 %v469
  %v1956 = vunpack.c.h.b16 %v469
  %v1957 = vunpack.c.l.b16 %v470
  %v1958 = vunpack.c.h.b16 %v470
  %v1959 = vunpack.c.l.b16 %v471
  %v1960 = vunpack.c.h.b16 %v471
  %v1961 = vunpack.c.l.b16 %v472
  %v1962 = vunpack.c.h.b16 %v472
  %v1963 = vunpack.c.l.b16 %v473
  %v1964 = vunpack.c.h.b16 %v473
  %v1965 = vunpack.c.l.b16 %v474
  %v1966 = vunpack.c.h.b16 %v474
  %v1967 = vunpack.c.l.b16 %v475
  %v1968 = vunpack.c.h.b16 %v475
  %v1969 = vunpack.c.l.b16 %v476
  %v1970 = vunpack.c.h.b16 %v476
  %v1971 = vunpack.c.l.b16 %v477
  %v1972 = vunpack.c.h.b16 %v477
  %v1973 = vunpack.c.l.b16 %v478
  %v1974 = vunpack.c.h.b16 %v478
  %v1975 = vunpack.c.l.b16 %v479
  %v1976 = vunpack.c.h.b16 %v479
  %v1977 = vunpack.c.l.b16 %v480
  %v1978 = vunpack.c.h.b16 %v480
  %v1979 = vunpack.c.l.b16 %v481
  %v1980 = vunpack.c.h.b16 %v481
  %v1981 = vunpack.c.l.b16 %v482
  %v1982 = vunpack.c.h.b16 %v482
  %v1983 = vunpack.c.l.b16 %v483
  %v1984 = vunpack.c.h.b16 %v483
  %v1985 = vunpack.c.l.b16 %v484
  %v1986 = vunpack.c.h.b16 %v484
  %v1987 = vunpack.c.l.b16 %v485
  %v1988 = vunpack.c.h.b16 %v485
  %v1989 = vunpack.c.l.b16 %v486
  %v1990 = vunpack.c.h.b16 %v486
  %v1991 = vunpack.c.l.b16 %v487
  %v1992 = vunpack.c.h.b16 %v487
  %v1993 = vunpack.c.l.b16 %v488
  %v1994 = vunpack.c.h.b16 %v488
  %v1995 = vunpack.c.l.b16 %v489
  %v1996 = vunpack.c.h.b16 %v489
  %v1997 = vunpack.c.l.b16 %v490
  %v1998 = vunpack.c.h.b16 %v490
  %v1999 = vunpack.c.l.b16 %v491
  %v2000 = vunpack.c.h.b16 %v491
  %v2001 = vunpack.c.l.b16 %v492
  %v2002 = vunpack.c.h.b16 %v492
  %v2003 = vunpack.c.l.b16 %v493
  %v2004 = vunpack.c.h.b16 %v493
  %v2005 = vunpack.c.l.b16 %v494
  %v2006 = vunpack.c.h.b16 %v494
  %v2007 = vunpack.c.l.b16 %v495
  %v2008 = vunpack.c.h.b16 %v495
  %v2009 = vunpack.c.l.b16 %v496
  %v2010 = vunpack.c.h.b16 %v496
  %v2011 = vunpack.c.l.b16 %v497
  %v2012 = vunpack.c.h.b16 %v497
  %v2013 = vunpack.c.l.b16 %v498
  %v2014 = vunpack.c.h.b16 %v498
  %v2015 = vunpack.c.l.b16 %v499
  %v2016 = vunpack.c.h.b16 %v499
  %v2017 = vunpack.c.l.b16 %v500
  %v2018 = vunpack.c.h.b16 %v500
  %v2019 = vunpack.c.l.b16 %v501
  %v2020 = vunpack.c.h.b16 %v501
  %v2021 = vunpack.c.l.b16 %v502
  %v2022 = vunpack.c.h.b16 %v502
  %v2023 = vunpack.c.l.b16 %v503
  %v2024 = vunpack.c.h.b16 %v503
  %v2025 = vunpack.c.l.b16 %v504
  %v2026 = vunpack.c.h.b16 %v504
  %v2027 = vunpack.c.l.b16 %v505
  %v2028 = vunpack.c.h.b16 %v505
  %v2029 = vunpack.c.l.b16 %v506
  %v2030 = vunpack.c.h.b16 %v506
  %v2031 = vunpack.c.l.b16 %v507
  %v2032 = vunpack.c.h.b16 %v507
  %v2033 = vunpack.c.l.b16 %v508
  %v2034 = vunpack.c.h.b16 %v508
  %v2035 = vunpack.c.l.b16 %v509
  %v2036 = vunpack.c.h.b16 %v509
  %v2037 = vunpack.c.l.b16 %v510
  %v2038 = vunpack.c.h.b16 %v510
  %v2039 = vunpack.c.l.b16 %v511
  %v2040 = vunpack.c.h.b16 %v511
  %v2041 = vunpack.c.l.b16 %v512
  %v2042 = vunpack.c.h.b16 %v512
  %v2043 = vpack.c.b16 %v1155, %v1147
  %v2044 = vpack.c.b16 %v1156, %v1148
  %v2045 = vpack.c.b16 %v1157, %v1149
  %v2046 = vpack.c.b16 %v1158, %v1150
  %v2047 = vpack.c.b16 %v1159, %v1151
  %v2048 = vpack.c.b16 %v1160, %v1152
  %v2049 = vpack.c.b16 %v1161, %v1153
  %v2050 = vpack.c.b16 %v1162, %v1154
  %v2051 = vpack.c.b16 %v1171, %v1163
  %v2052 = vpack.c.b16 %v1172, %v1164
  %v2053 = vpack.c.b16 %v1173, %v1165
  %v2054 = vpack.c.b16 %v1174, %v1166
  %v2055 = vpack.c.b16 %v1175, %v1167
  %v2056 = vpack.c.b16 %v1176, %v1168
  %v2057 = vpack.c.b16 %v1177, %v1169
  %v2058 = vpack.c.b16 %v1178, %v1170
  %v2059 = vpack.c.b16 %v1187, %v1179
  %v2060 = vpack.c.b16 %v1188, %v1180
  %v2061 = vpack.c.b16 %v1189, %v1181
  %v2062 = vpack.c.b16 %v1190, %v1182
  %v2063 = vpack.c.b16 %v1191, %v1183
  %v2064 = vpack.c.b16 %v1192, %v1184
  %v2065 = vpack.c.b16 %v1193, %v1185
  %v2066 = vpack.c.b16 %v1194, %v1186
  %v2067 = vpack.c.b16 %v1203, %v1195
  %v2068 = vpack.c.b16 %v1204, %v1196
  %v2069 = vpack.c.b16 %v1205, %v1197
  %v2070 = vpack.c.b16 %v1206, %v1198
  %v2071 = vpack.c.b16 %v1207, %v1199
  %v2072 = vpack.c.b16 %v1208, %v1200
  %v2073 = vpack.c.b16 %v1209, %v1201
  %v2074 = vpack.c.b16 %v1210, %v1202
  %v2075 = vpack.c.b16 %v1219, %v1211
  %v2076 = vpack.c.b16 %v1220, %v1212
  %v2077 = vpack.c.b16 %v1221, %v1213
  %v2078 = vpack.c.b16 %v1222, %v1214
  %v2079 = vpack.c.b16 %v1223, %v1215
  %v2080 = vpack.c.b16 %v1224, %v1216
  %v2081 = vpack.c.b16 %v1225, %v1217
  %v2082 = vpack.c.b16 %v1226, %v1218
  %v2083 = vpack.c.b16 %v1235, %v1227
  %v2084 = vpack.c.b16 %v1236, %v1228
  %v2085 = vpack.c.b16 %v1237, %v1229
  %v2086 = vpack.c.b16 %v1238, %v1230
  %v2087 = vpack.c.b16 %v1239, %v1231
  %v2088 = vpack.c.b16 %v1240, %v1232
  %v2089 = vpack.c.b16 %v1241, %v1233
  %v2090 = vpack.c.b16 %v1242, %v1234
  %v2091 = vpack.c.b16 %v1251, %v1243
  %v2092 = vpack.c.b16 %v1252, %v1244
  %v2093 = vpack.c.b16 %v1253, %v1245
  %v2094 = vpack.c.b16 %v1254, %v1246
  %v2095 = vpack.c.b16 %v1255, %v1247
  %v2096 = vpack.c.b16 %v1256, %v1248
  %v2097 = vpack.c.b16 %v1257, %v1249
  %v2098 = vpack.c.b16 %v1258, %v1250
  %v2099 = vpack.c.b16 %v1267, %v1259
  %v2100 = vpack.c.b16 %v1268, %v1260
  %v2101 = vpack.c.b16 %v1269, %v1261
  %v2102 = vpack.c.b16 %v1270, %v1262
  %v2103 = vpack.c.b16 %v1271, %v1263
  %v2104 = vpack.c.b16 %v1272, %v1264
  %v2105 = vpack.c.b16 %v1273, %v1265
  %v2106 = vpack.c.b16 %v1274, %v1266
  %v2107 = vpack.c.b16 %v1283, %v1275
  %v2108 = vpack.c.b16 %v1284, %v1276
  %v2109 = vpack.c.b16 %v1285, %v1277
  %v2110 = vpack.c.b16 %v1286, %v1278
  %v2111 = vpack.c.b16 %v1287, %v1279
  %v2112 = vpack.c.b16 %v1288, %v1280
  %v2113 = vpack.c.b16 %v1289, %v1281
  %v2114 = vpack.c.b16 %v1290, %v1282
  %v2115 = vpack.c.b16 %v1299, %v1291
  %v2116 = vpack.c.b16 %v1300, %v1292
  %v2117 = vpack.c.b16 %v1301, %v1293
  %v2118 = vpack.c.b16 %v1302, %v1294
  %v2119 = vpack.c.b16 %v1303, %v1295
  %v2120 = vpack.c.b16 %v1304, %v1296
  %v2121 = vpack.c.b16 %v1305, %v1297
  %v2122 = vpack.c.b16 %v1306, %v1298
  %v2123 = vpack.c.b16 %v1315, %v1307
  %v2124 = vpack.c.b16 %v1316, %v1308
  %v2125 = vpack.c.b16 %v1317, %v1309
  %v2126 = vpack.c.b16 %v1318, %v1310
  %v2127 = vpack.c.b16 %v1319, %v1311
  %v2128 = vpack.c.b16 %v1320, %v1312
  %v2129 = vpack.c.b16 %v1321, %v1313
  %v2130 = vpack.c.b16 %v1322, %v1314
  %v2131 = vpack.c.b16 %v1331, %v1323
  %v2132 = vpack.c.b16 %v1332, %v1324
  %v2133 = vpack.c.b16 %v1333, %v1325
  %v2134 = vpack.c.b16 %v1334, %v1326
  %v2135 = vpack.c.b16 %v1335, %v1327
  %v2136 = vpack.c.b16 %v1336, %v1328
  %v2137 = vpack.c.b16 %v1337, %v1329
  %v2138 = vpack.c.b16 %v1338, %v1330
  %v2139 = vpack.c.b16 %v1347, %v1339
  %v2140 = vpack.c.b16 %v1348, %v1340
  %v2141 = vpack.c.b16 %v1349, %v1341
  %v2142 = vpack.c.b16 %v1350, %v1342
  %v2143 = vpack.c.b16 %v1351, %v1343
  %v2144 = vpack.c.b16 %v1352, %v1344
  %v2145 = vpack.c.b16 %v1353, %v1345
  %v2146 = vpack.c.b16 %v1354, %v1346
  %v2147 = vpack.c.b16 %v1363, %v1355
  %v2148 = vpack.c.b16 %v1364, %v1356
  %v2149 = vpack.c.b16 %v1365, %v1357
  %v2150 = vpack.c.b16 %v1366, %v1358
  %v2151 = vpack.c.b16 %v1367, %v1359
  %v2152 = vpack.c.b16 %v1368, %v1360
  %v2153 = vpack.c.b16 %v1369, %v1361
  %v2154 = vpack.c.b16 %v1370, %v1362
  %v2155 = vpack.c.b16 %v1379, %v1371
  %v2156 = vpack.c.b16 %v1380, %v1372
  %v2157 = vpack.c.b16 %v1381, %v1373
  %v2158 = vpack.c.b16 %v1382, %v1374
  %v2159 = vpack.c.b16 %v1383, %v1375
  %v2160 = vpack.c.b16 %v1384, %v1376
  %v2161 = vpack.c.b16 %v1385, %v1377
  %v2162 = vpack.c.b16 %v1386, %v1378
  %v2163 = vpack.c.b16 %v1395, %v1387
  %v2164 = vpack.c.b16 %v1396, %v1388
  %v2165 = vpack.c.b16 %v1397, %v1389
  %v2166 = vpack.c.b16 %v1398, %v1390
  %v2167 = vpack.c.b16 %v1399, %v1391
  %v2168 = vpack.c.b16 %v1400, %v1392
  %v2169 = vpack.c.b16 %v1401, %v1393
  %v2170 = vpack.c.b16 %v1402, %v1394
  %v2171 = vpack.c.b16 %v1411, %v1403
  %v2172 = vpack.c.b16 %v1412, %v1404
  %v2173 = vpack.c.b16 %v1413, %v1405
  %v2174 = vpack.c.b16 %v1414, %v1406
  %v2175 = vpack.c.b16 %v1415, %v1407
  %v2176 = vpack.c.b16 %v1416, %v1408
  %v2177 = vpack.c.b16 %v1417, %v1409
  %v2178 = vpack.c.b16 %v1418, %v1410
  %v2179 = vpack.c.b16 %v1427, %v1419
  %v2180 = vpack.c.b16 %v1428, %v1420
  %v2181 = vpack.c.b16 %v1429, %v1421
  %v2182 = vpack.c.b16 %v1430, %v1422
  %v2183 = vpack.c.b16 %v1431, %v1423
  %v2184 = vpack.c.b16 %v1432, %v1424
  %v2185 = vpack.c.b16 %v1433, %v1425
  %v2186 = vpack.c.b16 %v1434, %v1426
  %v2187 = vpack.c.b16 %v1443, %v1435
  %v2188 = vpack.c.b16 %v1444, %v1436
  %v2189 = vpack.c.b16 %v1445, %v1437
  %v2190 = vpack.c.b16 %v1446, %v1438
  %v2191 = vpack.c.b16 %v1447, %v1439
  %v2192 = vpack.c.b16 %v1448, %v1440
  %v2193 = vpack.c.b16 %v1449, %v1441
  %v2194 = vpack.c.b16 %v1450, %v1442
  %v2195 = vpack.c.b16 %v1459, %v1451
  %v2196 = vpack.c.b16 %v1460, %v1452
  %v2197 = vpack.c.b16 %v1461, %v1453
  %v2198 = vpack.c.b16 %v1462, %v1454
  %v2199 = vpack.c.b16 %v1463, %v1455
  %v2200 = vpack.c.b16 %v1464, %v1456
  %v2201 = vpack.c.b16 %v1465, %v1457
  %v2202 = vpack.c.b16 %v1466, %v1458
  %v2203 = vpack.c.b16 %v1475, %v1467
  %v2204 = vpack.c.b16 %v1476, %v1468
  %v2205 = vpack.c.b16 %v1477, %v1469
  %v2206 = vpack.c.b16 %v1478, %v1470
  %v2207 = vpack.c.b16 %v1479, %v1471
  %v2208 = vpack.c.b16 %v1480, %v1472
  %v2209 = vpack.c.b16 %v1481, %v1473
  %v2210 = vpack.c.b16 %v1482, %v1474
  %v2211 = vpack.c.b16 %v1491, %v1483
  %v2212 = vpack.c.b16 %v1492, %v1484
  %v2213 = vpack.c.b16 %v1493, %v1485
  %v2214 = vpack.c.b16 %v1494, %v1486
  %v2215 = vpack.c.b16 %v1495, %v1487
  %v2216 = vpack.c.b16 %v1496, %v1488
  %v2217 = vpack.c.b16 %v1497, %v1489
  %v2218 = vpack.c.b16 %v1498, %v1490
  %v2219 = vpack.c.b16 %v1507, %v1499
  %v2220 = vpack.c.b16 %v1508, %v1500
  %v2221 = vpack.c.b16 %v1509, %v1501
  %v2222 = vpack.c.b16 %v1510, %v1502
  %v2223 = vpack.c.b16 %v1511, %v1503
  %v2224 = vpack.c.b16 %v1512, %v1504
  %v2225 = vpack.c.b16 %v1513, %v1505
  %v2226 = vpack.c.b16 %v1514, %v1506
  %v2227 = vpack.c.b16 %v1523, %v1515
  %v2228 = vpack.c.b16 %v1524, %v1516
  %v2229 = vpack.c.b16 %v1525, %v1517
  %v2230 = vpack.c.b16 %v1526, %v1518
  %v2231 = vpack.c.b16 %v1527, %v1519
  %v2232 = vpack.c.b16 %v1528, %v1520
  %v2233 = vpack.c.b16 %v1529, %v1521
  %v2234 = vpack.c.b16 %v1530, %v1522
  %v2235 = vpack.c.b16 %v1539, %v1531
  %v2236 = vpack.c.b16 %v1540, %v1532
  %v2237 = vpack.c.b16 %v1541, %v1533
  %v2238 = vpack.c.b16 %v1542, %v1534
  %v2239 = vpack.c.b16 %v1543, %v1535
  %v2240 = vpack.c.b16 %v1544, %v1536
  %v2241 = vpack.c.b16 %v1545, %v1537
  %v2242 = vpack.c.b16 %v1546, %v1538
  %v2243 = vpack.c.b16 %v1555, %v1547
  %v2244 = vpack.c.b16 %v1556, %v1548
  %v2245 = vpack.c.b16 %v1557, %v1549
  %v2246 = vpack.c.b16 %v1558, %v1550
  %v2247 = vpack.c.b16 %v1559, %v1551
  %v2248 = vpack.c.b16 %v1560, %v1552
  %v2249 = vpack.c.b16 %v1561, %v1553
  %v2250 = vpack.c.b16 %v1562, %v1554
  %v2251 = vpack.c.b16 %v1571, %v1563
  %v2252 = vpack.c.b16 %v1572, %v1564
  %v2253 = vpack.c.b16 %v1573, %v1565
  %v2254 = vpack.c.b16 %v1574, %v1566
  %v2255 = vpack.c.b16 %v1575, %v1567
  %v2256 = vpack.c.b16 %v1576, %v1568
  %v2257 = vpack.c.b16 %v1577, %v1569
  %v2258 = vpack.c.b16 %v1578, %v1570
  %v2259 = vpack.c.b16 %v1587, %v1579
  %v2260 = vpack.c.b16 %v1588, %v1580
  %v2261 = vpack.c.b16 %v1589, %v1581
  %v2262 = vpack.c.b16 %v1590, %v1582
  %v2263 = vpack.c.b16 %v1591, %v1583
  %v2264 = vpack.c.b16 %v1592, %v1584
  %v2265 = vpack.c.b16 %v1593, %v1585
  %v2266 = vpack.c.b16 %v1594, %v1586
  %v2267 = vpack.c.b16 %v1603, %v1595
  %v2268 = vpack.c.b16 %v1604, %v1596
  %v2269 = vpack.c.b16 %v1605, %v1597
  %v2270 = vpack.c.b16 %v1606, %v1598
  %v2271 = vpack.c.b16 %v1607, %v1599
  %v2272 = vpack.c.b16 %v1608, %v1600
  %v2273 = vpack.c.b16 %v1609, %v1601
  %v2274 = vpack.c.b16 %v1610, %v1602
  %v2275 = vpack.c.b16 %v1619, %v1611
  %v2276 = vpack.c.b16 %v1620, %v1612
  %v2277 = vpack.c.b16 %v1621, %v1613
  %v2278 = vpack.c.b16 %v1622, %v1614
  %v2279 = vpack.c.b16 %v1623, %v1615
  %v2280 = vpack.c.b16 %v1624, %v1616
  %v2281 = vpack.c.b16 %v1625, %v1617
  %v2282 = vpack.c.b16 %v1626, %v1618
  %v2283 = vpack.c.b16 %v1635, %v1627
  %v2284 = vpack.c.b16 %v1636, %v1628
  %v2285 = vpack.c.b16 %v1637, %v1629
  %v2286 = vpack.c.b16 %v1638, %v1630
  %v2287 = vpack.c.b16 %v1639, %v1631
  %v2288 = vpack.c.b16 %v1640, %v1632
  %v2289 = vpack.c.b16 %v1641, %v1633
  %v2290 = vpack.c.b16 %v1642, %v1634
  %v2291 = vpack.c.b16 %v1651, %v1643
  %v2292 = vpack.c.b16 %v1652, %v1644
  %v2293 = vpack.c.b16 %v1653, %v1645
  %v2294 = vpack.c.b16 %v1654, %v1646
  %v2295 = vpack.c.b16 %v1655, %v1647
  %v2296 = vpack.c.b16 %v1656, %v1648
  %v2297 = vpack.c.b16 %v1657, %v1649
  %v2298 = vpack.c.b16 %v1658, %v1650
  %v2299 = vpack.c.b16 %v1667, %v1659
  %v2300 = vpack.c.b16 %v1668, %v1660
  %v2301 = vpack.c.b16 %v1669, %v1661
  %v2302 = vpack.c.b16 %v1670, %v1662
  %v2303 = vpack.c.b16 %v1671, %v1663
  %v2304 = vpack.c.b16 %v1672, %v1664
  %v2305 = vpack.c.b16 %v1673, %v1665
  %v2306 = vpack.c.b16 %v1674, %v1666
  %v2307 = vpack.c.b16 %v1683, %v1675
  %v2308 = vpack.c.b16 %v1684, %v1676
  %v2309 = vpack.c.b16 %v1685, %v1677
  %v2310 = vpack.c.b16 %v1686, %v1678
  %v2311 = vpack.c.b16 %v1687, %v1679
  %v2312 = vpack.c.b16 %v1688, %v1680
  %v2313 = vpack.c.b16 %v1689, %v1681
  %v2314 = vpack.c.b16 %v1690, %v1682
  %v2315 = vpack.c.b16 %v1699, %v1691
  %v2316 = vpack.c.b16 %v1700, %v1692
  %v2317 = vpack.c.b16 %v1701, %v1693
  %v2318 = vpack.c.b16 %v1702, %v1694
  %v2319 = vpack.c.b16 %v1703, %v1695
  %v2320 = vpack.c.b16 %v1704, %v1696
  %v2321 = vpack.c.b16 %v1705, %v1697
  %v2322 = vpack.c.b16 %v1706, %v1698
  %v2323 = vpack.c.b16 %v1715, %v1707
  %v2324 = vpack.c.b16 %v1716, %v1708
  %v2325 = vpack.c.b16 %v1717, %v1709
  %v2326 = vpack.c.b16 %v1718, %v1710
  %v2327 = vpack.c.b16 %v1719, %v1711
  %v2328 = vpack.c.b16 %v1720, %v1712
  %v2329 = vpack.c.b16 %v1721, %v1713
  %v2330 = vpack.c.b16 %v1722, %v1714
  %v2331 = vpack.c.b16 %v1731, %v1723
  %v2332 = vpack.c.b16 %v1732, %v1724
  %v2333 = vpack.c.b16 %v1733, %v1725
  %v2334 = vpack.c.b16 %v1734, %v1726
  %v2335 = vpack.c.b16 %v1735, %v1727
  %v2336 = vpack.c.b16 %v1736, %v1728
  %v2337 = vpack.c.b16 %v1737, %v1729
  %v2338 = vpack.c.b16 %v1738, %v1730
  %v2339 = vpack.c.b16 %v1747, %v1739
  %v2340 = vpack.c.b16 %v1748, %v1740
  %v2341 = vpack.c.b16 %v1749, %v1741
  %v2342 = vpack.c.b16 %v1750, %v1742
  %v2343 = vpack.c.b16 %v1751, %v1743
  %v2344 = vpack.c.b16 %v1752, %v1744
  %v2345 = vpack.c.b16 %v1753, %v1745
  %v2346 = vpack.c.b16 %v1754, %v1746
  %v2347 = vpack.c.b16 %v1763, %v1755
  %v2348 = vpack.c.b16 %v1764, %v1756
  %v2349 = vpack.c.b16 %v1765, %v1757
  %v2350 = vpack.c.b16 %v1766, %v1758
  %v2351 = vpack.c.b16 %v1767, %v1759
  %v2352 = vpack.c.b16 %v1768, %v1760
  %v2353 = vpack.c.b16 %v1769, %v1761
  %v2354 = vpack.c.b16 %v1770, %v1762
  %v2355 = vpack.c.b16 %v1779, %v1771
  %v2356 = vpack.c.b16 %v1780, %v1772
  %v2357 = vpack.c.b16 %v1781, %v1773
  %v2358 = vpack.c.b16 %v1782, %v1774
  %v2359 = vpack.c.b16 %v1783, %v1775
  %v2360 = vpack.c.b16 %v1784, %v1776
  %v2361 = vpack.c.b16 %v1785, %v1777
  %v2362 = vpack.c.b16 %v1786, %v1778
  %v2363 = vpack.c.b16 %v1795, %v1787
  %v2364 = vpack.c.b16 %v1796, %v1788
  %v2365 = vpack.c.b16 %v1797, %v1789
  %v2366 = vpack.c.b16 %v1798, %v1790
  %v2367 = vpack.c.b16 %v1799, %v1791
  %v2368 = vpack.c.b16 %v1800, %v1792
  %v2369 = vpack.c.b16 %v1801, %v1793
  %v2370 = vpack.c.b16 %v1802, %v1794
  %v2371 = vpack.c.b16 %v1811, %v1803
  %v2372 = vpack.c.b16 %v1812, %v1804
  %v2373 = vpack.c.b16 %v1813, %v1805
  %v2374 = vpack.c.b16 %v1814, %v1806
  %v2375 = vpack.c.b16 %v1815, %v1807
  %v2376 = vpack.c.b16 %v1816, %v1808
  %v2377 = vpack.c.b16 %v1817, %v1809
  %v2378 = vpack.c.b16 %v1818, %v1810
  %v2379 = vpack.c.b16 %v1827, %v1819
  %v2380 = vpack.c.b16 %v1828, %v1820
  %v2381 = vpack.c.b16 %v1829, %v1821
  %v2382 = vpack.c.b16 %v1830, %v1822
  %v2383 = vpack.c.b16 %v1831, %v1823
  %v2384 = vpack.c.b16 %v1832, %v1824
  %v2385 = vpack.c.b16 %v1833, %v1825
  %v2386 = vpack.c.b16 %v1834, %v1826
  %v2387 = vpack.c.b16 %v1843, %v1835
  %v2388 = vpack.c.b16 %v1844, %v1836
  %v2389 = vpack.c.b16 %v1845, %v1837
  %v2390 = vpack.c.b16 %v1846, %v1838
  %v2391 = vpack.c.b16 %v1847, %v1839
  %v2392 = vpack.c.b16 %v1848, %v1840
  %v2393 = vpack.c.b16 %v1849, %v1841
  %v2394 = vpack.c.b16 %v1850, %v1842
  %v2395 = vpack.c.b16 %v1859, %v1851
  %v2396 = vpack.c.b16 %v1860, %v1852
  %v2397 = vpack.c.b16 %v1861, %v1853
  %v2398 = vpack.c.b16 %v1862, %v1854
  %v2399 = vpack.c.b16 %v1863, %v1855
  %v2400 = vpack.c.b16 %v1864, %v1856
  %v2401 = vpack.c.b16 %v1865, %v1857
  %v2402 = vpack.c.b16 %v1866, %v1858
  %v2403 = vpack.c.b16 %v1875, %v1867
  %v2404 = vpack.c.b16 %v1876, %v1868
  %v2405 = vpack.c.b16 %v1877, %v1869
  %v2406 = vpack.c.b16 %v1878, %v1870
  %v2407 = vpack.c.b16 %v1879, %v1871
  %v2408 = vpack.c.b16 %v1880, %v1872
  %v2409 = vpack.c.b16 %v1881, %v1873
  %v2410 = vpack.c.b16 %v1882, %v1874
  %v2411 = vpack.c.b16 %v1891, %v1883
  %v2412 = vpack.c.b16 %v1892, %v1884
  %v2413 = vpack.c.b16 %v1893, %v1885
  %v2414 = vpack.c.b16 %v1894, %v1886
  %v2415 = vpack.c.b16 %v1895, %v1887
  %v2416 = vpack.c.b16 %v1896, %v1888
  %v2417 = vpack.c.b16 %v1897, %v1889
  %v2418 = vpack.c.b16 %v1898, %v1890
  %v2419 = vpack.c.b16 %v1907, %v1899
  %v2420 = vpack.c.b16 %v1908, %v1900
  %v2421 = vpack.c.b16 %v1909, %v1901
  %v2422 = vpack.c.b16 %v1910, %v1902
  %v2423 = vpack.c.b16 %v1911, %v1903
  %v2424 = vpack.c.b16 %v1912, %v1904
  %v2425 = vpack.c.b16 %v1913, %v1905
  %v2426 = vpack.c.b16 %v1914, %v1906
  %v2427 = vpack.c.b16 %v1923, %v1915
  %v2428 = vpack.c.b16 %v1924, %v1916
  %v2429 = vpack.c.b16 %v1925, %v1917
  %v2430 = vpack.c.b16 %v1926, %v1918
  %v2431 = vpack.c.b16 %v1927, %v1919
  %v2432 = vpack.c.b16 %v1928, %v1920
  %v2433 = vpack.c.b16 %v1929, %v1921
  %v2434 = vpack.c.b16 %v1930, %v1922
  %v2435 = vpack.c.b16 %v1939, %v1931
  %v2436 = vpack.c.b16 %v1940, %v1932
  %v2437 = vpack.c.b16 %v1941, %v1933
  %v2438 = vpack.c.b16 %v1942, %v1934
  %v2439 = vpack.c.b16 %v1943, %v1935
  %v2440 = vpack.c.b16 %v1944, %v1936
  %v2441 = vpack.c.b16 %v1945, %v1937
  %v2442 = vpack.c.b16 %v1946, %v1938
  %v2443 = vpack.c.b16 %v1955, %v1947
  %v2444 = vpack.c.b16 %v1956, %v1948
  %v2445 = vpack.c.b16 %v1957, %v1949
  %v2446 = vpack.c.b16 %v1958, %v1950
  %v2447 = vpack.c.b16 %v1959, %v1951
  %v2448 = vpack.c.b16 %v1960, %v1952
  %v2449 = vpack.c.b16 %v1961, %v1953
  %v2450 = vpack.c.b16 %v1962, %v1954
  %v2451 = vpack.c.b16 %v1971, %v1963
  %v2452 = vpack.c.b16 %v1972, %v1964
  %v2453 = vpack.c.b16 %v1973, %v1965
  %v2454 = vpack.c.b16 %v1974, %v1966
  %v2455 = vpack.c.b16 %v1975, %v1967
  %v2456 = vpack.c.b16 %v1976, %v1968
  %v2457 = vpack.c.b16 %v1977, %v1969
  %v2458 = vpack.c.b16 %v1978, %v1970
  %v2459 = vpack.c.b16 %v1987, %v1979
  %v2460 = vpack.c.b16 %v1988, %v1980
  %v2461 = vpack.c.b16 %v1989, %v1981
  %v2462 = vpack.c.b16 %v1990, %v1982
  %v2463 = vpack.c.b16 %v1991, %v1983
  %v2464 = vpack.c.b16 %v1992, %v1984
  %v2465 = vpack.c.b16 %v1993, %v1985
  %v2466 = vpack.c.b16 %v1994, %v1986
  %v2467 = vpack.c.b16 %v2003, %v1995
  %v2468 = vpack.c.b16 %v2004, %v1996
  %v2469 = vpack.c.b16 %v2005, %v1997
  %v2470 = vpack.c.b16 %v2006, %v1998
  %v2471 = vpack.c.b16 %v2007, %v1999
  %v2472 = vpack.c.b16 %v2008, %v2000
  %v2473 = vpack.c.b16 %v2009, %v2001
  %v2474 = vpack.c.b16 %v2010, %v2002
  %v2475 = vpack.c.b16 %v2019, %v2011
  %v2476 = vpack.c.b16 %v2020, %v2012
  %v2477 = vpack.c.b16 %v2021, %v2013
  %v2478 = vpack.c.b16 %v2022, %v2014
  %v2479 = vpack.c.b16 %v2023, %v2015
  %v2480 = vpack.c.b16 %v2024, %v2016
  %v2481 = vpack.c.b16 %v2025, %v2017
  %v2482 = vpack.c.b16 %v2026, %v2018
  %v2483 = vpack.c.b16 %v2035, %v2027
  %v2484 = vpack.c.b16 %v2036, %v2028
  %v2485 = vpack.c.b16 %v2037, %v2029
  %v2486 = vpack.c.b16 %v2038, %v2030
  %v2487 = vpack.c.b16 %v2039, %v2031
  %v2488 = vpack.c.b16 %v2040, %v2032
  %v2489 = vpack.c.b16 %v2041, %v2033
  %v2490 = vpack.c.b16 %v2042, %v2034
  %2939 = vmatprep.subr.bf16.mxu0 %v2044
  %2940 = vmatpush1.bf16.msra.mxu0 %v2043
  %2941 = vmatprep.subr.bf16.mxu0 %v2052
  %2942 = vmatpush1.bf16.msra.mxu0 %v2051
  %2943 = vmatprep.subr.bf16.mxu0 %v2060
  %2944 = vmatpush1.bf16.msra.mxu0 %v2059
  %2945 = vmatprep.subr.bf16.mxu0 %v2068
  %2946 = vmatpush1.bf16.msra.mxu0 %v2067
  %2947 = vmatprep.subr.bf16.mxu0 %v2076
  %2948 = vmatpush1.bf16.msra.mxu0 %v2075
  %2949 = vmatprep.subr.bf16.mxu0 %v2084
  %2950 = vmatpush1.bf16.msra.mxu0 %v2083
  %2951 = vmatprep.subr.bf16.mxu0 %v2092
  %2952 = vmatpush1.bf16.msra.mxu0 %v2091
  %2953 = vmatprep.subr.bf16.mxu0 %v2100
  %2954 = vmatpush1.bf16.msra.mxu0 %v2099
  %2955 = vmatprep.subr.bf16.mxu0 %v2108
  %2956 = vmatpush1.bf16.msra.mxu0 %v2107
  %2957 = vmatprep.subr.bf16.mxu0 %v2116
  %2958 = vmatpush1.bf16.msra.mxu0 %v2115
  %2959 = vmatprep.subr.bf16.mxu0 %v2124
  %2960 = vmatpush1.bf16.msra.mxu0 %v2123
  %2961 = vmatprep.subr.bf16.mxu0 %v2132
  %2962 = vmatpush1.bf16.msra.mxu0 %v2131
  %2963 = vmatprep.subr.bf16.mxu0 %v2140
  %2964 = vmatpush1.bf16.msra.mxu0 %v2139
  %2965 = vmatprep.subr.bf16.mxu0 %v2148
  %2966 = vmatpush1.bf16.msra.mxu0 %v2147
  %2967 = vmatprep.subr.bf16.mxu0 %v2156
  %2968 = vmatpush1.bf16.msra.mxu0 %v2155
  %2969 = vmatprep.subr.bf16.mxu0 %v2164
  %2970 = vmatpush1.bf16.msra.mxu0 %v2163
  %2971 = vmatprep.mubr.bf16.mxu0 %v644
  %2972 = vmatmul.mubr.bf16.gmra.mrb[0].mxu0 %v643
  %v2973 = vpop.f32.mrb[0].mxu0
  %v2974 = vadd.f32 %v518, %v2973
  %v2975 = vpop.f32.mrb[0].mxu0
  %v2976 = vadd.f32 %v522, %v2975
  %v2977 = vpop.f32.mrb[0].mxu0
  %v2978 = vadd.f32 %v518, %v2977
  %v2979 = vpop.f32.mrb[0].mxu0
  %v2980 = vadd.f32 %v522, %v2979
  %2981 = vmatprep.mubr.bf16.mxu0 %v651
  %2982 = vmatmul.mubr.bf16.gmra.mrb[0].mxu0 %v650
  %v2983 = vpop.f32.mrb[0].mxu0
  %v2984 = vadd.f32 %v518, %v2983
  %v2985 = vpop.f32.mrb[0].mxu0
  %v2986 = vadd.f32 %v522, %v2985
  %v2987 = vpop.f32.mrb[0].mxu0
  %v2988 = vadd.f32 %v518, %v2987
  %v2989 = vpop.f32.mrb[0].mxu0
  %v2990 = vadd.f32 %v522, %v2989
  %2991 = vmatprep.mubr.bf16.mxu0 %v658
  %2992 = vmatmul.mubr.bf16.gmra.mrb[0].mxu0 %v657
  %v2993 = vpop.f32.mrb[0].mxu0
  %v2994 = vadd.f32 %v518, %v2993
  %v2995 = vpop.f32.mrb[0].mxu0
  %v2996 = vadd.f32 %v522, %v2995
  %v2997 = vpop.f32.mrb[0].mxu0
  %v2998 = vadd.f32 %v518, %v2997
  %v2999 = vpop.f32.mrb[0].mxu0
  %v3000 = vadd.f32 %v522, %v2999
  %3001 = vmatprep.mubr.bf16.mxu0 %v665
  %3002 = vmatmul.mubr.bf16.gmra.mrb[0].mxu0 %v664
  %v3003 = vpop.f32.mrb[0].mxu0
  %v3004 = vadd.f32 %v518, %v3003
  %v3005 = vpop.f32.mrb[0].mxu0
  %v3006 = vadd.f32 %v522, %v3005
  %v3007 = vpop.f32.mrb[0].mxu0
  %v3008 = vadd.f32 %v518, %v3007
  %v3009 = vpop.f32.mrb[0].mxu0
  %v3010 = vadd.f32 %v522, %v3009
  %3011 = vdwg.mxu0
  %3012 = vmatprep.subr.bf16.mxu0 %v2172
  %3013 = vmatpush1.bf16.msra.mxu0 %v2171
  %3014 = vmatprep.subr.bf16.mxu0 %v2180
  %3015 = vmatpush1.bf16.msra.mxu0 %v2179
  %3016 = vmatprep.subr.bf16.mxu0 %v2188
  %3017 = vmatpush1.bf16.msra.mxu0 %v2187
  %3018 = vmatprep.subr.bf16.mxu0 %v2196
  %3019 = vmatpush1.bf16.msra.mxu0 %v2195
  %3020 = vmatprep.subr.bf16.mxu0 %v2204
  %3021 = vmatpush1.bf16.msra.mxu0 %v2203
  %3022 = vmatprep.subr.bf16.mxu0 %v2212
  %3023 = vmatpush1.bf16.msra.mxu0 %v2211
  %3024 = vmatprep.subr.bf16.mxu0 %v2220
  %3025 = vmatpush1.bf16.msra.mxu0 %v2219
  %3026 = vmatprep.subr.bf16.mxu0 %v2228
  %3027 = vmatpush1.bf16.msra.mxu0 %v2227
  %3028 = vmatprep.subr.bf16.mxu0 %v2236
  %3029 = vmatpush1.bf16.msra.mxu0 %v2235
  %3030 = vmatprep.subr.bf16.mxu0 %v2244
  %3031 = vmatpush1.bf16.msra.mxu0 %v2243
  %3032 = vmatprep.subr.bf16.mxu0 %v2252
  %3033 = vmatpush1.bf16.msra.mxu0 %v2251
  %3034 = vmatprep.subr.bf16.mxu0 %v2260
  %3035 = vmatpush1.bf16.msra.mxu0 %v2259
  %3036 = vmatprep.subr.bf16.mxu0 %v2268
  %3037 = vmatpush1.bf16.msra.mxu0 %v2267
  %3038 = vmatprep.subr.bf16.mxu0 %v2276
  %3039 = vmatpush1.bf16.msra.mxu0 %v2275
  %3040 = vmatprep.subr.bf16.mxu0 %v2284
  %3041 = vmatpush1.bf16.msra.mxu0 %v2283
  %3042 = vmatprep.subr.bf16.mxu0 %v2292
  %3043 = vmatpush1.bf16.msra.mxu0 %v2291
  %3044 = vmatprep.mubr.bf16.mxu0 %v646
  %3045 = vmatmul.mubr.bf16.gmra.mrb[0].mxu0 %v645
  %v3046 = vpop.f32.mrb[0].mxu0
  %v3047 = vadd.f32 %v2974, %v3046
  %v3048 = vpop.f32.mrb[0].mxu0
  %v3049 = vadd.f32 %v2976, %v3048
  %v3050 = vpop.f32.mrb[0].mxu0
  %v3051 = vadd.f32 %v2978, %v3050
  %v3052 = vpop.f32.mrb[0].mxu0
  %v3053 = vadd.f32 %v2980, %v3052
  %3054 = vmatprep.mubr.bf16.mxu0 %v653
  %3055 = vmatmul.mubr.bf16.gmra.mrb[0].mxu0 %v652
  %v3056 = vpop.f32.mrb[0].mxu0
  %v3057 = vadd.f32 %v2984, %v3056
  %v3058 = vpop.f32.mrb[0].mxu0
  %v3059 = vadd.f32 %v2986, %v3058
  %v3060 = vpop.f32.mrb[0].mxu0
  %v3061 = vadd.f32 %v2988, %v3060
  %v3062 = vpop.f32.mrb[0].mxu0
  %v3063 = vadd.f32 %v2990, %v3062
  %3064 = vmatprep.mubr.bf16.mxu0 %v660
  %3065 = vmatmul.mubr.bf16.gmra.mrb[0].mxu0 %v659
  %v3066 = vpop.f32.mrb[0].mxu0
  %v3067 = vadd.f32 %v2994, %v3066
  %v3068 = vpop.f32.mrb[0].mxu0
  %v3069 = vadd.f32 %v2996, %v3068
  %v3070 = vpop.f32.mrb[0].mxu0
  %v3071 = vadd.f32 %v2998, %v3070
  %v3072 = vpop.f32.mrb[0].mxu0
  %v3073 = vadd.f32 %v3000, %v3072
  %3074 = vmatprep.mubr.bf16.mxu0 %v667
  %3075 = vmatmul.mubr.bf16.gmra.mrb[0].mxu0 %v666
  %v3076 = vpop.f32.mrb[0].mxu0
  %v3077 = vadd.f32 %v3004, %v3076
  %v3078 = vpop.f32.mrb[0].mxu0
  %v3079 = vadd.f32 %v3006, %v3078
  %v3080 = vpop.f32.mrb[0].mxu0
  %v3081 = vadd.f32 %v3008, %v3080
  %v3082 = vpop.f32.mrb[0].mxu0
  %v3083 = vadd.f32 %v3010, %v3082
  %3084 = vdwg.mxu0
  %3085 = vmatprep.subr.bf16.mxu0 %v2300
  %3086 = vmatpush1.bf16.msra.mxu0 %v2299
  %3087 = vmatprep.subr.bf16.mxu0 %v2308
  %3088 = vmatpush1.bf16.msra.mxu0 %v2307
  %3089 = vmatprep.subr.bf16.mxu0 %v2316
  %3090 = vmatpush1.bf16.msra.mxu0 %v2315
  %3091 = vmatprep.subr.bf16.mxu0 %v2324
  %3092 = vmatpush1.bf16.msra.mxu0 %v2323
  %3093 = vmatprep.subr.bf16.mxu0 %v2332
  %3094 = vmatpush1.bf16.msra.mxu0 %v2331
  %3095 = vmatprep.subr.bf16.mxu0 %v2340
  %3096 = vmatpush1.bf16.msra.mxu0 %v2339
  %3097 = vmatprep.subr.bf16.mxu0 %v2348
  %3098 = vmatpush1.bf16.msra.mxu0 %v2347
  %3099 = vmatprep.subr.bf16.mxu0 %v2356
  %3100 = vmatpush1.bf16.msra.mxu0 %v2355
  %3101 = vmatprep.subr.bf16.mxu0 %v2364
  %3102 = vmatpush1.bf16.msra.mxu0 %v2363
  %3103 = vmatprep.subr.bf16.mxu0 %v2372
  %3104 = vmatpush1.bf16.msra.mxu0 %v2371
  %3105 = vmatprep.subr.bf16.mxu0 %v2380
  %3106 = vmatpush1.bf16.msra.mxu0 %v2379
  %3107 = vmatprep.subr.bf16.mxu0 %v2388
  %3108 = vmatpush1.bf16.msra.mxu0 %v2387
  %3109 = vmatprep.subr.bf16.mxu0 %v2396
  %3110 = vmatpush1.bf16.msra.mxu0 %v2395
  %3111 = vmatprep.subr.bf16.mxu0 %v2404
  %3112 = vmatpush1.bf16.msra.mxu0 %v2403
  %3113 = vmatprep.subr.bf16.mxu0 %v2412
  %3114 = vmatpush1.bf16.msra.mxu0 %v2411
  %3115 = vmatprep.subr.bf16.mxu0 %v2420
  %3116 = vmatpush1.bf16.msra.mxu0 %v2419
  %3117 = vmatprep.mubr.bf16.mxu0 %v648
  %3118 = vmatmul.mubr.bf16.gmra.mrb[0].mxu0 %v647
  %v3119 = vpop.f32.mrb[0].mxu0
  %v3120 = vadd.f32 %v3047, %v3119
  %v3121 = vpop.f32.mrb[0].mxu0
  %v3122 = vadd.f32 %v3049, %v3121
  %v3123 = vpop.f32.mrb[0].mxu0
  %v3124 = vadd.f32 %v3051, %v3123
  %v3125 = vpop.f32.mrb[0].mxu0
  %v3126 = vadd.f32 %v3053, %v3125
  %3127 = vmatprep.mubr.bf16.mxu0 %v655
  %3128 = vmatmul.mubr.bf16.gmra.mrb[0].mxu0 %v654
  %v3129 = vpop.f32.mrb[0].mxu0
  %v3130 = vadd.f32 %v3057, %v3129
  %v3131 = vpop.f32.mrb[0].mxu0
  %v3132 = vadd.f32 %v3059, %v3131
  %v3133 = vpop.f32.mrb[0].mxu0
  %v3134 = vadd.f32 %v3061, %v3133
  %v3135 = vpop.f32.mrb[0].mxu0
  %v3136 = vadd.f32 %v3063, %v3135
  %3137 = vmatprep.mubr.bf16.mxu0 %v662
  %3138 = vmatmul.mubr.bf16.gmra.mrb[0].mxu0 %v661
  %v3139 = vpop.f32.mrb[0].mxu0
  %v3140 = vadd.f32 %v3067, %v3139
  %v3141 = vpop.f32.mrb[0].mxu0
  %v3142 = vadd.f32 %v3069, %v3141
  %v3143 = vpop.f32.mrb[0].mxu0
  %v3144 = vadd.f32 %v3071, %v3143
  %v3145 = vpop.f32.mrb[0].mxu0
  %v3146 = vadd.f32 %v3073, %v3145
  %3147 = vmatprep.mubr.bf16.mxu0 %v669
  %3148 = vmatmul.mubr.bf16.gmra.mrb[0].mxu0 %v668
  %v3149 = vpop.f32.mrb[0].mxu0
  %v3150 = vadd.f32 %v3077, %v3149
  %v3151 = vpop.f32.mrb[0].mxu0
  %v3152 = vadd.f32 %v3079, %v3151
  %v3153 = vpop.f32.mrb[0].mxu0
  %v3154 = vadd.f32 %v3081, %v3153
  %v3155 = vpop.f32.mrb[0].mxu0
  %v3156 = vadd.f32 %v3083, %v3155
  %3157 = vdwg.mxu0
  %3158 = vmatprep.subr.bf16.mxu0 %v2428
  %3159 = vmatpush1.bf16.msra.mxu0 %v2427
  %3160 = vmatprep.subr.bf16.mxu0 %v2436
  %3161 = vmatpush1.bf16.msra.mxu0 %v2435
  %3162 = vmatprep.subr.bf16.mxu0 %v2444
  %3163 = vmatpush1.bf16.msra.mxu0 %v2443
  %3164 = vmatprep.subr.bf16.mxu0 %v2452
  %3165 = vmatpush1.bf16.msra.mxu0 %v2451
  %3166 = vmatprep.subr.bf16.mxu0 %v2460
  %3167 = vmatpush1.bf16.msra.mxu0 %v2459
  %3168 = vmatprep.subr.bf16.mxu0 %v2468
  %3169 = vmatpush1.bf16.msra.mxu0 %v2467
  %3170 = vmatprep.subr.bf16.mxu0 %v2476
  %3171 = vmatpush1.bf16.msra.mxu0 %v2475
  %3172 = vmatprep.subr.bf16.mxu0 %v2484
  %3173 = vmatpush1.bf16.msra.mxu0 %v2483
  %3174 = vmatprep.subr.bf16.mxu0 0
  %3175 = vmatpush1.bf16.msra.mxu0 0
  %3176 = vmatprep.subr.bf16.mxu0 0
  %3177 = vmatpush1.bf16.msra.mxu0 0
  %3178 = vmatprep.subr.bf16.mxu0 0
  %3179 = vmatpush1.bf16.msra.mxu0 0
  %3180 = vmatprep.subr.bf16.mxu0 0
  %3181 = vmatpush1.bf16.msra.mxu0 0
  %3182 = vmatprep.subr.bf16.mxu0 0
  %3183 = vmatpush1.bf16.msra.mxu0 0
  %3184 = vmatprep.subr.bf16.mxu0 0
  %3185 = vmatpush1.bf16.msra.mxu0 0
  %3186 = vmatprep.subr.bf16.mxu0 0
  %3187 = vmatpush1.bf16.msra.mxu0 0
  %3188 = vmatprep.subr.bf16.mxu0 0
  %3189 = vmatpush1.bf16.msra.mxu0 0
  %3190 = vmatprep.mubr.bf16.mxu0 0
  %3191 = vmatmul.mubr.bf16.gmra.mrb[0].mxu0 %v649
  %v3192 = vpop.f32.mrb[0].mxu0
  %v3193 = vadd.f32 %v3120, %v3192
  %v3194 = vpop.f32.mrb[0].mxu0
  %v3195 = vadd.f32 %v3122, %v3194
  %v3196 = vpop.f32.mrb[0].mxu0
  %v3197 = vadd.f32 %v3124, %v3196
  %v3198 = vpop.f32.mrb[0].mxu0
  %v3199 = vadd.f32 %v3126, %v3198
  %3200 = vmatprep.mubr.bf16.mxu0 0
  %3201 = vmatmul.mubr.bf16.gmra.mrb[0].mxu0 %v656
  %v3202 = vpop.f32.mrb[0].mxu0
  %v3203 = vadd.f32 %v3130, %v3202
  %v3204 = vpop.f32.mrb[0].mxu0
  %v3205 = vadd.f32 %v3132, %v3204
  %v3206 = vpop.f32.mrb[0].mxu0
  %v3207 = vadd.f32 %v3134, %v3206
  %v3208 = vpop.f32.mrb[0].mxu0
  %v3209 = vadd.f32 %v3136, %v3208
  %3210 = vmatprep.mubr.bf16.mxu0 0
  %3211 = vmatmul.mubr.bf16.gmra.mrb[0].mxu0 %v663
  %v3212 = vpop.f32.mrb[0].mxu0
  %v3213 = vadd.f32 %v3140, %v3212
  %v3214 = vpop.f32.mrb[0].mxu0
  %v3215 = vadd.f32 %v3142, %v3214
  %v3216 = vpop.f32.mrb[0].mxu0
  %v3217 = vadd.f32 %v3144, %v3216
  %v3218 = vpop.f32.mrb[0].mxu0
  %v3219 = vadd.f32 %v3146, %v3218
  %3220 = vmatprep.mubr.bf16.mxu0 0
  %3221 = vmatmul.mubr.bf16.gmra.mrb[0].mxu0 %v670
  %v3222 = vpop.f32.mrb[0].mxu0
  %v3223 = vadd.f32 %v3150, %v3222
  %v3224 = vpop.f32.mrb[0].mxu0
  %v3225 = vadd.f32 %v3152, %v3224
  %v3226 = vpop.f32.mrb[0].mxu0
  %v3227 = vadd.f32 %v3154, %v3226
  %v3228 = vpop.f32.mrb[0].mxu0
  %v3229 = vadd.f32 %v3156, %v3228
  %3230 = vdwg.mxu0
  %3231 = vmatprep.subr.bf16.mxu0 %v2046
  %3232 = vmatpush1.bf16.msra.mxu0 %v2045
  %3233 = vmatprep.subr.bf16.mxu0 %v2054
  %3234 = vmatpush1.bf16.msra.mxu0 %v2053
  %3235 = vmatprep.subr.bf16.mxu0 %v2062
  %3236 = vmatpush1.bf16.msra.mxu0 %v2061
  %3237 = vmatprep.subr.bf16.mxu0 %v2070
  %3238 = vmatpush1.bf16.msra.mxu0 %v2069
  %3239 = vmatprep.subr.bf16.mxu0 %v2078
  %3240 = vmatpush1.bf16.msra.mxu0 %v2077
  %3241 = vmatprep.subr.bf16.mxu0 %v2086
  %3242 = vmatpush1.bf16.msra.mxu0 %v2085
  %3243 = vmatprep.subr.bf16.mxu0 %v2094
  %3244 = vmatpush1.bf16.msra.mxu0 %v2093
  %3245 = vmatprep.subr.bf16.mxu0 %v2102
  %3246 = vmatpush1.bf16.msra.mxu0 %v2101
  %3247 = vmatprep.subr.bf16.mxu0 %v2110
  %3248 = vmatpush1.bf16.msra.mxu0 %v2109
  %3249 = vmatprep.subr.bf16.mxu0 %v2118
  %3250 = vmatpush1.bf16.msra.mxu0 %v2117
  %3251 = vmatprep.subr.bf16.mxu0 %v2126
  %3252 = vmatpush1.bf16.msra.mxu0 %v2125
  %3253 = vmatprep.subr.bf16.mxu0 %v2134
  %3254 = vmatpush1.bf16.msra.mxu0 %v2133
  %3255 = vmatprep.subr.bf16.mxu0 %v2142
  %3256 = vmatpush1.bf16.msra.mxu0 %v2141
  %3257 = vmatprep.subr.bf16.mxu0 %v2150
  %3258 = vmatpush1.bf16.msra.mxu0 %v2149
  %3259 = vmatprep.subr.bf16.mxu0 %v2158
  %3260 = vmatpush1.bf16.msra.mxu0 %v2157
  %3261 = vmatprep.subr.bf16.mxu0 %v2166
  %3262 = vmatpush1.bf16.msra.mxu0 %v2165
  %3263 = vmatprep.mubr.bf16.mxu0 %v644
  %3264 = vmatmul.mubr.bf16.gmra.mrb[0].mxu0 %v643
  %v3265 = vpop.f32.mrb[0].mxu0
  %v3266 = vadd.f32 %v526, %v3265
  %v3267 = vpop.f32.mrb[0].mxu0
  %v3268 = vadd.f32 %v530, %v3267
  %v3269 = vpop.f32.mrb[0].mxu0
  %v3270 = vadd.f32 %v526, %v3269
  %v3271 = vpop.f32.mrb[0].mxu0
  %v3272 = vadd.f32 %v530, %v3271
  %3273 = vmatprep.mubr.bf16.mxu0 %v651
  %3274 = vmatmul.mubr.bf16.gmra.mrb[0].mxu0 %v650
  %v3275 = vpop.f32.mrb[0].mxu0
  %v3276 = vadd.f32 %v526, %v3275
  %v3277 = vpop.f32.mrb[0].mxu0
  %v3278 = vadd.f32 %v530, %v3277
  %v3279 = vpop.f32.mrb[0].mxu0
  %v3280 = vadd.f32 %v526, %v3279
  %v3281 = vpop.f32.mrb[0].mxu0
  %v3282 = vadd.f32 %v530, %v3281
  %3283 = vmatprep.mubr.bf16.mxu0 %v658
  %3284 = vmatmul.mubr.bf16.gmra.mrb[0].mxu0 %v657
  %v3285 = vpop.f32.mrb[0].mxu0
  %v3286 = vadd.f32 %v526, %v3285
  %v3287 = vpop.f32.mrb[0].mxu0
  %v3288 = vadd.f32 %v530, %v3287
  %v3289 = vpop.f32.mrb[0].mxu0
  %v3290 = vadd.f32 %v526, %v3289
  %v3291 = vpop.f32.mrb[0].mxu0
  %v3292 = vadd.f32 %v530, %v3291
  %3293 = vmatprep.mubr.bf16.mxu0 %v665
  %3294 = vmatmul.mubr.bf16.gmra.mrb[0].mxu0 %v664
  %v3295 = vpop.f32.mrb[0].mxu0
  %v3296 = vadd.f32 %v526, %v3295
  %v3297 = vpop.f32.mrb[0].mxu0
  %v3298 = vadd.f32 %v530, %v3297
  %v3299 = vpop.f32.mrb[0].mxu0
  %v3300 = vadd.f32 %v526, %v3299
  %v3301 = vpop.f32.mrb[0].mxu0
  %v3302 = vadd.f32 %v530, %v3301
  %3303 = vdwg.mxu0
  %3304 = vmatprep.subr.bf16.mxu0 %v2174
  %3305 = vmatpush1.bf16.msra.mxu0 %v2173
  %3306 = vmatprep.subr.bf16.mxu0 %v2182
  %3307 = vmatpush1.bf16.msra.mxu0 %v2181
  %3308 = vmatprep.subr.bf16.mxu0 %v2190
  %3309 = vmatpush1.bf16.msra.mxu0 %v2189
  %3310 = vmatprep.subr.bf16.mxu0 %v2198
  %3311 = vmatpush1.bf16.msra.mxu0 %v2197
  %3312 = vmatprep.subr.bf16.mxu0 %v2206
  %3313 = vmatpush1.bf16.msra.mxu0 %v2205
  %3314 = vmatprep.subr.bf16.mxu0 %v2214
  %3315 = vmatpush1.bf16.msra.mxu0 %v2213
  %3316 = vmatprep.subr.bf16.mxu0 %v2222
  %3317 = vmatpush1.bf16.msra.mxu0 %v2221
  %3318 = vmatprep.subr.bf16.mxu0 %v2230
  %3319 = vmatpush1.bf16.msra.mxu0 %v2229
  %3320 = vmatprep.subr.bf16.mxu0 %v2238
  %3321 = vmatpush1.bf16.msra.mxu0 %v2237
  %3322 = vmatprep.subr.bf16.mxu0 %v2246
  %3323 = vmatpush1.bf16.msra.mxu0 %v2245
  %3324 = vmatprep.subr.bf16.mxu0 %v2254
  %3325 = vmatpush1.bf16.msra.mxu0 %v2253
  %3326 = vmatprep.subr.bf16.mxu0 %v2262
  %3327 = vmatpush1.bf16.msra.mxu0 %v2261
  %3328 = vmatprep.subr.bf16.mxu0 %v2270
  %3329 = vmatpush1.bf16.msra.mxu0 %v2269
  %3330 = vmatprep.subr.bf16.mxu0 %v2278
  %3331 = vmatpush1.bf16.msra.mxu0 %v2277
  %3332 = vmatprep.subr.bf16.mxu0 %v2286
  %3333 = vmatpush1.bf16.msra.mxu0 %v2285
  %3334 = vmatprep.subr.bf16.mxu0 %v2294
  %3335 = vmatpush1.bf16.msra.mxu0 %v2293
  %3336 = vmatprep.mubr.bf16.mxu0 %v646
  %3337 = vmatmul.mubr.bf16.gmra.mrb[0].mxu0 %v645
  %v3338 = vpop.f32.mrb[0].mxu0
  %v3339 = vadd.f32 %v3266, %v3338
  %v3340 = vpop.f32.mrb[0].mxu0
  %v3341 = vadd.f32 %v3268, %v3340
  %v3342 = vpop.f32.mrb[0].mxu0
  %v3343 = vadd.f32 %v3270, %v3342
  %v3344 = vpop.f32.mrb[0].mxu0
  %v3345 = vadd.f32 %v3272, %v3344
  %3346 = vmatprep.mubr.bf16.mxu0 %v653
  %3347 = vmatmul.mubr.bf16.gmra.mrb[0].mxu0 %v652
  %v3348 = vpop.f32.mrb[0].mxu0
  %v3349 = vadd.f32 %v3276, %v3348
  %v3350 = vpop.f32.mrb[0].mxu0
  %v3351 = vadd.f32 %v3278, %v3350
  %v3352 = vpop.f32.mrb[0].mxu0
  %v3353 = vadd.f32 %v3280, %v3352
  %v3354 = vpop.f32.mrb[0].mxu0
  %v3355 = vadd.f32 %v3282, %v3354
  %3356 = vmatprep.mubr.bf16.mxu0 %v660
  %3357 = vmatmul.mubr.bf16.gmra.mrb[0].mxu0 %v659
  %v3358 = vpop.f32.mrb[0].mxu0
  %v3359 = vadd.f32 %v3286, %v3358
  %v3360 = vpop.f32.mrb[0].mxu0
  %v3361 = vadd.f32 %v3288, %v3360
  %v3362 = vpop.f32.mrb[0].mxu0
  %v3363 = vadd.f32 %v3290, %v3362
  %v3364 = vpop.f32.mrb[0].mxu0
  %v3365 = vadd.f32 %v3292, %v3364
  %3366 = vmatprep.mubr.bf16.mxu0 %v667
  %3367 = vmatmul.mubr.bf16.gmra.mrb[0].mxu0 %v666
  %v3368 = vpop.f32.mrb[0].mxu0
  %v3369 = vadd.f32 %v3296, %v3368
  %v3370 = vpop.f32.mrb[0].mxu0
  %v3371 = vadd.f32 %v3298, %v3370
  %v3372 = vpop.f32.mrb[0].mxu0
  %v3373 = vadd.f32 %v3300, %v3372
  %v3374 = vpop.f32.mrb[0].mxu0
  %v3375 = vadd.f32 %v3302, %v3374
  %3376 = vdwg.mxu0
  %3377 = vmatprep.subr.bf16.mxu0 %v2302
  %3378 = vmatpush1.bf16.msra.mxu0 %v2301
  %3379 = vmatprep.subr.bf16.mxu0 %v2310
  %3380 = vmatpush1.bf16.msra.mxu0 %v2309
  %3381 = vmatprep.subr.bf16.mxu0 %v2318
  %3382 = vmatpush1.bf16.msra.mxu0 %v2317
  %3383 = vmatprep.subr.bf16.mxu0 %v2326
  %3384 = vmatpush1.bf16.msra.mxu0 %v2325
  %3385 = vmatprep.subr.bf16.mxu0 %v2334
  %3386 = vmatpush1.bf16.msra.mxu0 %v2333
  %3387 = vmatprep.subr.bf16.mxu0 %v2342
  %3388 = vmatpush1.bf16.msra.mxu0 %v2341
  %3389 = vmatprep.subr.bf16.mxu0 %v2350
  %3390 = vmatpush1.bf16.msra.mxu0 %v2349
  %3391 = vmatprep.subr.bf16.mxu0 %v2358
  %3392 = vmatpush1.bf16.msra.mxu0 %v2357
  %3393 = vmatprep.subr.bf16.mxu0 %v2366
  %3394 = vmatpush1.bf16.msra.mxu0 %v2365
  %3395 = vmatprep.subr.bf16.mxu0 %v2374
  %3396 = vmatpush1.bf16.msra.mxu0 %v2373
  %3397 = vmatprep.subr.bf16.mxu0 %v2382
  %3398 = vmatpush1.bf16.msra.mxu0 %v2381
  %3399 = vmatprep.subr.bf16.mxu0 %v2390
  %3400 = vmatpush1.bf16.msra.mxu0 %v2389
  %3401 = vmatprep.subr.bf16.mxu0 %v2398
  %3402 = vmatpush1.bf16.msra.mxu0 %v2397
  %3403 = vmatprep.subr.bf16.mxu0 %v2406
  %3404 = vmatpush1.bf16.msra.mxu0 %v2405
  %3405 = vmatprep.subr.bf16.mxu0 %v2414
  %3406 = vmatpush1.bf16.msra.mxu0 %v2413
  %3407 = vmatprep.subr.bf16.mxu0 %v2422
  %3408 = vmatpush1.bf16.msra.mxu0 %v2421
  %3409 = vmatprep.mubr.bf16.mxu0 %v648
  %3410 = vmatmul.mubr.bf16.gmra.mrb[0].mxu0 %v647
  %v3411 = vpop.f32.mrb[0].mxu0
  %v3412 = vadd.f32 %v3339, %v3411
  %v3413 = vpop.f32.mrb[0].mxu0
  %v3414 = vadd.f32 %v3341, %v3413
  %v3415 = vpop.f32.mrb[0].mxu0
  %v3416 = vadd.f32 %v3343, %v3415
  %v3417 = vpop.f32.mrb[0].mxu0
  %v3418 = vadd.f32 %v3345, %v3417
  %3419 = vmatprep.mubr.bf16.mxu0 %v655
  %3420 = vmatmul.mubr.bf16.gmra.mrb[0].mxu0 %v654
  %v3421 = vpop.f32.mrb[0].mxu0
  %v3422 = vadd.f32 %v3349, %v3421
  %v3423 = vpop.f32.mrb[0].mxu0
  %v3424 = vadd.f32 %v3351, %v3423
  %v3425 = vpop.f32.mrb[0].mxu0
  %v3426 = vadd.f32 %v3353, %v3425
  %v3427 = vpop.f32.mrb[0].mxu0
  %v3428 = vadd.f32 %v3355, %v3427
  %3429 = vmatprep.mubr.bf16.mxu0 %v662
  %3430 = vmatmul.mubr.bf16.gmra.mrb[0].mxu0 %v661
  %v3431 = vpop.f32.mrb[0].mxu0
  %v3432 = vadd.f32 %v3359, %v3431
  %v3433 = vpop.f32.mrb[0].mxu0
  %v3434 = vadd.f32 %v3361, %v3433
  %v3435 = vpop.f32.mrb[0].mxu0
  %v3436 = vadd.f32 %v3363, %v3435
  %v3437 = vpop.f32.mrb[0].mxu0
  %v3438 = vadd.f32 %v3365, %v3437
  %3439 = vmatprep.mubr.bf16.mxu0 %v669
  %3440 = vmatmul.mubr.bf16.gmra.mrb[0].mxu0 %v668
  %v3441 = vpop.f32.mrb[0].mxu0
  %v3442 = vadd.f32 %v3369, %v3441
  %v3443 = vpop.f32.mrb[0].mxu0
  %v3444 = vadd.f32 %v3371, %v3443
  %v3445 = vpop.f32.mrb[0].mxu0
  %v3446 = vadd.f32 %v3373, %v3445
  %v3447 = vpop.f32.mrb[0].mxu0
  %v3448 = vadd.f32 %v3375, %v3447
  %3449 = vdwg.mxu0
  %3450 = vmatprep.subr.bf16.mxu0 %v2430
  %3451 = vmatpush1.bf16.msra.mxu0 %v2429
  %3452 = vmatprep.subr.bf16.mxu0 %v2438
  %3453 = vmatpush1.bf16.msra.mxu0 %v2437
  %3454 = vmatprep.subr.bf16.mxu0 %v2446
  %3455 = vmatpush1.bf16.msra.mxu0 %v2445
  %3456 = vmatprep.subr.bf16.mxu0 %v2454
  %3457 = vmatpush1.bf16.msra.mxu0 %v2453
  %3458 = vmatprep.subr.bf16.mxu0 %v2462
  %3459 = vmatpush1.bf16.msra.mxu0 %v2461
  %3460 = vmatprep.subr.bf16.mxu0 %v2470
  %3461 = vmatpush1.bf16.msra.mxu0 %v2469
  %3462 = vmatprep.subr.bf16.mxu0 %v2478
  %3463 = vmatpush1.bf16.msra.mxu0 %v2477
  %3464 = vmatprep.subr.bf16.mxu0 %v2486
  %3465 = vmatpush1.bf16.msra.mxu0 %v2485
  %3466 = vmatprep.subr.bf16.mxu0 0
  %3467 = vmatpush1.bf16.msra.mxu0 0
  %3468 = vmatprep.subr.bf16.mxu0 0
  %3469 = vmatpush1.bf16.msra.mxu0 0
  %3470 = vmatprep.subr.bf16.mxu0 0
  %3471 = vmatpush1.bf16.msra.mxu0 0
  %3472 = vmatprep.subr.bf16.mxu0 0
  %3473 = vmatpush1.bf16.msra.mxu0 0
  %3474 = vmatprep.subr.bf16.mxu0 0
  %3475 = vmatpush1.bf16.msra.mxu0 0
  %3476 = vmatprep.subr.bf16.mxu0 0
  %3477 = vmatpush1.bf16.msra.mxu0 0
  %3478 = vmatprep.subr.bf16.mxu0 0
  %3479 = vmatpush1.bf16.msra.mxu0 0
  %3480 = vmatprep.subr.bf16.mxu0 0
  %3481 = vmatpush1.bf16.msra.mxu0 0
  %3482 = vmatprep.mubr.bf16.mxu0 0
  %3483 = vmatmul.mubr.bf16.gmra.mrb[0].mxu0 %v649
  %v3484 = vpop.f32.mrb[0].mxu0
  %v3485 = vadd.f32 %v3412, %v3484
  %v3486 = vpop.f32.mrb[0].mxu0
  %v3487 = vadd.f32 %v3414, %v3486
  %v3488 = vpop.f32.mrb[0].mxu0
  %v3489 = vadd.f32 %v3416, %v3488
  %v3490 = vpop.f32.mrb[0].mxu0
  %v3491 = vadd.f32 %v3418, %v3490
  %3492 = vmatprep.mubr.bf16.mxu0 0
  %3493 = vmatmul.mubr.bf16.gmra.mrb[0].mxu0 %v656
  %v3494 = vpop.f32.mrb[0].mxu0
  %v3495 = vadd.f32 %v3422, %v3494
  %v3496 = vpop.f32.mrb[0].mxu0
  %v3497 = vadd.f32 %v3424, %v3496
  %v3498 = vpop.f32.mrb[0].mxu0
  %v3499 = vadd.f32 %v3426, %v3498
  %v3500 = vpop.f32.mrb[0].mxu0
  %v3501 = vadd.f32 %v3428, %v3500
  %3502 = vmatprep.mubr.bf16.mxu0 0
  %3503 = vmatmul.mubr.bf16.gmra.mrb[0].mxu0 %v663
  %v3504 = vpop.f32.mrb[0].mxu0
  %v3505 = vadd.f32 %v3432, %v3504
  %v3506 = vpop.f32.mrb[0].mxu0
  %v3507 = vadd.f32 %v3434, %v3506
  %v3508 = vpop.f32.mrb[0].mxu0
  %v3509 = vadd.f32 %v3436, %v3508
  %v3510 = vpop.f32.mrb[0].mxu0
  %v3511 = vadd.f32 %v3438, %v3510
  %3512 = vmatprep.mubr.bf16.mxu0 0
  %3513 = vmatmul.mubr.bf16.gmra.mrb[0].mxu0 %v670
  %v3514 = vpop.f32.mrb[0].mxu0
  %v3515 = vadd.f32 %v3442, %v3514
  %v3516 = vpop.f32.mrb[0].mxu0
  %v3517 = vadd.f32 %v3444, %v3516
  %v3518 = vpop.f32.mrb[0].mxu0
  %v3519 = vadd.f32 %v3446, %v3518
  %v3520 = vpop.f32.mrb[0].mxu0
  %v3521 = vadd.f32 %v3448, %v3520
  %3522 = vdwg.mxu0
  %3523 = vmatprep.subr.bf16.mxu0 %v2048
  %3524 = vmatpush1.bf16.msra.mxu0 %v2047
  %3525 = vmatprep.subr.bf16.mxu0 %v2056
  %3526 = vmatpush1.bf16.msra.mxu0 %v2055
  %3527 = vmatprep.subr.bf16.mxu0 %v2064
  %3528 = vmatpush1.bf16.msra.mxu0 %v2063
  %3529 = vmatprep.subr.bf16.mxu0 %v2072
  %3530 = vmatpush1.bf16.msra.mxu0 %v2071
  %3531 = vmatprep.subr.bf16.mxu0 %v2080
  %3532 = vmatpush1.bf16.msra.mxu0 %v2079
  %3533 = vmatprep.subr.bf16.mxu0 %v2088
  %3534 = vmatpush1.bf16.msra.mxu0 %v2087
  %3535 = vmatprep.subr.bf16.mxu0 %v2096
  %3536 = vmatpush1.bf16.msra.mxu0 %v2095
  %3537 = vmatprep.subr.bf16.mxu0 %v2104
  %3538 = vmatpush1.bf16.msra.mxu0 %v2103
  %3539 = vmatprep.subr.bf16.mxu0 %v2112
  %3540 = vmatpush1.bf16.msra.mxu0 %v2111
  %3541 = vmatprep.subr.bf16.mxu0 %v2120
  %3542 = vmatpush1.bf16.msra.mxu0 %v2119
  %3543 = vmatprep.subr.bf16.mxu0 %v2128
  %3544 = vmatpush1.bf16.msra.mxu0 %v2127
  %3545 = vmatprep.subr.bf16.mxu0 %v2136
  %3546 = vmatpush1.bf16.msra.mxu0 %v2135
  %3547 = vmatprep.subr.bf16.mxu0 %v2144
  %3548 = vmatpush1.bf16.msra.mxu0 %v2143
  %3549 = vmatprep.subr.bf16.mxu0 %v2152
  %3550 = vmatpush1.bf16.msra.mxu0 %v2151
  %3551 = vmatprep.subr.bf16.mxu0 %v2160
  %3552 = vmatpush1.bf16.msra.mxu0 %v2159
  %3553 = vmatprep.subr.bf16.mxu0 %v2168
  %3554 = vmatpush1.bf16.msra.mxu0 %v2167
  %3555 = vmatprep.mubr.bf16.mxu0 %v644
  %3556 = vmatmul.mubr.bf16.gmra.mrb[0].mxu0 %v643
  %v3557 = vpop.f32.mrb[0].mxu0
  %v3558 = vadd.f32 %v534, %v3557
  %v3559 = vpop.f32.mrb[0].mxu0
  %v3560 = vadd.f32 %v538, %v3559
  %v3561 = vpop.f32.mrb[0].mxu0
  %v3562 = vadd.f32 %v534, %v3561
  %v3563 = vpop.f32.mrb[0].mxu0
  %v3564 = vadd.f32 %v538, %v3563
  %3565 = vmatprep.mubr.bf16.mxu0 %v651
  %3566 = vmatmul.mubr.bf16.gmra.mrb[0].mxu0 %v650
  %v3567 = vpop.f32.mrb[0].mxu0
  %v3568 = vadd.f32 %v534, %v3567
  %v3569 = vpop.f32.mrb[0].mxu0
  %v3570 = vadd.f32 %v538, %v3569
  %v3571 = vpop.f32.mrb[0].mxu0
  %v3572 = vadd.f32 %v534, %v3571
  %v3573 = vpop.f32.mrb[0].mxu0
  %v3574 = vadd.f32 %v538, %v3573
  %3575 = vmatprep.mubr.bf16.mxu0 %v658
  %3576 = vmatmul.mubr.bf16.gmra.mrb[0].mxu0 %v657
  %v3577 = vpop.f32.mrb[0].mxu0
  %v3578 = vadd.f32 %v534, %v3577
  %v3579 = vpop.f32.mrb[0].mxu0
  %v3580 = vadd.f32 %v538, %v3579
  %v3581 = vpop.f32.mrb[0].mxu0
  %v3582 = vadd.f32 %v534, %v3581
  %v3583 = vpop.f32.mrb[0].mxu0
  %v3584 = vadd.f32 %v538, %v3583
  %3585 = vmatprep.mubr.bf16.mxu0 %v665
  %3586 = vmatmul.mubr.bf16.gmra.mrb[0].mxu0 %v664
  %v3587 = vpop.f32.mrb[0].mxu0
  %v3588 = vadd.f32 %v534, %v3587
  %v3589 = vpop.f32.mrb[0].mxu0
  %v3590 = vadd.f32 %v538, %v3589
  %v3591 = vpop.f32.mrb[0].mxu0
  %v3592 = vadd.f32 %v534, %v3591
  %v3593 = vpop.f32.mrb[0].mxu0
  %v3594 = vadd.f32 %v538, %v3593
  %3595 = vdwg.mxu0
  %3596 = vmatprep.subr.bf16.mxu0 %v2176
  %3597 = vmatpush1.bf16.msra.mxu0 %v2175
  %3598 = vmatprep.subr.bf16.mxu0 %v2184
  %3599 = vmatpush1.bf16.msra.mxu0 %v2183
  %3600 = vmatprep.subr.bf16.mxu0 %v2192
  %3601 = vmatpush1.bf16.msra.mxu0 %v2191
  %3602 = vmatprep.subr.bf16.mxu0 %v2200
  %3603 = vmatpush1.bf16.msra.mxu0 %v2199
  %3604 = vmatprep.subr.bf16.mxu0 %v2208
  %3605 = vmatpush1.bf16.msra.mxu0 %v2207
  %3606 = vmatprep.subr.bf16.mxu0 %v2216
  %3607 = vmatpush1.bf16.msra.mxu0 %v2215
  %3608 = vmatprep.subr.bf16.mxu0 %v2224
  %3609 = vmatpush1.bf16.msra.mxu0 %v2223
  %3610 = vmatprep.subr.bf16.mxu0 %v2232
  %3611 = vmatpush1.bf16.msra.mxu0 %v2231
  %3612 = vmatprep.subr.bf16.mxu0 %v2240
  %3613 = vmatpush1.bf16.msra.mxu0 %v2239
  %3614 = vmatprep.subr.bf16.mxu0 %v2248
  %3615 = vmatpush1.bf16.msra.mxu0 %v2247
  %3616 = vmatprep.subr.bf16.mxu0 %v2256
  %3617 = vmatpush1.bf16.msra.mxu0 %v2255
  %3618 = vmatprep.subr.bf16.mxu0 %v2264
  %3619 = vmatpush1.bf16.msra.mxu0 %v2263
  %3620 = vmatprep.subr.bf16.mxu0 %v2272
  %3621 = vmatpush1.bf16.msra.mxu0 %v2271
  %3622 = vmatprep.subr.bf16.mxu0 %v2280
  %3623 = vmatpush1.bf16.msra.mxu0 %v2279
  %3624 = vmatprep.subr.bf16.mxu0 %v2288
  %3625 = vmatpush1.bf16.msra.mxu0 %v2287
  %3626 = vmatprep.subr.bf16.mxu0 %v2296
  %3627 = vmatpush1.bf16.msra.mxu0 %v2295
  %3628 = vmatprep.mubr.bf16.mxu0 %v646
  %3629 = vmatmul.mubr.bf16.gmra.mrb[0].mxu0 %v645
  %v3630 = vpop.f32.mrb[0].mxu0
  %v3631 = vadd.f32 %v3558, %v3630
  %v3632 = vpop.f32.mrb[0].mxu0
  %v3633 = vadd.f32 %v3560, %v3632
  %v3634 = vpop.f32.mrb[0].mxu0
  %v3635 = vadd.f32 %v3562, %v3634
  %v3636 = vpop.f32.mrb[0].mxu0
  %v3637 = vadd.f32 %v3564, %v3636
  %3638 = vmatprep.mubr.bf16.mxu0 %v653
  %3639 = vmatmul.mubr.bf16.gmra.mrb[0].mxu0 %v652
  %v3640 = vpop.f32.mrb[0].mxu0
  %v3641 = vadd.f32 %v3568, %v3640
  %v3642 = vpop.f32.mrb[0].mxu0
  %v3643 = vadd.f32 %v3570, %v3642
  %v3644 = vpop.f32.mrb[0].mxu0
  %v3645 = vadd.f32 %v3572, %v3644
  %v3646 = vpop.f32.mrb[0].mxu0
  %v3647 = vadd.f32 %v3574, %v3646
  %3648 = vmatprep.mubr.bf16.mxu0 %v660
  %3649 = vmatmul.mubr.bf16.gmra.mrb[0].mxu0 %v659
  %v3650 = vpop.f32.mrb[0].mxu0
  %v3651 = vadd.f32 %v3578, %v3650
  %v3652 = vpop.f32.mrb[0].mxu0
  %v3653 = vadd.f32 %v3580, %v3652
  %v3654 = vpop.f32.mrb[0].mxu0
  %v3655 = vadd.f32 %v3582, %v3654
  %v3656 = vpop.f32.mrb[0].mxu0
  %v3657 = vadd.f32 %v3584, %v3656
  %3658 = vmatprep.mubr.bf16.mxu0 %v667
  %3659 = vmatmul.mubr.bf16.gmra.mrb[0].mxu0 %v666
  %v3660 = vpop.f32.mrb[0].mxu0
  %v3661 = vadd.f32 %v3588, %v3660
  %v3662 = vpop.f32.mrb[0].mxu0
  %v3663 = vadd.f32 %v3590, %v3662
  %v3664 = vpop.f32.mrb[0].mxu0
  %v3665 = vadd.f32 %v3592, %v3664
  %v3666 = vpop.f32.mrb[0].mxu0
  %v3667 = vadd.f32 %v3594, %v3666
  %3668 = vdwg.mxu0
  %3669 = vmatprep.subr.bf16.mxu0 %v2304
  %3670 = vmatpush1.bf16.msra.mxu0 %v2303
  %3671 = vmatprep.subr.bf16.mxu0 %v2312
  %3672 = vmatpush1.bf16.msra.mxu0 %v2311
  %3673 = vmatprep.subr.bf16.mxu0 %v2320
  %3674 = vmatpush1.bf16.msra.mxu0 %v2319
  %3675 = vmatprep.subr.bf16.mxu0 %v2328
  %3676 = vmatpush1.bf16.msra.mxu0 %v2327
  %3677 = vmatprep.subr.bf16.mxu0 %v2336
  %3678 = vmatpush1.bf16.msra.mxu0 %v2335
  %3679 = vmatprep.subr.bf16.mxu0 %v2344
  %3680 = vmatpush1.bf16.msra.mxu0 %v2343
  %3681 = vmatprep.subr.bf16.mxu0 %v2352
  %3682 = vmatpush1.bf16.msra.mxu0 %v2351
  %3683 = vmatprep.subr.bf16.mxu0 %v2360
  %3684 = vmatpush1.bf16.msra.mxu0 %v2359
  %3685 = vmatprep.subr.bf16.mxu0 %v2368
  %3686 = vmatpush1.bf16.msra.mxu0 %v2367
  %3687 = vmatprep.subr.bf16.mxu0 %v2376
  %3688 = vmatpush1.bf16.msra.mxu0 %v2375
  %3689 = vmatprep.subr.bf16.mxu0 %v2384
  %3690 = vmatpush1.bf16.msra.mxu0 %v2383
  %3691 = vmatprep.subr.bf16.mxu0 %v2392
  %3692 = vmatpush1.bf16.msra.mxu0 %v2391
  %3693 = vmatprep.subr.bf16.mxu0 %v2400
  %3694 = vmatpush1.bf16.msra.mxu0 %v2399
  %3695 = vmatprep.subr.bf16.mxu0 %v2408
  %3696 = vmatpush1.bf16.msra.mxu0 %v2407
  %3697 = vmatprep.subr.bf16.mxu0 %v2416
  %3698 = vmatpush1.bf16.msra.mxu0 %v2415
  %3699 = vmatprep.subr.bf16.mxu0 %v2424
  %3700 = vmatpush1.bf16.msra.mxu0 %v2423
  %3701 = vmatprep.mubr.bf16.mxu0 %v648
  %3702 = vmatmul.mubr.bf16.gmra.mrb[0].mxu0 %v647
  %v3703 = vpop.f32.mrb[0].mxu0
  %v3704 = vadd.f32 %v3631, %v3703
  %v3705 = vpop.f32.mrb[0].mxu0
  %v3706 = vadd.f32 %v3633, %v3705
  %v3707 = vpop.f32.mrb[0].mxu0
  %v3708 = vadd.f32 %v3635, %v3707
  %v3709 = vpop.f32.mrb[0].mxu0
  %v3710 = vadd.f32 %v3637, %v3709
  %3711 = vmatprep.mubr.bf16.mxu0 %v655
  %3712 = vmatmul.mubr.bf16.gmra.mrb[0].mxu0 %v654
  %v3713 = vpop.f32.mrb[0].mxu0
  %v3714 = vadd.f32 %v3641, %v3713
  %v3715 = vpop.f32.mrb[0].mxu0
  %v3716 = vadd.f32 %v3643, %v3715
  %v3717 = vpop.f32.mrb[0].mxu0
  %v3718 = vadd.f32 %v3645, %v3717
  %v3719 = vpop.f32.mrb[0].mxu0
  %v3720 = vadd.f32 %v3647, %v3719
  %3721 = vmatprep.mubr.bf16.mxu0 %v662
  %3722 = vmatmul.mubr.bf16.gmra.mrb[0].mxu0 %v661
  %v3723 = vpop.f32.mrb[0].mxu0
  %v3724 = vadd.f32 %v3651, %v3723
  %v3725 = vpop.f32.mrb[0].mxu0
  %v3726 = vadd.f32 %v3653, %v3725
  %v3727 = vpop.f32.mrb[0].mxu0
  %v3728 = vadd.f32 %v3655, %v3727
  %v3729 = vpop.f32.mrb[0].mxu0
  %v3730 = vadd.f32 %v3657, %v3729
  %3731 = vmatprep.mubr.bf16.mxu0 %v669
  %3732 = vmatmul.mubr.bf16.gmra.mrb[0].mxu0 %v668
  %v3733 = vpop.f32.mrb[0].mxu0
  %v3734 = vadd.f32 %v3661, %v3733
  %v3735 = vpop.f32.mrb[0].mxu0
  %v3736 = vadd.f32 %v3663, %v3735
  %v3737 = vpop.f32.mrb[0].mxu0
  %v3738 = vadd.f32 %v3665, %v3737
  %v3739 = vpop.f32.mrb[0].mxu0
  %v3740 = vadd.f32 %v3667, %v3739
  %3741 = vdwg.mxu0
  %3742 = vmatprep.subr.bf16.mxu0 %v2432
  %3743 = vmatpush1.bf16.msra.mxu0 %v2431
  %3744 = vmatprep.subr.bf16.mxu0 %v2440
  %3745 = vmatpush1.bf16.msra.mxu0 %v2439
  %3746 = vmatprep.subr.bf16.mxu0 %v2448
  %3747 = vmatpush1.bf16.msra.mxu0 %v2447
  %3748 = vmatprep.subr.bf16.mxu0 %v2456
  %3749 = vmatpush1.bf16.msra.mxu0 %v2455
  %3750 = vmatprep.subr.bf16.mxu0 %v2464
  %3751 = vmatpush1.bf16.msra.mxu0 %v2463
  %3752 = vmatprep.subr.bf16.mxu0 %v2472
  %3753 = vmatpush1.bf16.msra.mxu0 %v2471
  %3754 = vmatprep.subr.bf16.mxu0 %v2480
  %3755 = vmatpush1.bf16.msra.mxu0 %v2479
  %3756 = vmatprep.subr.bf16.mxu0 %v2488
  %3757 = vmatpush1.bf16.msra.mxu0 %v2487
  %3758 = vmatprep.subr.bf16.mxu0 0
  %3759 = vmatpush1.bf16.msra.mxu0 0
  %3760 = vmatprep.subr.bf16.mxu0 0
  %3761 = vmatpush1.bf16.msra.mxu0 0
  %3762 = vmatprep.subr.bf16.mxu0 0
  %3763 = vmatpush1.bf16.msra.mxu0 0
  %3764 = vmatprep.subr.bf16.mxu0 0
  %3765 = vmatpush1.bf16.msra.mxu0 0
  %3766 = vmatprep.subr.bf16.mxu0 0
  %3767 = vmatpush1.bf16.msra.mxu0 0
  %3768 = vmatprep.subr.bf16.mxu0 0
  %3769 = vmatpush1.bf16.msra.mxu0 0
  %3770 = vmatprep.subr.bf16.mxu0 0
  %3771 = vmatpush1.bf16.msra.mxu0 0
  %3772 = vmatprep.subr.bf16.mxu0 0
  %3773 = vmatpush1.bf16.msra.mxu0 0
  %3774 = vmatprep.mubr.bf16.mxu0 0
  %3775 = vmatmul.mubr.bf16.gmra.mrb[0].mxu0 %v649
  %v3776 = vpop.f32.mrb[0].mxu0
  %v3777 = vadd.f32 %v3704, %v3776
  %v3778 = vpop.f32.mrb[0].mxu0
  %v3779 = vadd.f32 %v3706, %v3778
  %v3780 = vpop.f32.mrb[0].mxu0
  %v3781 = vadd.f32 %v3708, %v3780
  %v3782 = vpop.f32.mrb[0].mxu0
  %v3783 = vadd.f32 %v3710, %v3782
  %3784 = vmatprep.mubr.bf16.mxu0 0
  %3785 = vmatmul.mubr.bf16.gmra.mrb[0].mxu0 %v656
  %v3786 = vpop.f32.mrb[0].mxu0
  %v3787 = vadd.f32 %v3714, %v3786
  %v3788 = vpop.f32.mrb[0].mxu0
  %v3789 = vadd.f32 %v3716, %v3788
  %v3790 = vpop.f32.mrb[0].mxu0
  %v3791 = vadd.f32 %v3718, %v3790
  %v3792 = vpop.f32.mrb[0].mxu0
  %v3793 = vadd.f32 %v3720, %v3792
  %3794 = vmatprep.mubr.bf16.mxu0 0
  %3795 = vmatmul.mubr.bf16.gmra.mrb[0].mxu0 %v663
  %v3796 = vpop.f32.mrb[0].mxu0
  %v3797 = vadd.f32 %v3724, %v3796
  %v3798 = vpop.f32.mrb[0].mxu0
  %v3799 = vadd.f32 %v3726, %v3798
  %v3800 = vpop.f32.mrb[0].mxu0
  %v3801 = vadd.f32 %v3728, %v3800
  %v3802 = vpop.f32.mrb[0].mxu0
  %v3803 = vadd.f32 %v3730, %v3802
  %3804 = vmatprep.mubr.bf16.mxu0 0
  %3805 = vmatmul.mubr.bf16.gmra.mrb[0].mxu0 %v670
  %v3806 = vpop.f32.mrb[0].mxu0
  %v3807 = vadd.f32 %v3734, %v3806
  %v3808 = vpop.f32.mrb[0].mxu0
  %v3809 = vadd.f32 %v3736, %v3808
  %v3810 = vpop.f32.mrb[0].mxu0
  %v3811 = vadd.f32 %v3738, %v3810
  %v3812 = vpop.f32.mrb[0].mxu0
  %v3813 = vadd.f32 %v3740, %v3812
  %3814 = vdwg.mxu0
  %3815 = vmatprep.subr.bf16.mxu0 %v2050
  %3816 = vmatpush1.bf16.msra.mxu0 %v2049
  %3817 = vmatprep.subr.bf16.mxu0 %v2058
  %3818 = vmatpush1.bf16.msra.mxu0 %v2057
  %3819 = vmatprep.subr.bf16.mxu0 %v2066
  %3820 = vmatpush1.bf16.msra.mxu0 %v2065
  %3821 = vmatprep.subr.bf16.mxu0 %v2074
  %3822 = vmatpush1.bf16.msra.mxu0 %v2073
  %3823 = vmatprep.subr.bf16.mxu0 %v2082
  %3824 = vmatpush1.bf16.msra.mxu0 %v2081
  %3825 = vmatprep.subr.bf16.mxu0 %v2090
  %3826 = vmatpush1.bf16.msra.mxu0 %v2089
  %3827 = vmatprep.subr.bf16.mxu0 %v2098
  %3828 = vmatpush1.bf16.msra.mxu0 %v2097
  %3829 = vmatprep.subr.bf16.mxu0 %v2106
  %3830 = vmatpush1.bf16.msra.mxu0 %v2105
  %3831 = vmatprep.subr.bf16.mxu0 %v2114
  %3832 = vmatpush1.bf16.msra.mxu0 %v2113
  %3833 = vmatprep.subr.bf16.mxu0 %v2122
  %3834 = vmatpush1.bf16.msra.mxu0 %v2121
  %3835 = vmatprep.subr.bf16.mxu0 %v2130
  %3836 = vmatpush1.bf16.msra.mxu0 %v2129
  %3837 = vmatprep.subr.bf16.mxu0 %v2138
  %3838 = vmatpush1.bf16.msra.mxu0 %v2137
  %3839 = vmatprep.subr.bf16.mxu0 %v2146
  %3840 = vmatpush1.bf16.msra.mxu0 %v2145
  %3841 = vmatprep.subr.bf16.mxu0 %v2154
  %3842 = vmatpush1.bf16.msra.mxu0 %v2153
  %3843 = vmatprep.subr.bf16.mxu0 %v2162
  %3844 = vmatpush1.bf16.msra.mxu0 %v2161
  %3845 = vmatprep.subr.bf16.mxu0 %v2170
  %3846 = vmatpush1.bf16.msra.mxu0 %v2169
  %3847 = vmatprep.mubr.bf16.mxu0 %v644
  %3848 = vmatmul.mubr.bf16.gmra.mrb[0].mxu0 %v643
  %v3849 = vpop.f32.mrb[0].mxu0
  %v3850 = vadd.f32 %v542, %v3849
  %v3851 = vpop.f32.mrb[0].mxu0
  %v3852 = vadd.f32 %v546, %v3851
  %v3853 = vpop.f32.mrb[0].mxu0
  %v3854 = vadd.f32 %v542, %v3853
  %v3855 = vpop.f32.mrb[0].mxu0
  %v3856 = vadd.f32 %v546, %v3855
  %3857 = vmatprep.mubr.bf16.mxu0 %v651
  %3858 = vmatmul.mubr.bf16.gmra.mrb[0].mxu0 %v650
  %v3859 = vpop.f32.mrb[0].mxu0
  %v3860 = vadd.f32 %v542, %v3859
  %v3861 = vpop.f32.mrb[0].mxu0
  %v3862 = vadd.f32 %v546, %v3861
  %v3863 = vpop.f32.mrb[0].mxu0
  %v3864 = vadd.f32 %v542, %v3863
  %v3865 = vpop.f32.mrb[0].mxu0
  %v3866 = vadd.f32 %v546, %v3865
  %3867 = vmatprep.mubr.bf16.mxu0 %v658
  %3868 = vmatmul.mubr.bf16.gmra.mrb[0].mxu0 %v657
  %v3869 = vpop.f32.mrb[0].mxu0
  %v3870 = vadd.f32 %v542, %v3869
  %v3871 = vpop.f32.mrb[0].mxu0
  %v3872 = vadd.f32 %v546, %v3871
  %v3873 = vpop.f32.mrb[0].mxu0
  %v3874 = vadd.f32 %v542, %v3873
  %v3875 = vpop.f32.mrb[0].mxu0
  %v3876 = vadd.f32 %v546, %v3875
  %3877 = vmatprep.mubr.bf16.mxu0 %v665
  %3878 = vmatmul.mubr.bf16.gmra.mrb[0].mxu0 %v664
  %v3879 = vpop.f32.mrb[0].mxu0
  %v3880 = vadd.f32 %v542, %v3879
  %v3881 = vpop.f32.mrb[0].mxu0
  %v3882 = vadd.f32 %v546, %v3881
  %v3883 = vpop.f32.mrb[0].mxu0
  %v3884 = vadd.f32 %v542, %v3883
  %v3885 = vpop.f32.mrb[0].mxu0
  %v3886 = vadd.f32 %v546, %v3885
  %3887 = vdwg.mxu0
  %3888 = vmatprep.subr.bf16.mxu0 %v2178
  %3889 = vmatpush1.bf16.msra.mxu0 %v2177
  %3890 = vmatprep.subr.bf16.mxu0 %v2186
  %3891 = vmatpush1.bf16.msra.mxu0 %v2185
  %3892 = vmatprep.subr.bf16.mxu0 %v2194
  %3893 = vmatpush1.bf16.msra.mxu0 %v2193
  %3894 = vmatprep.subr.bf16.mxu0 %v2202
  %3895 = vmatpush1.bf16.msra.mxu0 %v2201
  %3896 = vmatprep.subr.bf16.mxu0 %v2210
  %3897 = vmatpush1.bf16.msra.mxu0 %v2209
  %3898 = vmatprep.subr.bf16.mxu0 %v2218
  %3899 = vmatpush1.bf16.msra.mxu0 %v2217
  %3900 = vmatprep.subr.bf16.mxu0 %v2226
  %3901 = vmatpush1.bf16.msra.mxu0 %v2225
  %3902 = vmatprep.subr.bf16.mxu0 %v2234
  %3903 = vmatpush1.bf16.msra.mxu0 %v2233
  %3904 = vmatprep.subr.bf16.mxu0 %v2242
  %3905 = vmatpush1.bf16.msra.mxu0 %v2241
  %3906 = vmatprep.subr.bf16.mxu0 %v2250
  %3907 = vmatpush1.bf16.msra.mxu0 %v2249
  %3908 = vmatprep.subr.bf16.mxu0 %v2258
  %3909 = vmatpush1.bf16.msra.mxu0 %v2257
  %3910 = vmatprep.subr.bf16.mxu0 %v2266
  %3911 = vmatpush1.bf16.msra.mxu0 %v2265
  %3912 = vmatprep.subr.bf16.mxu0 %v2274
  %3913 = vmatpush1.bf16.msra.mxu0 %v2273
  %3914 = vmatprep.subr.bf16.mxu0 %v2282
  %3915 = vmatpush1.bf16.msra.mxu0 %v2281
  %3916 = vmatprep.subr.bf16.mxu0 %v2290
  %3917 = vmatpush1.bf16.msra.mxu0 %v2289
  %3918 = vmatprep.subr.bf16.mxu0 %v2298
  %3919 = vmatpush1.bf16.msra.mxu0 %v2297
  %3920 = vmatprep.mubr.bf16.mxu0 %v646
  %3921 = vmatmul.mubr.bf16.gmra.mrb[0].mxu0 %v645
  %v3922 = vpop.f32.mrb[0].mxu0
  %v3923 = vadd.f32 %v3850, %v3922
  %v3924 = vpop.f32.mrb[0].mxu0
  %v3925 = vadd.f32 %v3852, %v3924
  %v3926 = vpop.f32.mrb[0].mxu0
  %v3927 = vadd.f32 %v3854, %v3926
  %v3928 = vpop.f32.mrb[0].mxu0
  %v3929 = vadd.f32 %v3856, %v3928
  %3930 = vmatprep.mubr.bf16.mxu0 %v653
  %3931 = vmatmul.mubr.bf16.gmra.mrb[0].mxu0 %v652
  %v3932 = vpop.f32.mrb[0].mxu0
  %v3933 = vadd.f32 %v3860, %v3932
  %v3934 = vpop.f32.mrb[0].mxu0
  %v3935 = vadd.f32 %v3862, %v3934
  %v3936 = vpop.f32.mrb[0].mxu0
  %v3937 = vadd.f32 %v3864, %v3936
  %v3938 = vpop.f32.mrb[0].mxu0
  %v3939 = vadd.f32 %v3866, %v3938
  %3940 = vmatprep.mubr.bf16.mxu0 %v660
  %3941 = vmatmul.mubr.bf16.gmra.mrb[0].mxu0 %v659
  %v3942 = vpop.f32.mrb[0].mxu0
  %v3943 = vadd.f32 %v3870, %v3942
  %v3944 = vpop.f32.mrb[0].mxu0
  %v3945 = vadd.f32 %v3872, %v3944
  %v3946 = vpop.f32.mrb[0].mxu0
  %v3947 = vadd.f32 %v3874, %v3946
  %v3948 = vpop.f32.mrb[0].mxu0
  %v3949 = vadd.f32 %v3876, %v3948
  %3950 = vmatprep.mubr.bf16.mxu0 %v667
  %3951 = vmatmul.mubr.bf16.gmra.mrb[0].mxu0 %v666
  %v3952 = vpop.f32.mrb[0].mxu0
  %v3953 = vadd.f32 %v3880, %v3952
  %v3954 = vpop.f32.mrb[0].mxu0
  %v3955 = vadd.f32 %v3882, %v3954
  %v3956 = vpop.f32.mrb[0].mxu0
  %v3957 = vadd.f32 %v3884, %v3956
  %v3958 = vpop.f32.mrb[0].mxu0
  %v3959 = vadd.f32 %v3886, %v3958
  %3960 = vdwg.mxu0
  %3961 = vmatprep.subr.bf16.mxu0 %v2306
  %3962 = vmatpush1.bf16.msra.mxu0 %v2305
  %3963 = vmatprep.subr.bf16.mxu0 %v2314
  %3964 = vmatpush1.bf16.msra.mxu0 %v2313
  %3965 = vmatprep.subr.bf16.mxu0 %v2322
  %3966 = vmatpush1.bf16.msra.mxu0 %v2321
  %3967 = vmatprep.subr.bf16.mxu0 %v2330
  %3968 = vmatpush1.bf16.msra.mxu0 %v2329
  %3969 = vmatprep.subr.bf16.mxu0 %v2338
  %3970 = vmatpush1.bf16.msra.mxu0 %v2337
  %3971 = vmatprep.subr.bf16.mxu0 %v2346
  %3972 = vmatpush1.bf16.msra.mxu0 %v2345
  %3973 = vmatprep.subr.bf16.mxu0 %v2354
  %3974 = vmatpush1.bf16.msra.mxu0 %v2353
  %3975 = vmatprep.subr.bf16.mxu0 %v2362
  %3976 = vmatpush1.bf16.msra.mxu0 %v2361
  %3977 = vmatprep.subr.bf16.mxu0 %v2370
  %3978 = vmatpush1.bf16.msra.mxu0 %v2369
  %3979 = vmatprep.subr.bf16.mxu0 %v2378
  %3980 = vmatpush1.bf16.msra.mxu0 %v2377
  %3981 = vmatprep.subr.bf16.mxu0 %v2386
  %3982 = vmatpush1.bf16.msra.mxu0 %v2385
  %3983 = vmatprep.subr.bf16.mxu0 %v2394
  %3984 = vmatpush1.bf16.msra.mxu0 %v2393
  %3985 = vmatprep.subr.bf16.mxu0 %v2402
  %3986 = vmatpush1.bf16.msra.mxu0 %v2401
  %3987 = vmatprep.subr.bf16.mxu0 %v2410
  %3988 = vmatpush1.bf16.msra.mxu0 %v2409
  %3989 = vmatprep.subr.bf16.mxu0 %v2418
  %3990 = vmatpush1.bf16.msra.mxu0 %v2417
  %3991 = vmatprep.subr.bf16.mxu0 %v2426
  %3992 = vmatpush1.bf16.msra.mxu0 %v2425
  %3993 = vmatprep.mubr.bf16.mxu0 %v648
  %3994 = vmatmul.mubr.bf16.gmra.mrb[0].mxu0 %v647
  %v3995 = vpop.f32.mrb[0].mxu0
  %v3996 = vadd.f32 %v3923, %v3995
  %v3997 = vpop.f32.mrb[0].mxu0
  %v3998 = vadd.f32 %v3925, %v3997
  %v3999 = vpop.f32.mrb[0].mxu0
  %v4000 = vadd.f32 %v3927, %v3999
  %v4001 = vpop.f32.mrb[0].mxu0
  %v4002 = vadd.f32 %v3929, %v4001
  %4003 = vmatprep.mubr.bf16.mxu0 %v655
  %4004 = vmatmul.mubr.bf16.gmra.mrb[0].mxu0 %v654
  %v4005 = vpop.f32.mrb[0].mxu0
  %v4006 = vadd.f32 %v3933, %v4005
  %v4007 = vpop.f32.mrb[0].mxu0
  %v4008 = vadd.f32 %v3935, %v4007
  %v4009 = vpop.f32.mrb[0].mxu0
  %v4010 = vadd.f32 %v3937, %v4009
  %v4011 = vpop.f32.mrb[0].mxu0
  %v4012 = vadd.f32 %v3939, %v4011
  %4013 = vmatprep.mubr.bf16.mxu0 %v662
  %4014 = vmatmul.mubr.bf16.gmra.mrb[0].mxu0 %v661
  %v4015 = vpop.f32.mrb[0].mxu0
  %v4016 = vadd.f32 %v3943, %v4015
  %v4017 = vpop.f32.mrb[0].mxu0
  %v4018 = vadd.f32 %v3945, %v4017
  %v4019 = vpop.f32.mrb[0].mxu0
  %v4020 = vadd.f32 %v3947, %v4019
  %v4021 = vpop.f32.mrb[0].mxu0
  %v4022 = vadd.f32 %v3949, %v4021
  %4023 = vmatprep.mubr.bf16.mxu0 %v669
  %4024 = vmatmul.mubr.bf16.gmra.mrb[0].mxu0 %v668
  %v4025 = vpop.f32.mrb[0].mxu0
  %v4026 = vadd.f32 %v3953, %v4025
  %v4027 = vpop.f32.mrb[0].mxu0
  %v4028 = vadd.f32 %v3955, %v4027
  %v4029 = vpop.f32.mrb[0].mxu0
  %v4030 = vadd.f32 %v3957, %v4029
  %v4031 = vpop.f32.mrb[0].mxu0
  %v4032 = vadd.f32 %v3959, %v4031
  %4033 = vdwg.mxu0
  %4034 = vmatprep.subr.bf16.mxu0 %v2434
  %4035 = vmatpush1.bf16.msra.mxu0 %v2433
  %4036 = vmatprep.subr.bf16.mxu0 %v2442
  %4037 = vmatpush1.bf16.msra.mxu0 %v2441
  %4038 = vmatprep.subr.bf16.mxu0 %v2450
  %4039 = vmatpush1.bf16.msra.mxu0 %v2449
  %4040 = vmatprep.subr.bf16.mxu0 %v2458
  %4041 = vmatpush1.bf16.msra.mxu0 %v2457
  %4042 = vmatprep.subr.bf16.mxu0 %v2466
  %4043 = vmatpush1.bf16.msra.mxu0 %v2465
  %4044 = vmatprep.subr.bf16.mxu0 %v2474
  %4045 = vmatpush1.bf16.msra.mxu0 %v2473
  %4046 = vmatprep.subr.bf16.mxu0 %v2482
  %4047 = vmatpush1.bf16.msra.mxu0 %v2481
  %4048 = vmatprep.subr.bf16.mxu0 %v2490
  %4049 = vmatpush1.bf16.msra.mxu0 %v2489
  %4050 = vmatprep.subr.bf16.mxu0 0
  %4051 = vmatpush1.bf16.msra.mxu0 0
  %4052 = vmatprep.subr.bf16.mxu0 0
  %4053 = vmatpush1.bf16.msra.mxu0 0
  %4054 = vmatprep.subr.bf16.mxu0 0
  %4055 = vmatpush1.bf16.msra.mxu0 0
  %4056 = vmatprep.subr.bf16.mxu0 0
  %4057 = vmatpush1.bf16.msra.mxu0 0
  %4058 = vmatprep.subr.bf16.mxu0 0
  %4059 = vmatpush1.bf16.msra.mxu0 0
  %4060 = vmatprep.subr.bf16.mxu0 0
  %4061 = vmatpush1.bf16.msra.mxu0 0
  %4062 = vmatprep.subr.bf16.mxu0 0
  %4063 = vmatpush1.bf16.msra.mxu0 0
  %4064 = vmatprep.subr.bf16.mxu0 0
  %4065 = vmatpush1.bf16.msra.mxu0 0
  %4066 = vmatprep.mubr.bf16.mxu0 0
  %4067 = vmatmul.mubr.bf16.gmra.mrb[0].mxu0 %v649
  %v4068 = vpop.f32.mrb[0].mxu0
  %v4069 = vadd.f32 %v3996, %v4068
  %v4070 = vpop.f32.mrb[0].mxu0
  %v4071 = vadd.f32 %v3998, %v4070
  %v4072 = vpop.f32.mrb[0].mxu0
  %v4073 = vadd.f32 %v4000, %v4072
  %v4074 = vpop.f32.mrb[0].mxu0
  %v4075 = vadd.f32 %v4002, %v4074
  %4076 = vmatprep.mubr.bf16.mxu0 0
  %4077 = vmatmul.mubr.bf16.gmra.mrb[0].mxu0 %v656
  %v4078 = vpop.f32.mrb[0].mxu0
  %v4079 = vadd.f32 %v4006, %v4078
  %v4080 = vpop.f32.mrb[0].mxu0
  %v4081 = vadd.f32 %v4008, %v4080
  %v4082 = vpop.f32.mrb[0].mxu0
  %v4083 = vadd.f32 %v4010, %v4082
  %v4084 = vpop.f32.mrb[0].mxu0
  %v4085 = vadd.f32 %v4012, %v4084
  %4086 = vmatprep.mubr.bf16.mxu0 0
  %4087 = vmatmul.mubr.bf16.gmra.mrb[0].mxu0 %v663
  %v4088 = vpop.f32.mrb[0].mxu0
  %v4089 = vadd.f32 %v4016, %v4088
  %v4090 = vpop.f32.mrb[0].mxu0
  %v4091 = vadd.f32 %v4018, %v4090
  %v4092 = vpop.f32.mrb[0].mxu0
  %v4093 = vadd.f32 %v4020, %v4092
  %v4094 = vpop.f32.mrb[0].mxu0
  %v4095 = vadd.f32 %v4022, %v4094
  %4096 = vmatprep.mubr.bf16.mxu0 0
  %4097 = vmatmul.mubr.bf16.gmra.mrb[0].mxu0 %v670
  %v4098 = vpop.f32.mrb[0].mxu0
  %v4099 = vadd.f32 %v4026, %v4098
  %v4100 = vpop.f32.mrb[0].mxu0
  %v4101 = vadd.f32 %v4028, %v4100
  %v4102 = vpop.f32.mrb[0].mxu0
  %v4103 = vadd.f32 %v4030, %v4102
  %v4104 = vpop.f32.mrb[0].mxu0
  %v4105 = vadd.f32 %v4032, %v4104
  %4106 = vdwg.mxu0
  %4107 = vst [vmem:[#allocation2] sm:$0xff] %v3193
  %4108 = vst [vmem:[#allocation2 + $0x8] sm:$0xff] %v3195
  %4109 = vst [vmem:[#allocation2 + $0x10] sm:$0xff] %v3485
  %4110 = vst [vmem:[#allocation2 + $0x18] sm:$0xff] %v3487
  %4111 = vst [vmem:[#allocation2 + $0x20] sm:$0xff] %v3777
  %4112 = vst [vmem:[#allocation2 + $0x28] sm:$0xff] %v3779
  %4113 = vst [vmem:[#allocation2 + $0x30] sm:$0xff] %v4069
  %4114 = vst [vmem:[#allocation2 + $0x38] sm:$0xff] %v4071
  %4115 = vst [vmem:[#allocation2 + $0x40] sm:$0xff] %v3197
  %4116 = vst [vmem:[#allocation2 + $0x48] sm:$0xff] %v3199
  %4117 = vst [vmem:[#allocation2 + $0x50] sm:$0xff] %v3489
  %4118 = vst [vmem:[#allocation2 + $0x58] sm:$0xff] %v3491
  %4119 = vst [vmem:[#allocation2 + $0x60] sm:$0xff] %v3781
  %4120 = vst [vmem:[#allocation2 + $0x68] sm:$0xff] %v3783
  %4121 = vst [vmem:[#allocation2 + $0x70] sm:$0xff] %v4073
  %4122 = vst [vmem:[#allocation2 + $0x78] sm:$0xff] %v4075
  %4123 = vst [vmem:[#allocation2 + $0x80] sm:$0xff] %v3203
  %4124 = vst [vmem:[#allocation2 + $0x88] sm:$0xff] %v3205
  %4125 = vst [vmem:[#allocation2 + $0x90] sm:$0xff] %v3495
  %4126 = vst [vmem:[#allocation2 + $0x98] sm:$0xff] %v3497
  %4127 = vst [vmem:[#allocation2 + $0xa0] sm:$0xff] %v3787
  %4128 = vst [vmem:[#allocation2 + $0xa8] sm:$0xff] %v3789
  %4129 = vst [vmem:[#allocation2 + $0xb0] sm:$0xff] %v4079
  %4130 = vst [vmem:[#allocation2 + $0xb8] sm:$0xff] %v4081
  %4131 = vst [vmem:[#allocation2 + $0xc0] sm:$0xff] %v3207
  %4132 = vst [vmem:[#allocation2 + $0xc8] sm:$0xff] %v3209
  %4133 = vst [vmem:[#allocation2 + $0xd0] sm:$0xff] %v3499
  %4134 = vst [vmem:[#allocation2 + $0xd8] sm:$0xff] %v3501
  %4135 = vst [vmem:[#allocation2 + $0xe0] sm:$0xff] %v3791
  %4136 = vst [vmem:[#allocation2 + $0xe8] sm:$0xff] %v3793
  %4137 = vst [vmem:[#allocation2 + $0xf0] sm:$0xff] %v4083
  %4138 = vst [vmem:[#allocation2 + $0xf8] sm:$0xff] %v4085
  %4139 = vst [vmem:[#allocation2 + $0x100] sm:$0xff] %v3213
  %4140 = vst [vmem:[#allocation2 + $0x108] sm:$0xff] %v3215
  %4141 = vst [vmem:[#allocation2 + $0x110] sm:$0xff] %v3505
  %4142 = vst [vmem:[#allocation2 + $0x118] sm:$0xff] %v3507
  %4143 = vst [vmem:[#allocation2 + $0x120] sm:$0xff] %v3797
  %4144 = vst [vmem:[#allocation2 + $0x128] sm:$0xff] %v3799
  %4145 = vst [vmem:[#allocation2 + $0x130] sm:$0xff] %v4089
  %4146 = vst [vmem:[#allocation2 + $0x138] sm:$0xff] %v4091
  %4147 = vst [vmem:[#allocation2 + $0x140] sm:$0xff] %v3217
  %4148 = vst [vmem:[#allocation2 + $0x148] sm:$0xff] %v3219
  %4149 = vst [vmem:[#allocation2 + $0x150] sm:$0xff] %v3509
  %4150 = vst [vmem:[#allocation2 + $0x158] sm:$0xff] %v3511
  %4151 = vst [vmem:[#allocation2 + $0x160] sm:$0xff] %v3801
  %4152 = vst [vmem:[#allocation2 + $0x168] sm:$0xff] %v3803
  %4153 = vst [vmem:[#allocation2 + $0x170] sm:$0xff] %v4093
  %4154 = vst [vmem:[#allocation2 + $0x178] sm:$0xff] %v4095
  %4155 = vst [vmem:[#allocation2 + $0x180] sm:$0xff] %v3223
  %4156 = vst [vmem:[#allocation2 + $0x188] sm:$0xff] %v3225
  %4157 = vst [vmem:[#allocation2 + $0x190] sm:$0xff] %v3515
  %4158 = vst [vmem:[#allocation2 + $0x198] sm:$0xff] %v3517
  %4159 = vst [vmem:[#allocation2 + $0x1a0] sm:$0xff] %v3807
  %4160 = vst [vmem:[#allocation2 + $0x1a8] sm:$0xff] %v3809
  %4161 = vst [vmem:[#allocation2 + $0x1b0] sm:$0xff] %v4099
  %4162 = vst [vmem:[#allocation2 + $0x1b8] sm:$0xff] %v4101
  %4163 = vst [vmem:[#allocation2 + $0x1c0] sm:$0xff] %v3227
  %4164 = vst [vmem:[#allocation2 + $0x1c8] sm:$0xff] %v3229
  %4165 = vst [vmem:[#allocation2 + $0x1d0] sm:$0xff] %v3519
  %4166 = vst [vmem:[#allocation2 + $0x1d8] sm:$0xff] %v3521
  %4167 = vst [vmem:[#allocation2 + $0x1e0] sm:$0xff] %v3811
  %4168 = vst [vmem:[#allocation2 + $0x1e8] sm:$0xff] %v3813
  %4169 = vst [vmem:[#allocation2 + $0x1f0] sm:$0xff] %v4103
  %4170 = vst [vmem:[#allocation2 + $0x1f8] sm:$0xff] %v4105
  %v4171 = vld [vmem:[#allocation3] sm:$0xff]
  %v4172 = vld [vmem:[#allocation3 + $0x8] sm:$0xff]
  %v4173 = vld [vmem:[#allocation4] sm:$0xff]
  %v4174 = vld [vmem:[#allocation4 + $0x8] sm:$0xff]
  %s4175 = smul.u32 0, 8
  %s4176 = smul.addr %s4175, 8
  %s4177 = scalar_lea.vmem [#allocation2], %s4176
  %v4178 = vld [vmem:[%s4177] sm:$0xff]
  %v4179 = vld [vmem:[%s4177 + $0x8] sm:$0xff]
  %v4180 = vld [vmem:[%s4177 + $0x10] sm:$0xff]
  %v4181 = vld [vmem:[%s4177 + $0x18] sm:$0xff]
  %v4182 = vld [vmem:[%s4177 + $0x20] sm:$0xff]
  %v4183 = vld [vmem:[%s4177 + $0x28] sm:$0xff]
  %v4184 = vld [vmem:[%s4177 + $0x30] sm:$0xff]
  %v4185 = vld [vmem:[%s4177 + $0x38] sm:$0xff]
  %v4186 = vpack.c.bf16 %v4171, %v4171
  %v4187 = vpack.c.bf16 %v4172, %v4172
  %v4188 = vld [vmem:[%s3] sm:$0xff]
  %v4189 = vld [vmem:[%s3 + $0x8] sm:$0xff]
  %v4190 = vld [vmem:[%s3 + $0x10] sm:$0xff]
  %v4191 = vld [vmem:[%s3 + $0x18] sm:$0xff]
  %v4192 = vld [vmem:[%s3 + $0x20] sm:$0xff]
  %v4193 = vld [vmem:[%s3 + $0x28] sm:$0xff]
  %v4194 = vld [vmem:[%s3 + $0x30] sm:$0xff]
  %v4195 = vld [vmem:[%s3 + $0x38] sm:$0xff]
  %v4196 = vld [vmem:[%s3 + $0x40] sm:$0xff]
  %v4197 = vld [vmem:[%s3 + $0x48] sm:$0xff]
  %v4198 = vld [vmem:[%s3 + $0x50] sm:$0xff]
  %v4199 = vld [vmem:[%s3 + $0x58] sm:$0xff]
  %v4200 = vld [vmem:[%s3 + $0x60] sm:$0xff]
  %v4201 = vld [vmem:[%s3 + $0x68] sm:$0xff]
  %v4202 = vld [vmem:[%s3 + $0x70] sm:$0xff]
  %v4203 = vld [vmem:[%s3 + $0x78] sm:$0xff]
  %v4204 = vld [vmem:[%s3 + $0x80] sm:$0xff]
  %v4205 = vld [vmem:[%s3 + $0x88] sm:$0xff]
  %v4206 = vld [vmem:[%s3 + $0x90] sm:$0xff]
  %v4207 = vld [vmem:[%s3 + $0x98] sm:$0xff]
  %v4208 = vld [vmem:[%s3 + $0xa0] sm:$0xff]
  %v4209 = vld [vmem:[%s3 + $0xa8] sm:$0xff]
  %v4210 = vld [vmem:[%s3 + $0xb0] sm:$0xff]
  %v4211 = vld [vmem:[%s3 + $0xb8] sm:$0xff]
  %v4212 = vld [vmem:[%s3 + $0xc0] sm:$0xff]
  %v4213 = vld [vmem:[%s3 + $0xc8] sm:$0xff]
  %v4214 = vld [vmem:[%s3 + $0xd0] sm:$0xff]
  %v4215 = vld [vmem:[%s3 + $0xd8] sm:$0xff]
  %v4216 = vld [vmem:[%s3 + $0xe0] sm:$0xff]
  %v4217 = vld [vmem:[%s3 + $0xe8] sm:$0xff]
  %v4218 = vld [vmem:[%s3 + $0xf0] sm:$0xff]
  %v4219 = vld [vmem:[%s3 + $0xf8] sm:$0xff]
  %v4220 = vld [vmem:[%s3 + $0x100] sm:$0xff]
  %v4221 = vld [vmem:[%s3 + $0x108] sm:$0xff]
  %v4222 = vld [vmem:[%s3 + $0x110] sm:$0xff]
  %v4223 = vld [vmem:[%s3 + $0x118] sm:$0xff]
  %v4224 = vld [vmem:[%s3 + $0x120] sm:$0xff]
  %v4225 = vld [vmem:[%s3 + $0x128] sm:$0xff]
  %v4226 = vld [vmem:[%s3 + $0x130] sm:$0xff]
  %v4227 = vld [vmem:[%s3 + $0x138] sm:$0xff]
  %v4228 = vld [vmem:[%s3 + $0x140] sm:$0xff]
  %v4229 = vld [vmem:[%s3 + $0x148] sm:$0xff]
  %v4230 = vld [vmem:[%s3 + $0x150] sm:$0xff]
  %v4231 = vld [vmem:[%s3 + $0x158] sm:$0xff]
  %v4232 = vld [vmem:[%s3 + $0x160] sm:$0xff]
  %v4233 = vld [vmem:[%s3 + $0x168] sm:$0xff]
  %v4234 = vld [vmem:[%s3 + $0x170] sm:$0xff]
  %v4235 = vld [vmem:[%s3 + $0x178] sm:$0xff]
  %v4236 = vld [vmem:[%s3 + $0x180] sm:$0xff]
  %v4237 = vld [vmem:[%s3 + $0x188] sm:$0xff]
  %v4238 = vld [vmem:[%s3 + $0x190] sm:$0xff]
  %v4239 = vld [vmem:[%s3 + $0x198] sm:$0xff]
  %v4240 = vld [vmem:[%s3 + $0x1a0] sm:$0xff]
  %v4241 = vld [vmem:[%s3 + $0x1a8] sm:$0xff]
  %v4242 = vld [vmem:[%s3 + $0x1b0] sm:$0xff]
  %v4243 = vld [vmem:[%s3 + $0x1b8] sm:$0xff]
  %v4244 = vld [vmem:[%s3 + $0x1c0] sm:$0xff]
  %v4245 = vld [vmem:[%s3 + $0x1c8] sm:$0xff]
  %v4246 = vld [vmem:[%s3 + $0x1d0] sm:$0xff]
  %v4247 = vld [vmem:[%s3 + $0x1d8] sm:$0xff]
  %v4248 = vld [vmem:[%s3 + $0x1e0] sm:$0xff]
  %v4249 = vld [vmem:[%s3 + $0x1e8] sm:$0xff]
  %v4250 = vld [vmem:[%s3 + $0x1f0] sm:$0xff]
  %v4251 = vld [vmem:[%s3 + $0x1f8] sm:$0xff]
  %v4252 = vld [vmem:[%s3 + $0x200] sm:$0xff]
  %v4253 = vld [vmem:[%s3 + $0x208] sm:$0xff]
  %v4254 = vld [vmem:[%s3 + $0x210] sm:$0xff]
  %v4255 = vld [vmem:[%s3 + $0x218] sm:$0xff]
  %v4256 = vld [vmem:[%s3 + $0x220] sm:$0xff]
  %v4257 = vld [vmem:[%s3 + $0x228] sm:$0xff]
  %v4258 = vld [vmem:[%s3 + $0x230] sm:$0xff]
  %v4259 = vld [vmem:[%s3 + $0x238] sm:$0xff]
  %v4260 = vld [vmem:[%s3 + $0x240] sm:$0xff]
  %v4261 = vld [vmem:[%s3 + $0x248] sm:$0xff]
  %v4262 = vld [vmem:[%s3 + $0x250] sm:$0xff]
  %v4263 = vld [vmem:[%s3 + $0x258] sm:$0xff]
  %v4264 = vld [vmem:[%s3 + $0x260] sm:$0xff]
  %v4265 = vld [vmem:[%s3 + $0x268] sm:$0xff]
  %v4266 = vld [vmem:[%s3 + $0x270] sm:$0xff]
  %v4267 = vld [vmem:[%s3 + $0x278] sm:$0xff]
  %v4268 = vld [vmem:[%s3 + $0x280] sm:$0xff]
  %v4269 = vld [vmem:[%s3 + $0x288] sm:$0xff]
  %v4270 = vld [vmem:[%s3 + $0x290] sm:$0xff]
  %v4271 = vld [vmem:[%s3 + $0x298] sm:$0xff]
  %v4272 = vld [vmem:[%s3 + $0x2a0] sm:$0xff]
  %v4273 = vld [vmem:[%s3 + $0x2a8] sm:$0xff]
  %v4274 = vld [vmem:[%s3 + $0x2b0] sm:$0xff]
  %v4275 = vld [vmem:[%s3 + $0x2b8] sm:$0xff]
  %v4276 = vld [vmem:[%s3 + $0x2c0] sm:$0xff]
  %v4277 = vld [vmem:[%s3 + $0x2c8] sm:$0xff]
  %v4278 = vld [vmem:[%s3 + $0x2d0] sm:$0xff]
  %v4279 = vld [vmem:[%s3 + $0x2d8] sm:$0xff]
  %v4280 = vld [vmem:[%s3 + $0x2e0] sm:$0xff]
  %v4281 = vld [vmem:[%s3 + $0x2e8] sm:$0xff]
  %v4282 = vld [vmem:[%s3 + $0x2f0] sm:$0xff]
  %v4283 = vld [vmem:[%s3 + $0x2f8] sm:$0xff]
  %v4284 = vld [vmem:[%s3 + $0x300] sm:$0xff]
  %v4285 = vld [vmem:[%s3 + $0x308] sm:$0xff]
  %v4286 = vld [vmem:[%s3 + $0x310] sm:$0xff]
  %v4287 = vld [vmem:[%s3 + $0x318] sm:$0xff]
  %v4288 = vld [vmem:[%s3 + $0x320] sm:$0xff]
  %v4289 = vld [vmem:[%s3 + $0x328] sm:$0xff]
  %v4290 = vld [vmem:[%s3 + $0x330] sm:$0xff]
  %v4291 = vld [vmem:[%s3 + $0x338] sm:$0xff]
  %v4292 = vld [vmem:[%s3 + $0x340] sm:$0xff]
  %v4293 = vld [vmem:[%s3 + $0x348] sm:$0xff]
  %v4294 = vld [vmem:[%s3 + $0x350] sm:$0xff]
  %v4295 = vld [vmem:[%s3 + $0x358] sm:$0xff]
  %v4296 = vld [vmem:[%s3 + $0x360] sm:$0xff]
  %v4297 = vld [vmem:[%s3 + $0x368] sm:$0xff]
  %v4298 = vld [vmem:[%s3 + $0x370] sm:$0xff]
  %v4299 = vld [vmem:[%s3 + $0x378] sm:$0xff]
  %v4300 = vld [vmem:[%s3 + $0x380] sm:$0xff]
  %v4301 = vld [vmem:[%s3 + $0x388] sm:$0xff]
  %v4302 = vld [vmem:[%s3 + $0x390] sm:$0xff]
  %v4303 = vld [vmem:[%s3 + $0x398] sm:$0xff]
  %v4304 = vld [vmem:[%s3 + $0x3a0] sm:$0xff]
  %v4305 = vld [vmem:[%s3 + $0x3a8] sm:$0xff]
  %v4306 = vld [vmem:[%s3 + $0x3b0] sm:$0xff]
  %v4307 = vld [vmem:[%s3 + $0x3b8] sm:$0xff]
  %v4308 = vld [vmem:[%s3 + $0x3c0] sm:$0xff]
  %v4309 = vld [vmem:[%s3 + $0x3c8] sm:$0xff]
  %v4310 = vld [vmem:[%s3 + $0x3d0] sm:$0xff]
  %v4311 = vld [vmem:[%s3 + $0x3d8] sm:$0xff]
  %v4312 = vld [vmem:[%s3 + $0x3e0] sm:$0xff]
  %v4313 = vld [vmem:[%s3 + $0x3e8] sm:$0xff]
  %v4314 = vld [vmem:[%s3 + $0x3f0] sm:$0xff]
  %v4315 = vld [vmem:[%s3 + $0x3f8] sm:$0xff]
  %v4444 = vunpack.c.l.b16 %v4188
  %v4445 = vunpack.c.h.b16 %v4188
  %v4446 = vunpack.c.l.b16 %v4189
  %v4447 = vunpack.c.h.b16 %v4189
  %v4448 = vunpack.c.l.b16 %v4190
  %v4449 = vunpack.c.h.b16 %v4190
  %v4450 = vunpack.c.l.b16 %v4191
  %v4451 = vunpack.c.h.b16 %v4191
  %v4452 = vunpack.c.l.b16 %v4192
  %v4453 = vunpack.c.h.b16 %v4192
  %v4454 = vunpack.c.l.b16 %v4193
  %v4455 = vunpack.c.h.b16 %v4193
  %v4456 = vunpack.c.l.b16 %v4194
  %v4457 = vunpack.c.h.b16 %v4194
  %v4458 = vunpack.c.l.b16 %v4195
  %v4459 = vunpack.c.h.b16 %v4195
  %v4460 = vunpack.c.l.b16 %v4196
  %v4461 = vunpack.c.h.b16 %v4196
  %v4462 = vunpack.c.l.b16 %v4197
  %v4463 = vunpack.c.h.b16 %v4197
  %v4464 = vunpack.c.l.b16 %v4198
  %v4465 = vunpack.c.h.b16 %v4198
  %v4466 = vunpack.c.l.b16 %v4199
  %v4467 = vunpack.c.h.b16 %v4199
  %v4468 = vunpack.c.l.b16 %v4200
  %v4469 = vunpack.c.h.b16 %v4200
  %v4470 = vunpack.c.l.b16 %v4201
  %v4471 = vunpack.c.h.b16 %v4201
  %v4472 = vunpack.c.l.b16 %v4202
  %v4473 = vunpack.c.h.b16 %v4202
  %v4474 = vunpack.c.l.b16 %v4203
  %v4475 = vunpack.c.h.b16 %v4203
  %v4476 = vunpack.c.l.b16 %v4204
  %v4477 = vunpack.c.h.b16 %v4204
  %v4478 = vunpack.c.l.b16 %v4205
  %v4479 = vunpack.c.h.b16 %v4205
  %v4480 = vunpack.c.l.b16 %v4206
  %v4481 = vunpack.c.h.b16 %v4206
  %v4482 = vunpack.c.l.b16 %v4207
  %v4483 = vunpack.c.h.b16 %v4207
  %v4484 = vunpack.c.l.b16 %v4208
  %v4485 = vunpack.c.h.b16 %v4208
  %v4486 = vunpack.c.l.b16 %v4209
  %v4487 = vunpack.c.h.b16 %v4209
  %v4488 = vunpack.c.l.b16 %v4210
  %v4489 = vunpack.c.h.b16 %v4210
  %v4490 = vunpack.c.l.b16 %v4211
  %v4491 = vunpack.c.h.b16 %v4211
  %v4492 = vunpack.c.l.b16 %v4212
  %v4493 = vunpack.c.h.b16 %v4212
  %v4494 = vunpack.c.l.b16 %v4213
  %v4495 = vunpack.c.h.b16 %v4213
  %v4496 = vunpack.c.l.b16 %v4214
  %v4497 = vunpack.c.h.b16 %v4214
  %v4498 = vunpack.c.l.b16 %v4215
  %v4499 = vunpack.c.h.b16 %v4215
  %v4500 = vunpack.c.l.b16 %v4216
  %v4501 = vunpack.c.h.b16 %v4216
  %v4502 = vunpack.c.l.b16 %v4217
  %v4503 = vunpack.c.h.b16 %v4217
  %v4504 = vunpack.c.l.b16 %v4218
  %v4505 = vunpack.c.h.b16 %v4218
  %v4506 = vunpack.c.l.b16 %v4219
  %v4507 = vunpack.c.h.b16 %v4219
  %v4508 = vunpack.c.l.b16 %v4220
  %v4509 = vunpack.c.h.b16 %v4220
  %v4510 = vunpack.c.l.b16 %v4221
  %v4511 = vunpack.c.h.b16 %v4221
  %v4512 = vunpack.c.l.b16 %v4222
  %v4513 = vunpack.c.h.b16 %v4222
  %v4514 = vunpack.c.l.b16 %v4223
  %v4515 = vunpack.c.h.b16 %v4223
  %v4516 = vunpack.c.l.b16 %v4224
  %v4517 = vunpack.c.h.b16 %v4224
  %v4518 = vunpack.c.l.b16 %v4225
  %v4519 = vunpack.c.h.b16 %v4225
  %v4520 = vunpack.c.l.b16 %v4226
  %v4521 = vunpack.c.h.b16 %v4226
  %v4522 = vunpack.c.l.b16 %v4227
  %v4523 = vunpack.c.h.b16 %v4227
  %v4524 = vunpack.c.l.b16 %v4228
  %v4525 = vunpack.c.h.b16 %v4228
  %v4526 = vunpack.c.l.b16 %v4229
  %v4527 = vunpack.c.h.b16 %v4229
  %v4528 = vunpack.c.l.b16 %v4230
  %v4529 = vunpack.c.h.b16 %v4230
  %v4530 = vunpack.c.l.b16 %v4231
  %v4531 = vunpack.c.h.b16 %v4231
  %v4532 = vunpack.c.l.b16 %v4232
  %v4533 = vunpack.c.h.b16 %v4232
  %v4534 = vunpack.c.l.b16 %v4233
  %v4535 = vunpack.c.h.b16 %v4233
  %v4536 = vunpack.c.l.b16 %v4234
  %v4537 = vunpack.c.h.b16 %v4234
  %v4538 = vunpack.c.l.b16 %v4235
  %v4539 = vunpack.c.h.b16 %v4235
  %v4540 = vunpack.c.l.b16 %v4236
  %v4541 = vunpack.c.h.b16 %v4236
  %v4542 = vunpack.c.l.b16 %v4237
  %v4543 = vunpack.c.h.b16 %v4237
  %v4544 = vunpack.c.l.b16 %v4238
  %v4545 = vunpack.c.h.b16 %v4238
  %v4546 = vunpack.c.l.b16 %v4239
  %v4547 = vunpack.c.h.b16 %v4239
  %v4548 = vunpack.c.l.b16 %v4240
  %v4549 = vunpack.c.h.b16 %v4240
  %v4550 = vunpack.c.l.b16 %v4241
  %v4551 = vunpack.c.h.b16 %v4241
  %v4552 = vunpack.c.l.b16 %v4242
  %v4553 = vunpack.c.h.b16 %v4242
  %v4554 = vunpack.c.l.b16 %v4243
  %v4555 = vunpack.c.h.b16 %v4243
  %v4556 = vunpack.c.l.b16 %v4244
  %v4557 = vunpack.c.h.b16 %v4244
  %v4558 = vunpack.c.l.b16 %v4245
  %v4559 = vunpack.c.h.b16 %v4245
  %v4560 = vunpack.c.l.b16 %v4246
  %v4561 = vunpack.c.h.b16 %v4246
  %v4562 = vunpack.c.l.b16 %v4247
  %v4563 = vunpack.c.h.b16 %v4247
  %v4564 = vunpack.c.l.b16 %v4248
  %v4565 = vunpack.c.h.b16 %v4248
  %v4566 = vunpack.c.l.b16 %v4249
  %v4567 = vunpack.c.h.b16 %v4249
  %v4568 = vunpack.c.l.b16 %v4250
  %v4569 = vunpack.c.h.b16 %v4250
  %v4570 = vunpack.c.l.b16 %v4251
  %v4571 = vunpack.c.h.b16 %v4251
  %v4572 = vunpack.c.l.b16 %v4252
  %v4573 = vunpack.c.h.b16 %v4252
  %v4574 = vunpack.c.l.b16 %v4253
  %v4575 = vunpack.c.h.b16 %v4253
  %v4576 = vunpack.c.l.b16 %v4254
  %v4577 = vunpack.c.h.b16 %v4254
  %v4578 = vunpack.c.l.b16 %v4255
  %v4579 = vunpack.c.h.b16 %v4255
  %v4580 = vunpack.c.l.b16 %v4256
  %v4581 = vunpack.c.h.b16 %v4256
  %v4582 = vunpack.c.l.b16 %v4257
  %v4583 = vunpack.c.h.b16 %v4257
  %v4584 = vunpack.c.l.b16 %v4258
  %v4585 = vunpack.c.h.b16 %v4258
  %v4586 = vunpack.c.l.b16 %v4259
  %v4587 = vunpack.c.h.b16 %v4259
  %v4588 = vunpack.c.l.b16 %v4260
  %v4589 = vunpack.c.h.b16 %v4260
  %v4590 = vunpack.c.l.b16 %v4261
  %v4591 = vunpack.c.h.b16 %v4261
  %v4592 = vunpack.c.l.b16 %v4262
  %v4593 = vunpack.c.h.b16 %v4262
  %v4594 = vunpack.c.l.b16 %v4263
  %v4595 = vunpack.c.h.b16 %v4263
  %v4596 = vunpack.c.l.b16 %v4264
  %v4597 = vunpack.c.h.b16 %v4264
  %v4598 = vunpack.c.l.b16 %v4265
  %v4599 = vunpack.c.h.b16 %v4265
  %v4600 = vunpack.c.l.b16 %v4266
  %v4601 = vunpack.c.h.b16 %v4266
  %v4602 = vunpack.c.l.b16 %v4267
  %v4603 = vunpack.c.h.b16 %v4267
  %v4604 = vunpack.c.l.b16 %v4268
  %v4605 = vunpack.c.h.b16 %v4268
  %v4606 = vunpack.c.l.b16 %v4269
  %v4607 = vunpack.c.h.b16 %v4269
  %v4608 = vunpack.c.l.b16 %v4270
  %v4609 = vunpack.c.h.b16 %v4270
  %v4610 = vunpack.c.l.b16 %v4271
  %v4611 = vunpack.c.h.b16 %v4271
  %v4612 = vunpack.c.l.b16 %v4272
  %v4613 = vunpack.c.h.b16 %v4272
  %v4614 = vunpack.c.l.b16 %v4273
  %v4615 = vunpack.c.h.b16 %v4273
  %v4616 = vunpack.c.l.b16 %v4274
  %v4617 = vunpack.c.h.b16 %v4274
  %v4618 = vunpack.c.l.b16 %v4275
  %v4619 = vunpack.c.h.b16 %v4275
  %v4620 = vunpack.c.l.b16 %v4276
  %v4621 = vunpack.c.h.b16 %v4276
  %v4622 = vunpack.c.l.b16 %v4277
  %v4623 = vunpack.c.h.b16 %v4277
  %v4624 = vunpack.c.l.b16 %v4278
  %v4625 = vunpack.c.h.b16 %v4278
  %v4626 = vunpack.c.l.b16 %v4279
  %v4627 = vunpack.c.h.b16 %v4279
  %v4628 = vunpack.c.l.b16 %v4280
  %v4629 = vunpack.c.h.b16 %v4280
  %v4630 = vunpack.c.l.b16 %v4281
  %v4631 = vunpack.c.h.b16 %v4281
  %v4632 = vunpack.c.l.b16 %v4282
  %v4633 = vunpack.c.h.b16 %v4282
  %v4634 = vunpack.c.l.b16 %v4283
  %v4635 = vunpack.c.h.b16 %v4283
  %v4636 = vunpack.c.l.b16 %v4284
  %v4637 = vunpack.c.h.b16 %v4284
  %v4638 = vunpack.c.l.b16 %v4285
  %v4639 = vunpack.c.h.b16 %v4285
  %v4640 = vunpack.c.l.b16 %v4286
  %v4641 = vunpack.c.h.b16 %v4286
  %v4642 = vunpack.c.l.b16 %v4287
  %v4643 = vunpack.c.h.b16 %v4287
  %v4644 = vunpack.c.l.b16 %v4288
  %v4645 = vunpack.c.h.b16 %v4288
  %v4646 = vunpack.c.l.b16 %v4289
  %v4647 = vunpack.c.h.b16 %v4289
  %v4648 = vunpack.c.l.b16 %v4290
  %v4649 = vunpack.c.h.b16 %v4290
  %v4650 = vunpack.c.l.b16 %v4291
  %v4651 = vunpack.c.h.b16 %v4291
  %v4652 = vunpack.c.l.b16 %v4292
  %v4653 = vunpack.c.h.b16 %v4292
  %v4654 = vunpack.c.l.b16 %v4293
  %v4655 = vunpack.c.h.b16 %v4293
  %v4656 = vunpack.c.l.b16 %v4294
  %v4657 = vunpack.c.h.b16 %v4294
  %v4658 = vunpack.c.l.b16 %v4295
  %v4659 = vunpack.c.h.b16 %v4295
  %v4660 = vunpack.c.l.b16 %v4296
  %v4661 = vunpack.c.h.b16 %v4296
  %v4662 = vunpack.c.l.b16 %v4297
  %v4663 = vunpack.c.h.b16 %v4297
  %v4664 = vunpack.c.l.b16 %v4298
  %v4665 = vunpack.c.h.b16 %v4298
  %v4666 = vunpack.c.l.b16 %v4299
  %v4667 = vunpack.c.h.b16 %v4299
  %v4668 = vunpack.c.l.b16 %v4300
  %v4669 = vunpack.c.h.b16 %v4300
  %v4670 = vunpack.c.l.b16 %v4301
  %v4671 = vunpack.c.h.b16 %v4301
  %v4672 = vunpack.c.l.b16 %v4302
  %v4673 = vunpack.c.h.b16 %v4302
  %v4674 = vunpack.c.l.b16 %v4303
  %v4675 = vunpack.c.h.b16 %v4303
  %v4676 = vunpack.c.l.b16 %v4304
  %v4677 = vunpack.c.h.b16 %v4304
  %v4678 = vunpack.c.l.b16 %v4305
  %v4679 = vunpack.c.h.b16 %v4305
  %v4680 = vunpack.c.l.b16 %v4306
  %v4681 = vunpack.c.h.b16 %v4306
  %v4682 = vunpack.c.l.b16 %v4307
  %v4683 = vunpack.c.h.b16 %v4307
  %v4684 = vunpack.c.l.b16 %v4308
  %v4685 = vunpack.c.h.b16 %v4308
  %v4686 = vunpack.c.l.b16 %v4309
  %v4687 = vunpack.c.h.b16 %v4309
  %v4688 = vunpack.c.l.b16 %v4310
  %v4689 = vunpack.c.h.b16 %v4310
  %v4690 = vunpack.c.l.b16 %v4311
  %v4691 = vunpack.c.h.b16 %v4311
  %v4692 = vunpack.c.l.b16 %v4312
  %v4693 = vunpack.c.h.b16 %v4312
  %v4694 = vunpack.c.l.b16 %v4313
  %v4695 = vunpack.c.h.b16 %v4313
  %v4696 = vunpack.c.l.b16 %v4314
  %v4697 = vunpack.c.h.b16 %v4314
  %v4698 = vunpack.c.l.b16 %v4315
  %v4699 = vunpack.c.h.b16 %v4315
  %v4700 = vpack.c.b16 %v4452, %v4444
  %v4701 = vpack.c.b16 %v4453, %v4445
  %v4702 = vpack.c.b16 %v4454, %v4446
  %v4703 = vpack.c.b16 %v4455, %v4447
  %v4704 = vpack.c.b16 %v4456, %v4448
  %v4705 = vpack.c.b16 %v4457, %v4449
  %v4706 = vpack.c.b16 %v4458, %v4450
  %v4707 = vpack.c.b16 %v4459, %v4451
  %v4708 = vpack.c.b16 %v4468, %v4460
  %v4709 = vpack.c.b16 %v4469, %v4461
  %v4710 = vpack.c.b16 %v4470, %v4462
  %v4711 = vpack.c.b16 %v4471, %v4463
  %v4712 = vpack.c.b16 %v4472, %v4464
  %v4713 = vpack.c.b16 %v4473, %v4465
  %v4714 = vpack.c.b16 %v4474, %v4466
  %v4715 = vpack.c.b16 %v4475, %v4467
  %v4716 = vpack.c.b16 %v4484, %v4476
  %v4717 = vpack.c.b16 %v4485, %v4477
  %v4718 = vpack.c.b16 %v4486, %v4478
  %v4719 = vpack.c.b16 %v4487, %v4479
  %v4720 = vpack.c.b16 %v4488, %v4480
  %v4721 = vpack.c.b16 %v4489, %v4481
  %v4722 = vpack.c.b16 %v4490, %v4482
  %v4723 = vpack.c.b16 %v4491, %v4483
  %v4724 = vpack.c.b16 %v4500, %v4492
  %v4725 = vpack.c.b16 %v4501, %v4493
  %v4726 = vpack.c.b16 %v4502, %v4494
  %v4727 = vpack.c.b16 %v4503, %v4495
  %v4728 = vpack.c.b16 %v4504, %v4496
  %v4729 = vpack.c.b16 %v4505, %v4497
  %v4730 = vpack.c.b16 %v4506, %v4498
  %v4731 = vpack.c.b16 %v4507, %v4499
  %v4732 = vpack.c.b16 %v4516, %v4508
  %v4733 = vpack.c.b16 %v4517, %v4509
  %v4734 = vpack.c.b16 %v4518, %v4510
  %v4735 = vpack.c.b16 %v4519, %v4511
  %v4736 = vpack.c.b16 %v4520, %v4512
  %v4737 = vpack.c.b16 %v4521, %v4513
  %v4738 = vpack.c.b16 %v4522, %v4514
  %v4739 = vpack.c.b16 %v4523, %v4515
  %v4740 = vpack.c.b16 %v4532, %v4524
  %v4741 = vpack.c.b16 %v4533, %v4525
  %v4742 = vpack.c.b16 %v4534, %v4526
  %v4743 = vpack.c.b16 %v4535, %v4527
  %v4744 = vpack.c.b16 %v4536, %v4528
  %v4745 = vpack.c.b16 %v4537, %v4529
  %v4746 = vpack.c.b16 %v4538, %v4530
  %v4747 = vpack.c.b16 %v4539, %v4531
  %v4748 = vpack.c.b16 %v4548, %v4540
  %v4749 = vpack.c.b16 %v4549, %v4541
  %v4750 = vpack.c.b16 %v4550, %v4542
  %v4751 = vpack.c.b16 %v4551, %v4543
  %v4752 = vpack.c.b16 %v4552, %v4544
  %v4753 = vpack.c.b16 %v4553, %v4545
  %v4754 = vpack.c.b16 %v4554, %v4546
  %v4755 = vpack.c.b16 %v4555, %v4547
  %v4756 = vpack.c.b16 %v4564, %v4556
  %v4757 = vpack.c.b16 %v4565, %v4557
  %v4758 = vpack.c.b16 %v4566, %v4558
  %v4759 = vpack.c.b16 %v4567, %v4559
  %v4760 = vpack.c.b16 %v4568, %v4560
  %v4761 = vpack.c.b16 %v4569, %v4561
  %v4762 = vpack.c.b16 %v4570, %v4562
  %v4763 = vpack.c.b16 %v4571, %v4563
  %v4764 = vpack.c.b16 %v4580, %v4572
  %v4765 = vpack.c.b16 %v4581, %v4573
  %v4766 = vpack.c.b16 %v4582, %v4574
  %v4767 = vpack.c.b16 %v4583, %v4575
  %v4768 = vpack.c.b16 %v4584, %v4576
  %v4769 = vpack.c.b16 %v4585, %v4577
  %v4770 = vpack.c.b16 %v4586, %v4578
  %v4771 = vpack.c.b16 %v4587, %v4579
  %v4772 = vpack.c.b16 %v4596, %v4588
  %v4773 = vpack.c.b16 %v4597, %v4589
  %v4774 = vpack.c.b16 %v4598, %v4590
  %v4775 = vpack.c.b16 %v4599, %v4591
  %v4776 = vpack.c.b16 %v4600, %v4592
  %v4777 = vpack.c.b16 %v4601, %v4593
  %v4778 = vpack.c.b16 %v4602, %v4594
  %v4779 = vpack.c.b16 %v4603, %v4595
  %v4780 = vpack.c.b16 %v4612, %v4604
  %v4781 = vpack.c.b16 %v4613, %v4605
  %v4782 = vpack.c.b16 %v4614, %v4606
  %v4783 = vpack.c.b16 %v4615, %v4607
  %v4784 = vpack.c.b16 %v4616, %v4608
  %v4785 = vpack.c.b16 %v4617, %v4609
  %v4786 = vpack.c.b16 %v4618, %v4610
  %v4787 = vpack.c.b16 %v4619, %v4611
  %v4788 = vpack.c.b16 %v4628, %v4620
  %v4789 = vpack.c.b16 %v4629, %v4621
  %v4790 = vpack.c.b16 %v4630, %v4622
  %v4791 = vpack.c.b16 %v4631, %v4623
  %v4792 = vpack.c.b16 %v4632, %v4624
  %v4793 = vpack.c.b16 %v4633, %v4625
  %v4794 = vpack.c.b16 %v4634, %v4626
  %v4795 = vpack.c.b16 %v4635, %v4627
  %v4796 = vpack.c.b16 %v4644, %v4636
  %v4797 = vpack.c.b16 %v4645, %v4637
  %v4798 = vpack.c.b16 %v4646, %v4638
  %v4799 = vpack.c.b16 %v4647, %v4639
  %v4800 = vpack.c.b16 %v4648, %v4640
  %v4801 = vpack.c.b16 %v4649, %v4641
  %v4802 = vpack.c.b16 %v4650, %v4642
  %v4803 = vpack.c.b16 %v4651, %v4643
  %v4804 = vpack.c.b16 %v4660, %v4652
  %v4805 = vpack.c.b16 %v4661, %v4653
  %v4806 = vpack.c.b16 %v4662, %v4654
  %v4807 = vpack.c.b16 %v4663, %v4655
  %v4808 = vpack.c.b16 %v4664, %v4656
  %v4809 = vpack.c.b16 %v4665, %v4657
  %v4810 = vpack.c.b16 %v4666, %v4658
  %v4811 = vpack.c.b16 %v4667, %v4659
  %v4812 = vpack.c.b16 %v4676, %v4668
  %v4813 = vpack.c.b16 %v4677, %v4669
  %v4814 = vpack.c.b16 %v4678, %v4670
  %v4815 = vpack.c.b16 %v4679, %v4671
  %v4816 = vpack.c.b16 %v4680, %v4672
  %v4817 = vpack.c.b16 %v4681, %v4673
  %v4818 = vpack.c.b16 %v4682, %v4674
  %v4819 = vpack.c.b16 %v4683, %v4675
  %v4820 = vpack.c.b16 %v4692, %v4684
  %v4821 = vpack.c.b16 %v4693, %v4685
  %v4822 = vpack.c.b16 %v4694, %v4686
  %v4823 = vpack.c.b16 %v4695, %v4687
  %v4824 = vpack.c.b16 %v4696, %v4688
  %v4825 = vpack.c.b16 %v4697, %v4689
  %v4826 = vpack.c.b16 %v4698, %v4690
  %v4827 = vpack.c.b16 %v4699, %v4691
  %4956 = vmatprep.subr.bf16.mxu0 %v4701
  %4957 = vmatpush1.bf16.msra.mxu0 %v4700
  %4958 = vmatprep.subr.bf16.mxu0 %v4709
  %4959 = vmatpush1.bf16.msra.mxu0 %v4708
  %4960 = vmatprep.subr.bf16.mxu0 %v4717
  %4961 = vmatpush1.bf16.msra.mxu0 %v4716
  %4962 = vmatprep.subr.bf16.mxu0 %v4725
  %4963 = vmatpush1.bf16.msra.mxu0 %v4724
  %4964 = vmatprep.subr.bf16.mxu0 %v4733
  %4965 = vmatpush1.bf16.msra.mxu0 %v4732
  %4966 = vmatprep.subr.bf16.mxu0 %v4741
  %4967 = vmatpush1.bf16.msra.mxu0 %v4740
  %4968 = vmatprep.subr.bf16.mxu0 %v4749
  %4969 = vmatpush1.bf16.msra.mxu0 %v4748
  %4970 = vmatprep.subr.bf16.mxu0 %v4757
  %4971 = vmatpush1.bf16.msra.mxu0 %v4756
  %4972 = vmatprep.subr.bf16.mxu0 %v4765
  %4973 = vmatpush1.bf16.msra.mxu0 %v4764
  %4974 = vmatprep.subr.bf16.mxu0 %v4773
  %4975 = vmatpush1.bf16.msra.mxu0 %v4772
  %4976 = vmatprep.subr.bf16.mxu0 %v4781
  %4977 = vmatpush1.bf16.msra.mxu0 %v4780
  %4978 = vmatprep.subr.bf16.mxu0 %v4789
  %4979 = vmatpush1.bf16.msra.mxu0 %v4788
  %4980 = vmatprep.subr.bf16.mxu0 %v4797
  %4981 = vmatpush1.bf16.msra.mxu0 %v4796
  %4982 = vmatprep.subr.bf16.mxu0 %v4805
  %4983 = vmatpush1.bf16.msra.mxu0 %v4804
  %4984 = vmatprep.subr.bf16.mxu0 %v4813
  %4985 = vmatpush1.bf16.msra.mxu0 %v4812
  %4986 = vmatprep.subr.bf16.mxu0 %v4821
  %4987 = vmatpush1.bf16.msra.mxu0 %v4820
  %4988 = vmatprep.mubr.bf16.mxu0 %v4187
  %4989 = vmatmul.mubr.bf16.gmra.mrb[0].mxu0 %v4186
  %v4990 = vpop.f32.mrb[0].mxu0
  %v4991 = vadd.f32 0.0, %v4990
  %v4992 = vpop.f32.mrb[0].mxu0
  %v4993 = vadd.f32 0.0, %v4992
  %v4994 = vpop.f32.mrb[0].mxu0
  %v4995 = vpop.f32.mrb[0].mxu0
  %4996 = vdwg.mxu0
  %4997 = vmatprep.subr.bf16.mxu0 %v4703
  %4998 = vmatpush1.bf16.msra.mxu0 %v4702
  %4999 = vmatprep.subr.bf16.mxu0 %v4711
  %5000 = vmatpush1.bf16.msra.mxu0 %v4710
  %5001 = vmatprep.subr.bf16.mxu0 %v4719
  %5002 = vmatpush1.bf16.msra.mxu0 %v4718
  %5003 = vmatprep.subr.bf16.mxu0 %v4727
  %5004 = vmatpush1.bf16.msra.mxu0 %v4726
  %5005 = vmatprep.subr.bf16.mxu0 %v4735
  %5006 = vmatpush1.bf16.msra.mxu0 %v4734
  %5007 = vmatprep.subr.bf16.mxu0 %v4743
  %5008 = vmatpush1.bf16.msra.mxu0 %v4742
  %5009 = vmatprep.subr.bf16.mxu0 %v4751
  %5010 = vmatpush1.bf16.msra.mxu0 %v4750
  %5011 = vmatprep.subr.bf16.mxu0 %v4759
  %5012 = vmatpush1.bf16.msra.mxu0 %v4758
  %5013 = vmatprep.subr.bf16.mxu0 %v4767
  %5014 = vmatpush1.bf16.msra.mxu0 %v4766
  %5015 = vmatprep.subr.bf16.mxu0 %v4775
  %5016 = vmatpush1.bf16.msra.mxu0 %v4774
  %5017 = vmatprep.subr.bf16.mxu0 %v4783
  %5018 = vmatpush1.bf16.msra.mxu0 %v4782
  %5019 = vmatprep.subr.bf16.mxu0 %v4791
  %5020 = vmatpush1.bf16.msra.mxu0 %v4790
  %5021 = vmatprep.subr.bf16.mxu0 %v4799
  %5022 = vmatpush1.bf16.msra.mxu0 %v4798
  %5023 = vmatprep.subr.bf16.mxu0 %v4807
  %5024 = vmatpush1.bf16.msra.mxu0 %v4806
  %5025 = vmatprep.subr.bf16.mxu0 %v4815
  %5026 = vmatpush1.bf16.msra.mxu0 %v4814
  %5027 = vmatprep.subr.bf16.mxu0 %v4823
  %5028 = vmatpush1.bf16.msra.mxu0 %v4822
  %5029 = vmatprep.mubr.bf16.mxu0 %v4187
  %5030 = vmatmul.mubr.bf16.gmra.mrb[0].mxu0 %v4186
  %v5031 = vpop.f32.mrb[0].mxu0
  %v5032 = vadd.f32 0.0, %v5031
  %v5033 = vpop.f32.mrb[0].mxu0
  %v5034 = vadd.f32 0.0, %v5033
  %v5035 = vpop.f32.mrb[0].mxu0
  %v5036 = vpop.f32.mrb[0].mxu0
  %5037 = vdwg.mxu0
  %5038 = vmatprep.subr.bf16.mxu0 %v4705
  %5039 = vmatpush1.bf16.msra.mxu0 %v4704
  %5040 = vmatprep.subr.bf16.mxu0 %v4713
  %5041 = vmatpush1.bf16.msra.mxu0 %v4712
  %5042 = vmatprep.subr.bf16.mxu0 %v4721
  %5043 = vmatpush1.bf16.msra.mxu0 %v4720
  %5044 = vmatprep.subr.bf16.mxu0 %v4729
  %5045 = vmatpush1.bf16.msra.mxu0 %v4728
  %5046 = vmatprep.subr.bf16.mxu0 %v4737
  %5047 = vmatpush1.bf16.msra.mxu0 %v4736
  %5048 = vmatprep.subr.bf16.mxu0 %v4745
  %5049 = vmatpush1.bf16.msra.mxu0 %v4744
  %5050 = vmatprep.subr.bf16.mxu0 %v4753
  %5051 = vmatpush1.bf16.msra.mxu0 %v4752
  %5052 = vmatprep.subr.bf16.mxu0 %v4761
  %5053 = vmatpush1.bf16.msra.mxu0 %v4760
  %5054 = vmatprep.subr.bf16.mxu0 %v4769
  %5055 = vmatpush1.bf16.msra.mxu0 %v4768
  %5056 = vmatprep.subr.bf16.mxu0 %v4777
  %5057 = vmatpush1.bf16.msra.mxu0 %v4776
  %5058 = vmatprep.subr.bf16.mxu0 %v4785
  %5059 = vmatpush1.bf16.msra.mxu0 %v4784
  %5060 = vmatprep.subr.bf16.mxu0 %v4793
  %5061 = vmatpush1.bf16.msra.mxu0 %v4792
  %5062 = vmatprep.subr.bf16.mxu0 %v4801
  %5063 = vmatpush1.bf16.msra.mxu0 %v4800
  %5064 = vmatprep.subr.bf16.mxu0 %v4809
  %5065 = vmatpush1.bf16.msra.mxu0 %v4808
  %5066 = vmatprep.subr.bf16.mxu0 %v4817
  %5067 = vmatpush1.bf16.msra.mxu0 %v4816
  %5068 = vmatprep.subr.bf16.mxu0 %v4825
  %5069 = vmatpush1.bf16.msra.mxu0 %v4824
  %5070 = vmatprep.mubr.bf16.mxu0 %v4187
  %5071 = vmatmul.mubr.bf16.gmra.mrb[0].mxu0 %v4186
  %v5072 = vpop.f32.mrb[0].mxu0
  %v5073 = vadd.f32 0.0, %v5072
  %v5074 = vpop.f32.mrb[0].mxu0
  %v5075 = vadd.f32 0.0, %v5074
  %v5076 = vpop.f32.mrb[0].mxu0
  %v5077 = vpop.f32.mrb[0].mxu0
  %5078 = vdwg.mxu0
  %5079 = vmatprep.subr.bf16.mxu0 %v4707
  %5080 = vmatpush1.bf16.msra.mxu0 %v4706
  %5081 = vmatprep.subr.bf16.mxu0 %v4715
  %5082 = vmatpush1.bf16.msra.mxu0 %v4714
  %5083 = vmatprep.subr.bf16.mxu0 %v4723
  %5084 = vmatpush1.bf16.msra.mxu0 %v4722
  %5085 = vmatprep.subr.bf16.mxu0 %v4731
  %5086 = vmatpush1.bf16.msra.mxu0 %v4730
  %5087 = vmatprep.subr.bf16.mxu0 %v4739
  %5088 = vmatpush1.bf16.msra.mxu0 %v4738
  %5089 = vmatprep.subr.bf16.mxu0 %v4747
  %5090 = vmatpush1.bf16.msra.mxu0 %v4746
  %5091 = vmatprep.subr.bf16.mxu0 %v4755
  %5092 = vmatpush1.bf16.msra.mxu0 %v4754
  %5093 = vmatprep.subr.bf16.mxu0 %v4763
  %5094 = vmatpush1.bf16.msra.mxu0 %v4762
  %5095 = vmatprep.subr.bf16.mxu0 %v4771
  %5096 = vmatpush1.bf16.msra.mxu0 %v4770
  %5097 = vmatprep.subr.bf16.mxu0 %v4779
  %5098 = vmatpush1.bf16.msra.mxu0 %v4778
  %5099 = vmatprep.subr.bf16.mxu0 %v4787
  %5100 = vmatpush1.bf16.msra.mxu0 %v4786
  %5101 = vmatprep.subr.bf16.mxu0 %v4795
  %5102 = vmatpush1.bf16.msra.mxu0 %v4794
  %5103 = vmatprep.subr.bf16.mxu0 %v4803
  %5104 = vmatpush1.bf16.msra.mxu0 %v4802
  %5105 = vmatprep.subr.bf16.mxu0 %v4811
  %5106 = vmatpush1.bf16.msra.mxu0 %v4810
  %5107 = vmatprep.subr.bf16.mxu0 %v4819
  %5108 = vmatpush1.bf16.msra.mxu0 %v4818
  %5109 = vmatprep.subr.bf16.mxu0 %v4827
  %5110 = vmatpush1.bf16.msra.mxu0 %v4826
  %5111 = vmatprep.mubr.bf16.mxu0 %v4187
  %5112 = vmatmul.mubr.bf16.gmra.mrb[0].mxu0 %v4186
  %v5113 = vpop.f32.mrb[0].mxu0
  %v5114 = vadd.f32 0.0, %v5113
  %v5115 = vpop.f32.mrb[0].mxu0
  %v5116 = vadd.f32 0.0, %v5115
  %v5117 = vpop.f32.mrb[0].mxu0
  %v5118 = vpop.f32.mrb[0].mxu0
  %5119 = vdwg.mxu0
  %v5120 = vadd.f32 %v4178, %v4991
  %v5121 = vadd.f32 %v4179, %v4993
  %v5122 = vadd.f32 %v4180, %v5032
  %v5123 = vadd.f32 %v4181, %v5034
  %v5124 = vadd.f32 %v4182, %v5073
  %v5125 = vadd.f32 %v4183, %v5075
  %v5126 = vadd.f32 %v4184, %v5114
  %v5127 = vadd.f32 %v4185, %v5116
  %v5128 = vpack.c.bf16 %v5120, %v5120
  %v5129 = vpack.c.bf16 %v5121, %v5121
  %v5130 = vpack.c.bf16 %v5122, %v5122
  %v5131 = vpack.c.bf16 %v5123, %v5123
  %v5132 = vpack.c.bf16 %v5124, %v5124
  %v5133 = vpack.c.bf16 %v5125, %v5125
  %v5134 = vpack.c.bf16 %v5126, %v5126
  %v5135 = vpack.c.bf16 %v5127, %v5127
  %v5136 = vxor.u32 %v5128, 2147516416
  %v5137 = vxor.u32 %v5129, 2147516416
  %v5138 = vxor.u32 %v5130, 2147516416
  %v5139 = vxor.u32 %v5131, 2147516416
  %v5140 = vxor.u32 %v5132, 2147516416
  %v5141 = vxor.u32 %v5133, 2147516416
  %v5143 = vmul.bf16 %v5136, 1069105081
  %v5144 = vpow.bf16.pop %v5143
  %v5146 = vmul.bf16 %v5137, 1069105081
  %v5147 = vpow.bf16.pop %v5146
  %v5149 = vmul.bf16 %v5138, 1069105081
  %v5150 = vpow.bf16.pop %v5149
  %v5152 = vmul.bf16 %v5139, 1069105081
  %v5153 = vpow.bf16.pop %v5152
  %v5155 = vmul.bf16 %v5140, 1069105081
  %v5156 = vpow.bf16.pop %v5155
  %v5158 = vmul.bf16 %v5141, 1069105081
  %v5159 = vpow.bf16.pop %v5158
  %v5160 = vadd.bf16 %v5144, 1065369472
  %v5161 = vadd.bf16 %v5147, 1065369472
  %v5162 = vadd.bf16 %v5150, 1065369472
  %v5163 = vadd.bf16 %v5153, 1065369472
  %v5164 = vadd.bf16 %v5156, 1065369472
  %v5165 = vadd.bf16 %v5159, 1065369472
  %v5166 = vrcp.bf16.pop %v5160
  %v5167 = vmul.bf16 1065369472, %v5166
  %v5168 = vrcp.bf16.pop %v5161
  %v5169 = vmul.bf16 1065369472, %v5168
  %v5170 = vrcp.bf16.pop %v5162
  %v5171 = vmul.bf16 1065369472, %v5170
  %v5172 = vrcp.bf16.pop %v5163
  %v5173 = vmul.bf16 1065369472, %v5172
  %v5174 = vrcp.bf16.pop %v5164
  %v5175 = vmul.bf16 1065369472, %v5174
  %v5176 = vrcp.bf16.pop %v5165
  %v5177 = vmul.bf16 1065369472, %v5176
  %v5178 = vunpack.c.l.bf16 %v5167
  %v5179 = vunpack.c.l.bf16 %v5169
  %v5180 = vunpack.c.l.bf16 %v5171
  %v5181 = vunpack.c.l.bf16 %v5173
  %v5182 = vunpack.c.l.bf16 %v5175
  %v5183 = vunpack.c.l.bf16 %v5177
  %v5184 = vtanh.bf16.pop %v5134
  %v5185 = vtanh.bf16.pop %v5135
  %v5186 = vunpack.c.l.bf16 %v5184
  %v5187 = vunpack.c.l.bf16 %v5185
  %v5188 = vmul.f32 %v5180, %v4173
  %v5189 = vmul.f32 %v5181, %v4174
  %v5190 = vmul.f32 %v5178, %v5186
  %v5191 = vmul.f32 %v5179, %v5187
  %v5192 = vadd.f32 %v5188, %v5190
  %v5193 = vadd.f32 %v5189, %v5191
  %v5194 = vpack.c.bf16 %v5192, %v5192
  %v5195 = vpack.c.bf16 %v5193, %v5193
  %v5196 = vtanh.bf16.pop %v5194
  %v5197 = vtanh.bf16.pop %v5195
  %v5198 = vunpack.c.l.bf16 %v5196
  %v5199 = vunpack.c.l.bf16 %v5197
  %v5200 = vmul.f32 %v5182, %v5198
  %v5201 = vmul.f32 %v5183, %v5199
  %s5202 = smul.u32 1, 8
  %s5203 = smul.addr %s5202, 8
  %s5204 = scalar_lea.vmem [#allocation2], %s5203
  %v5205 = vld [vmem:[%s5204] sm:$0xff]
  %v5206 = vld [vmem:[%s5204 + $0x8] sm:$0xff]
  %v5207 = vld [vmem:[%s5204 + $0x10] sm:$0xff]
  %v5208 = vld [vmem:[%s5204 + $0x18] sm:$0xff]
  %v5209 = vld [vmem:[%s5204 + $0x20] sm:$0xff]
  %v5210 = vld [vmem:[%s5204 + $0x28] sm:$0xff]
  %v5211 = vld [vmem:[%s5204 + $0x30] sm:$0xff]
  %v5212 = vld [vmem:[%s5204 + $0x38] sm:$0xff]
  %v5213 = vpack.c.bf16 %v5200, %v5200
  %v5214 = vpack.c.bf16 %v5201, %v5201
  %5215 = vmatprep.subr.bf16.mxu0 %v4701
  %5216 = vmatpush1.bf16.msra.mxu0 %v4700
  %5217 = vmatprep.subr.bf16.mxu0 %v4709
  %5218 = vmatpush1.bf16.msra.mxu0 %v4708
  %5219 = vmatprep.subr.bf16.mxu0 %v4717
  %5220 = vmatpush1.bf16.msra.mxu0 %v4716
  %5221 = vmatprep.subr.bf16.mxu0 %v4725
  %5222 = vmatpush1.bf16.msra.mxu0 %v4724
  %5223 = vmatprep.subr.bf16.mxu0 %v4733
  %5224 = vmatpush1.bf16.msra.mxu0 %v4732
  %5225 = vmatprep.subr.bf16.mxu0 %v4741
  %5226 = vmatpush1.bf16.msra.mxu0 %v4740
  %5227 = vmatprep.subr.bf16.mxu0 %v4749
  %5228 = vmatpush1.bf16.msra.mxu0 %v4748
  %5229 = vmatprep.subr.bf16.mxu0 %v4757
  %5230 = vmatpush1.bf16.msra.mxu0 %v4756
  %5231 = vmatprep.subr.bf16.mxu0 %v4765
  %5232 = vmatpush1.bf16.msra.mxu0 %v4764
  %5233 = vmatprep.subr.bf16.mxu0 %v4773
  %5234 = vmatpush1.bf16.msra.mxu0 %v4772
  %5235 = vmatprep.subr.bf16.mxu0 %v4781
  %5236 = vmatpush1.bf16.msra.mxu0 %v4780
  %5237 = vmatprep.subr.bf16.mxu0 %v4789
  %5238 = vmatpush1.bf16.msra.mxu0 %v4788
  %5239 = vmatprep.subr.bf16.mxu0 %v4797
  %5240 = vmatpush1.bf16.msra.mxu0 %v4796
  %5241 = vmatprep.subr.bf16.mxu0 %v4805
  %5242 = vmatpush1.bf16.msra.mxu0 %v4804
  %5243 = vmatprep.subr.bf16.mxu0 %v4813
  %5244 = vmatpush1.bf16.msra.mxu0 %v4812
  %5245 = vmatprep.subr.bf16.mxu0 %v4821
  %5246 = vmatpush1.bf16.msra.mxu0 %v4820
  %5247 = vmatprep.mubr.bf16.mxu0 %v5214
  %5248 = vmatmul.mubr.bf16.gmra.mrb[0].mxu0 %v5213
  %v5249 = vpop.f32.mrb[0].mxu0
  %v5250 = vadd.f32 0.0, %v5249
  %v5251 = vpop.f32.mrb[0].mxu0
  %v5252 = vadd.f32 0.0, %v5251
  %v5253 = vpop.f32.mrb[0].mxu0
  %v5254 = vpop.f32.mrb[0].mxu0
  %5255 = vdwg.mxu0
  %5256 = vmatprep.subr.bf16.mxu0 %v4703
  %5257 = vmatpush1.bf16.msra.mxu0 %v4702
  %5258 = vmatprep.subr.bf16.mxu0 %v4711
  %5259 = vmatpush1.bf16.msra.mxu0 %v4710
  %5260 = vmatprep.subr.bf16.mxu0 %v4719
  %5261 = vmatpush1.bf16.msra.mxu0 %v4718
  %5262 = vmatprep.subr.bf16.mxu0 %v4727
  %5263 = vmatpush1.bf16.msra.mxu0 %v4726
  %5264 = vmatprep.subr.bf16.mxu0 %v4735
  %5265 = vmatpush1.bf16.msra.mxu0 %v4734
  %5266 = vmatprep.subr.bf16.mxu0 %v4743
  %5267 = vmatpush1.bf16.msra.mxu0 %v4742
  %5268 = vmatprep.subr.bf16.mxu0 %v4751
  %5269 = vmatpush1.bf16.msra.mxu0 %v4750
  %5270 = vmatprep.subr.bf16.mxu0 %v4759
  %5271 = vmatpush1.bf16.msra.mxu0 %v4758
  %5272 = vmatprep.subr.bf16.mxu0 %v4767
  %5273 = vmatpush1.bf16.msra.mxu0 %v4766
  %5274 = vmatprep.subr.bf16.mxu0 %v4775
  %5275 = vmatpush1.bf16.msra.mxu0 %v4774
  %5276 = vmatprep.subr.bf16.mxu0 %v4783
  %5277 = vmatpush1.bf16.msra.mxu0 %v4782
  %5278 = vmatprep.subr.bf16.mxu0 %v4791
  %5279 = vmatpush1.bf16.msra.mxu0 %v4790
  %5280 = vmatprep.subr.bf16.mxu0 %v4799
  %5281 = vmatpush1.bf16.msra.mxu0 %v4798
  %5282 = vmatprep.subr.bf16.mxu0 %v4807
  %5283 = vmatpush1.bf16.msra.mxu0 %v4806
  %5284 = vmatprep.subr.bf16.mxu0 %v4815
  %5285 = vmatpush1.bf16.msra.mxu0 %v4814
  %5286 = vmatprep.subr.bf16.mxu0 %v4823
  %5287 = vmatpush1.bf16.msra.mxu0 %v4822
  %5288 = vmatprep.mubr.bf16.mxu0 %v5214
  %5289 = vmatmul.mubr.bf16.gmra.mrb[0].mxu0 %v5213
  %v5290 = vpop.f32.mrb[0].mxu0
  %v5291 = vadd.f32 0.0, %v5290
  %v5292 = vpop.f32.mrb[0].mxu0
  %v5293 = vadd.f32 0.0, %v5292
  %v5294 = vpop.f32.mrb[0].mxu0
  %v5295 = vpop.f32.mrb[0].mxu0
  %5296 = vdwg.mxu0
  %5297 = vmatprep.subr.bf16.mxu0 %v4705
  %5298 = vmatpush1.bf16.msra.mxu0 %v4704
  %5299 = vmatprep.subr.bf16.mxu0 %v4713
  %5300 = vmatpush1.bf16.msra.mxu0 %v4712
  %5301 = vmatprep.subr.bf16.mxu0 %v4721
  %5302 = vmatpush1.bf16.msra.mxu0 %v4720
  %5303 = vmatprep.subr.bf16.mxu0 %v4729
  %5304 = vmatpush1.bf16.msra.mxu0 %v4728
  %5305 = vmatprep.subr.bf16.mxu0 %v4737
  %5306 = vmatpush1.bf16.msra.mxu0 %v4736
  %5307 = vmatprep.subr.bf16.mxu0 %v4745
  %5308 = vmatpush1.bf16.msra.mxu0 %v4744
  %5309 = vmatprep.subr.bf16.mxu0 %v4753
  %5310 = vmatpush1.bf16.msra.mxu0 %v4752
  %5311 = vmatprep.subr.bf16.mxu0 %v4761
  %5312 = vmatpush1.bf16.msra.mxu0 %v4760
  %5313 = vmatprep.subr.bf16.mxu0 %v4769
  %5314 = vmatpush1.bf16.msra.mxu0 %v4768
  %5315 = vmatprep.subr.bf16.mxu0 %v4777
  %5316 = vmatpush1.bf16.msra.mxu0 %v4776
  %5317 = vmatprep.subr.bf16.mxu0 %v4785
  %5318 = vmatpush1.bf16.msra.mxu0 %v4784
  %5319 = vmatprep.subr.bf16.mxu0 %v4793
  %5320 = vmatpush1.bf16.msra.mxu0 %v4792
  %5321 = vmatprep.subr.bf16.mxu0 %v4801
  %5322 = vmatpush1.bf16.msra.mxu0 %v4800
  %5323 = vmatprep.subr.bf16.mxu0 %v4809
  %5324 = vmatpush1.bf16.msra.mxu0 %v4808
  %5325 = vmatprep.subr.bf16.mxu0 %v4817
  %5326 = vmatpush1.bf16.msra.mxu0 %v4816
  %5327 = vmatprep.subr.bf16.mxu0 %v4825
  %5328 = vmatpush1.bf16.msra.mxu0 %v4824
  %5329 = vmatprep.mubr.bf16.mxu0 %v5214
  %5330 = vmatmul.mubr.bf16.gmra.mrb[0].mxu0 %v5213
  %v5331 = vpop.f32.mrb[0].mxu0
  %v5332 = vadd.f32 0.0, %v5331
  %v5333 = vpop.f32.mrb[0].mxu0
  %v5334 = vadd.f32 0.0, %v5333
  %v5335 = vpop.f32.mrb[0].mxu0
  %v5336 = vpop.f32.mrb[0].mxu0
  %5337 = vdwg.mxu0
  %5338 = vmatprep.subr.bf16.mxu0 %v4707
  %5339 = vmatpush1.bf16.msra.mxu0 %v4706
  %5340 = vmatprep.subr.bf16.mxu0 %v4715
  %5341 = vmatpush1.bf16.msra.mxu0 %v4714
  %5342 = vmatprep.subr.bf16.mxu0 %v4723
  %5343 = vmatpush1.bf16.msra.mxu0 %v4722
  %5344 = vmatprep.subr.bf16.mxu0 %v4731
  %5345 = vmatpush1.bf16.msra.mxu0 %v4730
  %5346 = vmatprep.subr.bf16.mxu0 %v4739
  %5347 = vmatpush1.bf16.msra.mxu0 %v4738
  %5348 = vmatprep.subr.bf16.mxu0 %v4747
  %5349 = vmatpush1.bf16.msra.mxu0 %v4746
  %5350 = vmatprep.subr.bf16.mxu0 %v4755
  %5351 = vmatpush1.bf16.msra.mxu0 %v4754
  %5352 = vmatprep.subr.bf16.mxu0 %v4763
  %5353 = vmatpush1.bf16.msra.mxu0 %v4762
  %5354 = vmatprep.subr.bf16.mxu0 %v4771
  %5355 = vmatpush1.bf16.msra.mxu0 %v4770
  %5356 = vmatprep.subr.bf16.mxu0 %v4779
  %5357 = vmatpush1.bf16.msra.mxu0 %v4778
  %5358 = vmatprep.subr.bf16.mxu0 %v4787
  %5359 = vmatpush1.bf16.msra.mxu0 %v4786
  %5360 = vmatprep.subr.bf16.mxu0 %v4795
  %5361 = vmatpush1.bf16.msra.mxu0 %v4794
  %5362 = vmatprep.subr.bf16.mxu0 %v4803
  %5363 = vmatpush1.bf16.msra.mxu0 %v4802
  %5364 = vmatprep.subr.bf16.mxu0 %v4811
  %5365 = vmatpush1.bf16.msra.mxu0 %v4810
  %5366 = vmatprep.subr.bf16.mxu0 %v4819
  %5367 = vmatpush1.bf16.msra.mxu0 %v4818
  %5368 = vmatprep.subr.bf16.mxu0 %v4827
  %5369 = vmatpush1.bf16.msra.mxu0 %v4826
  %5370 = vmatprep.mubr.bf16.mxu0 %v5214
  %5371 = vmatmul.mubr.bf16.gmra.mrb[0].mxu0 %v5213
  %v5372 = vpop.f32.mrb[0].mxu0
  %v5373 = vadd.f32 0.0, %v5372
  %v5374 = vpop.f32.mrb[0].mxu0
  %v5375 = vadd.f32 0.0, %v5374
  %v5376 = vpop.f32.mrb[0].mxu0
  %v5377 = vpop.f32.mrb[0].mxu0
  %5378 = vdwg.mxu0
  %v5379 = vadd.f32 %v5205, %v5250
  %v5380 = vadd.f32 %v5206, %v5252
  %v5381 = vadd.f32 %v5207, %v5291
  %v5382 = vadd.f32 %v5208, %v5293
  %v5383 = vadd.f32 %v5209, %v5332
  %v5384 = vadd.f32 %v5210, %v5334
  %v5385 = vadd.f32 %v5211, %v5373
  %v5386 = vadd.f32 %v5212, %v5375
  %v5387 = vpack.c.bf16 %v5379, %v5379
  %v5388 = vpack.c.bf16 %v5380, %v5380
  %v5389 = vpack.c.bf16 %v5381, %v5381
  %v5390 = vpack.c.bf16 %v5382, %v5382
  %v5391 = vpack.c.bf16 %v5383, %v5383
  %v5392 = vpack.c.bf16 %v5384, %v5384
  %v5393 = vpack.c.bf16 %v5385, %v5385
  %v5394 = vpack.c.bf16 %v5386, %v5386
  %v5395 = vxor.u32 %v5387, 2147516416
  %v5396 = vxor.u32 %v5388, 2147516416
  %v5397 = vxor.u32 %v5389, 2147516416
  %v5398 = vxor.u32 %v5390, 2147516416
  %v5399 = vxor.u32 %v5391, 2147516416
  %v5400 = vxor.u32 %v5392, 2147516416
  %v5402 = vmul.bf16 %v5395, 1069105081
  %v5403 = vpow.bf16.pop %v5402
  %v5405 = vmul.bf16 %v5396, 1069105081
  %v5406 = vpow.bf16.pop %v5405
  %v5408 = vmul.bf16 %v5397, 1069105081
  %v5409 = vpow.bf16.pop %v5408
  %v5411 = vmul.bf16 %v5398, 1069105081
  %v5412 = vpow.bf16.pop %v5411
  %v5414 = vmul.bf16 %v5399, 1069105081
  %v5415 = vpow.bf16.pop %v5414
  %v5417 = vmul.bf16 %v5400, 1069105081
  %v5418 = vpow.bf16.pop %v5417
  %v5419 = vadd.bf16 %v5403, 1065369472
  %v5420 = vadd.bf16 %v5406, 1065369472
  %v5421 = vadd.bf16 %v5409, 1065369472
  %v5422 = vadd.bf16 %v5412, 1065369472
  %v5423 = vadd.bf16 %v5415, 1065369472
  %v5424 = vadd.bf16 %v5418, 1065369472
  %v5425 = vrcp.bf16.pop %v5419
  %v5426 = vmul.bf16 1065369472, %v5425
  %v5427 = vrcp.bf16.pop %v5420
  %v5428 = vmul.bf16 1065369472, %v5427
  %v5429 = vrcp.bf16.pop %v5421
  %v5430 = vmul.bf16 1065369472, %v5429
  %v5431 = vrcp.bf16.pop %v5422
  %v5432 = vmul.bf16 1065369472, %v5431
  %v5433 = vrcp.bf16.pop %v5423
  %v5434 = vmul.bf16 1065369472, %v5433
  %v5435 = vrcp.bf16.pop %v5424
  %v5436 = vmul.bf16 1065369472, %v5435
  %v5437 = vunpack.c.l.bf16 %v5426
  %v5438 = vunpack.c.l.bf16 %v5428
  %v5439 = vunpack.c.l.bf16 %v5430
  %v5440 = vunpack.c.l.bf16 %v5432
  %v5441 = vunpack.c.l.bf16 %v5434
  %v5442 = vunpack.c.l.bf16 %v5436
  %v5443 = vtanh.bf16.pop %v5393
  %v5444 = vtanh.bf16.pop %v5394
  %v5445 = vunpack.c.l.bf16 %v5443
  %v5446 = vunpack.c.l.bf16 %v5444
  %v5447 = vmul.f32 %v5439, %v5192
  %v5448 = vmul.f32 %v5440, %v5193
  %v5449 = vmul.f32 %v5437, %v5445
  %v5450 = vmul.f32 %v5438, %v5446
  %v5451 = vadd.f32 %v5447, %v5449
  %v5452 = vadd.f32 %v5448, %v5450
  %v5453 = vpack.c.bf16 %v5451, %v5451
  %v5454 = vpack.c.bf16 %v5452, %v5452
  %v5455 = vtanh.bf16.pop %v5453
  %v5456 = vtanh.bf16.pop %v5454
  %v5457 = vunpack.c.l.bf16 %v5455
  %v5458 = vunpack.c.l.bf16 %v5456
  %v5459 = vmul.f32 %v5441, %v5457
  %v5460 = vmul.f32 %v5442, %v5458
  %s5461 = smul.u32 2, 8
  %s5462 = smul.addr %s5461, 8
  %s5463 = scalar_lea.vmem [#allocation2], %s5462
  %v5464 = vld [vmem:[%s5463] sm:$0xff]
  %v5465 = vld [vmem:[%s5463 + $0x8] sm:$0xff]
  %v5466 = vld [vmem:[%s5463 + $0x10] sm:$0xff]
  %v5467 = vld [vmem:[%s5463 + $0x18] sm:$0xff]
  %v5468 = vld [vmem:[%s5463 + $0x20] sm:$0xff]
  %v5469 = vld [vmem:[%s5463 + $0x28] sm:$0xff]
  %v5470 = vld [vmem:[%s5463 + $0x30] sm:$0xff]
  %v5471 = vld [vmem:[%s5463 + $0x38] sm:$0xff]
  %v5472 = vpack.c.bf16 %v5459, %v5459
  %v5473 = vpack.c.bf16 %v5460, %v5460
  %5474 = vmatprep.subr.bf16.mxu0 %v4701
  %5475 = vmatpush1.bf16.msra.mxu0 %v4700
  %5476 = vmatprep.subr.bf16.mxu0 %v4709
  %5477 = vmatpush1.bf16.msra.mxu0 %v4708
  %5478 = vmatprep.subr.bf16.mxu0 %v4717
  %5479 = vmatpush1.bf16.msra.mxu0 %v4716
  %5480 = vmatprep.subr.bf16.mxu0 %v4725
  %5481 = vmatpush1.bf16.msra.mxu0 %v4724
  %5482 = vmatprep.subr.bf16.mxu0 %v4733
  %5483 = vmatpush1.bf16.msra.mxu0 %v4732
  %5484 = vmatprep.subr.bf16.mxu0 %v4741
  %5485 = vmatpush1.bf16.msra.mxu0 %v4740
  %5486 = vmatprep.subr.bf16.mxu0 %v4749
  %5487 = vmatpush1.bf16.msra.mxu0 %v4748
  %5488 = vmatprep.subr.bf16.mxu0 %v4757
  %5489 = vmatpush1.bf16.msra.mxu0 %v4756
  %5490 = vmatprep.subr.bf16.mxu0 %v4765
  %5491 = vmatpush1.bf16.msra.mxu0 %v4764
  %5492 = vmatprep.subr.bf16.mxu0 %v4773
  %5493 = vmatpush1.bf16.msra.mxu0 %v4772
  %5494 = vmatprep.subr.bf16.mxu0 %v4781
  %5495 = vmatpush1.bf16.msra.mxu0 %v4780
  %5496 = vmatprep.subr.bf16.mxu0 %v4789
  %5497 = vmatpush1.bf16.msra.mxu0 %v4788
  %5498 = vmatprep.subr.bf16.mxu0 %v4797
  %5499 = vmatpush1.bf16.msra.mxu0 %v4796
  %5500 = vmatprep.subr.bf16.mxu0 %v4805
  %5501 = vmatpush1.bf16.msra.mxu0 %v4804
  %5502 = vmatprep.subr.bf16.mxu0 %v4813
  %5503 = vmatpush1.bf16.msra.mxu0 %v4812
  %5504 = vmatprep.subr.bf16.mxu0 %v4821
  %5505 = vmatpush1.bf16.msra.mxu0 %v4820
  %5506 = vmatprep.mubr.bf16.mxu0 %v5473
  %5507 = vmatmul.mubr.bf16.gmra.mrb[0].mxu0 %v5472
  %v5508 = vpop.f32.mrb[0].mxu0
  %v5509 = vadd.f32 0.0, %v5508
  %v5510 = vpop.f32.mrb[0].mxu0
  %v5511 = vadd.f32 0.0, %v5510
  %v5512 = vpop.f32.mrb[0].mxu0
  %v5513 = vpop.f32.mrb[0].mxu0
  %5514 = vdwg.mxu0
  %5515 = vmatprep.subr.bf16.mxu0 %v4703
  %5516 = vmatpush1.bf16.msra.mxu0 %v4702
  %5517 = vmatprep.subr.bf16.mxu0 %v4711
  %5518 = vmatpush1.bf16.msra.mxu0 %v4710
  %5519 = vmatprep.subr.bf16.mxu0 %v4719
  %5520 = vmatpush1.bf16.msra.mxu0 %v4718
  %5521 = vmatprep.subr.bf16.mxu0 %v4727
  %5522 = vmatpush1.bf16.msra.mxu0 %v4726
  %5523 = vmatprep.subr.bf16.mxu0 %v4735
  %5524 = vmatpush1.bf16.msra.mxu0 %v4734
  %5525 = vmatprep.subr.bf16.mxu0 %v4743
  %5526 = vmatpush1.bf16.msra.mxu0 %v4742
  %5527 = vmatprep.subr.bf16.mxu0 %v4751
  %5528 = vmatpush1.bf16.msra.mxu0 %v4750
  %5529 = vmatprep.subr.bf16.mxu0 %v4759
  %5530 = vmatpush1.bf16.msra.mxu0 %v4758
  %5531 = vmatprep.subr.bf16.mxu0 %v4767
  %5532 = vmatpush1.bf16.msra.mxu0 %v4766
  %5533 = vmatprep.subr.bf16.mxu0 %v4775
  %5534 = vmatpush1.bf16.msra.mxu0 %v4774
  %5535 = vmatprep.subr.bf16.mxu0 %v4783
  %5536 = vmatpush1.bf16.msra.mxu0 %v4782
  %5537 = vmatprep.subr.bf16.mxu0 %v4791
  %5538 = vmatpush1.bf16.msra.mxu0 %v4790
  %5539 = vmatprep.subr.bf16.mxu0 %v4799
  %5540 = vmatpush1.bf16.msra.mxu0 %v4798
  %5541 = vmatprep.subr.bf16.mxu0 %v4807
  %5542 = vmatpush1.bf16.msra.mxu0 %v4806
  %5543 = vmatprep.subr.bf16.mxu0 %v4815
  %5544 = vmatpush1.bf16.msra.mxu0 %v4814
  %5545 = vmatprep.subr.bf16.mxu0 %v4823
  %5546 = vmatpush1.bf16.msra.mxu0 %v4822
  %5547 = vmatprep.mubr.bf16.mxu0 %v5473
  %5548 = vmatmul.mubr.bf16.gmra.mrb[0].mxu0 %v5472
  %v5549 = vpop.f32.mrb[0].mxu0
  %v5550 = vadd.f32 0.0, %v5549
  %v5551 = vpop.f32.mrb[0].mxu0
  %v5552 = vadd.f32 0.0, %v5551
  %v5553 = vpop.f32.mrb[0].mxu0
  %v5554 = vpop.f32.mrb[0].mxu0
  %5555 = vdwg.mxu0
  %5556 = vmatprep.subr.bf16.mxu0 %v4705
  %5557 = vmatpush1.bf16.msra.mxu0 %v4704
  %5558 = vmatprep.subr.bf16.mxu0 %v4713
  %5559 = vmatpush1.bf16.msra.mxu0 %v4712
  %5560 = vmatprep.subr.bf16.mxu0 %v4721
  %5561 = vmatpush1.bf16.msra.mxu0 %v4720
  %5562 = vmatprep.subr.bf16.mxu0 %v4729
  %5563 = vmatpush1.bf16.msra.mxu0 %v4728
  %5564 = vmatprep.subr.bf16.mxu0 %v4737
  %5565 = vmatpush1.bf16.msra.mxu0 %v4736
  %5566 = vmatprep.subr.bf16.mxu0 %v4745
  %5567 = vmatpush1.bf16.msra.mxu0 %v4744
  %5568 = vmatprep.subr.bf16.mxu0 %v4753
  %5569 = vmatpush1.bf16.msra.mxu0 %v4752
  %5570 = vmatprep.subr.bf16.mxu0 %v4761
  %5571 = vmatpush1.bf16.msra.mxu0 %v4760
  %5572 = vmatprep.subr.bf16.mxu0 %v4769
  %5573 = vmatpush1.bf16.msra.mxu0 %v4768
  %5574 = vmatprep.subr.bf16.mxu0 %v4777
  %5575 = vmatpush1.bf16.msra.mxu0 %v4776
  %5576 = vmatprep.subr.bf16.mxu0 %v4785
  %5577 = vmatpush1.bf16.msra.mxu0 %v4784
  %5578 = vmatprep.subr.bf16.mxu0 %v4793
  %5579 = vmatpush1.bf16.msra.mxu0 %v4792
  %5580 = vmatprep.subr.bf16.mxu0 %v4801
  %5581 = vmatpush1.bf16.msra.mxu0 %v4800
  %5582 = vmatprep.subr.bf16.mxu0 %v4809
  %5583 = vmatpush1.bf16.msra.mxu0 %v4808
  %5584 = vmatprep.subr.bf16.mxu0 %v4817
  %5585 = vmatpush1.bf16.msra.mxu0 %v4816
  %5586 = vmatprep.subr.bf16.mxu0 %v4825
  %5587 = vmatpush1.bf16.msra.mxu0 %v4824
  %5588 = vmatprep.mubr.bf16.mxu0 %v5473
  %5589 = vmatmul.mubr.bf16.gmra.mrb[0].mxu0 %v5472
  %v5590 = vpop.f32.mrb[0].mxu0
  %v5591 = vadd.f32 0.0, %v5590
  %v5592 = vpop.f32.mrb[0].mxu0
  %v5593 = vadd.f32 0.0, %v5592
  %v5594 = vpop.f32.mrb[0].mxu0
  %v5595 = vpop.f32.mrb[0].mxu0
  %5596 = vdwg.mxu0
  %5597 = vmatprep.subr.bf16.mxu0 %v4707
  %5598 = vmatpush1.bf16.msra.mxu0 %v4706
  %5599 = vmatprep.subr.bf16.mxu0 %v4715
  %5600 = vmatpush1.bf16.msra.mxu0 %v4714
  %5601 = vmatprep.subr.bf16.mxu0 %v4723
  %5602 = vmatpush1.bf16.msra.mxu0 %v4722
  %5603 = vmatprep.subr.bf16.mxu0 %v4731
  %5604 = vmatpush1.bf16.msra.mxu0 %v4730
  %5605 = vmatprep.subr.bf16.mxu0 %v4739
  %5606 = vmatpush1.bf16.msra.mxu0 %v4738
  %5607 = vmatprep.subr.bf16.mxu0 %v4747
  %5608 = vmatpush1.bf16.msra.mxu0 %v4746
  %5609 = vmatprep.subr.bf16.mxu0 %v4755
  %5610 = vmatpush1.bf16.msra.mxu0 %v4754
  %5611 = vmatprep.subr.bf16.mxu0 %v4763
  %5612 = vmatpush1.bf16.msra.mxu0 %v4762
  %5613 = vmatprep.subr.bf16.mxu0 %v4771
  %5614 = vmatpush1.bf16.msra.mxu0 %v4770
  %5615 = vmatprep.subr.bf16.mxu0 %v4779
  %5616 = vmatpush1.bf16.msra.mxu0 %v4778
  %5617 = vmatprep.subr.bf16.mxu0 %v4787
  %5618 = vmatpush1.bf16.msra.mxu0 %v4786
  %5619 = vmatprep.subr.bf16.mxu0 %v4795
  %5620 = vmatpush1.bf16.msra.mxu0 %v4794
  %5621 = vmatprep.subr.bf16.mxu0 %v4803
  %5622 = vmatpush1.bf16.msra.mxu0 %v4802
  %5623 = vmatprep.subr.bf16.mxu0 %v4811
  %5624 = vmatpush1.bf16.msra.mxu0 %v4810
  %5625 = vmatprep.subr.bf16.mxu0 %v4819
  %5626 = vmatpush1.bf16.msra.mxu0 %v4818
  %5627 = vmatprep.subr.bf16.mxu0 %v4827
  %5628 = vmatpush1.bf16.msra.mxu0 %v4826
  %5629 = vmatprep.mubr.bf16.mxu0 %v5473
  %5630 = vmatmul.mubr.bf16.gmra.mrb[0].mxu0 %v5472
  %v5631 = vpop.f32.mrb[0].mxu0
  %v5632 = vadd.f32 0.0, %v5631
  %v5633 = vpop.f32.mrb[0].mxu0
  %v5634 = vadd.f32 0.0, %v5633
  %v5635 = vpop.f32.mrb[0].mxu0
  %v5636 = vpop.f32.mrb[0].mxu0
  %5637 = vdwg.mxu0
  %v5638 = vadd.f32 %v5464, %v5509
  %v5639 = vadd.f32 %v5465, %v5511
  %v5640 = vadd.f32 %v5466, %v5550
  %v5641 = vadd.f32 %v5467, %v5552
  %v5642 = vadd.f32 %v5468, %v5591
  %v5643 = vadd.f32 %v5469, %v5593
  %v5644 = vadd.f32 %v5470, %v5632
  %v5645 = vadd.f32 %v5471, %v5634
  %v5646 = vpack.c.bf16 %v5638, %v5638
  %v5647 = vpack.c.bf16 %v5639, %v5639
  %v5648 = vpack.c.bf16 %v5640, %v5640
  %v5649 = vpack.c.bf16 %v5641, %v5641
  %v5650 = vpack.c.bf16 %v5642, %v5642
  %v5651 = vpack.c.bf16 %v5643, %v5643
  %v5652 = vpack.c.bf16 %v5644, %v5644
  %v5653 = vpack.c.bf16 %v5645, %v5645
  %v5654 = vxor.u32 %v5646, 2147516416
  %v5655 = vxor.u32 %v5647, 2147516416
  %v5656 = vxor.u32 %v5648, 2147516416
  %v5657 = vxor.u32 %v5649, 2147516416
  %v5658 = vxor.u32 %v5650, 2147516416
  %v5659 = vxor.u32 %v5651, 2147516416
  %v5661 = vmul.bf16 %v5654, 1069105081
  %v5662 = vpow.bf16.pop %v5661
  %v5664 = vmul.bf16 %v5655, 1069105081
  %v5665 = vpow.bf16.pop %v5664
  %v5667 = vmul.bf16 %v5656, 1069105081
  %v5668 = vpow.bf16.pop %v5667
  %v5670 = vmul.bf16 %v5657, 1069105081
  %v5671 = vpow.bf16.pop %v5670
  %v5673 = vmul.bf16 %v5658, 1069105081
  %v5674 = vpow.bf16.pop %v5673
  %v5676 = vmul.bf16 %v5659, 1069105081
  %v5677 = vpow.bf16.pop %v5676
  %v5678 = vadd.bf16 %v5662, 1065369472
  %v5679 = vadd.bf16 %v5665, 1065369472
  %v5680 = vadd.bf16 %v5668, 1065369472
  %v5681 = vadd.bf16 %v5671, 1065369472
  %v5682 = vadd.bf16 %v5674, 1065369472
  %v5683 = vadd.bf16 %v5677, 1065369472
  %v5684 = vrcp.bf16.pop %v5678
  %v5685 = vmul.bf16 1065369472, %v5684
  %v5686 = vrcp.bf16.pop %v5679
  %v5687 = vmul.bf16 1065369472, %v5686
  %v5688 = vrcp.bf16.pop %v5680
  %v5689 = vmul.bf16 1065369472, %v5688
  %v5690 = vrcp.bf16.pop %v5681
  %v5691 = vmul.bf16 1065369472, %v5690
  %v5692 = vrcp.bf16.pop %v5682
  %v5693 = vmul.bf16 1065369472, %v5692
  %v5694 = vrcp.bf16.pop %v5683
  %v5695 = vmul.bf16 1065369472, %v5694
  %v5696 = vunpack.c.l.bf16 %v5685
  %v5697 = vunpack.c.l.bf16 %v5687
  %v5698 = vunpack.c.l.bf16 %v5689
  %v5699 = vunpack.c.l.bf16 %v5691
  %v5700 = vunpack.c.l.bf16 %v5693
  %v5701 = vunpack.c.l.bf16 %v5695
  %v5702 = vtanh.bf16.pop %v5652
  %v5703 = vtanh.bf16.pop %v5653
  %v5704 = vunpack.c.l.bf16 %v5702
  %v5705 = vunpack.c.l.bf16 %v5703
  %v5706 = vmul.f32 %v5698, %v5451
  %v5707 = vmul.f32 %v5699, %v5452
  %v5708 = vmul.f32 %v5696, %v5704
  %v5709 = vmul.f32 %v5697, %v5705
  %v5710 = vadd.f32 %v5706, %v5708
  %v5711 = vadd.f32 %v5707, %v5709
  %v5712 = vpack.c.bf16 %v5710, %v5710
  %v5713 = vpack.c.bf16 %v5711, %v5711
  %v5714 = vtanh.bf16.pop %v5712
  %v5715 = vtanh.bf16.pop %v5713
  %v5716 = vunpack.c.l.bf16 %v5714
  %v5717 = vunpack.c.l.bf16 %v5715
  %v5718 = vmul.f32 %v5700, %v5716
  %v5719 = vmul.f32 %v5701, %v5717
  %s5720 = smul.u32 3, 8
  %s5721 = smul.addr %s5720, 8
  %s5722 = scalar_lea.vmem [#allocation2], %s5721
  %v5723 = vld [vmem:[%s5722] sm:$0xff]
  %v5724 = vld [vmem:[%s5722 + $0x8] sm:$0xff]
  %v5725 = vld [vmem:[%s5722 + $0x10] sm:$0xff]
  %v5726 = vld [vmem:[%s5722 + $0x18] sm:$0xff]
  %v5727 = vld [vmem:[%s5722 + $0x20] sm:$0xff]
  %v5728 = vld [vmem:[%s5722 + $0x28] sm:$0xff]
  %v5729 = vld [vmem:[%s5722 + $0x30] sm:$0xff]
  %v5730 = vld [vmem:[%s5722 + $0x38] sm:$0xff]
  %v5731 = vpack.c.bf16 %v5718, %v5718
  %v5732 = vpack.c.bf16 %v5719, %v5719
  %5733 = vmatprep.subr.bf16.mxu0 %v4701
  %5734 = vmatpush1.bf16.msra.mxu0 %v4700
  %5735 = vmatprep.subr.bf16.mxu0 %v4709
  %5736 = vmatpush1.bf16.msra.mxu0 %v4708
  %5737 = vmatprep.subr.bf16.mxu0 %v4717
  %5738 = vmatpush1.bf16.msra.mxu0 %v4716
  %5739 = vmatprep.subr.bf16.mxu0 %v4725
  %5740 = vmatpush1.bf16.msra.mxu0 %v4724
  %5741 = vmatprep.subr.bf16.mxu0 %v4733
  %5742 = vmatpush1.bf16.msra.mxu0 %v4732
  %5743 = vmatprep.subr.bf16.mxu0 %v4741
  %5744 = vmatpush1.bf16.msra.mxu0 %v4740
  %5745 = vmatprep.subr.bf16.mxu0 %v4749
  %5746 = vmatpush1.bf16.msra.mxu0 %v4748
  %5747 = vmatprep.subr.bf16.mxu0 %v4757
  %5748 = vmatpush1.bf16.msra.mxu0 %v4756
  %5749 = vmatprep.subr.bf16.mxu0 %v4765
  %5750 = vmatpush1.bf16.msra.mxu0 %v4764
  %5751 = vmatprep.subr.bf16.mxu0 %v4773
  %5752 = vmatpush1.bf16.msra.mxu0 %v4772
  %5753 = vmatprep.subr.bf16.mxu0 %v4781
  %5754 = vmatpush1.bf16.msra.mxu0 %v4780
  %5755 = vmatprep.subr.bf16.mxu0 %v4789
  %5756 = vmatpush1.bf16.msra.mxu0 %v4788
  %5757 = vmatprep.subr.bf16.mxu0 %v4797
  %5758 = vmatpush1.bf16.msra.mxu0 %v4796
  %5759 = vmatprep.subr.bf16.mxu0 %v4805
  %5760 = vmatpush1.bf16.msra.mxu0 %v4804
  %5761 = vmatprep.subr.bf16.mxu0 %v4813
  %5762 = vmatpush1.bf16.msra.mxu0 %v4812
  %5763 = vmatprep.subr.bf16.mxu0 %v4821
  %5764 = vmatpush1.bf16.msra.mxu0 %v4820
  %5765 = vmatprep.mubr.bf16.mxu0 %v5732
  %5766 = vmatmul.mubr.bf16.gmra.mrb[0].mxu0 %v5731
  %v5767 = vpop.f32.mrb[0].mxu0
  %v5768 = vadd.f32 0.0, %v5767
  %v5769 = vpop.f32.mrb[0].mxu0
  %v5770 = vadd.f32 0.0, %v5769
  %v5771 = vpop.f32.mrb[0].mxu0
  %v5772 = vpop.f32.mrb[0].mxu0
  %5773 = vdwg.mxu0
  %5774 = vmatprep.subr.bf16.mxu0 %v4703
  %5775 = vmatpush1.bf16.msra.mxu0 %v4702
  %5776 = vmatprep.subr.bf16.mxu0 %v4711
  %5777 = vmatpush1.bf16.msra.mxu0 %v4710
  %5778 = vmatprep.subr.bf16.mxu0 %v4719
  %5779 = vmatpush1.bf16.msra.mxu0 %v4718
  %5780 = vmatprep.subr.bf16.mxu0 %v4727
  %5781 = vmatpush1.bf16.msra.mxu0 %v4726
  %5782 = vmatprep.subr.bf16.mxu0 %v4735
  %5783 = vmatpush1.bf16.msra.mxu0 %v4734
  %5784 = vmatprep.subr.bf16.mxu0 %v4743
  %5785 = vmatpush1.bf16.msra.mxu0 %v4742
  %5786 = vmatprep.subr.bf16.mxu0 %v4751
  %5787 = vmatpush1.bf16.msra.mxu0 %v4750
  %5788 = vmatprep.subr.bf16.mxu0 %v4759
  %5789 = vmatpush1.bf16.msra.mxu0 %v4758
  %5790 = vmatprep.subr.bf16.mxu0 %v4767
  %5791 = vmatpush1.bf16.msra.mxu0 %v4766
  %5792 = vmatprep.subr.bf16.mxu0 %v4775
  %5793 = vmatpush1.bf16.msra.mxu0 %v4774
  %5794 = vmatprep.subr.bf16.mxu0 %v4783
  %5795 = vmatpush1.bf16.msra.mxu0 %v4782
  %5796 = vmatprep.subr.bf16.mxu0 %v4791
  %5797 = vmatpush1.bf16.msra.mxu0 %v4790
  %5798 = vmatprep.subr.bf16.mxu0 %v4799
  %5799 = vmatpush1.bf16.msra.mxu0 %v4798
  %5800 = vmatprep.subr.bf16.mxu0 %v4807
  %5801 = vmatpush1.bf16.msra.mxu0 %v4806
  %5802 = vmatprep.subr.bf16.mxu0 %v4815
  %5803 = vmatpush1.bf16.msra.mxu0 %v4814
  %5804 = vmatprep.subr.bf16.mxu0 %v4823
  %5805 = vmatpush1.bf16.msra.mxu0 %v4822
  %5806 = vmatprep.mubr.bf16.mxu0 %v5732
  %5807 = vmatmul.mubr.bf16.gmra.mrb[0].mxu0 %v5731
  %v5808 = vpop.f32.mrb[0].mxu0
  %v5809 = vadd.f32 0.0, %v5808
  %v5810 = vpop.f32.mrb[0].mxu0
  %v5811 = vadd.f32 0.0, %v5810
  %v5812 = vpop.f32.mrb[0].mxu0
  %v5813 = vpop.f32.mrb[0].mxu0
  %5814 = vdwg.mxu0
  %5815 = vmatprep.subr.bf16.mxu0 %v4705
  %5816 = vmatpush1.bf16.msra.mxu0 %v4704
  %5817 = vmatprep.subr.bf16.mxu0 %v4713
  %5818 = vmatpush1.bf16.msra.mxu0 %v4712
  %5819 = vmatprep.subr.bf16.mxu0 %v4721
  %5820 = vmatpush1.bf16.msra.mxu0 %v4720
  %5821 = vmatprep.subr.bf16.mxu0 %v4729
  %5822 = vmatpush1.bf16.msra.mxu0 %v4728
  %5823 = vmatprep.subr.bf16.mxu0 %v4737
  %5824 = vmatpush1.bf16.msra.mxu0 %v4736
  %5825 = vmatprep.subr.bf16.mxu0 %v4745
  %5826 = vmatpush1.bf16.msra.mxu0 %v4744
  %5827 = vmatprep.subr.bf16.mxu0 %v4753
  %5828 = vmatpush1.bf16.msra.mxu0 %v4752
  %5829 = vmatprep.subr.bf16.mxu0 %v4761
  %5830 = vmatpush1.bf16.msra.mxu0 %v4760
  %5831 = vmatprep.subr.bf16.mxu0 %v4769
  %5832 = vmatpush1.bf16.msra.mxu0 %v4768
  %5833 = vmatprep.subr.bf16.mxu0 %v4777
  %5834 = vmatpush1.bf16.msra.mxu0 %v4776
  %5835 = vmatprep.subr.bf16.mxu0 %v4785
  %5836 = vmatpush1.bf16.msra.mxu0 %v4784
  %5837 = vmatprep.subr.bf16.mxu0 %v4793
  %5838 = vmatpush1.bf16.msra.mxu0 %v4792
  %5839 = vmatprep.subr.bf16.mxu0 %v4801
  %5840 = vmatpush1.bf16.msra.mxu0 %v4800
  %5841 = vmatprep.subr.bf16.mxu0 %v4809
  %5842 = vmatpush1.bf16.msra.mxu0 %v4808
  %5843 = vmatprep.subr.bf16.mxu0 %v4817
  %5844 = vmatpush1.bf16.msra.mxu0 %v4816
  %5845 = vmatprep.subr.bf16.mxu0 %v4825
  %5846 = vmatpush1.bf16.msra.mxu0 %v4824
  %5847 = vmatprep.mubr.bf16.mxu0 %v5732
  %5848 = vmatmul.mubr.bf16.gmra.mrb[0].mxu0 %v5731
  %v5849 = vpop.f32.mrb[0].mxu0
  %v5850 = vadd.f32 0.0, %v5849
  %v5851 = vpop.f32.mrb[0].mxu0
  %v5852 = vadd.f32 0.0, %v5851
  %v5853 = vpop.f32.mrb[0].mxu0
  %v5854 = vpop.f32.mrb[0].mxu0
  %5855 = vdwg.mxu0
  %5856 = vmatprep.subr.bf16.mxu0 %v4707
  %5857 = vmatpush1.bf16.msra.mxu0 %v4706
  %5858 = vmatprep.subr.bf16.mxu0 %v4715
  %5859 = vmatpush1.bf16.msra.mxu0 %v4714
  %5860 = vmatprep.subr.bf16.mxu0 %v4723
  %5861 = vmatpush1.bf16.msra.mxu0 %v4722
  %5862 = vmatprep.subr.bf16.mxu0 %v4731
  %5863 = vmatpush1.bf16.msra.mxu0 %v4730
  %5864 = vmatprep.subr.bf16.mxu0 %v4739
  %5865 = vmatpush1.bf16.msra.mxu0 %v4738
  %5866 = vmatprep.subr.bf16.mxu0 %v4747
  %5867 = vmatpush1.bf16.msra.mxu0 %v4746
  %5868 = vmatprep.subr.bf16.mxu0 %v4755
  %5869 = vmatpush1.bf16.msra.mxu0 %v4754
  %5870 = vmatprep.subr.bf16.mxu0 %v4763
  %5871 = vmatpush1.bf16.msra.mxu0 %v4762
  %5872 = vmatprep.subr.bf16.mxu0 %v4771
  %5873 = vmatpush1.bf16.msra.mxu0 %v4770
  %5874 = vmatprep.subr.bf16.mxu0 %v4779
  %5875 = vmatpush1.bf16.msra.mxu0 %v4778
  %5876 = vmatprep.subr.bf16.mxu0 %v4787
  %5877 = vmatpush1.bf16.msra.mxu0 %v4786
  %5878 = vmatprep.subr.bf16.mxu0 %v4795
  %5879 = vmatpush1.bf16.msra.mxu0 %v4794
  %5880 = vmatprep.subr.bf16.mxu0 %v4803
  %5881 = vmatpush1.bf16.msra.mxu0 %v4802
  %5882 = vmatprep.subr.bf16.mxu0 %v4811
  %5883 = vmatpush1.bf16.msra.mxu0 %v4810
  %5884 = vmatprep.subr.bf16.mxu0 %v4819
  %5885 = vmatpush1.bf16.msra.mxu0 %v4818
  %5886 = vmatprep.subr.bf16.mxu0 %v4827
  %5887 = vmatpush1.bf16.msra.mxu0 %v4826
  %5888 = vmatprep.mubr.bf16.mxu0 %v5732
  %5889 = vmatmul.mubr.bf16.gmra.mrb[0].mxu0 %v5731
  %v5890 = vpop.f32.mrb[0].mxu0
  %v5891 = vadd.f32 0.0, %v5890
  %v5892 = vpop.f32.mrb[0].mxu0
  %v5893 = vadd.f32 0.0, %v5892
  %v5894 = vpop.f32.mrb[0].mxu0
  %v5895 = vpop.f32.mrb[0].mxu0
  %5896 = vdwg.mxu0
  %v5897 = vadd.f32 %v5723, %v5768
  %v5898 = vadd.f32 %v5724, %v5770
  %v5899 = vadd.f32 %v5725, %v5809
  %v5900 = vadd.f32 %v5726, %v5811
  %v5901 = vadd.f32 %v5727, %v5850
  %v5902 = vadd.f32 %v5728, %v5852
  %v5903 = vadd.f32 %v5729, %v5891
  %v5904 = vadd.f32 %v5730, %v5893
  %v5905 = vpack.c.bf16 %v5897, %v5897
  %v5906 = vpack.c.bf16 %v5898, %v5898
  %v5907 = vpack.c.bf16 %v5899, %v5899
  %v5908 = vpack.c.bf16 %v5900, %v5900
  %v5909 = vpack.c.bf16 %v5901, %v5901
  %v5910 = vpack.c.bf16 %v5902, %v5902
  %v5911 = vpack.c.bf16 %v5903, %v5903
  %v5912 = vpack.c.bf16 %v5904, %v5904
  %v5913 = vxor.u32 %v5905, 2147516416
  %v5914 = vxor.u32 %v5906, 2147516416
  %v5915 = vxor.u32 %v5907, 2147516416
  %v5916 = vxor.u32 %v5908, 2147516416
  %v5917 = vxor.u32 %v5909, 2147516416
  %v5918 = vxor.u32 %v5910, 2147516416
  %v5920 = vmul.bf16 %v5913, 1069105081
  %v5921 = vpow.bf16.pop %v5920
  %v5923 = vmul.bf16 %v5914, 1069105081
  %v5924 = vpow.bf16.pop %v5923
  %v5926 = vmul.bf16 %v5915, 1069105081
  %v5927 = vpow.bf16.pop %v5926
  %v5929 = vmul.bf16 %v5916, 1069105081
  %v5930 = vpow.bf16.pop %v5929
  %v5932 = vmul.bf16 %v5917, 1069105081
  %v5933 = vpow.bf16.pop %v5932
  %v5935 = vmul.bf16 %v5918, 1069105081
  %v5936 = vpow.bf16.pop %v5935
  %v5937 = vadd.bf16 %v5921, 1065369472
  %v5938 = vadd.bf16 %v5924, 1065369472
  %v5939 = vadd.bf16 %v5927, 1065369472
  %v5940 = vadd.bf16 %v5930, 1065369472
  %v5941 = vadd.bf16 %v5933, 1065369472
  %v5942 = vadd.bf16 %v5936, 1065369472
  %v5943 = vrcp.bf16.pop %v5937
  %v5944 = vmul.bf16 1065369472, %v5943
  %v5945 = vrcp.bf16.pop %v5938
  %v5946 = vmul.bf16 1065369472, %v5945
  %v5947 = vrcp.bf16.pop %v5939
  %v5948 = vmul.bf16 1065369472, %v5947
  %v5949 = vrcp.bf16.pop %v5940
  %v5950 = vmul.bf16 1065369472, %v5949
  %v5951 = vrcp.bf16.pop %v5941
  %v5952 = vmul.bf16 1065369472, %v5951
  %v5953 = vrcp.bf16.pop %v5942
  %v5954 = vmul.bf16 1065369472, %v5953
  %v5955 = vunpack.c.l.bf16 %v5944
  %v5956 = vunpack.c.l.bf16 %v5946
  %v5957 = vunpack.c.l.bf16 %v5948
  %v5958 = vunpack.c.l.bf16 %v5950
  %v5959 = vunpack.c.l.bf16 %v5952
  %v5960 = vunpack.c.l.bf16 %v5954
  %v5961 = vtanh.bf16.pop %v5911
  %v5962 = vtanh.bf16.pop %v5912
  %v5963 = vunpack.c.l.bf16 %v5961
  %v5964 = vunpack.c.l.bf16 %v5962
  %v5965 = vmul.f32 %v5957, %v5710
  %v5966 = vmul.f32 %v5958, %v5711
  %v5967 = vmul.f32 %v5955, %v5963
  %v5968 = vmul.f32 %v5956, %v5964
  %v5969 = vadd.f32 %v5965, %v5967
  %v5970 = vadd.f32 %v5966, %v5968
  %v5971 = vpack.c.bf16 %v5969, %v5969
  %v5972 = vpack.c.bf16 %v5970, %v5970
  %v5973 = vtanh.bf16.pop %v5971
  %v5974 = vtanh.bf16.pop %v5972
  %v5975 = vunpack.c.l.bf16 %v5973
  %v5976 = vunpack.c.l.bf16 %v5974
  %v5977 = vmul.f32 %v5959, %v5975
  %v5978 = vmul.f32 %v5960, %v5976
  %s5979 = smul.u32 4, 8
  %s5980 = smul.addr %s5979, 8
  %s5981 = scalar_lea.vmem [#allocation2], %s5980
  %v5982 = vld [vmem:[%s5981] sm:$0xff]
  %v5983 = vld [vmem:[%s5981 + $0x8] sm:$0xff]
  %v5984 = vld [vmem:[%s5981 + $0x10] sm:$0xff]
  %v5985 = vld [vmem:[%s5981 + $0x18] sm:$0xff]
  %v5986 = vld [vmem:[%s5981 + $0x20] sm:$0xff]
  %v5987 = vld [vmem:[%s5981 + $0x28] sm:$0xff]
  %v5988 = vld [vmem:[%s5981 + $0x30] sm:$0xff]
  %v5989 = vld [vmem:[%s5981 + $0x38] sm:$0xff]
  %v5990 = vpack.c.bf16 %v5977, %v5977
  %v5991 = vpack.c.bf16 %v5978, %v5978
  %5992 = vmatprep.subr.bf16.mxu0 %v4701
  %5993 = vmatpush1.bf16.msra.mxu0 %v4700
  %5994 = vmatprep.subr.bf16.mxu0 %v4709
  %5995 = vmatpush1.bf16.msra.mxu0 %v4708
  %5996 = vmatprep.subr.bf16.mxu0 %v4717
  %5997 = vmatpush1.bf16.msra.mxu0 %v4716
  %5998 = vmatprep.subr.bf16.mxu0 %v4725
  %5999 = vmatpush1.bf16.msra.mxu0 %v4724
  %6000 = vmatprep.subr.bf16.mxu0 %v4733
  %6001 = vmatpush1.bf16.msra.mxu0 %v4732
  %6002 = vmatprep.subr.bf16.mxu0 %v4741
  %6003 = vmatpush1.bf16.msra.mxu0 %v4740
  %6004 = vmatprep.subr.bf16.mxu0 %v4749
  %6005 = vmatpush1.bf16.msra.mxu0 %v4748
  %6006 = vmatprep.subr.bf16.mxu0 %v4757
  %6007 = vmatpush1.bf16.msra.mxu0 %v4756
  %6008 = vmatprep.subr.bf16.mxu0 %v4765
  %6009 = vmatpush1.bf16.msra.mxu0 %v4764
  %6010 = vmatprep.subr.bf16.mxu0 %v4773
  %6011 = vmatpush1.bf16.msra.mxu0 %v4772
  %6012 = vmatprep.subr.bf16.mxu0 %v4781
  %6013 = vmatpush1.bf16.msra.mxu0 %v4780
  %6014 = vmatprep.subr.bf16.mxu0 %v4789
  %6015 = vmatpush1.bf16.msra.mxu0 %v4788
  %6016 = vmatprep.subr.bf16.mxu0 %v4797
  %6017 = vmatpush1.bf16.msra.mxu0 %v4796
  %6018 = vmatprep.subr.bf16.mxu0 %v4805
  %6019 = vmatpush1.bf16.msra.mxu0 %v4804
  %6020 = vmatprep.subr.bf16.mxu0 %v4813
  %6021 = vmatpush1.bf16.msra.mxu0 %v4812
  %6022 = vmatprep.subr.bf16.mxu0 %v4821
  %6023 = vmatpush1.bf16.msra.mxu0 %v4820
  %6024 = vmatprep.mubr.bf16.mxu0 %v5991
  %6025 = vmatmul.mubr.bf16.gmra.mrb[0].mxu0 %v5990
  %v6026 = vpop.f32.mrb[0].mxu0
  %v6027 = vadd.f32 0.0, %v6026
  %v6028 = vpop.f32.mrb[0].mxu0
  %v6029 = vadd.f32 0.0, %v6028
  %v6030 = vpop.f32.mrb[0].mxu0
  %v6031 = vpop.f32.mrb[0].mxu0
  %6032 = vdwg.mxu0
  %6033 = vmatprep.subr.bf16.mxu0 %v4703
  %6034 = vmatpush1.bf16.msra.mxu0 %v4702
  %6035 = vmatprep.subr.bf16.mxu0 %v4711
  %6036 = vmatpush1.bf16.msra.mxu0 %v4710
  %6037 = vmatprep.subr.bf16.mxu0 %v4719
  %6038 = vmatpush1.bf16.msra.mxu0 %v4718
  %6039 = vmatprep.subr.bf16.mxu0 %v4727
  %6040 = vmatpush1.bf16.msra.mxu0 %v4726
  %6041 = vmatprep.subr.bf16.mxu0 %v4735
  %6042 = vmatpush1.bf16.msra.mxu0 %v4734
  %6043 = vmatprep.subr.bf16.mxu0 %v4743
  %6044 = vmatpush1.bf16.msra.mxu0 %v4742
  %6045 = vmatprep.subr.bf16.mxu0 %v4751
  %6046 = vmatpush1.bf16.msra.mxu0 %v4750
  %6047 = vmatprep.subr.bf16.mxu0 %v4759
  %6048 = vmatpush1.bf16.msra.mxu0 %v4758
  %6049 = vmatprep.subr.bf16.mxu0 %v4767
  %6050 = vmatpush1.bf16.msra.mxu0 %v4766
  %6051 = vmatprep.subr.bf16.mxu0 %v4775
  %6052 = vmatpush1.bf16.msra.mxu0 %v4774
  %6053 = vmatprep.subr.bf16.mxu0 %v4783
  %6054 = vmatpush1.bf16.msra.mxu0 %v4782
  %6055 = vmatprep.subr.bf16.mxu0 %v4791
  %6056 = vmatpush1.bf16.msra.mxu0 %v4790
  %6057 = vmatprep.subr.bf16.mxu0 %v4799
  %6058 = vmatpush1.bf16.msra.mxu0 %v4798
  %6059 = vmatprep.subr.bf16.mxu0 %v4807
  %6060 = vmatpush1.bf16.msra.mxu0 %v4806
  %6061 = vmatprep.subr.bf16.mxu0 %v4815
  %6062 = vmatpush1.bf16.msra.mxu0 %v4814
  %6063 = vmatprep.subr.bf16.mxu0 %v4823
  %6064 = vmatpush1.bf16.msra.mxu0 %v4822
  %6065 = vmatprep.mubr.bf16.mxu0 %v5991
  %6066 = vmatmul.mubr.bf16.gmra.mrb[0].mxu0 %v5990
  %v6067 = vpop.f32.mrb[0].mxu0
  %v6068 = vadd.f32 0.0, %v6067
  %v6069 = vpop.f32.mrb[0].mxu0
  %v6070 = vadd.f32 0.0, %v6069
  %v6071 = vpop.f32.mrb[0].mxu0
  %v6072 = vpop.f32.mrb[0].mxu0
  %6073 = vdwg.mxu0
  %6074 = vmatprep.subr.bf16.mxu0 %v4705
  %6075 = vmatpush1.bf16.msra.mxu0 %v4704
  %6076 = vmatprep.subr.bf16.mxu0 %v4713
  %6077 = vmatpush1.bf16.msra.mxu0 %v4712
  %6078 = vmatprep.subr.bf16.mxu0 %v4721
  %6079 = vmatpush1.bf16.msra.mxu0 %v4720
  %6080 = vmatprep.subr.bf16.mxu0 %v4729
  %6081 = vmatpush1.bf16.msra.mxu0 %v4728
  %6082 = vmatprep.subr.bf16.mxu0 %v4737
  %6083 = vmatpush1.bf16.msra.mxu0 %v4736
  %6084 = vmatprep.subr.bf16.mxu0 %v4745
  %6085 = vmatpush1.bf16.msra.mxu0 %v4744
  %6086 = vmatprep.subr.bf16.mxu0 %v4753
  %6087 = vmatpush1.bf16.msra.mxu0 %v4752
  %6088 = vmatprep.subr.bf16.mxu0 %v4761
  %6089 = vmatpush1.bf16.msra.mxu0 %v4760
  %6090 = vmatprep.subr.bf16.mxu0 %v4769
  %6091 = vmatpush1.bf16.msra.mxu0 %v4768
  %6092 = vmatprep.subr.bf16.mxu0 %v4777
  %6093 = vmatpush1.bf16.msra.mxu0 %v4776
  %6094 = vmatprep.subr.bf16.mxu0 %v4785
  %6095 = vmatpush1.bf16.msra.mxu0 %v4784
  %6096 = vmatprep.subr.bf16.mxu0 %v4793
  %6097 = vmatpush1.bf16.msra.mxu0 %v4792
  %6098 = vmatprep.subr.bf16.mxu0 %v4801
  %6099 = vmatpush1.bf16.msra.mxu0 %v4800
  %6100 = vmatprep.subr.bf16.mxu0 %v4809
  %6101 = vmatpush1.bf16.msra.mxu0 %v4808
  %6102 = vmatprep.subr.bf16.mxu0 %v4817
  %6103 = vmatpush1.bf16.msra.mxu0 %v4816
  %6104 = vmatprep.subr.bf16.mxu0 %v4825
  %6105 = vmatpush1.bf16.msra.mxu0 %v4824
  %6106 = vmatprep.mubr.bf16.mxu0 %v5991
  %6107 = vmatmul.mubr.bf16.gmra.mrb[0].mxu0 %v5990
  %v6108 = vpop.f32.mrb[0].mxu0
  %v6109 = vadd.f32 0.0, %v6108
  %v6110 = vpop.f32.mrb[0].mxu0
  %v6111 = vadd.f32 0.0, %v6110
  %v6112 = vpop.f32.mrb[0].mxu0
  %v6113 = vpop.f32.mrb[0].mxu0
  %6114 = vdwg.mxu0
  %6115 = vmatprep.subr.bf16.mxu0 %v4707
  %6116 = vmatpush1.bf16.msra.mxu0 %v4706
  %6117 = vmatprep.subr.bf16.mxu0 %v4715
  %6118 = vmatpush1.bf16.msra.mxu0 %v4714
  %6119 = vmatprep.subr.bf16.mxu0 %v4723
  %6120 = vmatpush1.bf16.msra.mxu0 %v4722
  %6121 = vmatprep.subr.bf16.mxu0 %v4731
  %6122 = vmatpush1.bf16.msra.mxu0 %v4730
  %6123 = vmatprep.subr.bf16.mxu0 %v4739
  %6124 = vmatpush1.bf16.msra.mxu0 %v4738
  %6125 = vmatprep.subr.bf16.mxu0 %v4747
  %6126 = vmatpush1.bf16.msra.mxu0 %v4746
  %6127 = vmatprep.subr.bf16.mxu0 %v4755
  %6128 = vmatpush1.bf16.msra.mxu0 %v4754
  %6129 = vmatprep.subr.bf16.mxu0 %v4763
  %6130 = vmatpush1.bf16.msra.mxu0 %v4762
  %6131 = vmatprep.subr.bf16.mxu0 %v4771
  %6132 = vmatpush1.bf16.msra.mxu0 %v4770
  %6133 = vmatprep.subr.bf16.mxu0 %v4779
  %6134 = vmatpush1.bf16.msra.mxu0 %v4778
  %6135 = vmatprep.subr.bf16.mxu0 %v4787
  %6136 = vmatpush1.bf16.msra.mxu0 %v4786
  %6137 = vmatprep.subr.bf16.mxu0 %v4795
  %6138 = vmatpush1.bf16.msra.mxu0 %v4794
  %6139 = vmatprep.subr.bf16.mxu0 %v4803
  %6140 = vmatpush1.bf16.msra.mxu0 %v4802
  %6141 = vmatprep.subr.bf16.mxu0 %v4811
  %6142 = vmatpush1.bf16.msra.mxu0 %v4810
  %6143 = vmatprep.subr.bf16.mxu0 %v4819
  %6144 = vmatpush1.bf16.msra.mxu0 %v4818
  %6145 = vmatprep.subr.bf16.mxu0 %v4827
  %6146 = vmatpush1.bf16.msra.mxu0 %v4826
  %6147 = vmatprep.mubr.bf16.mxu0 %v5991
  %6148 = vmatmul.mubr.bf16.gmra.mrb[0].mxu0 %v5990
  %v6149 = vpop.f32.mrb[0].mxu0
  %v6150 = vadd.f32 0.0, %v6149
  %v6151 = vpop.f32.mrb[0].mxu0
  %v6152 = vadd.f32 0.0, %v6151
  %v6153 = vpop.f32.mrb[0].mxu0
  %v6154 = vpop.f32.mrb[0].mxu0
  %6155 = vdwg.mxu0
  %v6156 = vadd.f32 %v5982, %v6027
  %v6157 = vadd.f32 %v5983, %v6029
  %v6158 = vadd.f32 %v5984, %v6068
  %v6159 = vadd.f32 %v5985, %v6070
  %v6160 = vadd.f32 %v5986, %v6109
  %v6161 = vadd.f32 %v5987, %v6111
  %v6162 = vadd.f32 %v5988, %v6150
  %v6163 = vadd.f32 %v5989, %v6152
  %v6164 = vpack.c.bf16 %v6156, %v6156
  %v6165 = vpack.c.bf16 %v6157, %v6157
  %v6166 = vpack.c.bf16 %v6158, %v6158
  %v6167 = vpack.c.bf16 %v6159, %v6159
  %v6168 = vpack.c.bf16 %v6160, %v6160
  %v6169 = vpack.c.bf16 %v6161, %v6161
  %v6170 = vpack.c.bf16 %v6162, %v6162
  %v6171 = vpack.c.bf16 %v6163, %v6163
  %v6172 = vxor.u32 %v6164, 2147516416
  %v6173 = vxor.u32 %v6165, 2147516416
  %v6174 = vxor.u32 %v6166, 2147516416
  %v6175 = vxor.u32 %v6167, 2147516416
  %v6176 = vxor.u32 %v6168, 2147516416
  %v6177 = vxor.u32 %v6169, 2147516416
  %v6179 = vmul.bf16 %v6172, 1069105081
  %v6180 = vpow.bf16.pop %v6179
  %v6182 = vmul.bf16 %v6173, 1069105081
  %v6183 = vpow.bf16.pop %v6182
  %v6185 = vmul.bf16 %v6174, 1069105081
  %v6186 = vpow.bf16.pop %v6185
  %v6188 = vmul.bf16 %v6175, 1069105081
  %v6189 = vpow.bf16.pop %v6188
  %v6191 = vmul.bf16 %v6176, 1069105081
  %v6192 = vpow.bf16.pop %v6191
  %v6194 = vmul.bf16 %v6177, 1069105081
  %v6195 = vpow.bf16.pop %v6194
  %v6196 = vadd.bf16 %v6180, 1065369472
  %v6197 = vadd.bf16 %v6183, 1065369472
  %v6198 = vadd.bf16 %v6186, 1065369472
  %v6199 = vadd.bf16 %v6189, 1065369472
  %v6200 = vadd.bf16 %v6192, 1065369472
  %v6201 = vadd.bf16 %v6195, 1065369472
  %v6202 = vrcp.bf16.pop %v6196
  %v6203 = vmul.bf16 1065369472, %v6202
  %v6204 = vrcp.bf16.pop %v6197
  %v6205 = vmul.bf16 1065369472, %v6204
  %v6206 = vrcp.bf16.pop %v6198
  %v6207 = vmul.bf16 1065369472, %v6206
  %v6208 = vrcp.bf16.pop %v6199
  %v6209 = vmul.bf16 1065369472, %v6208
  %v6210 = vrcp.bf16.pop %v6200
  %v6211 = vmul.bf16 1065369472, %v6210
  %v6212 = vrcp.bf16.pop %v6201
  %v6213 = vmul.bf16 1065369472, %v6212
  %v6214 = vunpack.c.l.bf16 %v6203
  %v6215 = vunpack.c.l.bf16 %v6205
  %v6216 = vunpack.c.l.bf16 %v6207
  %v6217 = vunpack.c.l.bf16 %v6209
  %v6218 = vunpack.c.l.bf16 %v6211
  %v6219 = vunpack.c.l.bf16 %v6213
  %v6220 = vtanh.bf16.pop %v6170
  %v6221 = vtanh.bf16.pop %v6171
  %v6222 = vunpack.c.l.bf16 %v6220
  %v6223 = vunpack.c.l.bf16 %v6221
  %v6224 = vmul.f32 %v6216, %v5969
  %v6225 = vmul.f32 %v6217, %v5970
  %v6226 = vmul.f32 %v6214, %v6222
  %v6227 = vmul.f32 %v6215, %v6223
  %v6228 = vadd.f32 %v6224, %v6226
  %v6229 = vadd.f32 %v6225, %v6227
  %v6230 = vpack.c.bf16 %v6228, %v6228
  %v6231 = vpack.c.bf16 %v6229, %v6229
  %v6232 = vtanh.bf16.pop %v6230
  %v6233 = vtanh.bf16.pop %v6231
  %v6234 = vunpack.c.l.bf16 %v6232
  %v6235 = vunpack.c.l.bf16 %v6233
  %v6236 = vmul.f32 %v6218, %v6234
  %v6237 = vmul.f32 %v6219, %v6235
  %s6238 = smul.u32 5, 8
  %s6239 = smul.addr %s6238, 8
  %s6240 = scalar_lea.vmem [#allocation2], %s6239
  %v6241 = vld [vmem:[%s6240] sm:$0xff]
  %v6242 = vld [vmem:[%s6240 + $0x8] sm:$0xff]
  %v6243 = vld [vmem:[%s6240 + $0x10] sm:$0xff]
  %v6244 = vld [vmem:[%s6240 + $0x18] sm:$0xff]
  %v6245 = vld [vmem:[%s6240 + $0x20] sm:$0xff]
  %v6246 = vld [vmem:[%s6240 + $0x28] sm:$0xff]
  %v6247 = vld [vmem:[%s6240 + $0x30] sm:$0xff]
  %v6248 = vld [vmem:[%s6240 + $0x38] sm:$0xff]
  %v6249 = vpack.c.bf16 %v6236, %v6236
  %v6250 = vpack.c.bf16 %v6237, %v6237
  %6251 = vmatprep.subr.bf16.mxu0 %v4701
  %6252 = vmatpush1.bf16.msra.mxu0 %v4700
  %6253 = vmatprep.subr.bf16.mxu0 %v4709
  %6254 = vmatpush1.bf16.msra.mxu0 %v4708
  %6255 = vmatprep.subr.bf16.mxu0 %v4717
  %6256 = vmatpush1.bf16.msra.mxu0 %v4716
  %6257 = vmatprep.subr.bf16.mxu0 %v4725
  %6258 = vmatpush1.bf16.msra.mxu0 %v4724
  %6259 = vmatprep.subr.bf16.mxu0 %v4733
  %6260 = vmatpush1.bf16.msra.mxu0 %v4732
  %6261 = vmatprep.subr.bf16.mxu0 %v4741
  %6262 = vmatpush1.bf16.msra.mxu0 %v4740
  %6263 = vmatprep.subr.bf16.mxu0 %v4749
  %6264 = vmatpush1.bf16.msra.mxu0 %v4748
  %6265 = vmatprep.subr.bf16.mxu0 %v4757
  %6266 = vmatpush1.bf16.msra.mxu0 %v4756
  %6267 = vmatprep.subr.bf16.mxu0 %v4765
  %6268 = vmatpush1.bf16.msra.mxu0 %v4764
  %6269 = vmatprep.subr.bf16.mxu0 %v4773
  %6270 = vmatpush1.bf16.msra.mxu0 %v4772
  %6271 = vmatprep.subr.bf16.mxu0 %v4781
  %6272 = vmatpush1.bf16.msra.mxu0 %v4780
  %6273 = vmatprep.subr.bf16.mxu0 %v4789
  %6274 = vmatpush1.bf16.msra.mxu0 %v4788
  %6275 = vmatprep.subr.bf16.mxu0 %v4797
  %6276 = vmatpush1.bf16.msra.mxu0 %v4796
  %6277 = vmatprep.subr.bf16.mxu0 %v4805
  %6278 = vmatpush1.bf16.msra.mxu0 %v4804
  %6279 = vmatprep.subr.bf16.mxu0 %v4813
  %6280 = vmatpush1.bf16.msra.mxu0 %v4812
  %6281 = vmatprep.subr.bf16.mxu0 %v4821
  %6282 = vmatpush1.bf16.msra.mxu0 %v4820
  %6283 = vmatprep.mubr.bf16.mxu0 %v6250
  %6284 = vmatmul.mubr.bf16.gmra.mrb[0].mxu0 %v6249
  %v6285 = vpop.f32.mrb[0].mxu0
  %v6286 = vadd.f32 0.0, %v6285
  %v6287 = vpop.f32.mrb[0].mxu0
  %v6288 = vadd.f32 0.0, %v6287
  %v6289 = vpop.f32.mrb[0].mxu0
  %v6290 = vpop.f32.mrb[0].mxu0
  %6291 = vdwg.mxu0
  %6292 = vmatprep.subr.bf16.mxu0 %v4703
  %6293 = vmatpush1.bf16.msra.mxu0 %v4702
  %6294 = vmatprep.subr.bf16.mxu0 %v4711
  %6295 = vmatpush1.bf16.msra.mxu0 %v4710
  %6296 = vmatprep.subr.bf16.mxu0 %v4719
  %6297 = vmatpush1.bf16.msra.mxu0 %v4718
  %6298 = vmatprep.subr.bf16.mxu0 %v4727
  %6299 = vmatpush1.bf16.msra.mxu0 %v4726
  %6300 = vmatprep.subr.bf16.mxu0 %v4735
  %6301 = vmatpush1.bf16.msra.mxu0 %v4734
  %6302 = vmatprep.subr.bf16.mxu0 %v4743
  %6303 = vmatpush1.bf16.msra.mxu0 %v4742
  %6304 = vmatprep.subr.bf16.mxu0 %v4751
  %6305 = vmatpush1.bf16.msra.mxu0 %v4750
  %6306 = vmatprep.subr.bf16.mxu0 %v4759
  %6307 = vmatpush1.bf16.msra.mxu0 %v4758
  %6308 = vmatprep.subr.bf16.mxu0 %v4767
  %6309 = vmatpush1.bf16.msra.mxu0 %v4766
  %6310 = vmatprep.subr.bf16.mxu0 %v4775
  %6311 = vmatpush1.bf16.msra.mxu0 %v4774
  %6312 = vmatprep.subr.bf16.mxu0 %v4783
  %6313 = vmatpush1.bf16.msra.mxu0 %v4782
  %6314 = vmatprep.subr.bf16.mxu0 %v4791
  %6315 = vmatpush1.bf16.msra.mxu0 %v4790
  %6316 = vmatprep.subr.bf16.mxu0 %v4799
  %6317 = vmatpush1.bf16.msra.mxu0 %v4798
  %6318 = vmatprep.subr.bf16.mxu0 %v4807
  %6319 = vmatpush1.bf16.msra.mxu0 %v4806
  %6320 = vmatprep.subr.bf16.mxu0 %v4815
  %6321 = vmatpush1.bf16.msra.mxu0 %v4814
  %6322 = vmatprep.subr.bf16.mxu0 %v4823
  %6323 = vmatpush1.bf16.msra.mxu0 %v4822
  %6324 = vmatprep.mubr.bf16.mxu0 %v6250
  %6325 = vmatmul.mubr.bf16.gmra.mrb[0].mxu0 %v6249
  %v6326 = vpop.f32.mrb[0].mxu0
  %v6327 = vadd.f32 0.0, %v6326
  %v6328 = vpop.f32.mrb[0].mxu0
  %v6329 = vadd.f32 0.0, %v6328
  %v6330 = vpop.f32.mrb[0].mxu0
  %v6331 = vpop.f32.mrb[0].mxu0
  %6332 = vdwg.mxu0
  %6333 = vmatprep.subr.bf16.mxu0 %v4705
  %6334 = vmatpush1.bf16.msra.mxu0 %v4704
  %6335 = vmatprep.subr.bf16.mxu0 %v4713
  %6336 = vmatpush1.bf16.msra.mxu0 %v4712
  %6337 = vmatprep.subr.bf16.mxu0 %v4721
  %6338 = vmatpush1.bf16.msra.mxu0 %v4720
  %6339 = vmatprep.subr.bf16.mxu0 %v4729
  %6340 = vmatpush1.bf16.msra.mxu0 %v4728
  %6341 = vmatprep.subr.bf16.mxu0 %v4737
  %6342 = vmatpush1.bf16.msra.mxu0 %v4736
  %6343 = vmatprep.subr.bf16.mxu0 %v4745
  %6344 = vmatpush1.bf16.msra.mxu0 %v4744
  %6345 = vmatprep.subr.bf16.mxu0 %v4753
  %6346 = vmatpush1.bf16.msra.mxu0 %v4752
  %6347 = vmatprep.subr.bf16.mxu0 %v4761
  %6348 = vmatpush1.bf16.msra.mxu0 %v4760
  %6349 = vmatprep.subr.bf16.mxu0 %v4769
  %6350 = vmatpush1.bf16.msra.mxu0 %v4768
  %6351 = vmatprep.subr.bf16.mxu0 %v4777
  %6352 = vmatpush1.bf16.msra.mxu0 %v4776
  %6353 = vmatprep.subr.bf16.mxu0 %v4785
  %6354 = vmatpush1.bf16.msra.mxu0 %v4784
  %6355 = vmatprep.subr.bf16.mxu0 %v4793
  %6356 = vmatpush1.bf16.msra.mxu0 %v4792
  %6357 = vmatprep.subr.bf16.mxu0 %v4801
  %6358 = vmatpush1.bf16.msra.mxu0 %v4800
  %6359 = vmatprep.subr.bf16.mxu0 %v4809
  %6360 = vmatpush1.bf16.msra.mxu0 %v4808
  %6361 = vmatprep.subr.bf16.mxu0 %v4817
  %6362 = vmatpush1.bf16.msra.mxu0 %v4816
  %6363 = vmatprep.subr.bf16.mxu0 %v4825
  %6364 = vmatpush1.bf16.msra.mxu0 %v4824
  %6365 = vmatprep.mubr.bf16.mxu0 %v6250
  %6366 = vmatmul.mubr.bf16.gmra.mrb[0].mxu0 %v6249
  %v6367 = vpop.f32.mrb[0].mxu0
  %v6368 = vadd.f32 0.0, %v6367
  %v6369 = vpop.f32.mrb[0].mxu0
  %v6370 = vadd.f32 0.0, %v6369
  %v6371 = vpop.f32.mrb[0].mxu0
  %v6372 = vpop.f32.mrb[0].mxu0
  %6373 = vdwg.mxu0
  %6374 = vmatprep.subr.bf16.mxu0 %v4707
  %6375 = vmatpush1.bf16.msra.mxu0 %v4706
  %6376 = vmatprep.subr.bf16.mxu0 %v4715
  %6377 = vmatpush1.bf16.msra.mxu0 %v4714
  %6378 = vmatprep.subr.bf16.mxu0 %v4723
  %6379 = vmatpush1.bf16.msra.mxu0 %v4722
  %6380 = vmatprep.subr.bf16.mxu0 %v4731
  %6381 = vmatpush1.bf16.msra.mxu0 %v4730
  %6382 = vmatprep.subr.bf16.mxu0 %v4739
  %6383 = vmatpush1.bf16.msra.mxu0 %v4738
  %6384 = vmatprep.subr.bf16.mxu0 %v4747
  %6385 = vmatpush1.bf16.msra.mxu0 %v4746
  %6386 = vmatprep.subr.bf16.mxu0 %v4755
  %6387 = vmatpush1.bf16.msra.mxu0 %v4754
  %6388 = vmatprep.subr.bf16.mxu0 %v4763
  %6389 = vmatpush1.bf16.msra.mxu0 %v4762
  %6390 = vmatprep.subr.bf16.mxu0 %v4771
  %6391 = vmatpush1.bf16.msra.mxu0 %v4770
  %6392 = vmatprep.subr.bf16.mxu0 %v4779
  %6393 = vmatpush1.bf16.msra.mxu0 %v4778
  %6394 = vmatprep.subr.bf16.mxu0 %v4787
  %6395 = vmatpush1.bf16.msra.mxu0 %v4786
  %6396 = vmatprep.subr.bf16.mxu0 %v4795
  %6397 = vmatpush1.bf16.msra.mxu0 %v4794
  %6398 = vmatprep.subr.bf16.mxu0 %v4803
  %6399 = vmatpush1.bf16.msra.mxu0 %v4802
  %6400 = vmatprep.subr.bf16.mxu0 %v4811
  %6401 = vmatpush1.bf16.msra.mxu0 %v4810
  %6402 = vmatprep.subr.bf16.mxu0 %v4819
  %6403 = vmatpush1.bf16.msra.mxu0 %v4818
  %6404 = vmatprep.subr.bf16.mxu0 %v4827
  %6405 = vmatpush1.bf16.msra.mxu0 %v4826
  %6406 = vmatprep.mubr.bf16.mxu0 %v6250
  %6407 = vmatmul.mubr.bf16.gmra.mrb[0].mxu0 %v6249
  %v6408 = vpop.f32.mrb[0].mxu0
  %v6409 = vadd.f32 0.0, %v6408
  %v6410 = vpop.f32.mrb[0].mxu0
  %v6411 = vadd.f32 0.0, %v6410
  %v6412 = vpop.f32.mrb[0].mxu0
  %v6413 = vpop.f32.mrb[0].mxu0
  %6414 = vdwg.mxu0
  %v6415 = vadd.f32 %v6241, %v6286
  %v6416 = vadd.f32 %v6242, %v6288
  %v6417 = vadd.f32 %v6243, %v6327
  %v6418 = vadd.f32 %v6244, %v6329
  %v6419 = vadd.f32 %v6245, %v6368
  %v6420 = vadd.f32 %v6246, %v6370
  %v6421 = vadd.f32 %v6247, %v6409
  %v6422 = vadd.f32 %v6248, %v6411
  %v6423 = vpack.c.bf16 %v6415, %v6415
  %v6424 = vpack.c.bf16 %v6416, %v6416
  %v6425 = vpack.c.bf16 %v6417, %v6417
  %v6426 = vpack.c.bf16 %v6418, %v6418
  %v6427 = vpack.c.bf16 %v6419, %v6419
  %v6428 = vpack.c.bf16 %v6420, %v6420
  %v6429 = vpack.c.bf16 %v6421, %v6421
  %v6430 = vpack.c.bf16 %v6422, %v6422
  %v6431 = vxor.u32 %v6423, 2147516416
  %v6432 = vxor.u32 %v6424, 2147516416
  %v6433 = vxor.u32 %v6425, 2147516416
  %v6434 = vxor.u32 %v6426, 2147516416
  %v6435 = vxor.u32 %v6427, 2147516416
  %v6436 = vxor.u32 %v6428, 2147516416
  %v6438 = vmul.bf16 %v6431, 1069105081
  %v6439 = vpow.bf16.pop %v6438
  %v6441 = vmul.bf16 %v6432, 1069105081
  %v6442 = vpow.bf16.pop %v6441
  %v6444 = vmul.bf16 %v6433, 1069105081
  %v6445 = vpow.bf16.pop %v6444
  %v6447 = vmul.bf16 %v6434, 1069105081
  %v6448 = vpow.bf16.pop %v6447
  %v6450 = vmul.bf16 %v6435, 1069105081
  %v6451 = vpow.bf16.pop %v6450
  %v6453 = vmul.bf16 %v6436, 1069105081
  %v6454 = vpow.bf16.pop %v6453
  %v6455 = vadd.bf16 %v6439, 1065369472
  %v6456 = vadd.bf16 %v6442, 1065369472
  %v6457 = vadd.bf16 %v6445, 1065369472
  %v6458 = vadd.bf16 %v6448, 1065369472
  %v6459 = vadd.bf16 %v6451, 1065369472
  %v6460 = vadd.bf16 %v6454, 1065369472
  %v6461 = vrcp.bf16.pop %v6455
  %v6462 = vmul.bf16 1065369472, %v6461
  %v6463 = vrcp.bf16.pop %v6456
  %v6464 = vmul.bf16 1065369472, %v6463
  %v6465 = vrcp.bf16.pop %v6457
  %v6466 = vmul.bf16 1065369472, %v6465
  %v6467 = vrcp.bf16.pop %v6458
  %v6468 = vmul.bf16 1065369472, %v6467
  %v6469 = vrcp.bf16.pop %v6459
  %v6470 = vmul.bf16 1065369472, %v6469
  %v6471 = vrcp.bf16.pop %v6460
  %v6472 = vmul.bf16 1065369472, %v6471
  %v6473 = vunpack.c.l.bf16 %v6462
  %v6474 = vunpack.c.l.bf16 %v6464
  %v6475 = vunpack.c.l.bf16 %v6466
  %v6476 = vunpack.c.l.bf16 %v6468
  %v6477 = vunpack.c.l.bf16 %v6470
  %v6478 = vunpack.c.l.bf16 %v6472
  %v6479 = vtanh.bf16.pop %v6429
  %v6480 = vtanh.bf16.pop %v6430
  %v6481 = vunpack.c.l.bf16 %v6479
  %v6482 = vunpack.c.l.bf16 %v6480
  %v6483 = vmul.f32 %v6475, %v6228
  %v6484 = vmul.f32 %v6476, %v6229
  %v6485 = vmul.f32 %v6473, %v6481
  %v6486 = vmul.f32 %v6474, %v6482
  %v6487 = vadd.f32 %v6483, %v6485
  %v6488 = vadd.f32 %v6484, %v6486
  %v6489 = vpack.c.bf16 %v6487, %v6487
  %v6490 = vpack.c.bf16 %v6488, %v6488
  %v6491 = vtanh.bf16.pop %v6489
  %v6492 = vtanh.bf16.pop %v6490
  %v6493 = vunpack.c.l.bf16 %v6491
  %v6494 = vunpack.c.l.bf16 %v6492
  %v6495 = vmul.f32 %v6477, %v6493
  %v6496 = vmul.f32 %v6478, %v6494
  %s6497 = smul.u32 6, 8
  %s6498 = smul.addr %s6497, 8
  %s6499 = scalar_lea.vmem [#allocation2], %s6498
  %v6500 = vld [vmem:[%s6499] sm:$0xff]
  %v6501 = vld [vmem:[%s6499 + $0x8] sm:$0xff]
  %v6502 = vld [vmem:[%s6499 + $0x10] sm:$0xff]
  %v6503 = vld [vmem:[%s6499 + $0x18] sm:$0xff]
  %v6504 = vld [vmem:[%s6499 + $0x20] sm:$0xff]
  %v6505 = vld [vmem:[%s6499 + $0x28] sm:$0xff]
  %v6506 = vld [vmem:[%s6499 + $0x30] sm:$0xff]
  %v6507 = vld [vmem:[%s6499 + $0x38] sm:$0xff]
  %v6508 = vpack.c.bf16 %v6495, %v6495
  %v6509 = vpack.c.bf16 %v6496, %v6496
  %6510 = vmatprep.subr.bf16.mxu0 %v4701
  %6511 = vmatpush1.bf16.msra.mxu0 %v4700
  %6512 = vmatprep.subr.bf16.mxu0 %v4709
  %6513 = vmatpush1.bf16.msra.mxu0 %v4708
  %6514 = vmatprep.subr.bf16.mxu0 %v4717
  %6515 = vmatpush1.bf16.msra.mxu0 %v4716
  %6516 = vmatprep.subr.bf16.mxu0 %v4725
  %6517 = vmatpush1.bf16.msra.mxu0 %v4724
  %6518 = vmatprep.subr.bf16.mxu0 %v4733
  %6519 = vmatpush1.bf16.msra.mxu0 %v4732
  %6520 = vmatprep.subr.bf16.mxu0 %v4741
  %6521 = vmatpush1.bf16.msra.mxu0 %v4740
  %6522 = vmatprep.subr.bf16.mxu0 %v4749
  %6523 = vmatpush1.bf16.msra.mxu0 %v4748
  %6524 = vmatprep.subr.bf16.mxu0 %v4757
  %6525 = vmatpush1.bf16.msra.mxu0 %v4756
  %6526 = vmatprep.subr.bf16.mxu0 %v4765
  %6527 = vmatpush1.bf16.msra.mxu0 %v4764
  %6528 = vmatprep.subr.bf16.mxu0 %v4773
  %6529 = vmatpush1.bf16.msra.mxu0 %v4772
  %6530 = vmatprep.subr.bf16.mxu0 %v4781
  %6531 = vmatpush1.bf16.msra.mxu0 %v4780
  %6532 = vmatprep.subr.bf16.mxu0 %v4789
  %6533 = vmatpush1.bf16.msra.mxu0 %v4788
  %6534 = vmatprep.subr.bf16.mxu0 %v4797
  %6535 = vmatpush1.bf16.msra.mxu0 %v4796
  %6536 = vmatprep.subr.bf16.mxu0 %v4805
  %6537 = vmatpush1.bf16.msra.mxu0 %v4804
  %6538 = vmatprep.subr.bf16.mxu0 %v4813
  %6539 = vmatpush1.bf16.msra.mxu0 %v4812
  %6540 = vmatprep.subr.bf16.mxu0 %v4821
  %6541 = vmatpush1.bf16.msra.mxu0 %v4820
  %6542 = vmatprep.mubr.bf16.mxu0 %v6509
  %6543 = vmatmul.mubr.bf16.gmra.mrb[0].mxu0 %v6508
  %v6544 = vpop.f32.mrb[0].mxu0
  %v6545 = vadd.f32 0.0, %v6544
  %v6546 = vpop.f32.mrb[0].mxu0
  %v6547 = vadd.f32 0.0, %v6546
  %v6548 = vpop.f32.mrb[0].mxu0
  %v6549 = vpop.f32.mrb[0].mxu0
  %6550 = vdwg.mxu0
  %6551 = vmatprep.subr.bf16.mxu0 %v4703
  %6552 = vmatpush1.bf16.msra.mxu0 %v4702
  %6553 = vmatprep.subr.bf16.mxu0 %v4711
  %6554 = vmatpush1.bf16.msra.mxu0 %v4710
  %6555 = vmatprep.subr.bf16.mxu0 %v4719
  %6556 = vmatpush1.bf16.msra.mxu0 %v4718
  %6557 = vmatprep.subr.bf16.mxu0 %v4727
  %6558 = vmatpush1.bf16.msra.mxu0 %v4726
  %6559 = vmatprep.subr.bf16.mxu0 %v4735
  %6560 = vmatpush1.bf16.msra.mxu0 %v4734
  %6561 = vmatprep.subr.bf16.mxu0 %v4743
  %6562 = vmatpush1.bf16.msra.mxu0 %v4742
  %6563 = vmatprep.subr.bf16.mxu0 %v4751
  %6564 = vmatpush1.bf16.msra.mxu0 %v4750
  %6565 = vmatprep.subr.bf16.mxu0 %v4759
  %6566 = vmatpush1.bf16.msra.mxu0 %v4758
  %6567 = vmatprep.subr.bf16.mxu0 %v4767
  %6568 = vmatpush1.bf16.msra.mxu0 %v4766
  %6569 = vmatprep.subr.bf16.mxu0 %v4775
  %6570 = vmatpush1.bf16.msra.mxu0 %v4774
  %6571 = vmatprep.subr.bf16.mxu0 %v4783
  %6572 = vmatpush1.bf16.msra.mxu0 %v4782
  %6573 = vmatprep.subr.bf16.mxu0 %v4791
  %6574 = vmatpush1.bf16.msra.mxu0 %v4790
  %6575 = vmatprep.subr.bf16.mxu0 %v4799
  %6576 = vmatpush1.bf16.msra.mxu0 %v4798
  %6577 = vmatprep.subr.bf16.mxu0 %v4807
  %6578 = vmatpush1.bf16.msra.mxu0 %v4806
  %6579 = vmatprep.subr.bf16.mxu0 %v4815
  %6580 = vmatpush1.bf16.msra.mxu0 %v4814
  %6581 = vmatprep.subr.bf16.mxu0 %v4823
  %6582 = vmatpush1.bf16.msra.mxu0 %v4822
  %6583 = vmatprep.mubr.bf16.mxu0 %v6509
  %6584 = vmatmul.mubr.bf16.gmra.mrb[0].mxu0 %v6508
  %v6585 = vpop.f32.mrb[0].mxu0
  %v6586 = vadd.f32 0.0, %v6585
  %v6587 = vpop.f32.mrb[0].mxu0
  %v6588 = vadd.f32 0.0, %v6587
  %v6589 = vpop.f32.mrb[0].mxu0
  %v6590 = vpop.f32.mrb[0].mxu0
  %6591 = vdwg.mxu0
  %6592 = vmatprep.subr.bf16.mxu0 %v4705
  %6593 = vmatpush1.bf16.msra.mxu0 %v4704
  %6594 = vmatprep.subr.bf16.mxu0 %v4713
  %6595 = vmatpush1.bf16.msra.mxu0 %v4712
  %6596 = vmatprep.subr.bf16.mxu0 %v4721
  %6597 = vmatpush1.bf16.msra.mxu0 %v4720
  %6598 = vmatprep.subr.bf16.mxu0 %v4729
  %6599 = vmatpush1.bf16.msra.mxu0 %v4728
  %6600 = vmatprep.subr.bf16.mxu0 %v4737
  %6601 = vmatpush1.bf16.msra.mxu0 %v4736
  %6602 = vmatprep.subr.bf16.mxu0 %v4745
  %6603 = vmatpush1.bf16.msra.mxu0 %v4744
  %6604 = vmatprep.subr.bf16.mxu0 %v4753
  %6605 = vmatpush1.bf16.msra.mxu0 %v4752
  %6606 = vmatprep.subr.bf16.mxu0 %v4761
  %6607 = vmatpush1.bf16.msra.mxu0 %v4760
  %6608 = vmatprep.subr.bf16.mxu0 %v4769
  %6609 = vmatpush1.bf16.msra.mxu0 %v4768
  %6610 = vmatprep.subr.bf16.mxu0 %v4777
  %6611 = vmatpush1.bf16.msra.mxu0 %v4776
  %6612 = vmatprep.subr.bf16.mxu0 %v4785
  %6613 = vmatpush1.bf16.msra.mxu0 %v4784
  %6614 = vmatprep.subr.bf16.mxu0 %v4793
  %6615 = vmatpush1.bf16.msra.mxu0 %v4792
  %6616 = vmatprep.subr.bf16.mxu0 %v4801
  %6617 = vmatpush1.bf16.msra.mxu0 %v4800
  %6618 = vmatprep.subr.bf16.mxu0 %v4809
  %6619 = vmatpush1.bf16.msra.mxu0 %v4808
  %6620 = vmatprep.subr.bf16.mxu0 %v4817
  %6621 = vmatpush1.bf16.msra.mxu0 %v4816
  %6622 = vmatprep.subr.bf16.mxu0 %v4825
  %6623 = vmatpush1.bf16.msra.mxu0 %v4824
  %6624 = vmatprep.mubr.bf16.mxu0 %v6509
  %6625 = vmatmul.mubr.bf16.gmra.mrb[0].mxu0 %v6508
  %v6626 = vpop.f32.mrb[0].mxu0
  %v6627 = vadd.f32 0.0, %v6626
  %v6628 = vpop.f32.mrb[0].mxu0
  %v6629 = vadd.f32 0.0, %v6628
  %v6630 = vpop.f32.mrb[0].mxu0
  %v6631 = vpop.f32.mrb[0].mxu0
  %6632 = vdwg.mxu0
  %6633 = vmatprep.subr.bf16.mxu0 %v4707
  %6634 = vmatpush1.bf16.msra.mxu0 %v4706
  %6635 = vmatprep.subr.bf16.mxu0 %v4715
  %6636 = vmatpush1.bf16.msra.mxu0 %v4714
  %6637 = vmatprep.subr.bf16.mxu0 %v4723
  %6638 = vmatpush1.bf16.msra.mxu0 %v4722
  %6639 = vmatprep.subr.bf16.mxu0 %v4731
  %6640 = vmatpush1.bf16.msra.mxu0 %v4730
  %6641 = vmatprep.subr.bf16.mxu0 %v4739
  %6642 = vmatpush1.bf16.msra.mxu0 %v4738
  %6643 = vmatprep.subr.bf16.mxu0 %v4747
  %6644 = vmatpush1.bf16.msra.mxu0 %v4746
  %6645 = vmatprep.subr.bf16.mxu0 %v4755
  %6646 = vmatpush1.bf16.msra.mxu0 %v4754
  %6647 = vmatprep.subr.bf16.mxu0 %v4763
  %6648 = vmatpush1.bf16.msra.mxu0 %v4762
  %6649 = vmatprep.subr.bf16.mxu0 %v4771
  %6650 = vmatpush1.bf16.msra.mxu0 %v4770
  %6651 = vmatprep.subr.bf16.mxu0 %v4779
  %6652 = vmatpush1.bf16.msra.mxu0 %v4778
  %6653 = vmatprep.subr.bf16.mxu0 %v4787
  %6654 = vmatpush1.bf16.msra.mxu0 %v4786
  %6655 = vmatprep.subr.bf16.mxu0 %v4795
  %6656 = vmatpush1.bf16.msra.mxu0 %v4794
  %6657 = vmatprep.subr.bf16.mxu0 %v4803
  %6658 = vmatpush1.bf16.msra.mxu0 %v4802
  %6659 = vmatprep.subr.bf16.mxu0 %v4811
  %6660 = vmatpush1.bf16.msra.mxu0 %v4810
  %6661 = vmatprep.subr.bf16.mxu0 %v4819
  %6662 = vmatpush1.bf16.msra.mxu0 %v4818
  %6663 = vmatprep.subr.bf16.mxu0 %v4827
  %6664 = vmatpush1.bf16.msra.mxu0 %v4826
  %6665 = vmatprep.mubr.bf16.mxu0 %v6509
  %6666 = vmatmul.mubr.bf16.gmra.mrb[0].mxu0 %v6508
  %v6667 = vpop.f32.mrb[0].mxu0
  %v6668 = vadd.f32 0.0, %v6667
  %v6669 = vpop.f32.mrb[0].mxu0
  %v6670 = vadd.f32 0.0, %v6669
  %v6671 = vpop.f32.mrb[0].mxu0
  %v6672 = vpop.f32.mrb[0].mxu0
  %6673 = vdwg.mxu0
  %v6674 = vadd.f32 %v6500, %v6545
  %v6675 = vadd.f32 %v6501, %v6547
  %v6676 = vadd.f32 %v6502, %v6586
  %v6677 = vadd.f32 %v6503, %v6588
  %v6678 = vadd.f32 %v6504, %v6627
  %v6679 = vadd.f32 %v6505, %v6629
  %v6680 = vadd.f32 %v6506, %v6668
  %v6681 = vadd.f32 %v6507, %v6670
  %v6682 = vpack.c.bf16 %v6674, %v6674
  %v6683 = vpack.c.bf16 %v6675, %v6675
  %v6684 = vpack.c.bf16 %v6676, %v6676
  %v6685 = vpack.c.bf16 %v6677, %v6677
  %v6686 = vpack.c.bf16 %v6678, %v6678
  %v6687 = vpack.c.bf16 %v6679, %v6679
  %v6688 = vpack.c.bf16 %v6680, %v6680
  %v6689 = vpack.c.bf16 %v6681, %v6681
  %v6690 = vxor.u32 %v6682, 2147516416
  %v6691 = vxor.u32 %v6683, 2147516416
  %v6692 = vxor.u32 %v6684, 2147516416
  %v6693 = vxor.u32 %v6685, 2147516416
  %v6694 = vxor.u32 %v6686, 2147516416
  %v6695 = vxor.u32 %v6687, 2147516416
  %v6697 = vmul.bf16 %v6690, 1069105081
  %v6698 = vpow.bf16.pop %v6697
  %v6700 = vmul.bf16 %v6691, 1069105081
  %v6701 = vpow.bf16.pop %v6700
  %v6703 = vmul.bf16 %v6692, 1069105081
  %v6704 = vpow.bf16.pop %v6703
  %v6706 = vmul.bf16 %v6693, 1069105081
  %v6707 = vpow.bf16.pop %v6706
  %v6709 = vmul.bf16 %v6694, 1069105081
  %v6710 = vpow.bf16.pop %v6709
  %v6712 = vmul.bf16 %v6695, 1069105081
  %v6713 = vpow.bf16.pop %v6712
  %v6714 = vadd.bf16 %v6698, 1065369472
  %v6715 = vadd.bf16 %v6701, 1065369472
  %v6716 = vadd.bf16 %v6704, 1065369472
  %v6717 = vadd.bf16 %v6707, 1065369472
  %v6718 = vadd.bf16 %v6710, 1065369472
  %v6719 = vadd.bf16 %v6713, 1065369472
  %v6720 = vrcp.bf16.pop %v6714
  %v6721 = vmul.bf16 1065369472, %v6720
  %v6722 = vrcp.bf16.pop %v6715
  %v6723 = vmul.bf16 1065369472, %v6722
  %v6724 = vrcp.bf16.pop %v6716
  %v6725 = vmul.bf16 1065369472, %v6724
  %v6726 = vrcp.bf16.pop %v6717
  %v6727 = vmul.bf16 1065369472, %v6726
  %v6728 = vrcp.bf16.pop %v6718
  %v6729 = vmul.bf16 1065369472, %v6728
  %v6730 = vrcp.bf16.pop %v6719
  %v6731 = vmul.bf16 1065369472, %v6730
  %v6732 = vunpack.c.l.bf16 %v6721
  %v6733 = vunpack.c.l.bf16 %v6723
  %v6734 = vunpack.c.l.bf16 %v6725
  %v6735 = vunpack.c.l.bf16 %v6727
  %v6736 = vunpack.c.l.bf16 %v6729
  %v6737 = vunpack.c.l.bf16 %v6731
  %v6738 = vtanh.bf16.pop %v6688
  %v6739 = vtanh.bf16.pop %v6689
  %v6740 = vunpack.c.l.bf16 %v6738
  %v6741 = vunpack.c.l.bf16 %v6739
  %v6742 = vmul.f32 %v6734, %v6487
  %v6743 = vmul.f32 %v6735, %v6488
  %v6744 = vmul.f32 %v6732, %v6740
  %v6745 = vmul.f32 %v6733, %v6741
  %v6746 = vadd.f32 %v6742, %v6744
  %v6747 = vadd.f32 %v6743, %v6745
  %v6748 = vpack.c.bf16 %v6746, %v6746
  %v6749 = vpack.c.bf16 %v6747, %v6747
  %v6750 = vtanh.bf16.pop %v6748
  %v6751 = vtanh.bf16.pop %v6749
  %v6752 = vunpack.c.l.bf16 %v6750
  %v6753 = vunpack.c.l.bf16 %v6751
  %v6754 = vmul.f32 %v6736, %v6752
  %v6755 = vmul.f32 %v6737, %v6753
  %s6756 = smul.u32 7, 8
  %s6757 = smul.addr %s6756, 8
  %s6758 = scalar_lea.vmem [#allocation2], %s6757
  %v6759 = vld [vmem:[%s6758] sm:$0xff]
  %v6760 = vld [vmem:[%s6758 + $0x8] sm:$0xff]
  %v6761 = vld [vmem:[%s6758 + $0x10] sm:$0xff]
  %v6762 = vld [vmem:[%s6758 + $0x18] sm:$0xff]
  %v6763 = vld [vmem:[%s6758 + $0x20] sm:$0xff]
  %v6764 = vld [vmem:[%s6758 + $0x28] sm:$0xff]
  %v6765 = vld [vmem:[%s6758 + $0x30] sm:$0xff]
  %v6766 = vld [vmem:[%s6758 + $0x38] sm:$0xff]
  %v6767 = vpack.c.bf16 %v6754, %v6754
  %v6768 = vpack.c.bf16 %v6755, %v6755
  %6769 = vmatprep.subr.bf16.mxu0 %v4701
  %6770 = vmatpush1.bf16.msra.mxu0 %v4700
  %6771 = vmatprep.subr.bf16.mxu0 %v4709
  %6772 = vmatpush1.bf16.msra.mxu0 %v4708
  %6773 = vmatprep.subr.bf16.mxu0 %v4717
  %6774 = vmatpush1.bf16.msra.mxu0 %v4716
  %6775 = vmatprep.subr.bf16.mxu0 %v4725
  %6776 = vmatpush1.bf16.msra.mxu0 %v4724
  %6777 = vmatprep.subr.bf16.mxu0 %v4733
  %6778 = vmatpush1.bf16.msra.mxu0 %v4732
  %6779 = vmatprep.subr.bf16.mxu0 %v4741
  %6780 = vmatpush1.bf16.msra.mxu0 %v4740
  %6781 = vmatprep.subr.bf16.mxu0 %v4749
  %6782 = vmatpush1.bf16.msra.mxu0 %v4748
  %6783 = vmatprep.subr.bf16.mxu0 %v4757
  %6784 = vmatpush1.bf16.msra.mxu0 %v4756
  %6785 = vmatprep.subr.bf16.mxu0 %v4765
  %6786 = vmatpush1.bf16.msra.mxu0 %v4764
  %6787 = vmatprep.subr.bf16.mxu0 %v4773
  %6788 = vmatpush1.bf16.msra.mxu0 %v4772
  %6789 = vmatprep.subr.bf16.mxu0 %v4781
  %6790 = vmatpush1.bf16.msra.mxu0 %v4780
  %6791 = vmatprep.subr.bf16.mxu0 %v4789
  %6792 = vmatpush1.bf16.msra.mxu0 %v4788
  %6793 = vmatprep.subr.bf16.mxu0 %v4797
  %6794 = vmatpush1.bf16.msra.mxu0 %v4796
  %6795 = vmatprep.subr.bf16.mxu0 %v4805
  %6796 = vmatpush1.bf16.msra.mxu0 %v4804
  %6797 = vmatprep.subr.bf16.mxu0 %v4813
  %6798 = vmatpush1.bf16.msra.mxu0 %v4812
  %6799 = vmatprep.subr.bf16.mxu0 %v4821
  %6800 = vmatpush1.bf16.msra.mxu0 %v4820
  %6801 = vmatprep.mubr.bf16.mxu0 %v6768
  %6802 = vmatmul.mubr.bf16.gmra.mrb[0].mxu0 %v6767
  %v6803 = vpop.f32.mrb[0].mxu0
  %v6804 = vadd.f32 0.0, %v6803
  %v6805 = vpop.f32.mrb[0].mxu0
  %v6806 = vadd.f32 0.0, %v6805
  %v6807 = vpop.f32.mrb[0].mxu0
  %v6808 = vpop.f32.mrb[0].mxu0
  %6809 = vdwg.mxu0
  %6810 = vmatprep.subr.bf16.mxu0 %v4703
  %6811 = vmatpush1.bf16.msra.mxu0 %v4702
  %6812 = vmatprep.subr.bf16.mxu0 %v4711
  %6813 = vmatpush1.bf16.msra.mxu0 %v4710
  %6814 = vmatprep.subr.bf16.mxu0 %v4719
  %6815 = vmatpush1.bf16.msra.mxu0 %v4718
  %6816 = vmatprep.subr.bf16.mxu0 %v4727
  %6817 = vmatpush1.bf16.msra.mxu0 %v4726
  %6818 = vmatprep.subr.bf16.mxu0 %v4735
  %6819 = vmatpush1.bf16.msra.mxu0 %v4734
  %6820 = vmatprep.subr.bf16.mxu0 %v4743
  %6821 = vmatpush1.bf16.msra.mxu0 %v4742
  %6822 = vmatprep.subr.bf16.mxu0 %v4751
  %6823 = vmatpush1.bf16.msra.mxu0 %v4750
  %6824 = vmatprep.subr.bf16.mxu0 %v4759
  %6825 = vmatpush1.bf16.msra.mxu0 %v4758
  %6826 = vmatprep.subr.bf16.mxu0 %v4767
  %6827 = vmatpush1.bf16.msra.mxu0 %v4766
  %6828 = vmatprep.subr.bf16.mxu0 %v4775
  %6829 = vmatpush1.bf16.msra.mxu0 %v4774
  %6830 = vmatprep.subr.bf16.mxu0 %v4783
  %6831 = vmatpush1.bf16.msra.mxu0 %v4782
  %6832 = vmatprep.subr.bf16.mxu0 %v4791
  %6833 = vmatpush1.bf16.msra.mxu0 %v4790
  %6834 = vmatprep.subr.bf16.mxu0 %v4799
  %6835 = vmatpush1.bf16.msra.mxu0 %v4798
  %6836 = vmatprep.subr.bf16.mxu0 %v4807
  %6837 = vmatpush1.bf16.msra.mxu0 %v4806
  %6838 = vmatprep.subr.bf16.mxu0 %v4815
  %6839 = vmatpush1.bf16.msra.mxu0 %v4814
  %6840 = vmatprep.subr.bf16.mxu0 %v4823
  %6841 = vmatpush1.bf16.msra.mxu0 %v4822
  %6842 = vmatprep.mubr.bf16.mxu0 %v6768
  %6843 = vmatmul.mubr.bf16.gmra.mrb[0].mxu0 %v6767
  %v6844 = vpop.f32.mrb[0].mxu0
  %v6845 = vadd.f32 0.0, %v6844
  %v6846 = vpop.f32.mrb[0].mxu0
  %v6847 = vadd.f32 0.0, %v6846
  %v6848 = vpop.f32.mrb[0].mxu0
  %v6849 = vpop.f32.mrb[0].mxu0
  %6850 = vdwg.mxu0
  %6851 = vmatprep.subr.bf16.mxu0 %v4705
  %6852 = vmatpush1.bf16.msra.mxu0 %v4704
  %6853 = vmatprep.subr.bf16.mxu0 %v4713
  %6854 = vmatpush1.bf16.msra.mxu0 %v4712
  %6855 = vmatprep.subr.bf16.mxu0 %v4721
  %6856 = vmatpush1.bf16.msra.mxu0 %v4720
  %6857 = vmatprep.subr.bf16.mxu0 %v4729
  %6858 = vmatpush1.bf16.msra.mxu0 %v4728
  %6859 = vmatprep.subr.bf16.mxu0 %v4737
  %6860 = vmatpush1.bf16.msra.mxu0 %v4736
  %6861 = vmatprep.subr.bf16.mxu0 %v4745
  %6862 = vmatpush1.bf16.msra.mxu0 %v4744
  %6863 = vmatprep.subr.bf16.mxu0 %v4753
  %6864 = vmatpush1.bf16.msra.mxu0 %v4752
  %6865 = vmatprep.subr.bf16.mxu0 %v4761
  %6866 = vmatpush1.bf16.msra.mxu0 %v4760
  %6867 = vmatprep.subr.bf16.mxu0 %v4769
  %6868 = vmatpush1.bf16.msra.mxu0 %v4768
  %6869 = vmatprep.subr.bf16.mxu0 %v4777
  %6870 = vmatpush1.bf16.msra.mxu0 %v4776
  %6871 = vmatprep.subr.bf16.mxu0 %v4785
  %6872 = vmatpush1.bf16.msra.mxu0 %v4784
  %6873 = vmatprep.subr.bf16.mxu0 %v4793
  %6874 = vmatpush1.bf16.msra.mxu0 %v4792
  %6875 = vmatprep.subr.bf16.mxu0 %v4801
  %6876 = vmatpush1.bf16.msra.mxu0 %v4800
  %6877 = vmatprep.subr.bf16.mxu0 %v4809
  %6878 = vmatpush1.bf16.msra.mxu0 %v4808
  %6879 = vmatprep.subr.bf16.mxu0 %v4817
  %6880 = vmatpush1.bf16.msra.mxu0 %v4816
  %6881 = vmatprep.subr.bf16.mxu0 %v4825
  %6882 = vmatpush1.bf16.msra.mxu0 %v4824
  %6883 = vmatprep.mubr.bf16.mxu0 %v6768
  %6884 = vmatmul.mubr.bf16.gmra.mrb[0].mxu0 %v6767
  %v6885 = vpop.f32.mrb[0].mxu0
  %v6886 = vadd.f32 0.0, %v6885
  %v6887 = vpop.f32.mrb[0].mxu0
  %v6888 = vadd.f32 0.0, %v6887
  %v6889 = vpop.f32.mrb[0].mxu0
  %v6890 = vpop.f32.mrb[0].mxu0
  %6891 = vdwg.mxu0
  %6892 = vmatprep.subr.bf16.mxu0 %v4707
  %6893 = vmatpush1.bf16.msra.mxu0 %v4706
  %6894 = vmatprep.subr.bf16.mxu0 %v4715
  %6895 = vmatpush1.bf16.msra.mxu0 %v4714
  %6896 = vmatprep.subr.bf16.mxu0 %v4723
  %6897 = vmatpush1.bf16.msra.mxu0 %v4722
  %6898 = vmatprep.subr.bf16.mxu0 %v4731
  %6899 = vmatpush1.bf16.msra.mxu0 %v4730
  %6900 = vmatprep.subr.bf16.mxu0 %v4739
  %6901 = vmatpush1.bf16.msra.mxu0 %v4738
  %6902 = vmatprep.subr.bf16.mxu0 %v4747
  %6903 = vmatpush1.bf16.msra.mxu0 %v4746
  %6904 = vmatprep.subr.bf16.mxu0 %v4755
  %6905 = vmatpush1.bf16.msra.mxu0 %v4754
  %6906 = vmatprep.subr.bf16.mxu0 %v4763
  %6907 = vmatpush1.bf16.msra.mxu0 %v4762
  %6908 = vmatprep.subr.bf16.mxu0 %v4771
  %6909 = vmatpush1.bf16.msra.mxu0 %v4770
  %6910 = vmatprep.subr.bf16.mxu0 %v4779
  %6911 = vmatpush1.bf16.msra.mxu0 %v4778
  %6912 = vmatprep.subr.bf16.mxu0 %v4787
  %6913 = vmatpush1.bf16.msra.mxu0 %v4786
  %6914 = vmatprep.subr.bf16.mxu0 %v4795
  %6915 = vmatpush1.bf16.msra.mxu0 %v4794
  %6916 = vmatprep.subr.bf16.mxu0 %v4803
  %6917 = vmatpush1.bf16.msra.mxu0 %v4802
  %6918 = vmatprep.subr.bf16.mxu0 %v4811
  %6919 = vmatpush1.bf16.msra.mxu0 %v4810
  %6920 = vmatprep.subr.bf16.mxu0 %v4819
  %6921 = vmatpush1.bf16.msra.mxu0 %v4818
  %6922 = vmatprep.subr.bf16.mxu0 %v4827
  %6923 = vmatpush1.bf16.msra.mxu0 %v4826
  %6924 = vmatprep.mubr.bf16.mxu0 %v6768
  %6925 = vmatmul.mubr.bf16.gmra.mrb[0].mxu0 %v6767
  %v6926 = vpop.f32.mrb[0].mxu0
  %v6927 = vadd.f32 0.0, %v6926
  %v6928 = vpop.f32.mrb[0].mxu0
  %v6929 = vadd.f32 0.0, %v6928
  %v6930 = vpop.f32.mrb[0].mxu0
  %v6931 = vpop.f32.mrb[0].mxu0
  %6932 = vdwg.mxu0
  %v6933 = vadd.f32 %v6759, %v6804
  %v6934 = vadd.f32 %v6760, %v6806
  %v6935 = vadd.f32 %v6761, %v6845
  %v6936 = vadd.f32 %v6762, %v6847
  %v6937 = vadd.f32 %v6763, %v6886
  %v6938 = vadd.f32 %v6764, %v6888
  %v6939 = vadd.f32 %v6765, %v6927
  %v6940 = vadd.f32 %v6766, %v6929
  %v6941 = vpack.c.bf16 %v6933, %v6933
  %v6942 = vpack.c.bf16 %v6934, %v6934
  %v6943 = vpack.c.bf16 %v6935, %v6935
  %v6944 = vpack.c.bf16 %v6936, %v6936
  %v6945 = vpack.c.bf16 %v6937, %v6937
  %v6946 = vpack.c.bf16 %v6938, %v6938
  %v6947 = vpack.c.bf16 %v6939, %v6939
  %v6948 = vpack.c.bf16 %v6940, %v6940
  %v6949 = vxor.u32 %v6941, 2147516416
  %v6950 = vxor.u32 %v6942, 2147516416
  %v6951 = vxor.u32 %v6943, 2147516416
  %v6952 = vxor.u32 %v6944, 2147516416
  %v6953 = vxor.u32 %v6945, 2147516416
  %v6954 = vxor.u32 %v6946, 2147516416
  %v6956 = vmul.bf16 %v6949, 1069105081
  %v6957 = vpow.bf16.pop %v6956
  %v6959 = vmul.bf16 %v6950, 1069105081
  %v6960 = vpow.bf16.pop %v6959
  %v6962 = vmul.bf16 %v6951, 1069105081
  %v6963 = vpow.bf16.pop %v6962
  %v6965 = vmul.bf16 %v6952, 1069105081
  %v6966 = vpow.bf16.pop %v6965
  %v6968 = vmul.bf16 %v6953, 1069105081
  %v6969 = vpow.bf16.pop %v6968
  %v6971 = vmul.bf16 %v6954, 1069105081
  %v6972 = vpow.bf16.pop %v6971
  %v6973 = vadd.bf16 %v6957, 1065369472
  %v6974 = vadd.bf16 %v6960, 1065369472
  %v6975 = vadd.bf16 %v6963, 1065369472
  %v6976 = vadd.bf16 %v6966, 1065369472
  %v6977 = vadd.bf16 %v6969, 1065369472
  %v6978 = vadd.bf16 %v6972, 1065369472
  %v6979 = vrcp.bf16.pop %v6973
  %v6980 = vmul.bf16 1065369472, %v6979
  %v6981 = vrcp.bf16.pop %v6974
  %v6982 = vmul.bf16 1065369472, %v6981
  %v6983 = vrcp.bf16.pop %v6975
  %v6984 = vmul.bf16 1065369472, %v6983
  %v6985 = vrcp.bf16.pop %v6976
  %v6986 = vmul.bf16 1065369472, %v6985
  %v6987 = vrcp.bf16.pop %v6977
  %v6988 = vmul.bf16 1065369472, %v6987
  %v6989 = vrcp.bf16.pop %v6978
  %v6990 = vmul.bf16 1065369472, %v6989
  %v6991 = vunpack.c.l.bf16 %v6980
  %v6992 = vunpack.c.l.bf16 %v6982
  %v6993 = vunpack.c.l.bf16 %v6984
  %v6994 = vunpack.c.l.bf16 %v6986
  %v6995 = vunpack.c.l.bf16 %v6988
  %v6996 = vunpack.c.l.bf16 %v6990
  %v6997 = vtanh.bf16.pop %v6947
  %v6998 = vtanh.bf16.pop %v6948
  %v6999 = vunpack.c.l.bf16 %v6997
  %v7000 = vunpack.c.l.bf16 %v6998
  %v7001 = vmul.f32 %v6993, %v6746
  %v7002 = vmul.f32 %v6994, %v6747
  %v7003 = vmul.f32 %v6991, %v6999
  %v7004 = vmul.f32 %v6992, %v7000
  %v7005 = vadd.f32 %v7001, %v7003
  %v7006 = vadd.f32 %v7002, %v7004
  %v7007 = vpack.c.bf16 %v7005, %v7005
  %v7008 = vpack.c.bf16 %v7006, %v7006
  %v7009 = vtanh.bf16.pop %v7007
  %v7010 = vtanh.bf16.pop %v7008
  %v7011 = vunpack.c.l.bf16 %v7009
  %v7012 = vunpack.c.l.bf16 %v7010
  %v7013 = vmul.f32 %v6995, %v7011
  %v7014 = vmul.f32 %v6996, %v7012
  %7015 = vst [vmem:[#allocation3] sm:$0xff] %v7013
  %7016 = vst [vmem:[#allocation3 + $0x8] sm:$0xff] %v7014
  %7017 = vst [vmem:[#allocation4] sm:$0xff] %v7005
  %7018 = vst [vmem:[#allocation4 + $0x8] sm:$0xff] %v7006
  // Predicated region
  $region30: #{multi_model_forward.1} parent=0 // pred_check
    %p7019 = pneg %p25
  $region31: #{multi_model_forward.1} parent=0 // pred_check_branch
    %7021 = sbr.rel (%p7019) target = $region33
  $region32: #{multi_model_forward.1} parent=0 // pred_region
    %v7022 = vpack.c.bf16 %v7013, %v7013
    %v7023 = vpack.c.bf16 %v7014, %v7014
    %v7024 = vld [vmem:[%s4] sm:$0xf]
    %v7025 = vld [vmem:[%s4 + $0x4] sm:$0xf]
    %v7026 = vld [vmem:[%s4 + $0x8] sm:$0xf]
    %v7027 = vld [vmem:[%s4 + $0xc] sm:$0xf]
    %v7028 = vld [vmem:[%s4 + $0x10] sm:$0xf]
    %v7029 = vld [vmem:[%s4 + $0x14] sm:$0xf]
    %v7030 = vld [vmem:[%s4 + $0x18] sm:$0xf]
    %v7031 = vld [vmem:[%s4 + $0x1c] sm:$0xf]
    %v7032 = vld [vmem:[%s4 + $0x20] sm:$0xf]
    %v7033 = vld [vmem:[%s4 + $0x24] sm:$0xf]
    %v7034 = vld [vmem:[%s4 + $0x28] sm:$0xf]
    %v7035 = vld [vmem:[%s4 + $0x2c] sm:$0xf]
    %v7036 = vld [vmem:[%s4 + $0x30] sm:$0xf]
    %v7037 = vld [vmem:[%s4 + $0x34] sm:$0xf]
    %v7038 = vld [vmem:[%s4 + $0x38] sm:$0xf]
    %v7039 = vld [vmem:[%s4 + $0x3c] sm:$0xf]
    %v7040 = vld [vmem:[%s4 + $0x40] sm:$0xf]
    %v7041 = vld [vmem:[%s4 + $0x44] sm:$0xf]
    %v7042 = vld [vmem:[%s4 + $0x48] sm:$0xf]
    %v7043 = vld [vmem:[%s4 + $0x4c] sm:$0xf]
    %v7044 = vld [vmem:[%s4 + $0x50] sm:$0xf]
    %v7045 = vld [vmem:[%s4 + $0x54] sm:$0xf]
    %v7046 = vld [vmem:[%s4 + $0x58] sm:$0xf]
    %v7047 = vld [vmem:[%s4 + $0x5c] sm:$0xf]
    %v7048 = vld [vmem:[%s4 + $0x60] sm:$0xf]
    %v7049 = vld [vmem:[%s4 + $0x64] sm:$0xf]
    %v7050 = vld [vmem:[%s4 + $0x68] sm:$0xf]
    %v7051 = vld [vmem:[%s4 + $0x6c] sm:$0xf]
    %v7052 = vld [vmem:[%s4 + $0x70] sm:$0xf]
    %v7053 = vld [vmem:[%s4 + $0x74] sm:$0xf]
    %v7054 = vld [vmem:[%s4 + $0x78] sm:$0xf]
    %v7055 = vld [vmem:[%s4 + $0x7c] sm:$0xf]
    %v7056 = vld [vmem:[%s5] sm:$0x1]
    %v7058 = vlaneseq
    %v7059 = vshrl.u32 %v7058, 7
    %v7060 = vsub.s32 0, %v7059
    %v7061 = vrot.slane %v7056, %v7060
    %v7095 = vunpack.c.l.b16 %v7024
    %v7096 = vunpack.c.l.b16 %v7025
    %v7097 = vunpack.c.l.b16 %v7026
    %v7098 = vunpack.c.l.b16 %v7027
    %v7099 = vunpack.c.l.b16 %v7028
    %v7100 = vunpack.c.l.b16 %v7029
    %v7101 = vunpack.c.l.b16 %v7030
    %v7102 = vunpack.c.l.b16 %v7031
    %v7103 = vunpack.c.l.b16 %v7032
    %v7104 = vunpack.c.l.b16 %v7033
    %v7105 = vunpack.c.l.b16 %v7034
    %v7106 = vunpack.c.l.b16 %v7035
    %v7107 = vunpack.c.l.b16 %v7036
    %v7108 = vunpack.c.l.b16 %v7037
    %v7109 = vunpack.c.l.b16 %v7038
    %v7110 = vunpack.c.l.b16 %v7039
    %v7111 = vunpack.c.l.b16 %v7040
    %v7112 = vunpack.c.l.b16 %v7041
    %v7113 = vunpack.c.l.b16 %v7042
    %v7114 = vunpack.c.l.b16 %v7043
    %v7115 = vunpack.c.l.b16 %v7044
    %v7116 = vunpack.c.l.b16 %v7045
    %v7117 = vunpack.c.l.b16 %v7046
    %v7118 = vunpack.c.l.b16 %v7047
    %v7119 = vunpack.c.l.b16 %v7048
    %v7120 = vunpack.c.l.b16 %v7049
    %v7121 = vunpack.c.l.b16 %v7050
    %v7122 = vunpack.c.l.b16 %v7051
    %v7123 = vunpack.c.l.b16 %v7052
    %v7124 = vunpack.c.l.b16 %v7053
    %v7125 = vunpack.c.l.b16 %v7054
    %v7126 = vunpack.c.l.b16 %v7055
    %v7127 = vpack.c.b16 %v7096, %v7095
    %v7128 = vpack.c.b16 %v7098, %v7097
    %v7129 = vpack.c.b16 %v7100, %v7099
    %v7130 = vpack.c.b16 %v7102, %v7101
    %v7131 = vpack.c.b16 %v7104, %v7103
    %v7132 = vpack.c.b16 %v7106, %v7105
    %v7133 = vpack.c.b16 %v7108, %v7107
    %v7134 = vpack.c.b16 %v7110, %v7109
    %v7135 = vpack.c.b16 %v7112, %v7111
    %v7136 = vpack.c.b16 %v7114, %v7113
    %v7137 = vpack.c.b16 %v7116, %v7115
    %v7138 = vpack.c.b16 %v7118, %v7117
    %v7139 = vpack.c.b16 %v7120, %v7119
    %v7140 = vpack.c.b16 %v7122, %v7121
    %v7141 = vpack.c.b16 %v7124, %v7123
    %v7142 = vpack.c.b16 %v7126, %v7125
    %7159 = vmatprep.subr.bf16.mxu0 0
    %7160 = vmatpush1.bf16.msra.mxu0 %v7127
    %7161 = vmatprep.subr.bf16.mxu0 0
    %7162 = vmatpush1.bf16.msra.mxu0 %v7128
    %7163 = vmatprep.subr.bf16.mxu0 0
    %7164 = vmatpush1.bf16.msra.mxu0 %v7129
    %7165 = vmatprep.subr.bf16.mxu0 0
    %7166 = vmatpush1.bf16.msra.mxu0 %v7130
    %7167 = vmatprep.subr.bf16.mxu0 0
    %7168 = vmatpush1.bf16.msra.mxu0 %v7131
    %7169 = vmatprep.subr.bf16.mxu0 0
    %7170 = vmatpush1.bf16.msra.mxu0 %v7132
    %7171 = vmatprep.subr.bf16.mxu0 0
    %7172 = vmatpush1.bf16.msra.mxu0 %v7133
    %7173 = vmatprep.subr.bf16.mxu0 0
    %7174 = vmatpush1.bf16.msra.mxu0 %v7134
    %7175 = vmatprep.subr.bf16.mxu0 0
    %7176 = vmatpush1.bf16.msra.mxu0 %v7135
    %7177 = vmatprep.subr.bf16.mxu0 0
    %7178 = vmatpush1.bf16.msra.mxu0 %v7136
    %7179 = vmatprep.subr.bf16.mxu0 0
    %7180 = vmatpush1.bf16.msra.mxu0 %v7137
    %7181 = vmatprep.subr.bf16.mxu0 0
    %7182 = vmatpush1.bf16.msra.mxu0 %v7138
    %7183 = vmatprep.subr.bf16.mxu0 0
    %7184 = vmatpush1.bf16.msra.mxu0 %v7139
    %7185 = vmatprep.subr.bf16.mxu0 0
    %7186 = vmatpush1.bf16.msra.mxu0 %v7140
    %7187 = vmatprep.subr.bf16.mxu0 0
    %7188 = vmatpush1.bf16.msra.mxu0 %v7141
    %7189 = vmatprep.subr.bf16.mxu0 0
    %7190 = vmatpush1.bf16.msra.mxu0 %v7142
    %7191 = vmatprep.mubr.bf16.mxu0 %v7023
    %7192 = vmatmul.mubr.bf16.gmra.mrb[0].mxu0 %v7022
    %v7193 = vpop.f32.mrb[0].mxu0
    %v7194 = vadd.f32 %v7061, %v7193
    %v7195 = vpop.f32.mrb[0].mxu0
    %v7196 = vpop.f32.mrb[0].mxu0
    %v7197 = vpop.f32.mrb[0].mxu0
    %7198 = vdwg.mxu0
    %7199 = vst [vmem:[%s6] sm:$0xff] %v7194
  $region33: #{multi_model_forward.1} parent=0 // pred_fallthru
    _
  // Predicated region
  $region34: #{multi_model_forward.1} parent=0 // pred_check
    _
  $region35: #{multi_model_forward.1} parent=0 // pred_check_branch
    %7201 = sbr.rel (0) target = $region37
  $region36: #{multi_model_forward.1} parent=0 // pred_region
    _
  $region37: #{multi_model_forward.1} parent=0 // pred_fallthru
    _
  // Predicated region
  $region38: #{multi_model_forward.1} parent=0 // pred_check
    _
  $region39: #{multi_model_forward.1} parent=0 // pred_check_branch
    %7203 = sbr.rel (0) target = $region41
  $region40: #{multi_model_forward.1} parent=0 // pred_region
    _
  $region41: #{multi_model_forward.1} parent=0 // pred_fallthru
    _

</llo_original>
